<compile_context>
chip_gen: v7x
topology: tpu7x:2x2x1
jax: 0.10.0
libtpu: 0.0.40
codegen_flags: <defaults>
</compile_context>

<pallas_src>
import math

import jax
import jax.numpy as jnp
from jax.experimental import pallas as pl
from jax.experimental.pallas import tpu as pltpu


# ---------------------------------------------------------------------------
# Kernels
# ---------------------------------------------------------------------------

def _butterfly(x1, x2, x3, x4):
    """Factorized IWT butterfly (inputs already cast to f32).

    Returns the four phase planes, each already scaled by 1/2:
      ee -> out[0::2, 0::2], oe -> out[1::2, 0::2],
      eo -> out[0::2, 1::2], oo -> out[1::2, 1::2].
    """
    s12 = (x1 + x2) * 0.5
    d12 = (x1 - x2) * 0.5
    s34 = (x3 + x4) * 0.5
    d34 = (x3 - x4) * 0.5
    ee = d12 - d34
    oe = d12 + d34
    eo = s12 - s34
    oo = s12 + s34
    return ee, oe, eo, oo


def _iwt_kernel_rowpair(x_ref, o_ref):
    """Path A (2W % 128 == 0).

    x_ref: (1, 4, ct, ht, W); o_ref: (1, ct, ht, 2, 2W), the size-2 axis
    selecting even/odd output rows. Two direct lane-dense stores, no concat.
    """
    f32 = jnp.float32
    ee, oe, eo, oo = _butterfly(
        x_ref[0, 0].astype(f32), x_ref[0, 1].astype(f32),
        x_ref[0, 2].astype(f32), x_ref[0, 3].astype(f32))
    ct, ht, w = ee.shape
    # Column interleave only; the row interleave is implicit in the output view.
    even = jnp.stack([ee, eo], axis=-1).reshape(ct, ht, 2 * w)   # out rows 2i
    odd = jnp.stack([oe, oo], axis=-1).reshape(ct, ht, 2 * w)    # out rows 2i+1
    o_ref[0, :, :, 0, :] = even.astype(o_ref.dtype)
    o_ref[0, :, :, 1, :] = odd.astype(o_ref.dtype)
    # TODO(synk): for bf16 inputs, a 2xbf16->u32 pack (pltpu.pack_elementwise)
    # would replace the stack/reshape column interleave with cheap packing ops.


def _make_folded_kernel(ht, w):
    """Path B (small W, W % 4 == 0): rows folded into the lane axis.

    x_ref: (1, 4, ct, ht*W); o_ref: (1, ct, 4*ht*W). The butterfly runs on
    full-lane flat rows; the output is assembled as
      [even_row_0, odd_row_0, even_row_1, odd_row_1, ...]   (2W-wide pieces)
    with static lane slices + one lane concat, then written by a single
    lane-dense (multiple-of-128-wide) store.
    """
    tw = 2 * w

    def kernel(x_ref, o_ref):
        f32 = jnp.float32
        ee, oe, eo, oo = _butterfly(
            x_ref[0, 0].astype(f32), x_ref[0, 1].astype(f32),
            x_ref[0, 2].astype(f32), x_ref[0, 3].astype(f32))
        ct, flat = ee.shape
        # Column (pixel) interleave on flat rows:
        #   even[:, i*2W + 2j + c] == out[2i, 2j + c]; odd -> out row 2i+1.
        even = jnp.stack([ee, eo], axis=-1).reshape(ct, 2 * flat)
        odd = jnp.stack([oe, oo], axis=-1).reshape(ct, 2 * flat)
        # Row-pair interleave at 2W granularity (bounded static unroll, ht<=32).
        pieces = []
        for i in range(ht):
            pieces.append(even[:, i * tw:(i + 1) * tw])
            pieces.append(odd[:, i * tw:(i + 1) * tw])
        out = jnp.concatenate(pieces, axis=-1)           # (ct, 4*ht*W)
        o_ref[0] = out.astype(o_ref.dtype)

    return kernel


def _iwt_kernel_wide(x_ref, o_ref):
    """Path C fallback (awkward W): (1, ct, ht, 4W) output, single store."""
    f32 = jnp.float32
    ee, oe, eo, oo = _butterfly(
        x_ref[0, 0].astype(f32), x_ref[0, 1].astype(f32),
        x_ref[0, 2].astype(f32), x_ref[0, 3].astype(f32))
    ct, ht, w = ee.shape
    even = jnp.stack([ee, eo], axis=-1).reshape(ct, ht, 2 * w)
    odd = jnp.stack([oe, oo], axis=-1).reshape(ct, ht, 2 * w)
    # 2W is not a lane multiple here; the single full-width 4W store is the
    # best available option, so keep the concat for this rare path.
    o_ref[0] = jnp.concatenate([even, odd], axis=-1).astype(o_ref.dtype)


# ---------------------------------------------------------------------------
# Generation-aware sizing / tiling
# ---------------------------------------------------------------------------

def _hw_params():
    """(target block bytes, scoped-VMEM limit) tuned per TPU generation."""
    try:
        cap = int(getattr(pltpu.get_tpu_info(), "vmem_capacity_bytes", 128 << 20))
    except Exception:
        cap = 128 << 20
    if cap <= (64 << 20):
        # v7x-class: ~3.2 TB/s HBM -> bigger blocks to amortize the ~0.35us
        # per-step overhead, but only 64 MiB VMEM -> keep the scoped limit at 32 MiB.
        return 4 << 20, 32 << 20
    # v5e / v6e: 2 MiB blocks already sit on the bandwidth plateau; give the
    # compiler headroom (physical VMEM is 128 MiB) for interleave temporaries.
    return 2 << 20, 64 << 20


def _sublane(itemsize):
    # dtype-aware sublane multiple (f32: 8, bf16: 16, int8/fp8: 32)
    return {4: 8, 2: 16, 1: 32}.get(itemsize, 8)


def _ensure_two_steps_rows(b, nc, h, ct, ht, sub):
    """Expose >= 2 grid steps so both v7x TensorCores get work."""
    if b * pl.cdiv(nc, ct) * pl.cdiv(h, ht) >= 2:
        return ct, ht
    if ct > 1:
        return max(1, ct // 2), ht
    if h >= 2 * sub:
        return ct, max(sub, ((h // 2) // sub) * sub)
    return ct, ht


def _plan_rows(b, nc, h, w, itemsize, target):
    """(channels, rows) per step for the row-pair / wide layouts (paths A, C)."""
    sub = _sublane(itemsize)
    row_bytes = 4 * w * itemsize                 # one row, all 4 quarters
    if h * row_bytes <= target:
        ht = h
        ct = int(max(1, min(nc, target // (h * row_bytes))))
    else:
        ct = 1
        if h <= sub:
            ht = h
        else:
            cap_rows = max(sub, (target // row_bytes) // sub * sub)
            ht = int(min(cap_rows, (h // sub) * sub))
    return _ensure_two_steps_rows(b, nc, h, ct, ht, sub)


def _plan_folded(b, nc, h, w, itemsize, target):
    """(channels, rows) per step for the folded layout (path B)."""
    sub = _sublane(itemsize)
    ht_min = 128 // math.gcd(128, w)     # rows per 128-multiple lane tile
    ht_cap = min(32, 2 * ht_min)         # bounded static unroll in the kernel
    if h <= ht_cap or ht_min >= h:
        ht = h                            # full flattened axis -> always legal
    else:
        ht = max(ht_min, (ht_cap // ht_min) * ht_min)

    blk_ch_bytes = 4 * ht * w * itemsize
    ct_cap = max(1, target // blk_ch_bytes)
    if ct_cap >= nc or nc <= sub:
        ct = nc
    else:
        ct = int(min((nc // sub) * sub, max(sub, (ct_cap // sub) * sub)))

    # Expose >= 2 grid steps so both v7x TensorCores get work.
    if b * pl.cdiv(nc, ct) * pl.cdiv(h, ht) < 2:
        if ct == nc and nc >= 2 * sub:
            ct = max(sub, ((nc // 2) // sub) * sub)
        elif ht == h and h >= 2 * ht_min:
            ht = max(ht_min, ((h // 2) // ht_min) * ht_min)
    return ct, ht


# ---------------------------------------------------------------------------
# Wrapper
# ---------------------------------------------------------------------------

def iwt(x: jax.Array) -> jax.Array:
    """Inverse wavelet transform. x: (B, C, H, W), C % 4 == 0 -> (B, C//4, 2H, 2W)."""
    b, ch, h, w = x.shape
    assert ch % 4 == 0, "channel dim must be divisible by 4"
    nc = ch // 4
    itemsize = jnp.dtype(x.dtype).itemsize
    target, vmem_limit = _hw_params()

    params = pltpu.CompilerParams(
        dimension_semantics=("parallel", "parallel", "parallel"),
        vmem_limit_bytes=vmem_limit,
    )
    # Pure-bandwidth op: ~3 flops/element, 2x the data moved (read + write).
    cost = pl.CostEstimate(
        flops=int(3 * x.size), transcendentals=0,
        bytes_accessed=int(2 * x.size * itemsize))

    if w % 64 == 0:
        # ---- Path A: 2W is a lane multiple -> two dense stores per step. ----
        ct, ht = _plan_rows(b, nc, h, w, itemsize, target)
        grid = (b, pl.cdiv(nc, ct), pl.cdiv(h, ht))
        x5 = x.reshape(b, 4, nc, h, w)                       # free reshape
        out_view = pl.pallas_call(
            _iwt_kernel_rowpair,
            out_shape=jax.ShapeDtypeStruct((b, nc, h, 2, 2 * w), x.dtype),
            grid_spec=pl.GridSpec(
                grid=grid,
                in_specs=[pl.BlockSpec((1, 4, ct, ht, w),
                                       lambda i, c, r: (i, 0, c, r, 0))],
                out_specs=pl.BlockSpec((1, ct, ht, 2, 2 * w),
                                       lambda i, c, r: (i, c, r, 0, 0)),
            ),
            compiler_params=params,
            cost_estimate=cost,
        )(x5)
        # (B, nc, H, 2, 2W) -> (B, nc, 2H, 2W): free contiguous reshape.
        return out_view.reshape(b, nc, 2 * h, 2 * w)

    if w % 4 == 0:
        # ---- Path B: small W -> fold rows into lanes for dense loads/stores.
        ct, ht = _plan_folded(b, nc, h, w, itemsize, target)
        lane = ht * w
        grid = (b, pl.cdiv(nc, ct), pl.cdiv(h, ht))
        x4d = x.reshape(b, 4, nc, h * w)                     # free reshape
        out_view = pl.pallas_call(
            _make_folded_kernel(ht, w),
            out_shape=jax.ShapeDtypeStruct((b, nc, 4 * h * w), x.dtype),
            grid_spec=pl.GridSpec(
                grid=grid,
                in_specs=[pl.BlockSpec((1, 4, ct, lane),
                                       lambda i, c, r: (i, 0, c, r))],
                out_specs=pl.BlockSpec((1, ct, 4 * lane),
                                       lambda i, c, r: (i, c, r)),
            ),
            compiler_params=params,
            cost_estimate=cost,
        )(x4d)
        # (B, nc, 4HW) -> (B, nc, 2H, 2W): free contiguous reshape.
        return out_view.reshape(b, nc, 2 * h, 2 * w)

    # ---- Path C: awkward W (not a multiple of 4) -> (H, 4W) row layout. ----
    ct, ht = _plan_rows(b, nc, h, w, itemsize, target)
    grid = (b, pl.cdiv(nc, ct), pl.cdiv(h, ht))
    x5 = x.reshape(b, 4, nc, h, w)
    out_view = pl.pallas_call(
        _iwt_kernel_wide,
        out_shape=jax.ShapeDtypeStruct((b, nc, h, 4 * w), x.dtype),
        grid_spec=pl.GridSpec(
            grid=grid,
            in_specs=[pl.BlockSpec((1, 4, ct, ht, w),
                                   lambda i, c, r: (i, 0, c, r, 0))],
            out_specs=pl.BlockSpec((1, ct, ht, 4 * w),
                                   lambda i, c, r: (i, c, r, 0)),
        ),
        compiler_params=params,
        cost_estimate=cost,
    )(x5)
    return out_view.reshape(b, nc, 2 * h, 2 * w)


# ---------------------------------------------------------------------------
# Pure-JAX reference and self-test
# ---------------------------------------------------------------------------

def iwt_reference(x: jax.Array) -> jax.Array:
    """Pure-JAX reference mirroring the PyTorch forward."""
    b, ch, h, w = x.shape
    nc = ch // 4
    x1 = x[:, 0 * nc:1 * nc] / 2
    x2 = x[:, 1 * nc:2 * nc] / 2
    x3 = x[:, 2 * nc:3 * nc] / 2
    x4 = x[:, 3 * nc:4 * nc] / 2
    out = jnp.zeros((b, nc, 2 * h, 2 * w), dtype=x.dtype)
    out = out.at[:, :, 0::2, 0::2].set(x1 - x2 - x3 + x4)
    out = out.at[:, :, 1::2, 0::2].set(x1 - x2 + x3 - x4)
    out = out.at[:, :, 0::2, 1::2].set(x1 + x2 - x3 - x4)
    out = out.at[:, :, 1::2, 1::2].set(x1 + x2 + x3 + x4)
    return out


if __name__ == "__main__":
    key = jax.random.PRNGKey(0)

    # Primary MWCNN-like shape: B=2, C=16 (-> 4 output channels), H=W=16.
    # Small W -> exercises the folded, lane-dense path (Path B).
    x = jax.random.normal(key, (2, 16, 16, 16), dtype=jnp.float32)
    y = jax.block_until_ready(iwt(x))
    assert y.shape == (2, 4, 32, 32), y.shape
    assert jnp.allclose(y, iwt_reference(x), atol=1e-5, rtol=1e-5), \
        "mismatch vs reference (folded path)"

    # Wide-image shape (2W % 128 == 0) -> exercises the row-pair path (Path A).
    x_wide = jax.random.normal(jax.random.PRNGKey(0), (1, 8, 8, 64),
                               dtype=jnp.float32)
    y_wide = jax.block_until_ready(iwt(x_wide))
    assert y_wide.shape == (1, 2, 16, 128), y_wide.shape
    assert jnp.allclose(y_wide, iwt_reference(x_wide), atol=1e-5, rtol=1e-5), \
        "mismatch vs reference (row-pair path)"

    print("KERNEL_OK")
</pallas_src>

<mosaic_0001>
module attributes {stable_mosaic.version = 11 : i64} {
  func.func @kernel(%arg0: i32, %arg1: i32, %arg2: i32, %arg3: memref<1x4x4x256xf32, #tpu.memory_space<vmem>>, %arg4: memref<1x4x1024xf32, #tpu.memory_space<vmem>>) attributes {dimension_semantics = [#tpu.dimension_semantics<parallel>, #tpu.dimension_semantics<parallel>, #tpu.dimension_semantics<parallel>], iteration_bounds = array<i64: 2, 1, 1>, scalar_prefetch = 0 : i64, scratch_operands = 0 : i64, tpu.core_type = #tpu.core_type<tc>, window_params = [{transform_indices = @transform_0, window_bounds = array<i64: 1, 4, 4, 256>}, {transform_indices = @transform_1, window_bounds = array<i64: 1, 4, 1024>}]} {
    %c0 = arith.constant 0 : index
    %c0_0 = arith.constant 0 : index
    %c0_1 = arith.constant 0 : index
    %c0_2 = arith.constant 0 : index
    %0 = vector.load %arg3[%c0, %c0_0, %c0_1, %c0_2] : memref<1x4x4x256xf32, #tpu.memory_space<vmem>>, vector<1x1x4x256xf32>
    %1 = vector.shape_cast %0 : vector<1x1x4x256xf32> to vector<4x256xf32>
    %c0_3 = arith.constant 0 : index
    %c1 = arith.constant 1 : index
    %c0_4 = arith.constant 0 : index
    %c0_5 = arith.constant 0 : index
    %2 = vector.load %arg3[%c0_3, %c1, %c0_4, %c0_5] : memref<1x4x4x256xf32, #tpu.memory_space<vmem>>, vector<1x1x4x256xf32>
    %3 = vector.shape_cast %2 : vector<1x1x4x256xf32> to vector<4x256xf32>
    %c0_6 = arith.constant 0 : index
    %c2 = arith.constant 2 : index
    %c0_7 = arith.constant 0 : index
    %c0_8 = arith.constant 0 : index
    %4 = vector.load %arg3[%c0_6, %c2, %c0_7, %c0_8] : memref<1x4x4x256xf32, #tpu.memory_space<vmem>>, vector<1x1x4x256xf32>
    %5 = vector.shape_cast %4 : vector<1x1x4x256xf32> to vector<4x256xf32>
    %c0_9 = arith.constant 0 : index
    %c3 = arith.constant 3 : index
    %c0_10 = arith.constant 0 : index
    %c0_11 = arith.constant 0 : index
    %6 = vector.load %arg3[%c0_9, %c3, %c0_10, %c0_11] : memref<1x4x4x256xf32, #tpu.memory_space<vmem>>, vector<1x1x4x256xf32>
    %7 = vector.shape_cast %6 : vector<1x1x4x256xf32> to vector<4x256xf32>
    %8 = arith.addf %1, %3 : vector<4x256xf32>
    %cst = arith.constant 5.000000e-01 : f32
    %9 = vector.broadcast %cst : f32 to vector<4x256xf32>
    %10 = arith.mulf %8, %9 : vector<4x256xf32>
    %11 = arith.subf %1, %3 : vector<4x256xf32>
    %cst_12 = arith.constant 5.000000e-01 : f32
    %12 = vector.broadcast %cst_12 : f32 to vector<4x256xf32>
    %13 = arith.mulf %11, %12 : vector<4x256xf32>
    %14 = arith.addf %5, %7 : vector<4x256xf32>
    %cst_13 = arith.constant 5.000000e-01 : f32
    %15 = vector.broadcast %cst_13 : f32 to vector<4x256xf32>
    %16 = arith.mulf %14, %15 : vector<4x256xf32>
    %17 = arith.subf %5, %7 : vector<4x256xf32>
    %cst_14 = arith.constant 5.000000e-01 : f32
    %18 = vector.broadcast %cst_14 : f32 to vector<4x256xf32>
    %19 = arith.mulf %17, %18 : vector<4x256xf32>
    %20 = arith.subf %13, %19 : vector<4x256xf32>
    %21 = arith.addf %13, %19 : vector<4x256xf32>
    %22 = arith.subf %10, %16 : vector<4x256xf32>
    %23 = arith.addf %10, %16 : vector<4x256xf32>
    %24 = vector.shape_cast %20 : vector<4x256xf32> to vector<4x256x1xf32>
    %25 = vector.shape_cast %22 : vector<4x256xf32> to vector<4x256x1xf32>
    %26 = tpu.concatenate %24, %25 in 2 : vector<4x256x1xf32>, vector<4x256x1xf32> -> vector<4x256x2xf32>
    %27 = vector.shape_cast %26 : vector<4x256x2xf32> to vector<4x512xf32>
    %28 = vector.shape_cast %21 : vector<4x256xf32> to vector<4x256x1xf32>
    %29 = vector.shape_cast %23 : vector<4x256xf32> to vector<4x256x1xf32>
    %30 = tpu.concatenate %28, %29 in 2 : vector<4x256x1xf32>, vector<4x256x1xf32> -> vector<4x256x2xf32>
    %31 = vector.shape_cast %30 : vector<4x256x2xf32> to vector<4x512xf32>
    %32 = vector.extract_strided_slice %27 {offsets = [0, 0], sizes = [4, 32], strides = [1, 1]} : vector<4x512xf32> to vector<4x32xf32>
    %33 = vector.extract_strided_slice %31 {offsets = [0, 0], sizes = [4, 32], strides = [1, 1]} : vector<4x512xf32> to vector<4x32xf32>
    %34 = vector.extract_strided_slice %27 {offsets = [0, 32], sizes = [4, 32], strides = [1, 1]} : vector<4x512xf32> to vector<4x32xf32>
    %35 = vector.extract_strided_slice %31 {offsets = [0, 32], sizes = [4, 32], strides = [1, 1]} : vector<4x512xf32> to vector<4x32xf32>
    %36 = vector.extract_strided_slice %27 {offsets = [0, 64], sizes = [4, 32], strides = [1, 1]} : vector<4x512xf32> to vector<4x32xf32>
    %37 = vector.extract_strided_slice %31 {offsets = [0, 64], sizes = [4, 32], strides = [1, 1]} : vector<4x512xf32> to vector<4x32xf32>
    %38 = vector.extract_strided_slice %27 {offsets = [0, 96], sizes = [4, 32], strides = [1, 1]} : vector<4x512xf32> to vector<4x32xf32>
    %39 = vector.extract_strided_slice %31 {offsets = [0, 96], sizes = [4, 32], strides = [1, 1]} : vector<4x512xf32> to vector<4x32xf32>
    %40 = vector.extract_strided_slice %27 {offsets = [0, 128], sizes = [4, 32], strides = [1, 1]} : vector<4x512xf32> to vector<4x32xf32>
    %41 = vector.extract_strided_slice %31 {offsets = [0, 128], sizes = [4, 32], strides = [1, 1]} : vector<4x512xf32> to vector<4x32xf32>
    %42 = vector.extract_strided_slice %27 {offsets = [0, 160], sizes = [4, 32], strides = [1, 1]} : vector<4x512xf32> to vector<4x32xf32>
    %43 = vector.extract_strided_slice %31 {offsets = [0, 160], sizes = [4, 32], strides = [1, 1]} : vector<4x512xf32> to vector<4x32xf32>
    %44 = vector.extract_strided_slice %27 {offsets = [0, 192], sizes = [4, 32], strides = [1, 1]} : vector<4x512xf32> to vector<4x32xf32>
    %45 = vector.extract_strided_slice %31 {offsets = [0, 192], sizes = [4, 32], strides = [1, 1]} : vector<4x512xf32> to vector<4x32xf32>
    %46 = vector.extract_strided_slice %27 {offsets = [0, 224], sizes = [4, 32], strides = [1, 1]} : vector<4x512xf32> to vector<4x32xf32>
    %47 = vector.extract_strided_slice %31 {offsets = [0, 224], sizes = [4, 32], strides = [1, 1]} : vector<4x512xf32> to vector<4x32xf32>
    %48 = vector.extract_strided_slice %27 {offsets = [0, 256], sizes = [4, 32], strides = [1, 1]} : vector<4x512xf32> to vector<4x32xf32>
    %49 = vector.extract_strided_slice %31 {offsets = [0, 256], sizes = [4, 32], strides = [1, 1]} : vector<4x512xf32> to vector<4x32xf32>
    %50 = vector.extract_strided_slice %27 {offsets = [0, 288], sizes = [4, 32], strides = [1, 1]} : vector<4x512xf32> to vector<4x32xf32>
    %51 = vector.extract_strided_slice %31 {offsets = [0, 288], sizes = [4, 32], strides = [1, 1]} : vector<4x512xf32> to vector<4x32xf32>
    %52 = vector.extract_strided_slice %27 {offsets = [0, 320], sizes = [4, 32], strides = [1, 1]} : vector<4x512xf32> to vector<4x32xf32>
    %53 = vector.extract_strided_slice %31 {offsets = [0, 320], sizes = [4, 32], strides = [1, 1]} : vector<4x512xf32> to vector<4x32xf32>
    %54 = vector.extract_strided_slice %27 {offsets = [0, 352], sizes = [4, 32], strides = [1, 1]} : vector<4x512xf32> to vector<4x32xf32>
    %55 = vector.extract_strided_slice %31 {offsets = [0, 352], sizes = [4, 32], strides = [1, 1]} : vector<4x512xf32> to vector<4x32xf32>
    %56 = vector.extract_strided_slice %27 {offsets = [0, 384], sizes = [4, 32], strides = [1, 1]} : vector<4x512xf32> to vector<4x32xf32>
    %57 = vector.extract_strided_slice %31 {offsets = [0, 384], sizes = [4, 32], strides = [1, 1]} : vector<4x512xf32> to vector<4x32xf32>
    %58 = vector.extract_strided_slice %27 {offsets = [0, 416], sizes = [4, 32], strides = [1, 1]} : vector<4x512xf32> to vector<4x32xf32>
    %59 = vector.extract_strided_slice %31 {offsets = [0, 416], sizes = [4, 32], strides = [1, 1]} : vector<4x512xf32> to vector<4x32xf32>
    %60 = vector.extract_strided_slice %27 {offsets = [0, 448], sizes = [4, 32], strides = [1, 1]} : vector<4x512xf32> to vector<4x32xf32>
    %61 = vector.extract_strided_slice %31 {offsets = [0, 448], sizes = [4, 32], strides = [1, 1]} : vector<4x512xf32> to vector<4x32xf32>
    %62 = vector.extract_strided_slice %27 {offsets = [0, 480], sizes = [4, 32], strides = [1, 1]} : vector<4x512xf32> to vector<4x32xf32>
    %63 = vector.extract_strided_slice %31 {offsets = [0, 480], sizes = [4, 32], strides = [1, 1]} : vector<4x512xf32> to vector<4x32xf32>
    %64 = tpu.concatenate %32, %33, %34, %35, %36, %37, %38, %39, %40, %41, %42, %43, %44, %45, %46, %47 in 1 : vector<4x32xf32>, vector<4x32xf32>, vector<4x32xf32>, vector<4x32xf32>, vector<4x32xf32>, vector<4x32xf32>, vector<4x32xf32>, vector<4x32xf32>, vector<4x32xf32>, vector<4x32xf32>, vector<4x32xf32>, vector<4x32xf32>, vector<4x32xf32>, vector<4x32xf32>, vector<4x32xf32>, vector<4x32xf32> -> vector<4x512xf32>
    %65 = tpu.concatenate %48, %49, %50, %51, %52, %53, %54, %55, %56, %57, %58, %59, %60, %61, %62, %63 in 1 : vector<4x32xf32>, vector<4x32xf32>, vector<4x32xf32>, vector<4x32xf32>, vector<4x32xf32>, vector<4x32xf32>, vector<4x32xf32>, vector<4x32xf32>, vector<4x32xf32>, vector<4x32xf32>, vector<4x32xf32>, vector<4x32xf32>, vector<4x32xf32>, vector<4x32xf32>, vector<4x32xf32>, vector<4x32xf32> -> vector<4x512xf32>
    %66 = tpu.concatenate %64, %65 in 1 : vector<4x512xf32>, vector<4x512xf32> -> vector<4x1024xf32>
    %c0_15 = arith.constant 0 : index
    %c0_16 = arith.constant 0 : index
    %c0_17 = arith.constant 0 : index
    %67 = vector.load %arg4[%c0_15, %c0_16, %c0_17] : memref<1x4x1024xf32, #tpu.memory_space<vmem>>, vector<1x4x1024xf32>
    %68 = vector.shape_cast %67 : vector<1x4x1024xf32> to vector<4x1024xf32>
    %69 = vector.shape_cast %66 : vector<4x1024xf32> to vector<1x4x1024xf32>
    tpu.vector_store %arg4[%c0_15, %c0_16, %c0_17], %69 {strides = array<i32>} : memref<1x4x1024xf32, #tpu.memory_space<vmem>>, vector<1x4x1024xf32>,
    return
  }
  func.func @transform_0(%arg0: i32, %arg1: i32, %arg2: i32) -> (i32, i32, i32, i32) {
    %c0_i32 = arith.constant 0 : i32
    %c0_i32_0 = arith.constant 0 : i32
    return %arg0, %c0_i32, %arg1, %arg2 : i32, i32, i32, i32
  }
  func.func @transform_1(%arg0: i32, %arg1: i32, %arg2: i32) -> (i32, i32, i32) {
    %c0_i32 = arith.constant 0 : i32
    return %arg0, %arg1, %arg2 : i32, i32, i32
  }
}

</mosaic_0001>

<llo_original>
// kernel: tpu_custom_call.1
$region0: #{tpu_custom_call.1}
  #allocation0 [shape = 'u32[]', space=smem, size = 0x4, offset = 0x4, fixed_abs, tag = 'smem constant byte address 0x4 - core index']
  #allocation1 [shape = 'u32[144,128]{1,0:T(1,128)}', space=vmem, size = 0x12000, scoped, tag = 'internal scratch']
  %s0 = inlined_call_operand.hbm [shape: f32[2,4,4,256], index: 0, kind: input, shape index: {}]
  %s1 = inlined_call_operand.hbm [shape: f32[2,4,1024], index: 1, kind: output, shape index: {}]
  %s2 = sld [smem:[#allocation0]]
  $region41: #{tpu_custom_call.1} parent=0
    _
  %s4 = ssub.s32 1, %s2
  %s5 = scalar_select 0, %s4, %s2
  $region1: #{tpu_custom_call.1} parent=0
    #allocation2 [shape = 'u8[32768]{0}', space=vmem, size = 0x8000, scoped, tag = 'input window, operand 0']
    #allocation3 [shape = 's32[2]{0}', space=sflag, size = 0x8, scoped, tag = 'scoped memory for tpu_custom_call.1']
    #allocation4 [shape = 's32[2]{0}', space=sflag, size = 0x8, scoped, tag = 'scoped memory for tpu_custom_call.1']
    #allocation5 [shape = 'u8[32768]{0}', space=vmem, size = 0x8000, scoped, tag = 'output window, operand 0']
    %6 = vsyncpa [#allocation3], 0
    %s7 = scalar_lea.sflag [#allocation3], 1
    %8 = vsyncpa %s7, 0
    %9 = vsyncpa [#allocation4], 0
    %s10 = scalar_lea.sflag [#allocation4], 1
    %11 = vsyncpa %s10, 0
    loop: start=0, step=1, limit=4
    $region2: #{tpu_custom_call.1} parent=1 // loop_pre_header
      _
    $region3: #{tpu_custom_call.1} parent=1 // loop_header
      %s13 = sphi 0, %s17
      %p14 = scmp.ge.s32.totalorder %s13, 4
      %s20 = sphi 0, %s39
      %s21 = sphi 0, %s35
      %s22 = sphi 0, %s31
      %s23 = sphi 0, %s20
      %s24 = sphi 0, %s21
      %s25 = sphi 0, %s22
      %s26 = sphi 0, %s23
      %s27 = sphi 0, %s24
      %s28 = sphi 0, %s25
      %s46 = sphi 0, %s48
      %s49 = sphi 0, %s46
      %s50 = sphi 0, %s49
      %s66 = sphi 0, %s50
      %s76 = sphi 0, %s78
      %s79 = sphi 0, %s76
      %s80 = sphi 0, %s79
      %s96 = sphi 0, %s80
    $region4: #{tpu_custom_call.1} parent=1 // loop_header_branch
      %16 = sbr.rel (%p14) target = $region8
    $region5: #{tpu_custom_call.1} parent=1 // loop_body
      %s18 = ssub.s32 %s13, 1
      %s19 = ssub.s32 %s13, 2
      %s29 = sadd.s32 1, %s22
      %p30 = scmp.ge.s32.totalorder %s29, 1
      %s31 = scalar_select %p30, 0, %s29
      %s32 = sadd.s32 1, %s21
      %s33 = scalar_select %p30, %s32, %s21
      %p34 = scmp.ge.s32.totalorder %s33, 1
      %s35 = scalar_select %p34, 0, %s33
      %s36 = sadd.s32 1, %s20
      %s37 = scalar_select %p34, %s36, %s20
      %p38 = scmp.ge.s32.totalorder %s37, 2
      %s39 = scalar_select %p38, 0, %s37
      %s40 = ssub.s32 %s20, %s39
      %s41 = ssub.s32 %s21, %s35
      %s42 = sor.u32 %s40, %s41
      %s43 = ssub.s32 %s22, %s31
      %s44 = sor.u32 %s42, %s43
      %p45 = scmp.eq.s32.totalorder %s44, 0
      %s47 = sadd.s32 %s46, 1
      %s48 = scalar_select %p45, %s46, %s47
      %p51 = pneg %p45
      %p52 = scmp.eq.s32.totalorder %s13, 1
      %p53 = por %p51, %p52
      %p54 = scmp.ne.s32.totalorder %s46, %s49
      %p55 = scmp.eq.s32.totalorder %s13, 0
      %p56 = por %p54, %p55
      %p57 = scmp.ne.s32.totalorder %s46, %s49
      %p58 = scmp.eq.s32.totalorder %s18, 1
      %p59 = por %p57, %p58
      %p60 = scmp.ne.s32.totalorder %s49, %s50
      %p61 = scmp.eq.s32.totalorder %s18, 0
      %p62 = por %p60, %p61
      %p63 = scmp.ne.s32.totalorder %s49, %s50
      %p64 = scmp.eq.s32.totalorder %s19, 1
      %p65 = por %p63, %p64
      %p67 = scmp.ne.s32.totalorder %s50, %s66
      %p68 = scmp.eq.s32.totalorder %s19, 0
      %p69 = por %p67, %p68
      %s70 = ssub.s32 %s20, %s39
      %s71 = ssub.s32 %s21, %s35
      %s72 = sor.u32 %s70, %s71
      %s73 = ssub.s32 %s22, %s31
      %s74 = sor.u32 %s72, %s73
      %p75 = scmp.eq.s32.totalorder %s74, 0
      %s77 = sadd.s32 %s76, 1
      %s78 = scalar_select %p75, %s76, %s77
      %p81 = pneg %p75
      %p82 = scmp.eq.s32.totalorder %s13, 1
      %p83 = por %p81, %p82
      %p84 = scmp.ne.s32.totalorder %s76, %s79
      %p85 = scmp.eq.s32.totalorder %s13, 0
      %p86 = por %p84, %p85
      %p87 = scmp.ne.s32.totalorder %s76, %s79
      %p88 = scmp.eq.s32.totalorder %s18, 1
      %p89 = por %p87, %p88
      %p90 = scmp.ne.s32.totalorder %s79, %s80
      %p91 = scmp.eq.s32.totalorder %s18, 0
      %p92 = por %p90, %p91
      %p93 = scmp.ne.s32.totalorder %s79, %s80
      %p94 = scmp.eq.s32.totalorder %s19, 1
      %p95 = por %p93, %p94
      %p97 = scmp.ne.s32.totalorder %s80, %s96
      %p98 = scmp.eq.s32.totalorder %s19, 0
      %p99 = por %p97, %p98
      %p100 = scmp.le.s32.totalorder 1, %s13
      %p101 = scmp.lt.s32.totalorder %s13, 3
      %p102 = pnand %p100, %p101
      %p103 = pneg %p102
      // Predicated region
      $region9: #{tpu_custom_call.1} parent=5 // pred_check
        _
      $region10: #{tpu_custom_call.1} parent=5 // pred_check_branch
        %105 = sbr.rel (%p102) target = $region12
      $region11: #{tpu_custom_call.1} parent=5 // pred_region
        %s106 = ssub.s32 %s13, 1
      $region12: #{tpu_custom_call.1} parent=5 // pred_fallthru
        _
      %p107 = scmp.lt.s32.totalorder %s13, 2
      // Predicated region
      $region13: #{tpu_custom_call.1} parent=5 // pred_check
        %p108 = pneg %p107
      $region14: #{tpu_custom_call.1} parent=5 // pred_check_branch
        %110 = sbr.rel (%p108) target = $region16
      $region15: #{tpu_custom_call.1} parent=5 // pred_region
        // Predicated region
        $region17: #{tpu_custom_call.1} parent=15 // pred_check
          %p111 = pneg %p56
        $region18: #{tpu_custom_call.1} parent=15 // pred_check_branch
          %113 = sbr.rel (%p111) target = $region20
        $region19: #{tpu_custom_call.1} parent=15 // pred_region
          %s114 = sand.u32 %s46, 1
          %s115 = scalar_lea.sflag [#allocation3], %s114
          %s116 = sand.u32 %s46, 1
          %s117 = smul.addr %s116, 32
          %s118 = scalar_lea.vmem [#allocation2], %s117
          %s119 = smul.u32 2, %s22
          %s121 = ssub.s32 512, 512
          %122 = vsyncadd %s115, %s121
          %s123 = smul.addr %s21, 2
          %s124 = sadd.s32 %s119, %s123
          %s125 = smul.addr %s20, 8
          %s126 = sadd.s32 %s124, %s125
          %s127 = smul.addr %s126, 64
          %s128 = scalar_lea.hbm %s0, %s127
          %s129 = sshll.u32 %s118, 4
          %s130 = int_to_ptr.vmem [resolvable:$true] %s129
          %135 = dma.hbm_to_vmem [thread:$0]  %s128, 512, %s130, %s115, 128, 128, 8
        $region20: #{tpu_custom_call.1} parent=15 // pred_fallthru
          _
      $region16: #{tpu_custom_call.1} parent=5 // pred_fallthru
        _
      %p136 = scmp.le.s32.totalorder 1, %s13
      %p137 = scmp.lt.s32.totalorder %s13, 3
      %p138 = pnand %p136, %p137
      %p139 = pneg %p138
      // Predicated region
      $region21: #{tpu_custom_call.1} parent=5 // pred_check
        _
      $region22: #{tpu_custom_call.1} parent=5 // pred_check_branch
        %141 = sbr.rel (%p138) target = $region24
      $region23: #{tpu_custom_call.1} parent=5 // pred_region
        %s142 = ssub.s32 %s13, 1
        %s143 = sand.u32 %s49, 1
        %s144 = scalar_lea.sflag [#allocation3], %s143
        %s145 = sand.u32 %s49, 1
        %s146 = smul.addr %s145, 32
        %s147 = scalar_lea.vmem [#allocation2], %s146
        // Predicated region
        $region25: #{tpu_custom_call.1} parent=23 // pred_check
          %p148 = pneg %p62
        $region26: #{tpu_custom_call.1} parent=23 // pred_check_branch
          %150 = sbr.rel (%p148) target = $region28
        $region27: #{tpu_custom_call.1} parent=23 // pred_region
          %151 = dma.done %s144, 512
        $region28: #{tpu_custom_call.1} parent=23 // pred_fallthru
          _
        %s152 = sand.u32 %s49, 1
        %s153 = scalar_lea.sflag [#allocation3], %s152
        %s154 = sand.u32 %s49, 1
        %s155 = smul.addr %s154, 32
        %s156 = scalar_lea.vmem [#allocation2], %s155
        %p157 = pneg %p62
        %p158 = pneg %p59
        %p159 = pneg %p92
        %p160 = pneg %p89
        %s161 = sand.u32 %s79, 1
        %s162 = scalar_lea.sflag [#allocation4], %s161
        %s163 = sand.u32 %s79, 1
        %s164 = smul.addr %s163, 32
        %s165 = scalar_lea.vmem [#allocation5], %s164
        %s166 = smul.u32 2, %s25
        %s167 = smul.u32 8, %s25
        %v168 = vld [vmem:[%s147] sm:$0xff]
        %s169 = scalar_lea.vmem %s147, 8 [#allocation2]
        %v170 = vld [vmem:[%s169] sm:$0xff]
        %s171 = scalar_lea.vmem %s147, 16 [#allocation2]
        %v172 = vld [vmem:[%s171] sm:$0xff]
        %s173 = scalar_lea.vmem %s147, 24 [#allocation2]
        %v174 = vld [vmem:[%s173] sm:$0xff]
        %v175 = vadd.f32 %v168, %v170
        %v176 = vmul.f32 %v175, 0.5
        %v177 = vsub.f32 %v168, %v170
        %v178 = vmul.f32 %v177, 0.5
        %v179 = vadd.f32 %v172, %v174
        %v180 = vmul.f32 %v179, 0.5
        %v181 = vsub.f32 %v172, %v174
        %v182 = vmul.f32 %v181, 0.5
        %v183 = vsub.f32 %v178, %v182
        %v184 = vadd.f32 %v178, %v182
        %v185 = vsub.f32 %v176, %v180
        %v186 = vadd.f32 %v176, %v180
        %v188 = vcombine.high %v183, %v183
        %v190 = vlaneseq
        %v191 = vshrl.u32 %v190, 7
        %v192 = vsub.s32 0, %v191
        %v193 = vrot.slane %v183, %v192
        %195 = vbcast.lane.b32.xlu0 %v193, 256
        %v196 = vpop.permute.xlu0 %195
        %s198 = sor.u32 256, 8
        %199 = vbcast.lane.b32.xlu0 %v193, %s198
        %v200 = vpop.permute.xlu0 %199
        %s202 = sor.u32 256, 16
        %203 = vbcast.lane.b32.xlu0 %v193, %s202
        %v204 = vpop.permute.xlu0 %203
        %s206 = sor.u32 256, 24
        %207 = vbcast.lane.b32.xlu0 %v193, %s206
        %v208 = vpop.permute.xlu0 %207
        %s210 = sor.u32 256, 32
        %211 = vbcast.lane.b32.xlu0 %v193, %s210
        %v212 = vpop.permute.xlu0 %211
        %s214 = sor.u32 256, 40
        %215 = vbcast.lane.b32.xlu0 %v193, %s214
        %v216 = vpop.permute.xlu0 %215
        %s218 = sor.u32 256, 48
        %219 = vbcast.lane.b32.xlu0 %v193, %s218
        %v220 = vpop.permute.xlu0 %219
        %s222 = sor.u32 256, 56
        %223 = vbcast.lane.b32.xlu0 %v193, %s222
        %v224 = vpop.permute.xlu0 %223
        %s226 = sor.u32 256, 64
        %227 = vbcast.lane.b32.xlu0 %v193, %s226
        %v228 = vpop.permute.xlu0 %227
        %s230 = sor.u32 256, 72
        %231 = vbcast.lane.b32.xlu0 %v193, %s230
        %v232 = vpop.permute.xlu0 %231
        %s234 = sor.u32 256, 80
        %235 = vbcast.lane.b32.xlu0 %v193, %s234
        %v236 = vpop.permute.xlu0 %235
        %s238 = sor.u32 256, 88
        %239 = vbcast.lane.b32.xlu0 %v193, %s238
        %v240 = vpop.permute.xlu0 %239
        %s242 = sor.u32 256, 96
        %243 = vbcast.lane.b32.xlu0 %v193, %s242
        %v244 = vpop.permute.xlu0 %243
        %s246 = sor.u32 256, 104
        %247 = vbcast.lane.b32.xlu0 %v193, %s246
        %v248 = vpop.permute.xlu0 %247
        %s250 = sor.u32 256, 112
        %251 = vbcast.lane.b32.xlu0 %v193, %s250
        %v252 = vpop.permute.xlu0 %251
        %s254 = sor.u32 256, 120
        %255 = vbcast.lane.b32.xlu0 %v193, %s254
        %v256 = vpop.permute.xlu0 %255
        %v257 = vlaneseq
        %v258 = vshrl.u32 %v257, 7
        %v259 = vsub.s32 0, %v258
        %v260 = vrot.slane %v188, %v259
        %262 = vbcast.lane.b32.xlu0 %v260, 256
        %v263 = vpop.permute.xlu0 %262
        %s265 = sor.u32 256, 8
        %266 = vbcast.lane.b32.xlu0 %v260, %s265
        %v267 = vpop.permute.xlu0 %266
        %s269 = sor.u32 256, 16
        %270 = vbcast.lane.b32.xlu0 %v260, %s269
        %v271 = vpop.permute.xlu0 %270
        %s273 = sor.u32 256, 24
        %274 = vbcast.lane.b32.xlu0 %v260, %s273
        %v275 = vpop.permute.xlu0 %274
        %s277 = sor.u32 256, 32
        %278 = vbcast.lane.b32.xlu0 %v260, %s277
        %v279 = vpop.permute.xlu0 %278
        %s281 = sor.u32 256, 40
        %282 = vbcast.lane.b32.xlu0 %v260, %s281
        %v283 = vpop.permute.xlu0 %282
        %s285 = sor.u32 256, 48
        %286 = vbcast.lane.b32.xlu0 %v260, %s285
        %v287 = vpop.permute.xlu0 %286
        %s289 = sor.u32 256, 56
        %290 = vbcast.lane.b32.xlu0 %v260, %s289
        %v291 = vpop.permute.xlu0 %290
        %s293 = sor.u32 256, 64
        %294 = vbcast.lane.b32.xlu0 %v260, %s293
        %v295 = vpop.permute.xlu0 %294
        %s297 = sor.u32 256, 72
        %298 = vbcast.lane.b32.xlu0 %v260, %s297
        %v299 = vpop.permute.xlu0 %298
        %s301 = sor.u32 256, 80
        %302 = vbcast.lane.b32.xlu0 %v260, %s301
        %v303 = vpop.permute.xlu0 %302
        %s305 = sor.u32 256, 88
        %306 = vbcast.lane.b32.xlu0 %v260, %s305
        %v307 = vpop.permute.xlu0 %306
        %s309 = sor.u32 256, 96
        %310 = vbcast.lane.b32.xlu0 %v260, %s309
        %v311 = vpop.permute.xlu0 %310
        %s313 = sor.u32 256, 104
        %314 = vbcast.lane.b32.xlu0 %v260, %s313
        %v315 = vpop.permute.xlu0 %314
        %s317 = sor.u32 256, 112
        %318 = vbcast.lane.b32.xlu0 %v260, %s317
        %v319 = vpop.permute.xlu0 %318
        %s321 = sor.u32 256, 120
        %322 = vbcast.lane.b32.xlu0 %v260, %s321
        %v323 = vpop.permute.xlu0 %322
        %v324 = vlaneseq
        %v325 = vshrl.u32 %v324, 7
        %v326 = vsub.s32 1, %v325
        %v327 = vrot.slane %v183, %v326
        %329 = vbcast.lane.b32.xlu0 %v327, 256
        %v330 = vpop.permute.xlu0 %329
        %s332 = sor.u32 256, 8
        %333 = vbcast.lane.b32.xlu0 %v327, %s332
        %v334 = vpop.permute.xlu0 %333
        %s336 = sor.u32 256, 16
        %337 = vbcast.lane.b32.xlu0 %v327, %s336
        %v338 = vpop.permute.xlu0 %337
        %s340 = sor.u32 256, 24
        %341 = vbcast.lane.b32.xlu0 %v327, %s340
        %v342 = vpop.permute.xlu0 %341
        %s344 = sor.u32 256, 32
        %345 = vbcast.lane.b32.xlu0 %v327, %s344
        %v346 = vpop.permute.xlu0 %345
        %s348 = sor.u32 256, 40
        %349 = vbcast.lane.b32.xlu0 %v327, %s348
        %v350 = vpop.permute.xlu0 %349
        %s352 = sor.u32 256, 48
        %353 = vbcast.lane.b32.xlu0 %v327, %s352
        %v354 = vpop.permute.xlu0 %353
        %s356 = sor.u32 256, 56
        %357 = vbcast.lane.b32.xlu0 %v327, %s356
        %v358 = vpop.permute.xlu0 %357
        %s360 = sor.u32 256, 64
        %361 = vbcast.lane.b32.xlu0 %v327, %s360
        %v362 = vpop.permute.xlu0 %361
        %s364 = sor.u32 256, 72
        %365 = vbcast.lane.b32.xlu0 %v327, %s364
        %v366 = vpop.permute.xlu0 %365
        %s368 = sor.u32 256, 80
        %369 = vbcast.lane.b32.xlu0 %v327, %s368
        %v370 = vpop.permute.xlu0 %369
        %s372 = sor.u32 256, 88
        %373 = vbcast.lane.b32.xlu0 %v327, %s372
        %v374 = vpop.permute.xlu0 %373
        %s376 = sor.u32 256, 96
        %377 = vbcast.lane.b32.xlu0 %v327, %s376
        %v378 = vpop.permute.xlu0 %377
        %s380 = sor.u32 256, 104
        %381 = vbcast.lane.b32.xlu0 %v327, %s380
        %v382 = vpop.permute.xlu0 %381
        %s384 = sor.u32 256, 112
        %385 = vbcast.lane.b32.xlu0 %v327, %s384
        %v386 = vpop.permute.xlu0 %385
        %s388 = sor.u32 256, 120
        %389 = vbcast.lane.b32.xlu0 %v327, %s388
        %v390 = vpop.permute.xlu0 %389
        %v391 = vlaneseq
        %v392 = vshrl.u32 %v391, 7
        %v393 = vsub.s32 1, %v392
        %v394 = vrot.slane %v188, %v393
        %396 = vbcast.lane.b32.xlu0 %v394, 256
        %v397 = vpop.permute.xlu0 %396
        %s399 = sor.u32 256, 8
        %400 = vbcast.lane.b32.xlu0 %v394, %s399
        %v401 = vpop.permute.xlu0 %400
        %s403 = sor.u32 256, 16
        %404 = vbcast.lane.b32.xlu0 %v394, %s403
        %v405 = vpop.permute.xlu0 %404
        %s407 = sor.u32 256, 24
        %408 = vbcast.lane.b32.xlu0 %v394, %s407
        %v409 = vpop.permute.xlu0 %408
        %s411 = sor.u32 256, 32
        %412 = vbcast.lane.b32.xlu0 %v394, %s411
        %v413 = vpop.permute.xlu0 %412
        %s415 = sor.u32 256, 40
        %416 = vbcast.lane.b32.xlu0 %v394, %s415
        %v417 = vpop.permute.xlu0 %416
        %s419 = sor.u32 256, 48
        %420 = vbcast.lane.b32.xlu0 %v394, %s419
        %v421 = vpop.permute.xlu0 %420
        %s423 = sor.u32 256, 56
        %424 = vbcast.lane.b32.xlu0 %v394, %s423
        %v425 = vpop.permute.xlu0 %424
        %s427 = sor.u32 256, 64
        %428 = vbcast.lane.b32.xlu0 %v394, %s427
        %v429 = vpop.permute.xlu0 %428
        %s431 = sor.u32 256, 72
        %432 = vbcast.lane.b32.xlu0 %v394, %s431
        %v433 = vpop.permute.xlu0 %432
        %s435 = sor.u32 256, 80
        %436 = vbcast.lane.b32.xlu0 %v394, %s435
        %v437 = vpop.permute.xlu0 %436
        %s439 = sor.u32 256, 88
        %440 = vbcast.lane.b32.xlu0 %v394, %s439
        %v441 = vpop.permute.xlu0 %440
        %s443 = sor.u32 256, 96
        %444 = vbcast.lane.b32.xlu0 %v394, %s443
        %v445 = vpop.permute.xlu0 %444
        %s447 = sor.u32 256, 104
        %448 = vbcast.lane.b32.xlu0 %v394, %s447
        %v449 = vpop.permute.xlu0 %448
        %s451 = sor.u32 256, 112
        %452 = vbcast.lane.b32.xlu0 %v394, %s451
        %v453 = vpop.permute.xlu0 %452
        %s455 = sor.u32 256, 120
        %456 = vbcast.lane.b32.xlu0 %v394, %s455
        %v457 = vpop.permute.xlu0 %456
        %v458 = vlaneseq
        %v459 = vshrl.u32 %v458, 7
        %v460 = vsub.s32 2, %v459
        %v461 = vrot.slane %v183, %v460
        %463 = vbcast.lane.b32.xlu0 %v461, 256
        %v464 = vpop.permute.xlu0 %463
        %s466 = sor.u32 256, 8
        %467 = vbcast.lane.b32.xlu0 %v461, %s466
        %v468 = vpop.permute.xlu0 %467
        %s470 = sor.u32 256, 16
        %471 = vbcast.lane.b32.xlu0 %v461, %s470
        %v472 = vpop.permute.xlu0 %471
        %s474 = sor.u32 256, 24
        %475 = vbcast.lane.b32.xlu0 %v461, %s474
        %v476 = vpop.permute.xlu0 %475
        %s478 = sor.u32 256, 32
        %479 = vbcast.lane.b32.xlu0 %v461, %s478
        %v480 = vpop.permute.xlu0 %479
        %s482 = sor.u32 256, 40
        %483 = vbcast.lane.b32.xlu0 %v461, %s482
        %v484 = vpop.permute.xlu0 %483
        %s486 = sor.u32 256, 48
        %487 = vbcast.lane.b32.xlu0 %v461, %s486
        %v488 = vpop.permute.xlu0 %487
        %s490 = sor.u32 256, 56
        %491 = vbcast.lane.b32.xlu0 %v461, %s490
        %v492 = vpop.permute.xlu0 %491
        %s494 = sor.u32 256, 64
        %495 = vbcast.lane.b32.xlu0 %v461, %s494
        %v496 = vpop.permute.xlu0 %495
        %s498 = sor.u32 256, 72
        %499 = vbcast.lane.b32.xlu0 %v461, %s498
        %v500 = vpop.permute.xlu0 %499
        %s502 = sor.u32 256, 80
        %503 = vbcast.lane.b32.xlu0 %v461, %s502
        %v504 = vpop.permute.xlu0 %503
        %s506 = sor.u32 256, 88
        %507 = vbcast.lane.b32.xlu0 %v461, %s506
        %v508 = vpop.permute.xlu0 %507
        %s510 = sor.u32 256, 96
        %511 = vbcast.lane.b32.xlu0 %v461, %s510
        %v512 = vpop.permute.xlu0 %511
        %s514 = sor.u32 256, 104
        %515 = vbcast.lane.b32.xlu0 %v461, %s514
        %v516 = vpop.permute.xlu0 %515
        %s518 = sor.u32 256, 112
        %519 = vbcast.lane.b32.xlu0 %v461, %s518
        %v520 = vpop.permute.xlu0 %519
        %s522 = sor.u32 256, 120
        %523 = vbcast.lane.b32.xlu0 %v461, %s522
        %v524 = vpop.permute.xlu0 %523
        %v525 = vlaneseq
        %v526 = vshrl.u32 %v525, 7
        %v527 = vsub.s32 2, %v526
        %v528 = vrot.slane %v188, %v527
        %530 = vbcast.lane.b32.xlu0 %v528, 256
        %v531 = vpop.permute.xlu0 %530
        %s533 = sor.u32 256, 8
        %534 = vbcast.lane.b32.xlu0 %v528, %s533
        %v535 = vpop.permute.xlu0 %534
        %s537 = sor.u32 256, 16
        %538 = vbcast.lane.b32.xlu0 %v528, %s537
        %v539 = vpop.permute.xlu0 %538
        %s541 = sor.u32 256, 24
        %542 = vbcast.lane.b32.xlu0 %v528, %s541
        %v543 = vpop.permute.xlu0 %542
        %s545 = sor.u32 256, 32
        %546 = vbcast.lane.b32.xlu0 %v528, %s545
        %v547 = vpop.permute.xlu0 %546
        %s549 = sor.u32 256, 40
        %550 = vbcast.lane.b32.xlu0 %v528, %s549
        %v551 = vpop.permute.xlu0 %550
        %s553 = sor.u32 256, 48
        %554 = vbcast.lane.b32.xlu0 %v528, %s553
        %v555 = vpop.permute.xlu0 %554
        %s557 = sor.u32 256, 56
        %558 = vbcast.lane.b32.xlu0 %v528, %s557
        %v559 = vpop.permute.xlu0 %558
        %s561 = sor.u32 256, 64
        %562 = vbcast.lane.b32.xlu0 %v528, %s561
        %v563 = vpop.permute.xlu0 %562
        %s565 = sor.u32 256, 72
        %566 = vbcast.lane.b32.xlu0 %v528, %s565
        %v567 = vpop.permute.xlu0 %566
        %s569 = sor.u32 256, 80
        %570 = vbcast.lane.b32.xlu0 %v528, %s569
        %v571 = vpop.permute.xlu0 %570
        %s573 = sor.u32 256, 88
        %574 = vbcast.lane.b32.xlu0 %v528, %s573
        %v575 = vpop.permute.xlu0 %574
        %s577 = sor.u32 256, 96
        %578 = vbcast.lane.b32.xlu0 %v528, %s577
        %v579 = vpop.permute.xlu0 %578
        %s581 = sor.u32 256, 104
        %582 = vbcast.lane.b32.xlu0 %v528, %s581
        %v583 = vpop.permute.xlu0 %582
        %s585 = sor.u32 256, 112
        %586 = vbcast.lane.b32.xlu0 %v528, %s585
        %v587 = vpop.permute.xlu0 %586
        %s589 = sor.u32 256, 120
        %590 = vbcast.lane.b32.xlu0 %v528, %s589
        %v591 = vpop.permute.xlu0 %590
        %v592 = vlaneseq
        %v593 = vshrl.u32 %v592, 7
        %v594 = vsub.s32 3, %v593
        %v595 = vrot.slane %v183, %v594
        %597 = vbcast.lane.b32.xlu0 %v595, 256
        %v598 = vpop.permute.xlu0 %597
        %s600 = sor.u32 256, 8
        %601 = vbcast.lane.b32.xlu0 %v595, %s600
        %v602 = vpop.permute.xlu0 %601
        %s604 = sor.u32 256, 16
        %605 = vbcast.lane.b32.xlu0 %v595, %s604
        %v606 = vpop.permute.xlu0 %605
        %s608 = sor.u32 256, 24
        %609 = vbcast.lane.b32.xlu0 %v595, %s608
        %v610 = vpop.permute.xlu0 %609
        %s612 = sor.u32 256, 32
        %613 = vbcast.lane.b32.xlu0 %v595, %s612
        %v614 = vpop.permute.xlu0 %613
        %s616 = sor.u32 256, 40
        %617 = vbcast.lane.b32.xlu0 %v595, %s616
        %v618 = vpop.permute.xlu0 %617
        %s620 = sor.u32 256, 48
        %621 = vbcast.lane.b32.xlu0 %v595, %s620
        %v622 = vpop.permute.xlu0 %621
        %s624 = sor.u32 256, 56
        %625 = vbcast.lane.b32.xlu0 %v595, %s624
        %v626 = vpop.permute.xlu0 %625
        %s628 = sor.u32 256, 64
        %629 = vbcast.lane.b32.xlu0 %v595, %s628
        %v630 = vpop.permute.xlu0 %629
        %s632 = sor.u32 256, 72
        %633 = vbcast.lane.b32.xlu0 %v595, %s632
        %v634 = vpop.permute.xlu0 %633
        %s636 = sor.u32 256, 80
        %637 = vbcast.lane.b32.xlu0 %v595, %s636
        %v638 = vpop.permute.xlu0 %637
        %s640 = sor.u32 256, 88
        %641 = vbcast.lane.b32.xlu0 %v595, %s640
        %v642 = vpop.permute.xlu0 %641
        %s644 = sor.u32 256, 96
        %645 = vbcast.lane.b32.xlu0 %v595, %s644
        %v646 = vpop.permute.xlu0 %645
        %s648 = sor.u32 256, 104
        %649 = vbcast.lane.b32.xlu0 %v595, %s648
        %v650 = vpop.permute.xlu0 %649
        %s652 = sor.u32 256, 112
        %653 = vbcast.lane.b32.xlu0 %v595, %s652
        %v654 = vpop.permute.xlu0 %653
        %s656 = sor.u32 256, 120
        %657 = vbcast.lane.b32.xlu0 %v595, %s656
        %v658 = vpop.permute.xlu0 %657
        %v659 = vlaneseq
        %v660 = vshrl.u32 %v659, 7
        %v661 = vsub.s32 3, %v660
        %v662 = vrot.slane %v188, %v661
        %664 = vbcast.lane.b32.xlu0 %v662, 256
        %v665 = vpop.permute.xlu0 %664
        %s667 = sor.u32 256, 8
        %668 = vbcast.lane.b32.xlu0 %v662, %s667
        %v669 = vpop.permute.xlu0 %668
        %s671 = sor.u32 256, 16
        %672 = vbcast.lane.b32.xlu0 %v662, %s671
        %v673 = vpop.permute.xlu0 %672
        %s675 = sor.u32 256, 24
        %676 = vbcast.lane.b32.xlu0 %v662, %s675
        %v677 = vpop.permute.xlu0 %676
        %s679 = sor.u32 256, 32
        %680 = vbcast.lane.b32.xlu0 %v662, %s679
        %v681 = vpop.permute.xlu0 %680
        %s683 = sor.u32 256, 40
        %684 = vbcast.lane.b32.xlu0 %v662, %s683
        %v685 = vpop.permute.xlu0 %684
        %s687 = sor.u32 256, 48
        %688 = vbcast.lane.b32.xlu0 %v662, %s687
        %v689 = vpop.permute.xlu0 %688
        %s691 = sor.u32 256, 56
        %692 = vbcast.lane.b32.xlu0 %v662, %s691
        %v693 = vpop.permute.xlu0 %692
        %s695 = sor.u32 256, 64
        %696 = vbcast.lane.b32.xlu0 %v662, %s695
        %v697 = vpop.permute.xlu0 %696
        %s699 = sor.u32 256, 72
        %700 = vbcast.lane.b32.xlu0 %v662, %s699
        %v701 = vpop.permute.xlu0 %700
        %s703 = sor.u32 256, 80
        %704 = vbcast.lane.b32.xlu0 %v662, %s703
        %v705 = vpop.permute.xlu0 %704
        %s707 = sor.u32 256, 88
        %708 = vbcast.lane.b32.xlu0 %v662, %s707
        %v709 = vpop.permute.xlu0 %708
        %s711 = sor.u32 256, 96
        %712 = vbcast.lane.b32.xlu0 %v662, %s711
        %v713 = vpop.permute.xlu0 %712
        %s715 = sor.u32 256, 104
        %716 = vbcast.lane.b32.xlu0 %v662, %s715
        %v717 = vpop.permute.xlu0 %716
        %s719 = sor.u32 256, 112
        %720 = vbcast.lane.b32.xlu0 %v662, %s719
        %v721 = vpop.permute.xlu0 %720
        %s723 = sor.u32 256, 120
        %724 = vbcast.lane.b32.xlu0 %v662, %s723
        %v725 = vpop.permute.xlu0 %724
        %v727 = vcombine.high %v185, %v185
        %v729 = vlaneseq
        %v730 = vshrl.u32 %v729, 7
        %v731 = vsub.s32 0, %v730
        %v732 = vrot.slane %v185, %v731
        %734 = vbcast.lane.b32.xlu0 %v732, 256
        %v735 = vpop.permute.xlu0 %734
        %s737 = sor.u32 256, 8
        %738 = vbcast.lane.b32.xlu0 %v732, %s737
        %v739 = vpop.permute.xlu0 %738
        %s741 = sor.u32 256, 16
        %742 = vbcast.lane.b32.xlu0 %v732, %s741
        %v743 = vpop.permute.xlu0 %742
        %s745 = sor.u32 256, 24
        %746 = vbcast.lane.b32.xlu0 %v732, %s745
        %v747 = vpop.permute.xlu0 %746
        %s749 = sor.u32 256, 32
        %750 = vbcast.lane.b32.xlu0 %v732, %s749
        %v751 = vpop.permute.xlu0 %750
        %s753 = sor.u32 256, 40
        %754 = vbcast.lane.b32.xlu0 %v732, %s753
        %v755 = vpop.permute.xlu0 %754
        %s757 = sor.u32 256, 48
        %758 = vbcast.lane.b32.xlu0 %v732, %s757
        %v759 = vpop.permute.xlu0 %758
        %s761 = sor.u32 256, 56
        %762 = vbcast.lane.b32.xlu0 %v732, %s761
        %v763 = vpop.permute.xlu0 %762
        %s765 = sor.u32 256, 64
        %766 = vbcast.lane.b32.xlu0 %v732, %s765
        %v767 = vpop.permute.xlu0 %766
        %s769 = sor.u32 256, 72
        %770 = vbcast.lane.b32.xlu0 %v732, %s769
        %v771 = vpop.permute.xlu0 %770
        %s773 = sor.u32 256, 80
        %774 = vbcast.lane.b32.xlu0 %v732, %s773
        %v775 = vpop.permute.xlu0 %774
        %s777 = sor.u32 256, 88
        %778 = vbcast.lane.b32.xlu0 %v732, %s777
        %v779 = vpop.permute.xlu0 %778
        %s781 = sor.u32 256, 96
        %782 = vbcast.lane.b32.xlu0 %v732, %s781
        %v783 = vpop.permute.xlu0 %782
        %s785 = sor.u32 256, 104
        %786 = vbcast.lane.b32.xlu0 %v732, %s785
        %v787 = vpop.permute.xlu0 %786
        %s789 = sor.u32 256, 112
        %790 = vbcast.lane.b32.xlu0 %v732, %s789
        %v791 = vpop.permute.xlu0 %790
        %s793 = sor.u32 256, 120
        %794 = vbcast.lane.b32.xlu0 %v732, %s793
        %v795 = vpop.permute.xlu0 %794
        %v796 = vlaneseq
        %v797 = vshrl.u32 %v796, 7
        %v798 = vsub.s32 0, %v797
        %v799 = vrot.slane %v727, %v798
        %801 = vbcast.lane.b32.xlu0 %v799, 256
        %v802 = vpop.permute.xlu0 %801
        %s804 = sor.u32 256, 8
        %805 = vbcast.lane.b32.xlu0 %v799, %s804
        %v806 = vpop.permute.xlu0 %805
        %s808 = sor.u32 256, 16
        %809 = vbcast.lane.b32.xlu0 %v799, %s808
        %v810 = vpop.permute.xlu0 %809
        %s812 = sor.u32 256, 24
        %813 = vbcast.lane.b32.xlu0 %v799, %s812
        %v814 = vpop.permute.xlu0 %813
        %s816 = sor.u32 256, 32
        %817 = vbcast.lane.b32.xlu0 %v799, %s816
        %v818 = vpop.permute.xlu0 %817
        %s820 = sor.u32 256, 40
        %821 = vbcast.lane.b32.xlu0 %v799, %s820
        %v822 = vpop.permute.xlu0 %821
        %s824 = sor.u32 256, 48
        %825 = vbcast.lane.b32.xlu0 %v799, %s824
        %v826 = vpop.permute.xlu0 %825
        %s828 = sor.u32 256, 56
        %829 = vbcast.lane.b32.xlu0 %v799, %s828
        %v830 = vpop.permute.xlu0 %829
        %s832 = sor.u32 256, 64
        %833 = vbcast.lane.b32.xlu0 %v799, %s832
        %v834 = vpop.permute.xlu0 %833
        %s836 = sor.u32 256, 72
        %837 = vbcast.lane.b32.xlu0 %v799, %s836
        %v838 = vpop.permute.xlu0 %837
        %s840 = sor.u32 256, 80
        %841 = vbcast.lane.b32.xlu0 %v799, %s840
        %v842 = vpop.permute.xlu0 %841
        %s844 = sor.u32 256, 88
        %845 = vbcast.lane.b32.xlu0 %v799, %s844
        %v846 = vpop.permute.xlu0 %845
        %s848 = sor.u32 256, 96
        %849 = vbcast.lane.b32.xlu0 %v799, %s848
        %v850 = vpop.permute.xlu0 %849
        %s852 = sor.u32 256, 104
        %853 = vbcast.lane.b32.xlu0 %v799, %s852
        %v854 = vpop.permute.xlu0 %853
        %s856 = sor.u32 256, 112
        %857 = vbcast.lane.b32.xlu0 %v799, %s856
        %v858 = vpop.permute.xlu0 %857
        %s860 = sor.u32 256, 120
        %861 = vbcast.lane.b32.xlu0 %v799, %s860
        %v862 = vpop.permute.xlu0 %861
        %v863 = vlaneseq
        %v864 = vshrl.u32 %v863, 7
        %v865 = vsub.s32 1, %v864
        %v866 = vrot.slane %v185, %v865
        %868 = vbcast.lane.b32.xlu0 %v866, 256
        %v869 = vpop.permute.xlu0 %868
        %s871 = sor.u32 256, 8
        %872 = vbcast.lane.b32.xlu0 %v866, %s871
        %v873 = vpop.permute.xlu0 %872
        %s875 = sor.u32 256, 16
        %876 = vbcast.lane.b32.xlu0 %v866, %s875
        %v877 = vpop.permute.xlu0 %876
        %s879 = sor.u32 256, 24
        %880 = vbcast.lane.b32.xlu0 %v866, %s879
        %v881 = vpop.permute.xlu0 %880
        %s883 = sor.u32 256, 32
        %884 = vbcast.lane.b32.xlu0 %v866, %s883
        %v885 = vpop.permute.xlu0 %884
        %s887 = sor.u32 256, 40
        %888 = vbcast.lane.b32.xlu0 %v866, %s887
        %v889 = vpop.permute.xlu0 %888
        %s891 = sor.u32 256, 48
        %892 = vbcast.lane.b32.xlu0 %v866, %s891
        %v893 = vpop.permute.xlu0 %892
        %s895 = sor.u32 256, 56
        %896 = vbcast.lane.b32.xlu0 %v866, %s895
        %v897 = vpop.permute.xlu0 %896
        %s899 = sor.u32 256, 64
        %900 = vbcast.lane.b32.xlu0 %v866, %s899
        %v901 = vpop.permute.xlu0 %900
        %s903 = sor.u32 256, 72
        %904 = vbcast.lane.b32.xlu0 %v866, %s903
        %v905 = vpop.permute.xlu0 %904
        %s907 = sor.u32 256, 80
        %908 = vbcast.lane.b32.xlu0 %v866, %s907
        %v909 = vpop.permute.xlu0 %908
        %s911 = sor.u32 256, 88
        %912 = vbcast.lane.b32.xlu0 %v866, %s911
        %v913 = vpop.permute.xlu0 %912
        %s915 = sor.u32 256, 96
        %916 = vbcast.lane.b32.xlu0 %v866, %s915
        %v917 = vpop.permute.xlu0 %916
        %s919 = sor.u32 256, 104
        %920 = vbcast.lane.b32.xlu0 %v866, %s919
        %v921 = vpop.permute.xlu0 %920
        %s923 = sor.u32 256, 112
        %924 = vbcast.lane.b32.xlu0 %v866, %s923
        %v925 = vpop.permute.xlu0 %924
        %s927 = sor.u32 256, 120
        %928 = vbcast.lane.b32.xlu0 %v866, %s927
        %v929 = vpop.permute.xlu0 %928
        %v930 = vlaneseq
        %v931 = vshrl.u32 %v930, 7
        %v932 = vsub.s32 1, %v931
        %v933 = vrot.slane %v727, %v932
        %935 = vbcast.lane.b32.xlu0 %v933, 256
        %v936 = vpop.permute.xlu0 %935
        %s938 = sor.u32 256, 8
        %939 = vbcast.lane.b32.xlu0 %v933, %s938
        %v940 = vpop.permute.xlu0 %939
        %s942 = sor.u32 256, 16
        %943 = vbcast.lane.b32.xlu0 %v933, %s942
        %v944 = vpop.permute.xlu0 %943
        %s946 = sor.u32 256, 24
        %947 = vbcast.lane.b32.xlu0 %v933, %s946
        %v948 = vpop.permute.xlu0 %947
        %s950 = sor.u32 256, 32
        %951 = vbcast.lane.b32.xlu0 %v933, %s950
        %v952 = vpop.permute.xlu0 %951
        %s954 = sor.u32 256, 40
        %955 = vbcast.lane.b32.xlu0 %v933, %s954
        %v956 = vpop.permute.xlu0 %955
        %s958 = sor.u32 256, 48
        %959 = vbcast.lane.b32.xlu0 %v933, %s958
        %v960 = vpop.permute.xlu0 %959
        %s962 = sor.u32 256, 56
        %963 = vbcast.lane.b32.xlu0 %v933, %s962
        %v964 = vpop.permute.xlu0 %963
        %s966 = sor.u32 256, 64
        %967 = vbcast.lane.b32.xlu0 %v933, %s966
        %v968 = vpop.permute.xlu0 %967
        %s970 = sor.u32 256, 72
        %971 = vbcast.lane.b32.xlu0 %v933, %s970
        %v972 = vpop.permute.xlu0 %971
        %s974 = sor.u32 256, 80
        %975 = vbcast.lane.b32.xlu0 %v933, %s974
        %v976 = vpop.permute.xlu0 %975
        %s978 = sor.u32 256, 88
        %979 = vbcast.lane.b32.xlu0 %v933, %s978
        %v980 = vpop.permute.xlu0 %979
        %s982 = sor.u32 256, 96
        %983 = vbcast.lane.b32.xlu0 %v933, %s982
        %v984 = vpop.permute.xlu0 %983
        %s986 = sor.u32 256, 104
        %987 = vbcast.lane.b32.xlu0 %v933, %s986
        %v988 = vpop.permute.xlu0 %987
        %s990 = sor.u32 256, 112
        %991 = vbcast.lane.b32.xlu0 %v933, %s990
        %v992 = vpop.permute.xlu0 %991
        %s994 = sor.u32 256, 120
        %995 = vbcast.lane.b32.xlu0 %v933, %s994
        %v996 = vpop.permute.xlu0 %995
        %v997 = vlaneseq
        %v998 = vshrl.u32 %v997, 7
        %v999 = vsub.s32 2, %v998
        %v1000 = vrot.slane %v185, %v999
        %1002 = vbcast.lane.b32.xlu0 %v1000, 256
        %v1003 = vpop.permute.xlu0 %1002
        %s1005 = sor.u32 256, 8
        %1006 = vbcast.lane.b32.xlu0 %v1000, %s1005
        %v1007 = vpop.permute.xlu0 %1006
        %s1009 = sor.u32 256, 16
        %1010 = vbcast.lane.b32.xlu0 %v1000, %s1009
        %v1011 = vpop.permute.xlu0 %1010
        %s1013 = sor.u32 256, 24
        %1014 = vbcast.lane.b32.xlu0 %v1000, %s1013
        %v1015 = vpop.permute.xlu0 %1014
        %s1017 = sor.u32 256, 32
        %1018 = vbcast.lane.b32.xlu0 %v1000, %s1017
        %v1019 = vpop.permute.xlu0 %1018
        %s1021 = sor.u32 256, 40
        %1022 = vbcast.lane.b32.xlu0 %v1000, %s1021
        %v1023 = vpop.permute.xlu0 %1022
        %s1025 = sor.u32 256, 48
        %1026 = vbcast.lane.b32.xlu0 %v1000, %s1025
        %v1027 = vpop.permute.xlu0 %1026
        %s1029 = sor.u32 256, 56
        %1030 = vbcast.lane.b32.xlu0 %v1000, %s1029
        %v1031 = vpop.permute.xlu0 %1030
        %s1033 = sor.u32 256, 64
        %1034 = vbcast.lane.b32.xlu0 %v1000, %s1033
        %v1035 = vpop.permute.xlu0 %1034
        %s1037 = sor.u32 256, 72
        %1038 = vbcast.lane.b32.xlu0 %v1000, %s1037
        %v1039 = vpop.permute.xlu0 %1038
        %s1041 = sor.u32 256, 80
        %1042 = vbcast.lane.b32.xlu0 %v1000, %s1041
        %v1043 = vpop.permute.xlu0 %1042
        %s1045 = sor.u32 256, 88
        %1046 = vbcast.lane.b32.xlu0 %v1000, %s1045
        %v1047 = vpop.permute.xlu0 %1046
        %s1049 = sor.u32 256, 96
        %1050 = vbcast.lane.b32.xlu0 %v1000, %s1049
        %v1051 = vpop.permute.xlu0 %1050
        %s1053 = sor.u32 256, 104
        %1054 = vbcast.lane.b32.xlu0 %v1000, %s1053
        %v1055 = vpop.permute.xlu0 %1054
        %s1057 = sor.u32 256, 112
        %1058 = vbcast.lane.b32.xlu0 %v1000, %s1057
        %v1059 = vpop.permute.xlu0 %1058
        %s1061 = sor.u32 256, 120
        %1062 = vbcast.lane.b32.xlu0 %v1000, %s1061
        %v1063 = vpop.permute.xlu0 %1062
        %v1064 = vlaneseq
        %v1065 = vshrl.u32 %v1064, 7
        %v1066 = vsub.s32 2, %v1065
        %v1067 = vrot.slane %v727, %v1066
        %1069 = vbcast.lane.b32.xlu0 %v1067, 256
        %v1070 = vpop.permute.xlu0 %1069
        %s1072 = sor.u32 256, 8
        %1073 = vbcast.lane.b32.xlu0 %v1067, %s1072
        %v1074 = vpop.permute.xlu0 %1073
        %s1076 = sor.u32 256, 16
        %1077 = vbcast.lane.b32.xlu0 %v1067, %s1076
        %v1078 = vpop.permute.xlu0 %1077
        %s1080 = sor.u32 256, 24
        %1081 = vbcast.lane.b32.xlu0 %v1067, %s1080
        %v1082 = vpop.permute.xlu0 %1081
        %s1084 = sor.u32 256, 32
        %1085 = vbcast.lane.b32.xlu0 %v1067, %s1084
        %v1086 = vpop.permute.xlu0 %1085
        %s1088 = sor.u32 256, 40
        %1089 = vbcast.lane.b32.xlu0 %v1067, %s1088
        %v1090 = vpop.permute.xlu0 %1089
        %s1092 = sor.u32 256, 48
        %1093 = vbcast.lane.b32.xlu0 %v1067, %s1092
        %v1094 = vpop.permute.xlu0 %1093
        %s1096 = sor.u32 256, 56
        %1097 = vbcast.lane.b32.xlu0 %v1067, %s1096
        %v1098 = vpop.permute.xlu0 %1097
        %s1100 = sor.u32 256, 64
        %1101 = vbcast.lane.b32.xlu0 %v1067, %s1100
        %v1102 = vpop.permute.xlu0 %1101
        %s1104 = sor.u32 256, 72
        %1105 = vbcast.lane.b32.xlu0 %v1067, %s1104
        %v1106 = vpop.permute.xlu0 %1105
        %s1108 = sor.u32 256, 80
        %1109 = vbcast.lane.b32.xlu0 %v1067, %s1108
        %v1110 = vpop.permute.xlu0 %1109
        %s1112 = sor.u32 256, 88
        %1113 = vbcast.lane.b32.xlu0 %v1067, %s1112
        %v1114 = vpop.permute.xlu0 %1113
        %s1116 = sor.u32 256, 96
        %1117 = vbcast.lane.b32.xlu0 %v1067, %s1116
        %v1118 = vpop.permute.xlu0 %1117
        %s1120 = sor.u32 256, 104
        %1121 = vbcast.lane.b32.xlu0 %v1067, %s1120
        %v1122 = vpop.permute.xlu0 %1121
        %s1124 = sor.u32 256, 112
        %1125 = vbcast.lane.b32.xlu0 %v1067, %s1124
        %v1126 = vpop.permute.xlu0 %1125
        %s1128 = sor.u32 256, 120
        %1129 = vbcast.lane.b32.xlu0 %v1067, %s1128
        %v1130 = vpop.permute.xlu0 %1129
        %v1131 = vlaneseq
        %v1132 = vshrl.u32 %v1131, 7
        %v1133 = vsub.s32 3, %v1132
        %v1134 = vrot.slane %v185, %v1133
        %1136 = vbcast.lane.b32.xlu0 %v1134, 256
        %v1137 = vpop.permute.xlu0 %1136
        %s1139 = sor.u32 256, 8
        %1140 = vbcast.lane.b32.xlu0 %v1134, %s1139
        %v1141 = vpop.permute.xlu0 %1140
        %s1143 = sor.u32 256, 16
        %1144 = vbcast.lane.b32.xlu0 %v1134, %s1143
        %v1145 = vpop.permute.xlu0 %1144
        %s1147 = sor.u32 256, 24
        %1148 = vbcast.lane.b32.xlu0 %v1134, %s1147
        %v1149 = vpop.permute.xlu0 %1148
        %s1151 = sor.u32 256, 32
        %1152 = vbcast.lane.b32.xlu0 %v1134, %s1151
        %v1153 = vpop.permute.xlu0 %1152
        %s1155 = sor.u32 256, 40
        %1156 = vbcast.lane.b32.xlu0 %v1134, %s1155
        %v1157 = vpop.permute.xlu0 %1156
        %s1159 = sor.u32 256, 48
        %1160 = vbcast.lane.b32.xlu0 %v1134, %s1159
        %v1161 = vpop.permute.xlu0 %1160
        %s1163 = sor.u32 256, 56
        %1164 = vbcast.lane.b32.xlu0 %v1134, %s1163
        %v1165 = vpop.permute.xlu0 %1164
        %s1167 = sor.u32 256, 64
        %1168 = vbcast.lane.b32.xlu0 %v1134, %s1167
        %v1169 = vpop.permute.xlu0 %1168
        %s1171 = sor.u32 256, 72
        %1172 = vbcast.lane.b32.xlu0 %v1134, %s1171
        %v1173 = vpop.permute.xlu0 %1172
        %s1175 = sor.u32 256, 80
        %1176 = vbcast.lane.b32.xlu0 %v1134, %s1175
        %v1177 = vpop.permute.xlu0 %1176
        %s1179 = sor.u32 256, 88
        %1180 = vbcast.lane.b32.xlu0 %v1134, %s1179
        %v1181 = vpop.permute.xlu0 %1180
        %s1183 = sor.u32 256, 96
        %1184 = vbcast.lane.b32.xlu0 %v1134, %s1183
        %v1185 = vpop.permute.xlu0 %1184
        %s1187 = sor.u32 256, 104
        %1188 = vbcast.lane.b32.xlu0 %v1134, %s1187
        %v1189 = vpop.permute.xlu0 %1188
        %s1191 = sor.u32 256, 112
        %1192 = vbcast.lane.b32.xlu0 %v1134, %s1191
        %v1193 = vpop.permute.xlu0 %1192
        %s1195 = sor.u32 256, 120
        %1196 = vbcast.lane.b32.xlu0 %v1134, %s1195
        %v1197 = vpop.permute.xlu0 %1196
        %v1198 = vlaneseq
        %v1199 = vshrl.u32 %v1198, 7
        %v1200 = vsub.s32 3, %v1199
        %v1201 = vrot.slane %v727, %v1200
        %1203 = vbcast.lane.b32.xlu0 %v1201, 256
        %v1204 = vpop.permute.xlu0 %1203
        %s1206 = sor.u32 256, 8
        %1207 = vbcast.lane.b32.xlu0 %v1201, %s1206
        %v1208 = vpop.permute.xlu0 %1207
        %s1210 = sor.u32 256, 16
        %1211 = vbcast.lane.b32.xlu0 %v1201, %s1210
        %v1212 = vpop.permute.xlu0 %1211
        %s1214 = sor.u32 256, 24
        %1215 = vbcast.lane.b32.xlu0 %v1201, %s1214
        %v1216 = vpop.permute.xlu0 %1215
        %s1218 = sor.u32 256, 32
        %1219 = vbcast.lane.b32.xlu0 %v1201, %s1218
        %v1220 = vpop.permute.xlu0 %1219
        %s1222 = sor.u32 256, 40
        %1223 = vbcast.lane.b32.xlu0 %v1201, %s1222
        %v1224 = vpop.permute.xlu0 %1223
        %s1226 = sor.u32 256, 48
        %1227 = vbcast.lane.b32.xlu0 %v1201, %s1226
        %v1228 = vpop.permute.xlu0 %1227
        %s1230 = sor.u32 256, 56
        %1231 = vbcast.lane.b32.xlu0 %v1201, %s1230
        %v1232 = vpop.permute.xlu0 %1231
        %s1234 = sor.u32 256, 64
        %1235 = vbcast.lane.b32.xlu0 %v1201, %s1234
        %v1236 = vpop.permute.xlu0 %1235
        %s1238 = sor.u32 256, 72
        %1239 = vbcast.lane.b32.xlu0 %v1201, %s1238
        %v1240 = vpop.permute.xlu0 %1239
        %s1242 = sor.u32 256, 80
        %1243 = vbcast.lane.b32.xlu0 %v1201, %s1242
        %v1244 = vpop.permute.xlu0 %1243
        %s1246 = sor.u32 256, 88
        %1247 = vbcast.lane.b32.xlu0 %v1201, %s1246
        %v1248 = vpop.permute.xlu0 %1247
        %s1250 = sor.u32 256, 96
        %1251 = vbcast.lane.b32.xlu0 %v1201, %s1250
        %v1252 = vpop.permute.xlu0 %1251
        %s1254 = sor.u32 256, 104
        %1255 = vbcast.lane.b32.xlu0 %v1201, %s1254
        %v1256 = vpop.permute.xlu0 %1255
        %s1258 = sor.u32 256, 112
        %1259 = vbcast.lane.b32.xlu0 %v1201, %s1258
        %v1260 = vpop.permute.xlu0 %1259
        %s1262 = sor.u32 256, 120
        %1263 = vbcast.lane.b32.xlu0 %v1201, %s1262
        %v1264 = vpop.permute.xlu0 %1263
        %vm1265 = vcmask 7168
        %v1266 = vsel %vm1265, %v196, %v735
        %v1267 = vsel %vm1265, %v200, %v739
        %v1268 = vsel %vm1265, %v204, %v743
        %v1269 = vsel %vm1265, %v208, %v747
        %v1270 = vsel %vm1265, %v212, %v751
        %v1271 = vsel %vm1265, %v216, %v755
        %v1272 = vsel %vm1265, %v220, %v759
        %v1273 = vsel %vm1265, %v224, %v763
        %v1274 = vsel %vm1265, %v228, %v767
        %v1275 = vsel %vm1265, %v232, %v771
        %v1276 = vsel %vm1265, %v236, %v775
        %v1277 = vsel %vm1265, %v240, %v779
        %v1278 = vsel %vm1265, %v244, %v783
        %v1279 = vsel %vm1265, %v248, %v787
        %v1280 = vsel %vm1265, %v252, %v791
        %v1281 = vsel %vm1265, %v256, %v795
        %v1282 = vsel %vm1265, %v263, %v802
        %v1283 = vsel %vm1265, %v267, %v806
        %v1284 = vsel %vm1265, %v271, %v810
        %v1285 = vsel %vm1265, %v275, %v814
        %v1286 = vsel %vm1265, %v279, %v818
        %v1287 = vsel %vm1265, %v283, %v822
        %v1288 = vsel %vm1265, %v287, %v826
        %v1289 = vsel %vm1265, %v291, %v830
        %v1290 = vsel %vm1265, %v295, %v834
        %v1291 = vsel %vm1265, %v299, %v838
        %v1292 = vsel %vm1265, %v303, %v842
        %v1293 = vsel %vm1265, %v307, %v846
        %v1294 = vsel %vm1265, %v311, %v850
        %v1295 = vsel %vm1265, %v315, %v854
        %v1296 = vsel %vm1265, %v319, %v858
        %v1297 = vsel %vm1265, %v323, %v862
        %v1298 = vsel %vm1265, %v330, %v869
        %v1299 = vsel %vm1265, %v334, %v873
        %v1300 = vsel %vm1265, %v338, %v877
        %v1301 = vsel %vm1265, %v342, %v881
        %v1302 = vsel %vm1265, %v346, %v885
        %v1303 = vsel %vm1265, %v350, %v889
        %v1304 = vsel %vm1265, %v354, %v893
        %v1305 = vsel %vm1265, %v358, %v897
        %v1306 = vsel %vm1265, %v362, %v901
        %v1307 = vsel %vm1265, %v366, %v905
        %v1308 = vsel %vm1265, %v370, %v909
        %v1309 = vsel %vm1265, %v374, %v913
        %v1310 = vsel %vm1265, %v378, %v917
        %v1311 = vsel %vm1265, %v382, %v921
        %v1312 = vsel %vm1265, %v386, %v925
        %v1313 = vsel %vm1265, %v390, %v929
        %v1314 = vsel %vm1265, %v397, %v936
        %v1315 = vsel %vm1265, %v401, %v940
        %v1316 = vsel %vm1265, %v405, %v944
        %v1317 = vsel %vm1265, %v409, %v948
        %v1318 = vsel %vm1265, %v413, %v952
        %v1319 = vsel %vm1265, %v417, %v956
        %v1320 = vsel %vm1265, %v421, %v960
        %v1321 = vsel %vm1265, %v425, %v964
        %v1322 = vsel %vm1265, %v429, %v968
        %v1323 = vsel %vm1265, %v433, %v972
        %v1324 = vsel %vm1265, %v437, %v976
        %v1325 = vsel %vm1265, %v441, %v980
        %v1326 = vsel %vm1265, %v445, %v984
        %v1327 = vsel %vm1265, %v449, %v988
        %v1328 = vsel %vm1265, %v453, %v992
        %v1329 = vsel %vm1265, %v457, %v996
        %v1330 = vsel %vm1265, %v464, %v1003
        %v1331 = vsel %vm1265, %v468, %v1007
        %v1332 = vsel %vm1265, %v472, %v1011
        %v1333 = vsel %vm1265, %v476, %v1015
        %v1334 = vsel %vm1265, %v480, %v1019
        %v1335 = vsel %vm1265, %v484, %v1023
        %v1336 = vsel %vm1265, %v488, %v1027
        %v1337 = vsel %vm1265, %v492, %v1031
        %v1338 = vsel %vm1265, %v496, %v1035
        %v1339 = vsel %vm1265, %v500, %v1039
        %v1340 = vsel %vm1265, %v504, %v1043
        %v1341 = vsel %vm1265, %v508, %v1047
        %v1342 = vsel %vm1265, %v512, %v1051
        %v1343 = vsel %vm1265, %v516, %v1055
        %v1344 = vsel %vm1265, %v520, %v1059
        %v1345 = vsel %vm1265, %v524, %v1063
        %v1346 = vsel %vm1265, %v531, %v1070
        %v1347 = vsel %vm1265, %v535, %v1074
        %v1348 = vsel %vm1265, %v539, %v1078
        %v1349 = vsel %vm1265, %v543, %v1082
        %v1350 = vsel %vm1265, %v547, %v1086
        %v1351 = vsel %vm1265, %v551, %v1090
        %v1352 = vsel %vm1265, %v555, %v1094
        %v1353 = vsel %vm1265, %v559, %v1098
        %v1354 = vsel %vm1265, %v563, %v1102
        %v1355 = vsel %vm1265, %v567, %v1106
        %v1356 = vsel %vm1265, %v571, %v1110
        %v1357 = vsel %vm1265, %v575, %v1114
        %v1358 = vsel %vm1265, %v579, %v1118
        %v1359 = vsel %vm1265, %v583, %v1122
        %v1360 = vsel %vm1265, %v587, %v1126
        %v1361 = vsel %vm1265, %v591, %v1130
        %v1362 = vsel %vm1265, %v598, %v1137
        %v1363 = vsel %vm1265, %v602, %v1141
        %v1364 = vsel %vm1265, %v606, %v1145
        %v1365 = vsel %vm1265, %v610, %v1149
        %v1366 = vsel %vm1265, %v614, %v1153
        %v1367 = vsel %vm1265, %v618, %v1157
        %v1368 = vsel %vm1265, %v622, %v1161
        %v1369 = vsel %vm1265, %v626, %v1165
        %v1370 = vsel %vm1265, %v630, %v1169
        %v1371 = vsel %vm1265, %v634, %v1173
        %v1372 = vsel %vm1265, %v638, %v1177
        %v1373 = vsel %vm1265, %v642, %v1181
        %v1374 = vsel %vm1265, %v646, %v1185
        %v1375 = vsel %vm1265, %v650, %v1189
        %v1376 = vsel %vm1265, %v654, %v1193
        %v1377 = vsel %vm1265, %v658, %v1197
        %v1378 = vsel %vm1265, %v665, %v1204
        %v1379 = vsel %vm1265, %v669, %v1208
        %v1380 = vsel %vm1265, %v673, %v1212
        %v1381 = vsel %vm1265, %v677, %v1216
        %v1382 = vsel %vm1265, %v681, %v1220
        %v1383 = vsel %vm1265, %v685, %v1224
        %v1384 = vsel %vm1265, %v689, %v1228
        %v1385 = vsel %vm1265, %v693, %v1232
        %v1386 = vsel %vm1265, %v697, %v1236
        %v1387 = vsel %vm1265, %v701, %v1240
        %v1388 = vsel %vm1265, %v705, %v1244
        %v1389 = vsel %vm1265, %v709, %v1248
        %v1390 = vsel %vm1265, %v713, %v1252
        %v1391 = vsel %vm1265, %v717, %v1256
        %v1392 = vsel %vm1265, %v721, %v1260
        %v1393 = vsel %vm1265, %v725, %v1264
        %v1394 = vcombine.low %v1266, %v1330
        %v1395 = vcombine.high %v1266, %v1330
        %v1397 = vunpack.c.l.s4 1983009808
        %v1398 = vunpack.c.0.s8 %v1397
        %v1399 = vlaneseq
        %v1400 = vshrl.u32 %v1399, 7
        %v1401 = vsub.s32 %v1398, %v1400
        %v1402 = vrot.slane %v1394, %v1401
        %v1404 = vunpack.c.l.s4 1983009808
        %v1405 = vunpack.c.0.s8 %v1404
        %v1406 = vlaneseq
        %v1407 = vshrl.u32 %v1406, 7
        %v1408 = vsub.s32 %v1405, %v1407
        %v1409 = vrot.slane %v1395, %v1408
        %v1410 = vcombine.low %v1298, %v1362
        %v1411 = vcombine.high %v1298, %v1362
        %v1413 = vunpack.c.l.s4 1983009808
        %v1414 = vunpack.c.0.s8 %v1413
        %v1415 = vlaneseq
        %v1416 = vshrl.u32 %v1415, 7
        %v1417 = vsub.s32 %v1414, %v1416
        %v1418 = vrot.slane %v1410, %v1417
        %v1420 = vunpack.c.l.s4 1983009808
        %v1421 = vunpack.c.0.s8 %v1420
        %v1422 = vlaneseq
        %v1423 = vshrl.u32 %v1422, 7
        %v1424 = vsub.s32 %v1421, %v1423
        %v1425 = vrot.slane %v1411, %v1424
        %v1426 = vcombine.low %v1402, %v1418
        %v1427 = vcombine.high %v1402, %v1418
        %v1429 = vunpack.c.l.s4 1934713408
        %v1430 = vunpack.c.0.s8 %v1429
        %v1431 = vlaneseq
        %v1432 = vshrl.u32 %v1431, 7
        %v1433 = vsub.s32 %v1430, %v1432
        %v1434 = vrot.slane %v1426, %v1433
        %v1436 = vunpack.c.l.s4 1934713408
        %v1437 = vunpack.c.0.s8 %v1436
        %v1438 = vlaneseq
        %v1439 = vshrl.u32 %v1438, 7
        %v1440 = vsub.s32 %v1437, %v1439
        %v1441 = vrot.slane %v1427, %v1440
        %v1442 = vcombine.low %v1409, %v1425
        %v1443 = vcombine.high %v1409, %v1425
        %v1445 = vunpack.c.l.s4 1934713408
        %v1446 = vunpack.c.0.s8 %v1445
        %v1447 = vlaneseq
        %v1448 = vshrl.u32 %v1447, 7
        %v1449 = vsub.s32 %v1446, %v1448
        %v1450 = vrot.slane %v1442, %v1449
        %v1452 = vunpack.c.l.s4 1934713408
        %v1453 = vunpack.c.0.s8 %v1452
        %v1454 = vlaneseq
        %v1455 = vshrl.u32 %v1454, 7
        %v1456 = vsub.s32 %v1453, %v1455
        %v1457 = vrot.slane %v1443, %v1456
        %v1458 = vcombine.high %v1434, 0.0
        %v1459 = vcombine.high %v1441, 0.0
        %v1460 = vcombine.high %v1450, 0.0
        %v1461 = vcombine.high %v1457, 0.0
        %v1462 = vcombine.low %v1267, %v1331
        %v1463 = vcombine.high %v1267, %v1331
        %v1465 = vunpack.c.l.s4 1983009808
        %v1466 = vunpack.c.0.s8 %v1465
        %v1467 = vlaneseq
        %v1468 = vshrl.u32 %v1467, 7
        %v1469 = vsub.s32 %v1466, %v1468
        %v1470 = vrot.slane %v1462, %v1469
        %v1472 = vunpack.c.l.s4 1983009808
        %v1473 = vunpack.c.0.s8 %v1472
        %v1474 = vlaneseq
        %v1475 = vshrl.u32 %v1474, 7
        %v1476 = vsub.s32 %v1473, %v1475
        %v1477 = vrot.slane %v1463, %v1476
        %v1478 = vcombine.low %v1299, %v1363
        %v1479 = vcombine.high %v1299, %v1363
        %v1481 = vunpack.c.l.s4 1983009808
        %v1482 = vunpack.c.0.s8 %v1481
        %v1483 = vlaneseq
        %v1484 = vshrl.u32 %v1483, 7
        %v1485 = vsub.s32 %v1482, %v1484
        %v1486 = vrot.slane %v1478, %v1485
        %v1488 = vunpack.c.l.s4 1983009808
        %v1489 = vunpack.c.0.s8 %v1488
        %v1490 = vlaneseq
        %v1491 = vshrl.u32 %v1490, 7
        %v1492 = vsub.s32 %v1489, %v1491
        %v1493 = vrot.slane %v1479, %v1492
        %v1494 = vcombine.low %v1470, %v1486
        %v1495 = vcombine.high %v1470, %v1486
        %v1497 = vunpack.c.l.s4 1934713408
        %v1498 = vunpack.c.0.s8 %v1497
        %v1499 = vlaneseq
        %v1500 = vshrl.u32 %v1499, 7
        %v1501 = vsub.s32 %v1498, %v1500
        %v1502 = vrot.slane %v1494, %v1501
        %v1504 = vunpack.c.l.s4 1934713408
        %v1505 = vunpack.c.0.s8 %v1504
        %v1506 = vlaneseq
        %v1507 = vshrl.u32 %v1506, 7
        %v1508 = vsub.s32 %v1505, %v1507
        %v1509 = vrot.slane %v1495, %v1508
        %v1510 = vcombine.low %v1477, %v1493
        %v1511 = vcombine.high %v1477, %v1493
        %v1513 = vunpack.c.l.s4 1934713408
        %v1514 = vunpack.c.0.s8 %v1513
        %v1515 = vlaneseq
        %v1516 = vshrl.u32 %v1515, 7
        %v1517 = vsub.s32 %v1514, %v1516
        %v1518 = vrot.slane %v1510, %v1517
        %v1520 = vunpack.c.l.s4 1934713408
        %v1521 = vunpack.c.0.s8 %v1520
        %v1522 = vlaneseq
        %v1523 = vshrl.u32 %v1522, 7
        %v1524 = vsub.s32 %v1521, %v1523
        %v1525 = vrot.slane %v1511, %v1524
        %v1526 = vcombine.high %v1502, 0.0
        %v1527 = vcombine.high %v1509, 0.0
        %v1528 = vcombine.high %v1518, 0.0
        %v1529 = vcombine.high %v1525, 0.0
        %v1530 = vcombine.low %v1268, %v1332
        %v1531 = vcombine.high %v1268, %v1332
        %v1533 = vunpack.c.l.s4 1983009808
        %v1534 = vunpack.c.0.s8 %v1533
        %v1535 = vlaneseq
        %v1536 = vshrl.u32 %v1535, 7
        %v1537 = vsub.s32 %v1534, %v1536
        %v1538 = vrot.slane %v1530, %v1537
        %v1540 = vunpack.c.l.s4 1983009808
        %v1541 = vunpack.c.0.s8 %v1540
        %v1542 = vlaneseq
        %v1543 = vshrl.u32 %v1542, 7
        %v1544 = vsub.s32 %v1541, %v1543
        %v1545 = vrot.slane %v1531, %v1544
        %v1546 = vcombine.low %v1300, %v1364
        %v1547 = vcombine.high %v1300, %v1364
        %v1549 = vunpack.c.l.s4 1983009808
        %v1550 = vunpack.c.0.s8 %v1549
        %v1551 = vlaneseq
        %v1552 = vshrl.u32 %v1551, 7
        %v1553 = vsub.s32 %v1550, %v1552
        %v1554 = vrot.slane %v1546, %v1553
        %v1556 = vunpack.c.l.s4 1983009808
        %v1557 = vunpack.c.0.s8 %v1556
        %v1558 = vlaneseq
        %v1559 = vshrl.u32 %v1558, 7
        %v1560 = vsub.s32 %v1557, %v1559
        %v1561 = vrot.slane %v1547, %v1560
        %v1562 = vcombine.low %v1538, %v1554
        %v1563 = vcombine.high %v1538, %v1554
        %v1565 = vunpack.c.l.s4 1934713408
        %v1566 = vunpack.c.0.s8 %v1565
        %v1567 = vlaneseq
        %v1568 = vshrl.u32 %v1567, 7
        %v1569 = vsub.s32 %v1566, %v1568
        %v1570 = vrot.slane %v1562, %v1569
        %v1572 = vunpack.c.l.s4 1934713408
        %v1573 = vunpack.c.0.s8 %v1572
        %v1574 = vlaneseq
        %v1575 = vshrl.u32 %v1574, 7
        %v1576 = vsub.s32 %v1573, %v1575
        %v1577 = vrot.slane %v1563, %v1576
        %v1578 = vcombine.low %v1545, %v1561
        %v1579 = vcombine.high %v1545, %v1561
        %v1581 = vunpack.c.l.s4 1934713408
        %v1582 = vunpack.c.0.s8 %v1581
        %v1583 = vlaneseq
        %v1584 = vshrl.u32 %v1583, 7
        %v1585 = vsub.s32 %v1582, %v1584
        %v1586 = vrot.slane %v1578, %v1585
        %v1588 = vunpack.c.l.s4 1934713408
        %v1589 = vunpack.c.0.s8 %v1588
        %v1590 = vlaneseq
        %v1591 = vshrl.u32 %v1590, 7
        %v1592 = vsub.s32 %v1589, %v1591
        %v1593 = vrot.slane %v1579, %v1592
        %v1594 = vcombine.high %v1570, 0.0
        %v1595 = vcombine.high %v1577, 0.0
        %v1596 = vcombine.high %v1586, 0.0
        %v1597 = vcombine.high %v1593, 0.0
        %v1598 = vcombine.low %v1269, %v1333
        %v1599 = vcombine.high %v1269, %v1333
        %v1601 = vunpack.c.l.s4 1983009808
        %v1602 = vunpack.c.0.s8 %v1601
        %v1603 = vlaneseq
        %v1604 = vshrl.u32 %v1603, 7
        %v1605 = vsub.s32 %v1602, %v1604
        %v1606 = vrot.slane %v1598, %v1605
        %v1608 = vunpack.c.l.s4 1983009808
        %v1609 = vunpack.c.0.s8 %v1608
        %v1610 = vlaneseq
        %v1611 = vshrl.u32 %v1610, 7
        %v1612 = vsub.s32 %v1609, %v1611
        %v1613 = vrot.slane %v1599, %v1612
        %v1614 = vcombine.low %v1301, %v1365
        %v1615 = vcombine.high %v1301, %v1365
        %v1617 = vunpack.c.l.s4 1983009808
        %v1618 = vunpack.c.0.s8 %v1617
        %v1619 = vlaneseq
        %v1620 = vshrl.u32 %v1619, 7
        %v1621 = vsub.s32 %v1618, %v1620
        %v1622 = vrot.slane %v1614, %v1621
        %v1624 = vunpack.c.l.s4 1983009808
        %v1625 = vunpack.c.0.s8 %v1624
        %v1626 = vlaneseq
        %v1627 = vshrl.u32 %v1626, 7
        %v1628 = vsub.s32 %v1625, %v1627
        %v1629 = vrot.slane %v1615, %v1628
        %v1630 = vcombine.low %v1606, %v1622
        %v1631 = vcombine.high %v1606, %v1622
        %v1633 = vunpack.c.l.s4 1934713408
        %v1634 = vunpack.c.0.s8 %v1633
        %v1635 = vlaneseq
        %v1636 = vshrl.u32 %v1635, 7
        %v1637 = vsub.s32 %v1634, %v1636
        %v1638 = vrot.slane %v1630, %v1637
        %v1640 = vunpack.c.l.s4 1934713408
        %v1641 = vunpack.c.0.s8 %v1640
        %v1642 = vlaneseq
        %v1643 = vshrl.u32 %v1642, 7
        %v1644 = vsub.s32 %v1641, %v1643
        %v1645 = vrot.slane %v1631, %v1644
        %v1646 = vcombine.low %v1613, %v1629
        %v1647 = vcombine.high %v1613, %v1629
        %v1649 = vunpack.c.l.s4 1934713408
        %v1650 = vunpack.c.0.s8 %v1649
        %v1651 = vlaneseq
        %v1652 = vshrl.u32 %v1651, 7
        %v1653 = vsub.s32 %v1650, %v1652
        %v1654 = vrot.slane %v1646, %v1653
        %v1656 = vunpack.c.l.s4 1934713408
        %v1657 = vunpack.c.0.s8 %v1656
        %v1658 = vlaneseq
        %v1659 = vshrl.u32 %v1658, 7
        %v1660 = vsub.s32 %v1657, %v1659
        %v1661 = vrot.slane %v1647, %v1660
        %v1662 = vcombine.high %v1638, 0.0
        %v1663 = vcombine.high %v1645, 0.0
        %v1664 = vcombine.high %v1654, 0.0
        %v1665 = vcombine.high %v1661, 0.0
        %v1666 = vcombine.low %v1270, %v1334
        %v1667 = vcombine.high %v1270, %v1334
        %v1669 = vunpack.c.l.s4 1983009808
        %v1670 = vunpack.c.0.s8 %v1669
        %v1671 = vlaneseq
        %v1672 = vshrl.u32 %v1671, 7
        %v1673 = vsub.s32 %v1670, %v1672
        %v1674 = vrot.slane %v1666, %v1673
        %v1676 = vunpack.c.l.s4 1983009808
        %v1677 = vunpack.c.0.s8 %v1676
        %v1678 = vlaneseq
        %v1679 = vshrl.u32 %v1678, 7
        %v1680 = vsub.s32 %v1677, %v1679
        %v1681 = vrot.slane %v1667, %v1680
        %v1682 = vcombine.low %v1302, %v1366
        %v1683 = vcombine.high %v1302, %v1366
        %v1685 = vunpack.c.l.s4 1983009808
        %v1686 = vunpack.c.0.s8 %v1685
        %v1687 = vlaneseq
        %v1688 = vshrl.u32 %v1687, 7
        %v1689 = vsub.s32 %v1686, %v1688
        %v1690 = vrot.slane %v1682, %v1689
        %v1692 = vunpack.c.l.s4 1983009808
        %v1693 = vunpack.c.0.s8 %v1692
        %v1694 = vlaneseq
        %v1695 = vshrl.u32 %v1694, 7
        %v1696 = vsub.s32 %v1693, %v1695
        %v1697 = vrot.slane %v1683, %v1696
        %v1698 = vcombine.low %v1674, %v1690
        %v1699 = vcombine.high %v1674, %v1690
        %v1701 = vunpack.c.l.s4 1934713408
        %v1702 = vunpack.c.0.s8 %v1701
        %v1703 = vlaneseq
        %v1704 = vshrl.u32 %v1703, 7
        %v1705 = vsub.s32 %v1702, %v1704
        %v1706 = vrot.slane %v1698, %v1705
        %v1708 = vunpack.c.l.s4 1934713408
        %v1709 = vunpack.c.0.s8 %v1708
        %v1710 = vlaneseq
        %v1711 = vshrl.u32 %v1710, 7
        %v1712 = vsub.s32 %v1709, %v1711
        %v1713 = vrot.slane %v1699, %v1712
        %v1714 = vcombine.low %v1681, %v1697
        %v1715 = vcombine.high %v1681, %v1697
        %v1717 = vunpack.c.l.s4 1934713408
        %v1718 = vunpack.c.0.s8 %v1717
        %v1719 = vlaneseq
        %v1720 = vshrl.u32 %v1719, 7
        %v1721 = vsub.s32 %v1718, %v1720
        %v1722 = vrot.slane %v1714, %v1721
        %v1724 = vunpack.c.l.s4 1934713408
        %v1725 = vunpack.c.0.s8 %v1724
        %v1726 = vlaneseq
        %v1727 = vshrl.u32 %v1726, 7
        %v1728 = vsub.s32 %v1725, %v1727
        %v1729 = vrot.slane %v1715, %v1728
        %v1730 = vcombine.high %v1706, 0.0
        %v1731 = vcombine.high %v1713, 0.0
        %v1732 = vcombine.high %v1722, 0.0
        %v1733 = vcombine.high %v1729, 0.0
        %v1734 = vcombine.low %v1271, %v1335
        %v1735 = vcombine.high %v1271, %v1335
        %v1737 = vunpack.c.l.s4 1983009808
        %v1738 = vunpack.c.0.s8 %v1737
        %v1739 = vlaneseq
        %v1740 = vshrl.u32 %v1739, 7
        %v1741 = vsub.s32 %v1738, %v1740
        %v1742 = vrot.slane %v1734, %v1741
        %v1744 = vunpack.c.l.s4 1983009808
        %v1745 = vunpack.c.0.s8 %v1744
        %v1746 = vlaneseq
        %v1747 = vshrl.u32 %v1746, 7
        %v1748 = vsub.s32 %v1745, %v1747
        %v1749 = vrot.slane %v1735, %v1748
        %v1750 = vcombine.low %v1303, %v1367
        %v1751 = vcombine.high %v1303, %v1367
        %v1753 = vunpack.c.l.s4 1983009808
        %v1754 = vunpack.c.0.s8 %v1753
        %v1755 = vlaneseq
        %v1756 = vshrl.u32 %v1755, 7
        %v1757 = vsub.s32 %v1754, %v1756
        %v1758 = vrot.slane %v1750, %v1757
        %v1760 = vunpack.c.l.s4 1983009808
        %v1761 = vunpack.c.0.s8 %v1760
        %v1762 = vlaneseq
        %v1763 = vshrl.u32 %v1762, 7
        %v1764 = vsub.s32 %v1761, %v1763
        %v1765 = vrot.slane %v1751, %v1764
        %v1766 = vcombine.low %v1742, %v1758
        %v1767 = vcombine.high %v1742, %v1758
        %v1769 = vunpack.c.l.s4 1934713408
        %v1770 = vunpack.c.0.s8 %v1769
        %v1771 = vlaneseq
        %v1772 = vshrl.u32 %v1771, 7
        %v1773 = vsub.s32 %v1770, %v1772
        %v1774 = vrot.slane %v1766, %v1773
        %v1776 = vunpack.c.l.s4 1934713408
        %v1777 = vunpack.c.0.s8 %v1776
        %v1778 = vlaneseq
        %v1779 = vshrl.u32 %v1778, 7
        %v1780 = vsub.s32 %v1777, %v1779
        %v1781 = vrot.slane %v1767, %v1780
        %v1782 = vcombine.low %v1749, %v1765
        %v1783 = vcombine.high %v1749, %v1765
        %v1785 = vunpack.c.l.s4 1934713408
        %v1786 = vunpack.c.0.s8 %v1785
        %v1787 = vlaneseq
        %v1788 = vshrl.u32 %v1787, 7
        %v1789 = vsub.s32 %v1786, %v1788
        %v1790 = vrot.slane %v1782, %v1789
        %v1792 = vunpack.c.l.s4 1934713408
        %v1793 = vunpack.c.0.s8 %v1792
        %v1794 = vlaneseq
        %v1795 = vshrl.u32 %v1794, 7
        %v1796 = vsub.s32 %v1793, %v1795
        %v1797 = vrot.slane %v1783, %v1796
        %v1798 = vcombine.high %v1774, 0.0
        %v1799 = vcombine.high %v1781, 0.0
        %v1800 = vcombine.high %v1790, 0.0
        %v1801 = vcombine.high %v1797, 0.0
        %v1802 = vcombine.low %v1272, %v1336
        %v1803 = vcombine.high %v1272, %v1336
        %v1805 = vunpack.c.l.s4 1983009808
        %v1806 = vunpack.c.0.s8 %v1805
        %v1807 = vlaneseq
        %v1808 = vshrl.u32 %v1807, 7
        %v1809 = vsub.s32 %v1806, %v1808
        %v1810 = vrot.slane %v1802, %v1809
        %v1812 = vunpack.c.l.s4 1983009808
        %v1813 = vunpack.c.0.s8 %v1812
        %v1814 = vlaneseq
        %v1815 = vshrl.u32 %v1814, 7
        %v1816 = vsub.s32 %v1813, %v1815
        %v1817 = vrot.slane %v1803, %v1816
        %v1818 = vcombine.low %v1304, %v1368
        %v1819 = vcombine.high %v1304, %v1368
        %v1821 = vunpack.c.l.s4 1983009808
        %v1822 = vunpack.c.0.s8 %v1821
        %v1823 = vlaneseq
        %v1824 = vshrl.u32 %v1823, 7
        %v1825 = vsub.s32 %v1822, %v1824
        %v1826 = vrot.slane %v1818, %v1825
        %v1828 = vunpack.c.l.s4 1983009808
        %v1829 = vunpack.c.0.s8 %v1828
        %v1830 = vlaneseq
        %v1831 = vshrl.u32 %v1830, 7
        %v1832 = vsub.s32 %v1829, %v1831
        %v1833 = vrot.slane %v1819, %v1832
        %v1834 = vcombine.low %v1810, %v1826
        %v1835 = vcombine.high %v1810, %v1826
        %v1837 = vunpack.c.l.s4 1934713408
        %v1838 = vunpack.c.0.s8 %v1837
        %v1839 = vlaneseq
        %v1840 = vshrl.u32 %v1839, 7
        %v1841 = vsub.s32 %v1838, %v1840
        %v1842 = vrot.slane %v1834, %v1841
        %v1844 = vunpack.c.l.s4 1934713408
        %v1845 = vunpack.c.0.s8 %v1844
        %v1846 = vlaneseq
        %v1847 = vshrl.u32 %v1846, 7
        %v1848 = vsub.s32 %v1845, %v1847
        %v1849 = vrot.slane %v1835, %v1848
        %v1850 = vcombine.low %v1817, %v1833
        %v1851 = vcombine.high %v1817, %v1833
        %v1853 = vunpack.c.l.s4 1934713408
        %v1854 = vunpack.c.0.s8 %v1853
        %v1855 = vlaneseq
        %v1856 = vshrl.u32 %v1855, 7
        %v1857 = vsub.s32 %v1854, %v1856
        %v1858 = vrot.slane %v1850, %v1857
        %v1860 = vunpack.c.l.s4 1934713408
        %v1861 = vunpack.c.0.s8 %v1860
        %v1862 = vlaneseq
        %v1863 = vshrl.u32 %v1862, 7
        %v1864 = vsub.s32 %v1861, %v1863
        %v1865 = vrot.slane %v1851, %v1864
        %v1866 = vcombine.high %v1842, 0.0
        %v1867 = vcombine.high %v1849, 0.0
        %v1868 = vcombine.high %v1858, 0.0
        %v1869 = vcombine.high %v1865, 0.0
        %v1870 = vcombine.low %v1273, %v1337
        %v1871 = vcombine.high %v1273, %v1337
        %v1873 = vunpack.c.l.s4 1983009808
        %v1874 = vunpack.c.0.s8 %v1873
        %v1875 = vlaneseq
        %v1876 = vshrl.u32 %v1875, 7
        %v1877 = vsub.s32 %v1874, %v1876
        %v1878 = vrot.slane %v1870, %v1877
        %v1880 = vunpack.c.l.s4 1983009808
        %v1881 = vunpack.c.0.s8 %v1880
        %v1882 = vlaneseq
        %v1883 = vshrl.u32 %v1882, 7
        %v1884 = vsub.s32 %v1881, %v1883
        %v1885 = vrot.slane %v1871, %v1884
        %v1886 = vcombine.low %v1305, %v1369
        %v1887 = vcombine.high %v1305, %v1369
        %v1889 = vunpack.c.l.s4 1983009808
        %v1890 = vunpack.c.0.s8 %v1889
        %v1891 = vlaneseq
        %v1892 = vshrl.u32 %v1891, 7
        %v1893 = vsub.s32 %v1890, %v1892
        %v1894 = vrot.slane %v1886, %v1893
        %v1896 = vunpack.c.l.s4 1983009808
        %v1897 = vunpack.c.0.s8 %v1896
        %v1898 = vlaneseq
        %v1899 = vshrl.u32 %v1898, 7
        %v1900 = vsub.s32 %v1897, %v1899
        %v1901 = vrot.slane %v1887, %v1900
        %v1902 = vcombine.low %v1878, %v1894
        %v1903 = vcombine.high %v1878, %v1894
        %v1905 = vunpack.c.l.s4 1934713408
        %v1906 = vunpack.c.0.s8 %v1905
        %v1907 = vlaneseq
        %v1908 = vshrl.u32 %v1907, 7
        %v1909 = vsub.s32 %v1906, %v1908
        %v1910 = vrot.slane %v1902, %v1909
        %v1912 = vunpack.c.l.s4 1934713408
        %v1913 = vunpack.c.0.s8 %v1912
        %v1914 = vlaneseq
        %v1915 = vshrl.u32 %v1914, 7
        %v1916 = vsub.s32 %v1913, %v1915
        %v1917 = vrot.slane %v1903, %v1916
        %v1918 = vcombine.low %v1885, %v1901
        %v1919 = vcombine.high %v1885, %v1901
        %v1921 = vunpack.c.l.s4 1934713408
        %v1922 = vunpack.c.0.s8 %v1921
        %v1923 = vlaneseq
        %v1924 = vshrl.u32 %v1923, 7
        %v1925 = vsub.s32 %v1922, %v1924
        %v1926 = vrot.slane %v1918, %v1925
        %v1928 = vunpack.c.l.s4 1934713408
        %v1929 = vunpack.c.0.s8 %v1928
        %v1930 = vlaneseq
        %v1931 = vshrl.u32 %v1930, 7
        %v1932 = vsub.s32 %v1929, %v1931
        %v1933 = vrot.slane %v1919, %v1932
        %v1934 = vcombine.high %v1910, 0.0
        %v1935 = vcombine.high %v1917, 0.0
        %v1936 = vcombine.high %v1926, 0.0
        %v1937 = vcombine.high %v1933, 0.0
        %v1938 = vcombine.low %v1274, %v1338
        %v1939 = vcombine.high %v1274, %v1338
        %v1941 = vunpack.c.l.s4 1983009808
        %v1942 = vunpack.c.0.s8 %v1941
        %v1943 = vlaneseq
        %v1944 = vshrl.u32 %v1943, 7
        %v1945 = vsub.s32 %v1942, %v1944
        %v1946 = vrot.slane %v1938, %v1945
        %v1948 = vunpack.c.l.s4 1983009808
        %v1949 = vunpack.c.0.s8 %v1948
        %v1950 = vlaneseq
        %v1951 = vshrl.u32 %v1950, 7
        %v1952 = vsub.s32 %v1949, %v1951
        %v1953 = vrot.slane %v1939, %v1952
        %v1954 = vcombine.low %v1306, %v1370
        %v1955 = vcombine.high %v1306, %v1370
        %v1957 = vunpack.c.l.s4 1983009808
        %v1958 = vunpack.c.0.s8 %v1957
        %v1959 = vlaneseq
        %v1960 = vshrl.u32 %v1959, 7
        %v1961 = vsub.s32 %v1958, %v1960
        %v1962 = vrot.slane %v1954, %v1961
        %v1964 = vunpack.c.l.s4 1983009808
        %v1965 = vunpack.c.0.s8 %v1964
        %v1966 = vlaneseq
        %v1967 = vshrl.u32 %v1966, 7
        %v1968 = vsub.s32 %v1965, %v1967
        %v1969 = vrot.slane %v1955, %v1968
        %v1970 = vcombine.low %v1946, %v1962
        %v1971 = vcombine.high %v1946, %v1962
        %v1973 = vunpack.c.l.s4 1934713408
        %v1974 = vunpack.c.0.s8 %v1973
        %v1975 = vlaneseq
        %v1976 = vshrl.u32 %v1975, 7
        %v1977 = vsub.s32 %v1974, %v1976
        %v1978 = vrot.slane %v1970, %v1977
        %v1980 = vunpack.c.l.s4 1934713408
        %v1981 = vunpack.c.0.s8 %v1980
        %v1982 = vlaneseq
        %v1983 = vshrl.u32 %v1982, 7
        %v1984 = vsub.s32 %v1981, %v1983
        %v1985 = vrot.slane %v1971, %v1984
        %v1986 = vcombine.low %v1953, %v1969
        %v1987 = vcombine.high %v1953, %v1969
        %v1989 = vunpack.c.l.s4 1934713408
        %v1990 = vunpack.c.0.s8 %v1989
        %v1991 = vlaneseq
        %v1992 = vshrl.u32 %v1991, 7
        %v1993 = vsub.s32 %v1990, %v1992
        %v1994 = vrot.slane %v1986, %v1993
        %v1996 = vunpack.c.l.s4 1934713408
        %v1997 = vunpack.c.0.s8 %v1996
        %v1998 = vlaneseq
        %v1999 = vshrl.u32 %v1998, 7
        %v2000 = vsub.s32 %v1997, %v1999
        %v2001 = vrot.slane %v1987, %v2000
        %v2002 = vcombine.high %v1978, 0.0
        %v2003 = vcombine.high %v1985, 0.0
        %v2004 = vcombine.high %v1994, 0.0
        %v2005 = vcombine.high %v2001, 0.0
        %v2006 = vcombine.low %v1275, %v1339
        %v2007 = vcombine.high %v1275, %v1339
        %v2009 = vunpack.c.l.s4 1983009808
        %v2010 = vunpack.c.0.s8 %v2009
        %v2011 = vlaneseq
        %v2012 = vshrl.u32 %v2011, 7
        %v2013 = vsub.s32 %v2010, %v2012
        %v2014 = vrot.slane %v2006, %v2013
        %v2016 = vunpack.c.l.s4 1983009808
        %v2017 = vunpack.c.0.s8 %v2016
        %v2018 = vlaneseq
        %v2019 = vshrl.u32 %v2018, 7
        %v2020 = vsub.s32 %v2017, %v2019
        %v2021 = vrot.slane %v2007, %v2020
        %v2022 = vcombine.low %v1307, %v1371
        %v2023 = vcombine.high %v1307, %v1371
        %v2025 = vunpack.c.l.s4 1983009808
        %v2026 = vunpack.c.0.s8 %v2025
        %v2027 = vlaneseq
        %v2028 = vshrl.u32 %v2027, 7
        %v2029 = vsub.s32 %v2026, %v2028
        %v2030 = vrot.slane %v2022, %v2029
        %v2032 = vunpack.c.l.s4 1983009808
        %v2033 = vunpack.c.0.s8 %v2032
        %v2034 = vlaneseq
        %v2035 = vshrl.u32 %v2034, 7
        %v2036 = vsub.s32 %v2033, %v2035
        %v2037 = vrot.slane %v2023, %v2036
        %v2038 = vcombine.low %v2014, %v2030
        %v2039 = vcombine.high %v2014, %v2030
        %v2041 = vunpack.c.l.s4 1934713408
        %v2042 = vunpack.c.0.s8 %v2041
        %v2043 = vlaneseq
        %v2044 = vshrl.u32 %v2043, 7
        %v2045 = vsub.s32 %v2042, %v2044
        %v2046 = vrot.slane %v2038, %v2045
        %v2048 = vunpack.c.l.s4 1934713408
        %v2049 = vunpack.c.0.s8 %v2048
        %v2050 = vlaneseq
        %v2051 = vshrl.u32 %v2050, 7
        %v2052 = vsub.s32 %v2049, %v2051
        %v2053 = vrot.slane %v2039, %v2052
        %v2054 = vcombine.low %v2021, %v2037
        %v2055 = vcombine.high %v2021, %v2037
        %v2057 = vunpack.c.l.s4 1934713408
        %v2058 = vunpack.c.0.s8 %v2057
        %v2059 = vlaneseq
        %v2060 = vshrl.u32 %v2059, 7
        %v2061 = vsub.s32 %v2058, %v2060
        %v2062 = vrot.slane %v2054, %v2061
        %v2064 = vunpack.c.l.s4 1934713408
        %v2065 = vunpack.c.0.s8 %v2064
        %v2066 = vlaneseq
        %v2067 = vshrl.u32 %v2066, 7
        %v2068 = vsub.s32 %v2065, %v2067
        %v2069 = vrot.slane %v2055, %v2068
        %v2070 = vcombine.high %v2046, 0.0
        %v2071 = vcombine.high %v2053, 0.0
        %v2072 = vcombine.high %v2062, 0.0
        %v2073 = vcombine.high %v2069, 0.0
        %v2074 = vcombine.low %v1276, %v1340
        %v2075 = vcombine.high %v1276, %v1340
        %v2077 = vunpack.c.l.s4 1983009808
        %v2078 = vunpack.c.0.s8 %v2077
        %v2079 = vlaneseq
        %v2080 = vshrl.u32 %v2079, 7
        %v2081 = vsub.s32 %v2078, %v2080
        %v2082 = vrot.slane %v2074, %v2081
        %v2084 = vunpack.c.l.s4 1983009808
        %v2085 = vunpack.c.0.s8 %v2084
        %v2086 = vlaneseq
        %v2087 = vshrl.u32 %v2086, 7
        %v2088 = vsub.s32 %v2085, %v2087
        %v2089 = vrot.slane %v2075, %v2088
        %v2090 = vcombine.low %v1308, %v1372
        %v2091 = vcombine.high %v1308, %v1372
        %v2093 = vunpack.c.l.s4 1983009808
        %v2094 = vunpack.c.0.s8 %v2093
        %v2095 = vlaneseq
        %v2096 = vshrl.u32 %v2095, 7
        %v2097 = vsub.s32 %v2094, %v2096
        %v2098 = vrot.slane %v2090, %v2097
        %v2100 = vunpack.c.l.s4 1983009808
        %v2101 = vunpack.c.0.s8 %v2100
        %v2102 = vlaneseq
        %v2103 = vshrl.u32 %v2102, 7
        %v2104 = vsub.s32 %v2101, %v2103
        %v2105 = vrot.slane %v2091, %v2104
        %v2106 = vcombine.low %v2082, %v2098
        %v2107 = vcombine.high %v2082, %v2098
        %v2109 = vunpack.c.l.s4 1934713408
        %v2110 = vunpack.c.0.s8 %v2109
        %v2111 = vlaneseq
        %v2112 = vshrl.u32 %v2111, 7
        %v2113 = vsub.s32 %v2110, %v2112
        %v2114 = vrot.slane %v2106, %v2113
        %v2116 = vunpack.c.l.s4 1934713408
        %v2117 = vunpack.c.0.s8 %v2116
        %v2118 = vlaneseq
        %v2119 = vshrl.u32 %v2118, 7
        %v2120 = vsub.s32 %v2117, %v2119
        %v2121 = vrot.slane %v2107, %v2120
        %v2122 = vcombine.low %v2089, %v2105
        %v2123 = vcombine.high %v2089, %v2105
        %v2125 = vunpack.c.l.s4 1934713408
        %v2126 = vunpack.c.0.s8 %v2125
        %v2127 = vlaneseq
        %v2128 = vshrl.u32 %v2127, 7
        %v2129 = vsub.s32 %v2126, %v2128
        %v2130 = vrot.slane %v2122, %v2129
        %v2132 = vunpack.c.l.s4 1934713408
        %v2133 = vunpack.c.0.s8 %v2132
        %v2134 = vlaneseq
        %v2135 = vshrl.u32 %v2134, 7
        %v2136 = vsub.s32 %v2133, %v2135
        %v2137 = vrot.slane %v2123, %v2136
        %v2138 = vcombine.high %v2114, 0.0
        %v2139 = vcombine.high %v2121, 0.0
        %v2140 = vcombine.high %v2130, 0.0
        %v2141 = vcombine.high %v2137, 0.0
        %v2142 = vcombine.low %v1277, %v1341
        %v2143 = vcombine.high %v1277, %v1341
        %v2145 = vunpack.c.l.s4 1983009808
        %v2146 = vunpack.c.0.s8 %v2145
        %v2147 = vlaneseq
        %v2148 = vshrl.u32 %v2147, 7
        %v2149 = vsub.s32 %v2146, %v2148
        %v2150 = vrot.slane %v2142, %v2149
        %v2152 = vunpack.c.l.s4 1983009808
        %v2153 = vunpack.c.0.s8 %v2152
        %v2154 = vlaneseq
        %v2155 = vshrl.u32 %v2154, 7
        %v2156 = vsub.s32 %v2153, %v2155
        %v2157 = vrot.slane %v2143, %v2156
        %v2158 = vcombine.low %v1309, %v1373
        %v2159 = vcombine.high %v1309, %v1373
        %v2161 = vunpack.c.l.s4 1983009808
        %v2162 = vunpack.c.0.s8 %v2161
        %v2163 = vlaneseq
        %v2164 = vshrl.u32 %v2163, 7
        %v2165 = vsub.s32 %v2162, %v2164
        %v2166 = vrot.slane %v2158, %v2165
        %v2168 = vunpack.c.l.s4 1983009808
        %v2169 = vunpack.c.0.s8 %v2168
        %v2170 = vlaneseq
        %v2171 = vshrl.u32 %v2170, 7
        %v2172 = vsub.s32 %v2169, %v2171
        %v2173 = vrot.slane %v2159, %v2172
        %v2174 = vcombine.low %v2150, %v2166
        %v2175 = vcombine.high %v2150, %v2166
        %v2177 = vunpack.c.l.s4 1934713408
        %v2178 = vunpack.c.0.s8 %v2177
        %v2179 = vlaneseq
        %v2180 = vshrl.u32 %v2179, 7
        %v2181 = vsub.s32 %v2178, %v2180
        %v2182 = vrot.slane %v2174, %v2181
        %v2184 = vunpack.c.l.s4 1934713408
        %v2185 = vunpack.c.0.s8 %v2184
        %v2186 = vlaneseq
        %v2187 = vshrl.u32 %v2186, 7
        %v2188 = vsub.s32 %v2185, %v2187
        %v2189 = vrot.slane %v2175, %v2188
        %v2190 = vcombine.low %v2157, %v2173
        %v2191 = vcombine.high %v2157, %v2173
        %v2193 = vunpack.c.l.s4 1934713408
        %v2194 = vunpack.c.0.s8 %v2193
        %v2195 = vlaneseq
        %v2196 = vshrl.u32 %v2195, 7
        %v2197 = vsub.s32 %v2194, %v2196
        %v2198 = vrot.slane %v2190, %v2197
        %v2200 = vunpack.c.l.s4 1934713408
        %v2201 = vunpack.c.0.s8 %v2200
        %v2202 = vlaneseq
        %v2203 = vshrl.u32 %v2202, 7
        %v2204 = vsub.s32 %v2201, %v2203
        %v2205 = vrot.slane %v2191, %v2204
        %v2206 = vcombine.high %v2182, 0.0
        %v2207 = vcombine.high %v2189, 0.0
        %v2208 = vcombine.high %v2198, 0.0
        %v2209 = vcombine.high %v2205, 0.0
        %v2210 = vcombine.low %v1278, %v1342
        %v2211 = vcombine.high %v1278, %v1342
        %v2213 = vunpack.c.l.s4 1983009808
        %v2214 = vunpack.c.0.s8 %v2213
        %v2215 = vlaneseq
        %v2216 = vshrl.u32 %v2215, 7
        %v2217 = vsub.s32 %v2214, %v2216
        %v2218 = vrot.slane %v2210, %v2217
        %v2220 = vunpack.c.l.s4 1983009808
        %v2221 = vunpack.c.0.s8 %v2220
        %v2222 = vlaneseq
        %v2223 = vshrl.u32 %v2222, 7
        %v2224 = vsub.s32 %v2221, %v2223
        %v2225 = vrot.slane %v2211, %v2224
        %v2226 = vcombine.low %v1310, %v1374
        %v2227 = vcombine.high %v1310, %v1374
        %v2229 = vunpack.c.l.s4 1983009808
        %v2230 = vunpack.c.0.s8 %v2229
        %v2231 = vlaneseq
        %v2232 = vshrl.u32 %v2231, 7
        %v2233 = vsub.s32 %v2230, %v2232
        %v2234 = vrot.slane %v2226, %v2233
        %v2236 = vunpack.c.l.s4 1983009808
        %v2237 = vunpack.c.0.s8 %v2236
        %v2238 = vlaneseq
        %v2239 = vshrl.u32 %v2238, 7
        %v2240 = vsub.s32 %v2237, %v2239
        %v2241 = vrot.slane %v2227, %v2240
        %v2242 = vcombine.low %v2218, %v2234
        %v2243 = vcombine.high %v2218, %v2234
        %v2245 = vunpack.c.l.s4 1934713408
        %v2246 = vunpack.c.0.s8 %v2245
        %v2247 = vlaneseq
        %v2248 = vshrl.u32 %v2247, 7
        %v2249 = vsub.s32 %v2246, %v2248
        %v2250 = vrot.slane %v2242, %v2249
        %v2252 = vunpack.c.l.s4 1934713408
        %v2253 = vunpack.c.0.s8 %v2252
        %v2254 = vlaneseq
        %v2255 = vshrl.u32 %v2254, 7
        %v2256 = vsub.s32 %v2253, %v2255
        %v2257 = vrot.slane %v2243, %v2256
        %v2258 = vcombine.low %v2225, %v2241
        %v2259 = vcombine.high %v2225, %v2241
        %v2261 = vunpack.c.l.s4 1934713408
        %v2262 = vunpack.c.0.s8 %v2261
        %v2263 = vlaneseq
        %v2264 = vshrl.u32 %v2263, 7
        %v2265 = vsub.s32 %v2262, %v2264
        %v2266 = vrot.slane %v2258, %v2265
        %v2268 = vunpack.c.l.s4 1934713408
        %v2269 = vunpack.c.0.s8 %v2268
        %v2270 = vlaneseq
        %v2271 = vshrl.u32 %v2270, 7
        %v2272 = vsub.s32 %v2269, %v2271
        %v2273 = vrot.slane %v2259, %v2272
        %v2274 = vcombine.high %v2250, 0.0
        %v2275 = vcombine.high %v2257, 0.0
        %v2276 = vcombine.high %v2266, 0.0
        %v2277 = vcombine.high %v2273, 0.0
        %v2278 = vcombine.low %v1279, %v1343
        %v2279 = vcombine.high %v1279, %v1343
        %v2281 = vunpack.c.l.s4 1983009808
        %v2282 = vunpack.c.0.s8 %v2281
        %v2283 = vlaneseq
        %v2284 = vshrl.u32 %v2283, 7
        %v2285 = vsub.s32 %v2282, %v2284
        %v2286 = vrot.slane %v2278, %v2285
        %v2288 = vunpack.c.l.s4 1983009808
        %v2289 = vunpack.c.0.s8 %v2288
        %v2290 = vlaneseq
        %v2291 = vshrl.u32 %v2290, 7
        %v2292 = vsub.s32 %v2289, %v2291
        %v2293 = vrot.slane %v2279, %v2292
        %v2294 = vcombine.low %v1311, %v1375
        %v2295 = vcombine.high %v1311, %v1375
        %v2297 = vunpack.c.l.s4 1983009808
        %v2298 = vunpack.c.0.s8 %v2297
        %v2299 = vlaneseq
        %v2300 = vshrl.u32 %v2299, 7
        %v2301 = vsub.s32 %v2298, %v2300
        %v2302 = vrot.slane %v2294, %v2301
        %v2304 = vunpack.c.l.s4 1983009808
        %v2305 = vunpack.c.0.s8 %v2304
        %v2306 = vlaneseq
        %v2307 = vshrl.u32 %v2306, 7
        %v2308 = vsub.s32 %v2305, %v2307
        %v2309 = vrot.slane %v2295, %v2308
        %v2310 = vcombine.low %v2286, %v2302
        %v2311 = vcombine.high %v2286, %v2302
        %v2313 = vunpack.c.l.s4 1934713408
        %v2314 = vunpack.c.0.s8 %v2313
        %v2315 = vlaneseq
        %v2316 = vshrl.u32 %v2315, 7
        %v2317 = vsub.s32 %v2314, %v2316
        %v2318 = vrot.slane %v2310, %v2317
        %v2320 = vunpack.c.l.s4 1934713408
        %v2321 = vunpack.c.0.s8 %v2320
        %v2322 = vlaneseq
        %v2323 = vshrl.u32 %v2322, 7
        %v2324 = vsub.s32 %v2321, %v2323
        %v2325 = vrot.slane %v2311, %v2324
        %v2326 = vcombine.low %v2293, %v2309
        %v2327 = vcombine.high %v2293, %v2309
        %v2329 = vunpack.c.l.s4 1934713408
        %v2330 = vunpack.c.0.s8 %v2329
        %v2331 = vlaneseq
        %v2332 = vshrl.u32 %v2331, 7
        %v2333 = vsub.s32 %v2330, %v2332
        %v2334 = vrot.slane %v2326, %v2333
        %v2336 = vunpack.c.l.s4 1934713408
        %v2337 = vunpack.c.0.s8 %v2336
        %v2338 = vlaneseq
        %v2339 = vshrl.u32 %v2338, 7
        %v2340 = vsub.s32 %v2337, %v2339
        %v2341 = vrot.slane %v2327, %v2340
        %v2342 = vcombine.high %v2318, 0.0
        %v2343 = vcombine.high %v2325, 0.0
        %v2344 = vcombine.high %v2334, 0.0
        %v2345 = vcombine.high %v2341, 0.0
        %v2346 = vcombine.low %v1280, %v1344
        %v2347 = vcombine.high %v1280, %v1344
        %v2349 = vunpack.c.l.s4 1983009808
        %v2350 = vunpack.c.0.s8 %v2349
        %v2351 = vlaneseq
        %v2352 = vshrl.u32 %v2351, 7
        %v2353 = vsub.s32 %v2350, %v2352
        %v2354 = vrot.slane %v2346, %v2353
        %v2356 = vunpack.c.l.s4 1983009808
        %v2357 = vunpack.c.0.s8 %v2356
        %v2358 = vlaneseq
        %v2359 = vshrl.u32 %v2358, 7
        %v2360 = vsub.s32 %v2357, %v2359
        %v2361 = vrot.slane %v2347, %v2360
        %v2362 = vcombine.low %v1312, %v1376
        %v2363 = vcombine.high %v1312, %v1376
        %v2365 = vunpack.c.l.s4 1983009808
        %v2366 = vunpack.c.0.s8 %v2365
        %v2367 = vlaneseq
        %v2368 = vshrl.u32 %v2367, 7
        %v2369 = vsub.s32 %v2366, %v2368
        %v2370 = vrot.slane %v2362, %v2369
        %v2372 = vunpack.c.l.s4 1983009808
        %v2373 = vunpack.c.0.s8 %v2372
        %v2374 = vlaneseq
        %v2375 = vshrl.u32 %v2374, 7
        %v2376 = vsub.s32 %v2373, %v2375
        %v2377 = vrot.slane %v2363, %v2376
        %v2378 = vcombine.low %v2354, %v2370
        %v2379 = vcombine.high %v2354, %v2370
        %v2381 = vunpack.c.l.s4 1934713408
        %v2382 = vunpack.c.0.s8 %v2381
        %v2383 = vlaneseq
        %v2384 = vshrl.u32 %v2383, 7
        %v2385 = vsub.s32 %v2382, %v2384
        %v2386 = vrot.slane %v2378, %v2385
        %v2388 = vunpack.c.l.s4 1934713408
        %v2389 = vunpack.c.0.s8 %v2388
        %v2390 = vlaneseq
        %v2391 = vshrl.u32 %v2390, 7
        %v2392 = vsub.s32 %v2389, %v2391
        %v2393 = vrot.slane %v2379, %v2392
        %v2394 = vcombine.low %v2361, %v2377
        %v2395 = vcombine.high %v2361, %v2377
        %v2397 = vunpack.c.l.s4 1934713408
        %v2398 = vunpack.c.0.s8 %v2397
        %v2399 = vlaneseq
        %v2400 = vshrl.u32 %v2399, 7
        %v2401 = vsub.s32 %v2398, %v2400
        %v2402 = vrot.slane %v2394, %v2401
        %v2404 = vunpack.c.l.s4 1934713408
        %v2405 = vunpack.c.0.s8 %v2404
        %v2406 = vlaneseq
        %v2407 = vshrl.u32 %v2406, 7
        %v2408 = vsub.s32 %v2405, %v2407
        %v2409 = vrot.slane %v2395, %v2408
        %v2410 = vcombine.high %v2386, 0.0
        %v2411 = vcombine.high %v2393, 0.0
        %v2412 = vcombine.high %v2402, 0.0
        %v2413 = vcombine.high %v2409, 0.0
        %v2414 = vcombine.low %v1281, %v1345
        %v2415 = vcombine.high %v1281, %v1345
        %v2417 = vunpack.c.l.s4 1983009808
        %v2418 = vunpack.c.0.s8 %v2417
        %v2419 = vlaneseq
        %v2420 = vshrl.u32 %v2419, 7
        %v2421 = vsub.s32 %v2418, %v2420
        %v2422 = vrot.slane %v2414, %v2421
        %v2424 = vunpack.c.l.s4 1983009808
        %v2425 = vunpack.c.0.s8 %v2424
        %v2426 = vlaneseq
        %v2427 = vshrl.u32 %v2426, 7
        %v2428 = vsub.s32 %v2425, %v2427
        %v2429 = vrot.slane %v2415, %v2428
        %v2430 = vcombine.low %v1313, %v1377
        %v2431 = vcombine.high %v1313, %v1377
        %v2433 = vunpack.c.l.s4 1983009808
        %v2434 = vunpack.c.0.s8 %v2433
        %v2435 = vlaneseq
        %v2436 = vshrl.u32 %v2435, 7
        %v2437 = vsub.s32 %v2434, %v2436
        %v2438 = vrot.slane %v2430, %v2437
        %v2440 = vunpack.c.l.s4 1983009808
        %v2441 = vunpack.c.0.s8 %v2440
        %v2442 = vlaneseq
        %v2443 = vshrl.u32 %v2442, 7
        %v2444 = vsub.s32 %v2441, %v2443
        %v2445 = vrot.slane %v2431, %v2444
        %v2446 = vcombine.low %v2422, %v2438
        %v2447 = vcombine.high %v2422, %v2438
        %v2449 = vunpack.c.l.s4 1934713408
        %v2450 = vunpack.c.0.s8 %v2449
        %v2451 = vlaneseq
        %v2452 = vshrl.u32 %v2451, 7
        %v2453 = vsub.s32 %v2450, %v2452
        %v2454 = vrot.slane %v2446, %v2453
        %v2456 = vunpack.c.l.s4 1934713408
        %v2457 = vunpack.c.0.s8 %v2456
        %v2458 = vlaneseq
        %v2459 = vshrl.u32 %v2458, 7
        %v2460 = vsub.s32 %v2457, %v2459
        %v2461 = vrot.slane %v2447, %v2460
        %v2462 = vcombine.low %v2429, %v2445
        %v2463 = vcombine.high %v2429, %v2445
        %v2465 = vunpack.c.l.s4 1934713408
        %v2466 = vunpack.c.0.s8 %v2465
        %v2467 = vlaneseq
        %v2468 = vshrl.u32 %v2467, 7
        %v2469 = vsub.s32 %v2466, %v2468
        %v2470 = vrot.slane %v2462, %v2469
        %v2472 = vunpack.c.l.s4 1934713408
        %v2473 = vunpack.c.0.s8 %v2472
        %v2474 = vlaneseq
        %v2475 = vshrl.u32 %v2474, 7
        %v2476 = vsub.s32 %v2473, %v2475
        %v2477 = vrot.slane %v2463, %v2476
        %v2478 = vcombine.high %v2454, 0.0
        %v2479 = vcombine.high %v2461, 0.0
        %v2480 = vcombine.high %v2470, 0.0
        %v2481 = vcombine.high %v2477, 0.0
        %v2482 = vcombine.low %v1282, %v1346
        %v2483 = vcombine.high %v1282, %v1346
        %v2485 = vunpack.c.l.s4 1983009808
        %v2486 = vunpack.c.0.s8 %v2485
        %v2487 = vlaneseq
        %v2488 = vshrl.u32 %v2487, 7
        %v2489 = vsub.s32 %v2486, %v2488
        %v2490 = vrot.slane %v2482, %v2489
        %v2492 = vunpack.c.l.s4 1983009808
        %v2493 = vunpack.c.0.s8 %v2492
        %v2494 = vlaneseq
        %v2495 = vshrl.u32 %v2494, 7
        %v2496 = vsub.s32 %v2493, %v2495
        %v2497 = vrot.slane %v2483, %v2496
        %v2498 = vcombine.low %v1314, %v1378
        %v2499 = vcombine.high %v1314, %v1378
        %v2501 = vunpack.c.l.s4 1983009808
        %v2502 = vunpack.c.0.s8 %v2501
        %v2503 = vlaneseq
        %v2504 = vshrl.u32 %v2503, 7
        %v2505 = vsub.s32 %v2502, %v2504
        %v2506 = vrot.slane %v2498, %v2505
        %v2508 = vunpack.c.l.s4 1983009808
        %v2509 = vunpack.c.0.s8 %v2508
        %v2510 = vlaneseq
        %v2511 = vshrl.u32 %v2510, 7
        %v2512 = vsub.s32 %v2509, %v2511
        %v2513 = vrot.slane %v2499, %v2512
        %v2514 = vcombine.low %v2490, %v2506
        %v2515 = vcombine.high %v2490, %v2506
        %v2517 = vunpack.c.l.s4 1934713408
        %v2518 = vunpack.c.0.s8 %v2517
        %v2519 = vlaneseq
        %v2520 = vshrl.u32 %v2519, 7
        %v2521 = vsub.s32 %v2518, %v2520
        %v2522 = vrot.slane %v2514, %v2521
        %v2524 = vunpack.c.l.s4 1934713408
        %v2525 = vunpack.c.0.s8 %v2524
        %v2526 = vlaneseq
        %v2527 = vshrl.u32 %v2526, 7
        %v2528 = vsub.s32 %v2525, %v2527
        %v2529 = vrot.slane %v2515, %v2528
        %v2530 = vcombine.low %v2497, %v2513
        %v2531 = vcombine.high %v2497, %v2513
        %v2533 = vunpack.c.l.s4 1934713408
        %v2534 = vunpack.c.0.s8 %v2533
        %v2535 = vlaneseq
        %v2536 = vshrl.u32 %v2535, 7
        %v2537 = vsub.s32 %v2534, %v2536
        %v2538 = vrot.slane %v2530, %v2537
        %v2540 = vunpack.c.l.s4 1934713408
        %v2541 = vunpack.c.0.s8 %v2540
        %v2542 = vlaneseq
        %v2543 = vshrl.u32 %v2542, 7
        %v2544 = vsub.s32 %v2541, %v2543
        %v2545 = vrot.slane %v2531, %v2544
        %v2546 = vcombine.high %v2522, 0.0
        %v2547 = vcombine.high %v2529, 0.0
        %v2548 = vcombine.high %v2538, 0.0
        %v2549 = vcombine.high %v2545, 0.0
        %v2550 = vcombine.low %v1283, %v1347
        %v2551 = vcombine.high %v1283, %v1347
        %v2553 = vunpack.c.l.s4 1983009808
        %v2554 = vunpack.c.0.s8 %v2553
        %v2555 = vlaneseq
        %v2556 = vshrl.u32 %v2555, 7
        %v2557 = vsub.s32 %v2554, %v2556
        %v2558 = vrot.slane %v2550, %v2557
        %v2560 = vunpack.c.l.s4 1983009808
        %v2561 = vunpack.c.0.s8 %v2560
        %v2562 = vlaneseq
        %v2563 = vshrl.u32 %v2562, 7
        %v2564 = vsub.s32 %v2561, %v2563
        %v2565 = vrot.slane %v2551, %v2564
        %v2566 = vcombine.low %v1315, %v1379
        %v2567 = vcombine.high %v1315, %v1379
        %v2569 = vunpack.c.l.s4 1983009808
        %v2570 = vunpack.c.0.s8 %v2569
        %v2571 = vlaneseq
        %v2572 = vshrl.u32 %v2571, 7
        %v2573 = vsub.s32 %v2570, %v2572
        %v2574 = vrot.slane %v2566, %v2573
        %v2576 = vunpack.c.l.s4 1983009808
        %v2577 = vunpack.c.0.s8 %v2576
        %v2578 = vlaneseq
        %v2579 = vshrl.u32 %v2578, 7
        %v2580 = vsub.s32 %v2577, %v2579
        %v2581 = vrot.slane %v2567, %v2580
        %v2582 = vcombine.low %v2558, %v2574
        %v2583 = vcombine.high %v2558, %v2574
        %v2585 = vunpack.c.l.s4 1934713408
        %v2586 = vunpack.c.0.s8 %v2585
        %v2587 = vlaneseq
        %v2588 = vshrl.u32 %v2587, 7
        %v2589 = vsub.s32 %v2586, %v2588
        %v2590 = vrot.slane %v2582, %v2589
        %v2592 = vunpack.c.l.s4 1934713408
        %v2593 = vunpack.c.0.s8 %v2592
        %v2594 = vlaneseq
        %v2595 = vshrl.u32 %v2594, 7
        %v2596 = vsub.s32 %v2593, %v2595
        %v2597 = vrot.slane %v2583, %v2596
        %v2598 = vcombine.low %v2565, %v2581
        %v2599 = vcombine.high %v2565, %v2581
        %v2601 = vunpack.c.l.s4 1934713408
        %v2602 = vunpack.c.0.s8 %v2601
        %v2603 = vlaneseq
        %v2604 = vshrl.u32 %v2603, 7
        %v2605 = vsub.s32 %v2602, %v2604
        %v2606 = vrot.slane %v2598, %v2605
        %v2608 = vunpack.c.l.s4 1934713408
        %v2609 = vunpack.c.0.s8 %v2608
        %v2610 = vlaneseq
        %v2611 = vshrl.u32 %v2610, 7
        %v2612 = vsub.s32 %v2609, %v2611
        %v2613 = vrot.slane %v2599, %v2612
        %v2614 = vcombine.high %v2590, 0.0
        %v2615 = vcombine.high %v2597, 0.0
        %v2616 = vcombine.high %v2606, 0.0
        %v2617 = vcombine.high %v2613, 0.0
        %v2618 = vcombine.low %v1284, %v1348
        %v2619 = vcombine.high %v1284, %v1348
        %v2621 = vunpack.c.l.s4 1983009808
        %v2622 = vunpack.c.0.s8 %v2621
        %v2623 = vlaneseq
        %v2624 = vshrl.u32 %v2623, 7
        %v2625 = vsub.s32 %v2622, %v2624
        %v2626 = vrot.slane %v2618, %v2625
        %v2628 = vunpack.c.l.s4 1983009808
        %v2629 = vunpack.c.0.s8 %v2628
        %v2630 = vlaneseq
        %v2631 = vshrl.u32 %v2630, 7
        %v2632 = vsub.s32 %v2629, %v2631
        %v2633 = vrot.slane %v2619, %v2632
        %v2634 = vcombine.low %v1316, %v1380
        %v2635 = vcombine.high %v1316, %v1380
        %v2637 = vunpack.c.l.s4 1983009808
        %v2638 = vunpack.c.0.s8 %v2637
        %v2639 = vlaneseq
        %v2640 = vshrl.u32 %v2639, 7
        %v2641 = vsub.s32 %v2638, %v2640
        %v2642 = vrot.slane %v2634, %v2641
        %v2644 = vunpack.c.l.s4 1983009808
        %v2645 = vunpack.c.0.s8 %v2644
        %v2646 = vlaneseq
        %v2647 = vshrl.u32 %v2646, 7
        %v2648 = vsub.s32 %v2645, %v2647
        %v2649 = vrot.slane %v2635, %v2648
        %v2650 = vcombine.low %v2626, %v2642
        %v2651 = vcombine.high %v2626, %v2642
        %v2653 = vunpack.c.l.s4 1934713408
        %v2654 = vunpack.c.0.s8 %v2653
        %v2655 = vlaneseq
        %v2656 = vshrl.u32 %v2655, 7
        %v2657 = vsub.s32 %v2654, %v2656
        %v2658 = vrot.slane %v2650, %v2657
        %v2660 = vunpack.c.l.s4 1934713408
        %v2661 = vunpack.c.0.s8 %v2660
        %v2662 = vlaneseq
        %v2663 = vshrl.u32 %v2662, 7
        %v2664 = vsub.s32 %v2661, %v2663
        %v2665 = vrot.slane %v2651, %v2664
        %v2666 = vcombine.low %v2633, %v2649
        %v2667 = vcombine.high %v2633, %v2649
        %v2669 = vunpack.c.l.s4 1934713408
        %v2670 = vunpack.c.0.s8 %v2669
        %v2671 = vlaneseq
        %v2672 = vshrl.u32 %v2671, 7
        %v2673 = vsub.s32 %v2670, %v2672
        %v2674 = vrot.slane %v2666, %v2673
        %v2676 = vunpack.c.l.s4 1934713408
        %v2677 = vunpack.c.0.s8 %v2676
        %v2678 = vlaneseq
        %v2679 = vshrl.u32 %v2678, 7
        %v2680 = vsub.s32 %v2677, %v2679
        %v2681 = vrot.slane %v2667, %v2680
        %v2682 = vcombine.high %v2658, 0.0
        %v2683 = vcombine.high %v2665, 0.0
        %v2684 = vcombine.high %v2674, 0.0
        %v2685 = vcombine.high %v2681, 0.0
        %v2686 = vcombine.low %v1285, %v1349
        %v2687 = vcombine.high %v1285, %v1349
        %v2689 = vunpack.c.l.s4 1983009808
        %v2690 = vunpack.c.0.s8 %v2689
        %v2691 = vlaneseq
        %v2692 = vshrl.u32 %v2691, 7
        %v2693 = vsub.s32 %v2690, %v2692
        %v2694 = vrot.slane %v2686, %v2693
        %v2696 = vunpack.c.l.s4 1983009808
        %v2697 = vunpack.c.0.s8 %v2696
        %v2698 = vlaneseq
        %v2699 = vshrl.u32 %v2698, 7
        %v2700 = vsub.s32 %v2697, %v2699
        %v2701 = vrot.slane %v2687, %v2700
        %v2702 = vcombine.low %v1317, %v1381
        %v2703 = vcombine.high %v1317, %v1381
        %v2705 = vunpack.c.l.s4 1983009808
        %v2706 = vunpack.c.0.s8 %v2705
        %v2707 = vlaneseq
        %v2708 = vshrl.u32 %v2707, 7
        %v2709 = vsub.s32 %v2706, %v2708
        %v2710 = vrot.slane %v2702, %v2709
        %v2712 = vunpack.c.l.s4 1983009808
        %v2713 = vunpack.c.0.s8 %v2712
        %v2714 = vlaneseq
        %v2715 = vshrl.u32 %v2714, 7
        %v2716 = vsub.s32 %v2713, %v2715
        %v2717 = vrot.slane %v2703, %v2716
        %v2718 = vcombine.low %v2694, %v2710
        %v2719 = vcombine.high %v2694, %v2710
        %v2721 = vunpack.c.l.s4 1934713408
        %v2722 = vunpack.c.0.s8 %v2721
        %v2723 = vlaneseq
        %v2724 = vshrl.u32 %v2723, 7
        %v2725 = vsub.s32 %v2722, %v2724
        %v2726 = vrot.slane %v2718, %v2725
        %v2728 = vunpack.c.l.s4 1934713408
        %v2729 = vunpack.c.0.s8 %v2728
        %v2730 = vlaneseq
        %v2731 = vshrl.u32 %v2730, 7
        %v2732 = vsub.s32 %v2729, %v2731
        %v2733 = vrot.slane %v2719, %v2732
        %v2734 = vcombine.low %v2701, %v2717
        %v2735 = vcombine.high %v2701, %v2717
        %v2737 = vunpack.c.l.s4 1934713408
        %v2738 = vunpack.c.0.s8 %v2737
        %v2739 = vlaneseq
        %v2740 = vshrl.u32 %v2739, 7
        %v2741 = vsub.s32 %v2738, %v2740
        %v2742 = vrot.slane %v2734, %v2741
        %v2744 = vunpack.c.l.s4 1934713408
        %v2745 = vunpack.c.0.s8 %v2744
        %v2746 = vlaneseq
        %v2747 = vshrl.u32 %v2746, 7
        %v2748 = vsub.s32 %v2745, %v2747
        %v2749 = vrot.slane %v2735, %v2748
        %v2750 = vcombine.high %v2726, 0.0
        %v2751 = vcombine.high %v2733, 0.0
        %v2752 = vcombine.high %v2742, 0.0
        %v2753 = vcombine.high %v2749, 0.0
        %v2754 = vcombine.low %v1286, %v1350
        %v2755 = vcombine.high %v1286, %v1350
        %v2757 = vunpack.c.l.s4 1983009808
        %v2758 = vunpack.c.0.s8 %v2757
        %v2759 = vlaneseq
        %v2760 = vshrl.u32 %v2759, 7
        %v2761 = vsub.s32 %v2758, %v2760
        %v2762 = vrot.slane %v2754, %v2761
        %v2764 = vunpack.c.l.s4 1983009808
        %v2765 = vunpack.c.0.s8 %v2764
        %v2766 = vlaneseq
        %v2767 = vshrl.u32 %v2766, 7
        %v2768 = vsub.s32 %v2765, %v2767
        %v2769 = vrot.slane %v2755, %v2768
        %v2770 = vcombine.low %v1318, %v1382
        %v2771 = vcombine.high %v1318, %v1382
        %v2773 = vunpack.c.l.s4 1983009808
        %v2774 = vunpack.c.0.s8 %v2773
        %v2775 = vlaneseq
        %v2776 = vshrl.u32 %v2775, 7
        %v2777 = vsub.s32 %v2774, %v2776
        %v2778 = vrot.slane %v2770, %v2777
        %v2780 = vunpack.c.l.s4 1983009808
        %v2781 = vunpack.c.0.s8 %v2780
        %v2782 = vlaneseq
        %v2783 = vshrl.u32 %v2782, 7
        %v2784 = vsub.s32 %v2781, %v2783
        %v2785 = vrot.slane %v2771, %v2784
        %v2786 = vcombine.low %v2762, %v2778
        %v2787 = vcombine.high %v2762, %v2778
        %v2789 = vunpack.c.l.s4 1934713408
        %v2790 = vunpack.c.0.s8 %v2789
        %v2791 = vlaneseq
        %v2792 = vshrl.u32 %v2791, 7
        %v2793 = vsub.s32 %v2790, %v2792
        %v2794 = vrot.slane %v2786, %v2793
        %v2796 = vunpack.c.l.s4 1934713408
        %v2797 = vunpack.c.0.s8 %v2796
        %v2798 = vlaneseq
        %v2799 = vshrl.u32 %v2798, 7
        %v2800 = vsub.s32 %v2797, %v2799
        %v2801 = vrot.slane %v2787, %v2800
        %v2802 = vcombine.low %v2769, %v2785
        %v2803 = vcombine.high %v2769, %v2785
        %v2805 = vunpack.c.l.s4 1934713408
        %v2806 = vunpack.c.0.s8 %v2805
        %v2807 = vlaneseq
        %v2808 = vshrl.u32 %v2807, 7
        %v2809 = vsub.s32 %v2806, %v2808
        %v2810 = vrot.slane %v2802, %v2809
        %v2812 = vunpack.c.l.s4 1934713408
        %v2813 = vunpack.c.0.s8 %v2812
        %v2814 = vlaneseq
        %v2815 = vshrl.u32 %v2814, 7
        %v2816 = vsub.s32 %v2813, %v2815
        %v2817 = vrot.slane %v2803, %v2816
        %v2818 = vcombine.high %v2794, 0.0
        %v2819 = vcombine.high %v2801, 0.0
        %v2820 = vcombine.high %v2810, 0.0
        %v2821 = vcombine.high %v2817, 0.0
        %v2822 = vcombine.low %v1287, %v1351
        %v2823 = vcombine.high %v1287, %v1351
        %v2825 = vunpack.c.l.s4 1983009808
        %v2826 = vunpack.c.0.s8 %v2825
        %v2827 = vlaneseq
        %v2828 = vshrl.u32 %v2827, 7
        %v2829 = vsub.s32 %v2826, %v2828
        %v2830 = vrot.slane %v2822, %v2829
        %v2832 = vunpack.c.l.s4 1983009808
        %v2833 = vunpack.c.0.s8 %v2832
        %v2834 = vlaneseq
        %v2835 = vshrl.u32 %v2834, 7
        %v2836 = vsub.s32 %v2833, %v2835
        %v2837 = vrot.slane %v2823, %v2836
        %v2838 = vcombine.low %v1319, %v1383
        %v2839 = vcombine.high %v1319, %v1383
        %v2841 = vunpack.c.l.s4 1983009808
        %v2842 = vunpack.c.0.s8 %v2841
        %v2843 = vlaneseq
        %v2844 = vshrl.u32 %v2843, 7
        %v2845 = vsub.s32 %v2842, %v2844
        %v2846 = vrot.slane %v2838, %v2845
        %v2848 = vunpack.c.l.s4 1983009808
        %v2849 = vunpack.c.0.s8 %v2848
        %v2850 = vlaneseq
        %v2851 = vshrl.u32 %v2850, 7
        %v2852 = vsub.s32 %v2849, %v2851
        %v2853 = vrot.slane %v2839, %v2852
        %v2854 = vcombine.low %v2830, %v2846
        %v2855 = vcombine.high %v2830, %v2846
        %v2857 = vunpack.c.l.s4 1934713408
        %v2858 = vunpack.c.0.s8 %v2857
        %v2859 = vlaneseq
        %v2860 = vshrl.u32 %v2859, 7
        %v2861 = vsub.s32 %v2858, %v2860
        %v2862 = vrot.slane %v2854, %v2861
        %v2864 = vunpack.c.l.s4 1934713408
        %v2865 = vunpack.c.0.s8 %v2864
        %v2866 = vlaneseq
        %v2867 = vshrl.u32 %v2866, 7
        %v2868 = vsub.s32 %v2865, %v2867
        %v2869 = vrot.slane %v2855, %v2868
        %v2870 = vcombine.low %v2837, %v2853
        %v2871 = vcombine.high %v2837, %v2853
        %v2873 = vunpack.c.l.s4 1934713408
        %v2874 = vunpack.c.0.s8 %v2873
        %v2875 = vlaneseq
        %v2876 = vshrl.u32 %v2875, 7
        %v2877 = vsub.s32 %v2874, %v2876
        %v2878 = vrot.slane %v2870, %v2877
        %v2880 = vunpack.c.l.s4 1934713408
        %v2881 = vunpack.c.0.s8 %v2880
        %v2882 = vlaneseq
        %v2883 = vshrl.u32 %v2882, 7
        %v2884 = vsub.s32 %v2881, %v2883
        %v2885 = vrot.slane %v2871, %v2884
        %v2886 = vcombine.high %v2862, 0.0
        %v2887 = vcombine.high %v2869, 0.0
        %v2888 = vcombine.high %v2878, 0.0
        %v2889 = vcombine.high %v2885, 0.0
        %v2890 = vcombine.low %v1288, %v1352
        %v2891 = vcombine.high %v1288, %v1352
        %v2893 = vunpack.c.l.s4 1983009808
        %v2894 = vunpack.c.0.s8 %v2893
        %v2895 = vlaneseq
        %v2896 = vshrl.u32 %v2895, 7
        %v2897 = vsub.s32 %v2894, %v2896
        %v2898 = vrot.slane %v2890, %v2897
        %v2900 = vunpack.c.l.s4 1983009808
        %v2901 = vunpack.c.0.s8 %v2900
        %v2902 = vlaneseq
        %v2903 = vshrl.u32 %v2902, 7
        %v2904 = vsub.s32 %v2901, %v2903
        %v2905 = vrot.slane %v2891, %v2904
        %v2906 = vcombine.low %v1320, %v1384
        %v2907 = vcombine.high %v1320, %v1384
        %v2909 = vunpack.c.l.s4 1983009808
        %v2910 = vunpack.c.0.s8 %v2909
        %v2911 = vlaneseq
        %v2912 = vshrl.u32 %v2911, 7
        %v2913 = vsub.s32 %v2910, %v2912
        %v2914 = vrot.slane %v2906, %v2913
        %v2916 = vunpack.c.l.s4 1983009808
        %v2917 = vunpack.c.0.s8 %v2916
        %v2918 = vlaneseq
        %v2919 = vshrl.u32 %v2918, 7
        %v2920 = vsub.s32 %v2917, %v2919
        %v2921 = vrot.slane %v2907, %v2920
        %v2922 = vcombine.low %v2898, %v2914
        %v2923 = vcombine.high %v2898, %v2914
        %v2925 = vunpack.c.l.s4 1934713408
        %v2926 = vunpack.c.0.s8 %v2925
        %v2927 = vlaneseq
        %v2928 = vshrl.u32 %v2927, 7
        %v2929 = vsub.s32 %v2926, %v2928
        %v2930 = vrot.slane %v2922, %v2929
        %v2932 = vunpack.c.l.s4 1934713408
        %v2933 = vunpack.c.0.s8 %v2932
        %v2934 = vlaneseq
        %v2935 = vshrl.u32 %v2934, 7
        %v2936 = vsub.s32 %v2933, %v2935
        %v2937 = vrot.slane %v2923, %v2936
        %v2938 = vcombine.low %v2905, %v2921
        %v2939 = vcombine.high %v2905, %v2921
        %v2941 = vunpack.c.l.s4 1934713408
        %v2942 = vunpack.c.0.s8 %v2941
        %v2943 = vlaneseq
        %v2944 = vshrl.u32 %v2943, 7
        %v2945 = vsub.s32 %v2942, %v2944
        %v2946 = vrot.slane %v2938, %v2945
        %v2948 = vunpack.c.l.s4 1934713408
        %v2949 = vunpack.c.0.s8 %v2948
        %v2950 = vlaneseq
        %v2951 = vshrl.u32 %v2950, 7
        %v2952 = vsub.s32 %v2949, %v2951
        %v2953 = vrot.slane %v2939, %v2952
        %v2954 = vcombine.high %v2930, 0.0
        %v2955 = vcombine.high %v2937, 0.0
        %v2956 = vcombine.high %v2946, 0.0
        %v2957 = vcombine.high %v2953, 0.0
        %v2958 = vcombine.low %v1289, %v1353
        %v2959 = vcombine.high %v1289, %v1353
        %v2961 = vunpack.c.l.s4 1983009808
        %v2962 = vunpack.c.0.s8 %v2961
        %v2963 = vlaneseq
        %v2964 = vshrl.u32 %v2963, 7
        %v2965 = vsub.s32 %v2962, %v2964
        %v2966 = vrot.slane %v2958, %v2965
        %v2968 = vunpack.c.l.s4 1983009808
        %v2969 = vunpack.c.0.s8 %v2968
        %v2970 = vlaneseq
        %v2971 = vshrl.u32 %v2970, 7
        %v2972 = vsub.s32 %v2969, %v2971
        %v2973 = vrot.slane %v2959, %v2972
        %v2974 = vcombine.low %v1321, %v1385
        %v2975 = vcombine.high %v1321, %v1385
        %v2977 = vunpack.c.l.s4 1983009808
        %v2978 = vunpack.c.0.s8 %v2977
        %v2979 = vlaneseq
        %v2980 = vshrl.u32 %v2979, 7
        %v2981 = vsub.s32 %v2978, %v2980
        %v2982 = vrot.slane %v2974, %v2981
        %v2984 = vunpack.c.l.s4 1983009808
        %v2985 = vunpack.c.0.s8 %v2984
        %v2986 = vlaneseq
        %v2987 = vshrl.u32 %v2986, 7
        %v2988 = vsub.s32 %v2985, %v2987
        %v2989 = vrot.slane %v2975, %v2988
        %v2990 = vcombine.low %v2966, %v2982
        %v2991 = vcombine.high %v2966, %v2982
        %v2993 = vunpack.c.l.s4 1934713408
        %v2994 = vunpack.c.0.s8 %v2993
        %v2995 = vlaneseq
        %v2996 = vshrl.u32 %v2995, 7
        %v2997 = vsub.s32 %v2994, %v2996
        %v2998 = vrot.slane %v2990, %v2997
        %v3000 = vunpack.c.l.s4 1934713408
        %v3001 = vunpack.c.0.s8 %v3000
        %v3002 = vlaneseq
        %v3003 = vshrl.u32 %v3002, 7
        %v3004 = vsub.s32 %v3001, %v3003
        %v3005 = vrot.slane %v2991, %v3004
        %v3006 = vcombine.low %v2973, %v2989
        %v3007 = vcombine.high %v2973, %v2989
        %v3009 = vunpack.c.l.s4 1934713408
        %v3010 = vunpack.c.0.s8 %v3009
        %v3011 = vlaneseq
        %v3012 = vshrl.u32 %v3011, 7
        %v3013 = vsub.s32 %v3010, %v3012
        %v3014 = vrot.slane %v3006, %v3013
        %v3016 = vunpack.c.l.s4 1934713408
        %v3017 = vunpack.c.0.s8 %v3016
        %v3018 = vlaneseq
        %v3019 = vshrl.u32 %v3018, 7
        %v3020 = vsub.s32 %v3017, %v3019
        %v3021 = vrot.slane %v3007, %v3020
        %v3022 = vcombine.high %v2998, 0.0
        %v3023 = vcombine.high %v3005, 0.0
        %v3024 = vcombine.high %v3014, 0.0
        %v3025 = vcombine.high %v3021, 0.0
        %v3026 = vcombine.low %v1290, %v1354
        %v3027 = vcombine.high %v1290, %v1354
        %v3029 = vunpack.c.l.s4 1983009808
        %v3030 = vunpack.c.0.s8 %v3029
        %v3031 = vlaneseq
        %v3032 = vshrl.u32 %v3031, 7
        %v3033 = vsub.s32 %v3030, %v3032
        %v3034 = vrot.slane %v3026, %v3033
        %v3036 = vunpack.c.l.s4 1983009808
        %v3037 = vunpack.c.0.s8 %v3036
        %v3038 = vlaneseq
        %v3039 = vshrl.u32 %v3038, 7
        %v3040 = vsub.s32 %v3037, %v3039
        %v3041 = vrot.slane %v3027, %v3040
        %v3042 = vcombine.low %v1322, %v1386
        %v3043 = vcombine.high %v1322, %v1386
        %v3045 = vunpack.c.l.s4 1983009808
        %v3046 = vunpack.c.0.s8 %v3045
        %v3047 = vlaneseq
        %v3048 = vshrl.u32 %v3047, 7
        %v3049 = vsub.s32 %v3046, %v3048
        %v3050 = vrot.slane %v3042, %v3049
        %v3052 = vunpack.c.l.s4 1983009808
        %v3053 = vunpack.c.0.s8 %v3052
        %v3054 = vlaneseq
        %v3055 = vshrl.u32 %v3054, 7
        %v3056 = vsub.s32 %v3053, %v3055
        %v3057 = vrot.slane %v3043, %v3056
        %v3058 = vcombine.low %v3034, %v3050
        %v3059 = vcombine.high %v3034, %v3050
        %v3061 = vunpack.c.l.s4 1934713408
        %v3062 = vunpack.c.0.s8 %v3061
        %v3063 = vlaneseq
        %v3064 = vshrl.u32 %v3063, 7
        %v3065 = vsub.s32 %v3062, %v3064
        %v3066 = vrot.slane %v3058, %v3065
        %v3068 = vunpack.c.l.s4 1934713408
        %v3069 = vunpack.c.0.s8 %v3068
        %v3070 = vlaneseq
        %v3071 = vshrl.u32 %v3070, 7
        %v3072 = vsub.s32 %v3069, %v3071
        %v3073 = vrot.slane %v3059, %v3072
        %v3074 = vcombine.low %v3041, %v3057
        %v3075 = vcombine.high %v3041, %v3057
        %v3077 = vunpack.c.l.s4 1934713408
        %v3078 = vunpack.c.0.s8 %v3077
        %v3079 = vlaneseq
        %v3080 = vshrl.u32 %v3079, 7
        %v3081 = vsub.s32 %v3078, %v3080
        %v3082 = vrot.slane %v3074, %v3081
        %v3084 = vunpack.c.l.s4 1934713408
        %v3085 = vunpack.c.0.s8 %v3084
        %v3086 = vlaneseq
        %v3087 = vshrl.u32 %v3086, 7
        %v3088 = vsub.s32 %v3085, %v3087
        %v3089 = vrot.slane %v3075, %v3088
        %v3090 = vcombine.high %v3066, 0.0
        %v3091 = vcombine.high %v3073, 0.0
        %v3092 = vcombine.high %v3082, 0.0
        %v3093 = vcombine.high %v3089, 0.0
        %v3094 = vcombine.low %v1291, %v1355
        %v3095 = vcombine.high %v1291, %v1355
        %v3097 = vunpack.c.l.s4 1983009808
        %v3098 = vunpack.c.0.s8 %v3097
        %v3099 = vlaneseq
        %v3100 = vshrl.u32 %v3099, 7
        %v3101 = vsub.s32 %v3098, %v3100
        %v3102 = vrot.slane %v3094, %v3101
        %v3104 = vunpack.c.l.s4 1983009808
        %v3105 = vunpack.c.0.s8 %v3104
        %v3106 = vlaneseq
        %v3107 = vshrl.u32 %v3106, 7
        %v3108 = vsub.s32 %v3105, %v3107
        %v3109 = vrot.slane %v3095, %v3108
        %v3110 = vcombine.low %v1323, %v1387
        %v3111 = vcombine.high %v1323, %v1387
        %v3113 = vunpack.c.l.s4 1983009808
        %v3114 = vunpack.c.0.s8 %v3113
        %v3115 = vlaneseq
        %v3116 = vshrl.u32 %v3115, 7
        %v3117 = vsub.s32 %v3114, %v3116
        %v3118 = vrot.slane %v3110, %v3117
        %v3120 = vunpack.c.l.s4 1983009808
        %v3121 = vunpack.c.0.s8 %v3120
        %v3122 = vlaneseq
        %v3123 = vshrl.u32 %v3122, 7
        %v3124 = vsub.s32 %v3121, %v3123
        %v3125 = vrot.slane %v3111, %v3124
        %v3126 = vcombine.low %v3102, %v3118
        %v3127 = vcombine.high %v3102, %v3118
        %v3129 = vunpack.c.l.s4 1934713408
        %v3130 = vunpack.c.0.s8 %v3129
        %v3131 = vlaneseq
        %v3132 = vshrl.u32 %v3131, 7
        %v3133 = vsub.s32 %v3130, %v3132
        %v3134 = vrot.slane %v3126, %v3133
        %v3136 = vunpack.c.l.s4 1934713408
        %v3137 = vunpack.c.0.s8 %v3136
        %v3138 = vlaneseq
        %v3139 = vshrl.u32 %v3138, 7
        %v3140 = vsub.s32 %v3137, %v3139
        %v3141 = vrot.slane %v3127, %v3140
        %v3142 = vcombine.low %v3109, %v3125
        %v3143 = vcombine.high %v3109, %v3125
        %v3145 = vunpack.c.l.s4 1934713408
        %v3146 = vunpack.c.0.s8 %v3145
        %v3147 = vlaneseq
        %v3148 = vshrl.u32 %v3147, 7
        %v3149 = vsub.s32 %v3146, %v3148
        %v3150 = vrot.slane %v3142, %v3149
        %v3152 = vunpack.c.l.s4 1934713408
        %v3153 = vunpack.c.0.s8 %v3152
        %v3154 = vlaneseq
        %v3155 = vshrl.u32 %v3154, 7
        %v3156 = vsub.s32 %v3153, %v3155
        %v3157 = vrot.slane %v3143, %v3156
        %v3158 = vcombine.high %v3134, 0.0
        %v3159 = vcombine.high %v3141, 0.0
        %v3160 = vcombine.high %v3150, 0.0
        %v3161 = vcombine.high %v3157, 0.0
        %v3162 = vcombine.low %v1292, %v1356
        %v3163 = vcombine.high %v1292, %v1356
        %v3165 = vunpack.c.l.s4 1983009808
        %v3166 = vunpack.c.0.s8 %v3165
        %v3167 = vlaneseq
        %v3168 = vshrl.u32 %v3167, 7
        %v3169 = vsub.s32 %v3166, %v3168
        %v3170 = vrot.slane %v3162, %v3169
        %v3172 = vunpack.c.l.s4 1983009808
        %v3173 = vunpack.c.0.s8 %v3172
        %v3174 = vlaneseq
        %v3175 = vshrl.u32 %v3174, 7
        %v3176 = vsub.s32 %v3173, %v3175
        %v3177 = vrot.slane %v3163, %v3176
        %v3178 = vcombine.low %v1324, %v1388
        %v3179 = vcombine.high %v1324, %v1388
        %v3181 = vunpack.c.l.s4 1983009808
        %v3182 = vunpack.c.0.s8 %v3181
        %v3183 = vlaneseq
        %v3184 = vshrl.u32 %v3183, 7
        %v3185 = vsub.s32 %v3182, %v3184
        %v3186 = vrot.slane %v3178, %v3185
        %v3188 = vunpack.c.l.s4 1983009808
        %v3189 = vunpack.c.0.s8 %v3188
        %v3190 = vlaneseq
        %v3191 = vshrl.u32 %v3190, 7
        %v3192 = vsub.s32 %v3189, %v3191
        %v3193 = vrot.slane %v3179, %v3192
        %v3194 = vcombine.low %v3170, %v3186
        %v3195 = vcombine.high %v3170, %v3186
        %v3197 = vunpack.c.l.s4 1934713408
        %v3198 = vunpack.c.0.s8 %v3197
        %v3199 = vlaneseq
        %v3200 = vshrl.u32 %v3199, 7
        %v3201 = vsub.s32 %v3198, %v3200
        %v3202 = vrot.slane %v3194, %v3201
        %v3204 = vunpack.c.l.s4 1934713408
        %v3205 = vunpack.c.0.s8 %v3204
        %v3206 = vlaneseq
        %v3207 = vshrl.u32 %v3206, 7
        %v3208 = vsub.s32 %v3205, %v3207
        %v3209 = vrot.slane %v3195, %v3208
        %v3210 = vcombine.low %v3177, %v3193
        %v3211 = vcombine.high %v3177, %v3193
        %v3213 = vunpack.c.l.s4 1934713408
        %v3214 = vunpack.c.0.s8 %v3213
        %v3215 = vlaneseq
        %v3216 = vshrl.u32 %v3215, 7
        %v3217 = vsub.s32 %v3214, %v3216
        %v3218 = vrot.slane %v3210, %v3217
        %v3220 = vunpack.c.l.s4 1934713408
        %v3221 = vunpack.c.0.s8 %v3220
        %v3222 = vlaneseq
        %v3223 = vshrl.u32 %v3222, 7
        %v3224 = vsub.s32 %v3221, %v3223
        %v3225 = vrot.slane %v3211, %v3224
        %v3226 = vcombine.high %v3202, 0.0
        %v3227 = vcombine.high %v3209, 0.0
        %v3228 = vcombine.high %v3218, 0.0
        %v3229 = vcombine.high %v3225, 0.0
        %v3230 = vcombine.low %v1293, %v1357
        %v3231 = vcombine.high %v1293, %v1357
        %v3233 = vunpack.c.l.s4 1983009808
        %v3234 = vunpack.c.0.s8 %v3233
        %v3235 = vlaneseq
        %v3236 = vshrl.u32 %v3235, 7
        %v3237 = vsub.s32 %v3234, %v3236
        %v3238 = vrot.slane %v3230, %v3237
        %v3240 = vunpack.c.l.s4 1983009808
        %v3241 = vunpack.c.0.s8 %v3240
        %v3242 = vlaneseq
        %v3243 = vshrl.u32 %v3242, 7
        %v3244 = vsub.s32 %v3241, %v3243
        %v3245 = vrot.slane %v3231, %v3244
        %v3246 = vcombine.low %v1325, %v1389
        %v3247 = vcombine.high %v1325, %v1389
        %v3249 = vunpack.c.l.s4 1983009808
        %v3250 = vunpack.c.0.s8 %v3249
        %v3251 = vlaneseq
        %v3252 = vshrl.u32 %v3251, 7
        %v3253 = vsub.s32 %v3250, %v3252
        %v3254 = vrot.slane %v3246, %v3253
        %v3256 = vunpack.c.l.s4 1983009808
        %v3257 = vunpack.c.0.s8 %v3256
        %v3258 = vlaneseq
        %v3259 = vshrl.u32 %v3258, 7
        %v3260 = vsub.s32 %v3257, %v3259
        %v3261 = vrot.slane %v3247, %v3260
        %v3262 = vcombine.low %v3238, %v3254
        %v3263 = vcombine.high %v3238, %v3254
        %v3265 = vunpack.c.l.s4 1934713408
        %v3266 = vunpack.c.0.s8 %v3265
        %v3267 = vlaneseq
        %v3268 = vshrl.u32 %v3267, 7
        %v3269 = vsub.s32 %v3266, %v3268
        %v3270 = vrot.slane %v3262, %v3269
        %v3272 = vunpack.c.l.s4 1934713408
        %v3273 = vunpack.c.0.s8 %v3272
        %v3274 = vlaneseq
        %v3275 = vshrl.u32 %v3274, 7
        %v3276 = vsub.s32 %v3273, %v3275
        %v3277 = vrot.slane %v3263, %v3276
        %v3278 = vcombine.low %v3245, %v3261
        %v3279 = vcombine.high %v3245, %v3261
        %v3281 = vunpack.c.l.s4 1934713408
        %v3282 = vunpack.c.0.s8 %v3281
        %v3283 = vlaneseq
        %v3284 = vshrl.u32 %v3283, 7
        %v3285 = vsub.s32 %v3282, %v3284
        %v3286 = vrot.slane %v3278, %v3285
        %v3288 = vunpack.c.l.s4 1934713408
        %v3289 = vunpack.c.0.s8 %v3288
        %v3290 = vlaneseq
        %v3291 = vshrl.u32 %v3290, 7
        %v3292 = vsub.s32 %v3289, %v3291
        %v3293 = vrot.slane %v3279, %v3292
        %v3294 = vcombine.high %v3270, 0.0
        %v3295 = vcombine.high %v3277, 0.0
        %v3296 = vcombine.high %v3286, 0.0
        %v3297 = vcombine.high %v3293, 0.0
        %v3298 = vcombine.low %v1294, %v1358
        %v3299 = vcombine.high %v1294, %v1358
        %v3301 = vunpack.c.l.s4 1983009808
        %v3302 = vunpack.c.0.s8 %v3301
        %v3303 = vlaneseq
        %v3304 = vshrl.u32 %v3303, 7
        %v3305 = vsub.s32 %v3302, %v3304
        %v3306 = vrot.slane %v3298, %v3305
        %v3308 = vunpack.c.l.s4 1983009808
        %v3309 = vunpack.c.0.s8 %v3308
        %v3310 = vlaneseq
        %v3311 = vshrl.u32 %v3310, 7
        %v3312 = vsub.s32 %v3309, %v3311
        %v3313 = vrot.slane %v3299, %v3312
        %v3314 = vcombine.low %v1326, %v1390
        %v3315 = vcombine.high %v1326, %v1390
        %v3317 = vunpack.c.l.s4 1983009808
        %v3318 = vunpack.c.0.s8 %v3317
        %v3319 = vlaneseq
        %v3320 = vshrl.u32 %v3319, 7
        %v3321 = vsub.s32 %v3318, %v3320
        %v3322 = vrot.slane %v3314, %v3321
        %v3324 = vunpack.c.l.s4 1983009808
        %v3325 = vunpack.c.0.s8 %v3324
        %v3326 = vlaneseq
        %v3327 = vshrl.u32 %v3326, 7
        %v3328 = vsub.s32 %v3325, %v3327
        %v3329 = vrot.slane %v3315, %v3328
        %v3330 = vcombine.low %v3306, %v3322
        %v3331 = vcombine.high %v3306, %v3322
        %v3333 = vunpack.c.l.s4 1934713408
        %v3334 = vunpack.c.0.s8 %v3333
        %v3335 = vlaneseq
        %v3336 = vshrl.u32 %v3335, 7
        %v3337 = vsub.s32 %v3334, %v3336
        %v3338 = vrot.slane %v3330, %v3337
        %v3340 = vunpack.c.l.s4 1934713408
        %v3341 = vunpack.c.0.s8 %v3340
        %v3342 = vlaneseq
        %v3343 = vshrl.u32 %v3342, 7
        %v3344 = vsub.s32 %v3341, %v3343
        %v3345 = vrot.slane %v3331, %v3344
        %v3346 = vcombine.low %v3313, %v3329
        %v3347 = vcombine.high %v3313, %v3329
        %v3349 = vunpack.c.l.s4 1934713408
        %v3350 = vunpack.c.0.s8 %v3349
        %v3351 = vlaneseq
        %v3352 = vshrl.u32 %v3351, 7
        %v3353 = vsub.s32 %v3350, %v3352
        %v3354 = vrot.slane %v3346, %v3353
        %v3356 = vunpack.c.l.s4 1934713408
        %v3357 = vunpack.c.0.s8 %v3356
        %v3358 = vlaneseq
        %v3359 = vshrl.u32 %v3358, 7
        %v3360 = vsub.s32 %v3357, %v3359
        %v3361 = vrot.slane %v3347, %v3360
        %v3362 = vcombine.high %v3338, 0.0
        %v3363 = vcombine.high %v3345, 0.0
        %v3364 = vcombine.high %v3354, 0.0
        %v3365 = vcombine.high %v3361, 0.0
        %v3366 = vcombine.low %v1295, %v1359
        %v3367 = vcombine.high %v1295, %v1359
        %v3369 = vunpack.c.l.s4 1983009808
        %v3370 = vunpack.c.0.s8 %v3369
        %v3371 = vlaneseq
        %v3372 = vshrl.u32 %v3371, 7
        %v3373 = vsub.s32 %v3370, %v3372
        %v3374 = vrot.slane %v3366, %v3373
        %v3376 = vunpack.c.l.s4 1983009808
        %v3377 = vunpack.c.0.s8 %v3376
        %v3378 = vlaneseq
        %v3379 = vshrl.u32 %v3378, 7
        %v3380 = vsub.s32 %v3377, %v3379
        %v3381 = vrot.slane %v3367, %v3380
        %v3382 = vcombine.low %v1327, %v1391
        %v3383 = vcombine.high %v1327, %v1391
        %v3385 = vunpack.c.l.s4 1983009808
        %v3386 = vunpack.c.0.s8 %v3385
        %v3387 = vlaneseq
        %v3388 = vshrl.u32 %v3387, 7
        %v3389 = vsub.s32 %v3386, %v3388
        %v3390 = vrot.slane %v3382, %v3389
        %v3392 = vunpack.c.l.s4 1983009808
        %v3393 = vunpack.c.0.s8 %v3392
        %v3394 = vlaneseq
        %v3395 = vshrl.u32 %v3394, 7
        %v3396 = vsub.s32 %v3393, %v3395
        %v3397 = vrot.slane %v3383, %v3396
        %v3398 = vcombine.low %v3374, %v3390
        %v3399 = vcombine.high %v3374, %v3390
        %v3401 = vunpack.c.l.s4 1934713408
        %v3402 = vunpack.c.0.s8 %v3401
        %v3403 = vlaneseq
        %v3404 = vshrl.u32 %v3403, 7
        %v3405 = vsub.s32 %v3402, %v3404
        %v3406 = vrot.slane %v3398, %v3405
        %v3408 = vunpack.c.l.s4 1934713408
        %v3409 = vunpack.c.0.s8 %v3408
        %v3410 = vlaneseq
        %v3411 = vshrl.u32 %v3410, 7
        %v3412 = vsub.s32 %v3409, %v3411
        %v3413 = vrot.slane %v3399, %v3412
        %v3414 = vcombine.low %v3381, %v3397
        %v3415 = vcombine.high %v3381, %v3397
        %v3417 = vunpack.c.l.s4 1934713408
        %v3418 = vunpack.c.0.s8 %v3417
        %v3419 = vlaneseq
        %v3420 = vshrl.u32 %v3419, 7
        %v3421 = vsub.s32 %v3418, %v3420
        %v3422 = vrot.slane %v3414, %v3421
        %v3424 = vunpack.c.l.s4 1934713408
        %v3425 = vunpack.c.0.s8 %v3424
        %v3426 = vlaneseq
        %v3427 = vshrl.u32 %v3426, 7
        %v3428 = vsub.s32 %v3425, %v3427
        %v3429 = vrot.slane %v3415, %v3428
        %v3430 = vcombine.high %v3406, 0.0
        %v3431 = vcombine.high %v3413, 0.0
        %v3432 = vcombine.high %v3422, 0.0
        %v3433 = vcombine.high %v3429, 0.0
        %v3434 = vcombine.low %v1296, %v1360
        %v3435 = vcombine.high %v1296, %v1360
        %v3437 = vunpack.c.l.s4 1983009808
        %v3438 = vunpack.c.0.s8 %v3437
        %v3439 = vlaneseq
        %v3440 = vshrl.u32 %v3439, 7
        %v3441 = vsub.s32 %v3438, %v3440
        %v3442 = vrot.slane %v3434, %v3441
        %v3444 = vunpack.c.l.s4 1983009808
        %v3445 = vunpack.c.0.s8 %v3444
        %v3446 = vlaneseq
        %v3447 = vshrl.u32 %v3446, 7
        %v3448 = vsub.s32 %v3445, %v3447
        %v3449 = vrot.slane %v3435, %v3448
        %v3450 = vcombine.low %v1328, %v1392
        %v3451 = vcombine.high %v1328, %v1392
        %v3453 = vunpack.c.l.s4 1983009808
        %v3454 = vunpack.c.0.s8 %v3453
        %v3455 = vlaneseq
        %v3456 = vshrl.u32 %v3455, 7
        %v3457 = vsub.s32 %v3454, %v3456
        %v3458 = vrot.slane %v3450, %v3457
        %v3460 = vunpack.c.l.s4 1983009808
        %v3461 = vunpack.c.0.s8 %v3460
        %v3462 = vlaneseq
        %v3463 = vshrl.u32 %v3462, 7
        %v3464 = vsub.s32 %v3461, %v3463
        %v3465 = vrot.slane %v3451, %v3464
        %v3466 = vcombine.low %v3442, %v3458
        %v3467 = vcombine.high %v3442, %v3458
        %v3469 = vunpack.c.l.s4 1934713408
        %v3470 = vunpack.c.0.s8 %v3469
        %v3471 = vlaneseq
        %v3472 = vshrl.u32 %v3471, 7
        %v3473 = vsub.s32 %v3470, %v3472
        %v3474 = vrot.slane %v3466, %v3473
        %v3476 = vunpack.c.l.s4 1934713408
        %v3477 = vunpack.c.0.s8 %v3476
        %v3478 = vlaneseq
        %v3479 = vshrl.u32 %v3478, 7
        %v3480 = vsub.s32 %v3477, %v3479
        %v3481 = vrot.slane %v3467, %v3480
        %v3482 = vcombine.low %v3449, %v3465
        %v3483 = vcombine.high %v3449, %v3465
        %v3485 = vunpack.c.l.s4 1934713408
        %v3486 = vunpack.c.0.s8 %v3485
        %v3487 = vlaneseq
        %v3488 = vshrl.u32 %v3487, 7
        %v3489 = vsub.s32 %v3486, %v3488
        %v3490 = vrot.slane %v3482, %v3489
        %v3492 = vunpack.c.l.s4 1934713408
        %v3493 = vunpack.c.0.s8 %v3492
        %v3494 = vlaneseq
        %v3495 = vshrl.u32 %v3494, 7
        %v3496 = vsub.s32 %v3493, %v3495
        %v3497 = vrot.slane %v3483, %v3496
        %v3498 = vcombine.high %v3474, 0.0
        %v3499 = vcombine.high %v3481, 0.0
        %v3500 = vcombine.high %v3490, 0.0
        %v3501 = vcombine.high %v3497, 0.0
        %v3502 = vcombine.low %v1297, %v1361
        %v3503 = vcombine.high %v1297, %v1361
        %v3505 = vunpack.c.l.s4 1983009808
        %v3506 = vunpack.c.0.s8 %v3505
        %v3507 = vlaneseq
        %v3508 = vshrl.u32 %v3507, 7
        %v3509 = vsub.s32 %v3506, %v3508
        %v3510 = vrot.slane %v3502, %v3509
        %v3512 = vunpack.c.l.s4 1983009808
        %v3513 = vunpack.c.0.s8 %v3512
        %v3514 = vlaneseq
        %v3515 = vshrl.u32 %v3514, 7
        %v3516 = vsub.s32 %v3513, %v3515
        %v3517 = vrot.slane %v3503, %v3516
        %v3518 = vcombine.low %v1329, %v1393
        %v3519 = vcombine.high %v1329, %v1393
        %v3521 = vunpack.c.l.s4 1983009808
        %v3522 = vunpack.c.0.s8 %v3521
        %v3523 = vlaneseq
        %v3524 = vshrl.u32 %v3523, 7
        %v3525 = vsub.s32 %v3522, %v3524
        %v3526 = vrot.slane %v3518, %v3525
        %v3528 = vunpack.c.l.s4 1983009808
        %v3529 = vunpack.c.0.s8 %v3528
        %v3530 = vlaneseq
        %v3531 = vshrl.u32 %v3530, 7
        %v3532 = vsub.s32 %v3529, %v3531
        %v3533 = vrot.slane %v3519, %v3532
        %v3534 = vcombine.low %v3510, %v3526
        %v3535 = vcombine.high %v3510, %v3526
        %v3537 = vunpack.c.l.s4 1934713408
        %v3538 = vunpack.c.0.s8 %v3537
        %v3539 = vlaneseq
        %v3540 = vshrl.u32 %v3539, 7
        %v3541 = vsub.s32 %v3538, %v3540
        %v3542 = vrot.slane %v3534, %v3541
        %v3544 = vunpack.c.l.s4 1934713408
        %v3545 = vunpack.c.0.s8 %v3544
        %v3546 = vlaneseq
        %v3547 = vshrl.u32 %v3546, 7
        %v3548 = vsub.s32 %v3545, %v3547
        %v3549 = vrot.slane %v3535, %v3548
        %v3550 = vcombine.low %v3517, %v3533
        %v3551 = vcombine.high %v3517, %v3533
        %v3553 = vunpack.c.l.s4 1934713408
        %v3554 = vunpack.c.0.s8 %v3553
        %v3555 = vlaneseq
        %v3556 = vshrl.u32 %v3555, 7
        %v3557 = vsub.s32 %v3554, %v3556
        %v3558 = vrot.slane %v3550, %v3557
        %v3560 = vunpack.c.l.s4 1934713408
        %v3561 = vunpack.c.0.s8 %v3560
        %v3562 = vlaneseq
        %v3563 = vshrl.u32 %v3562, 7
        %v3564 = vsub.s32 %v3561, %v3563
        %v3565 = vrot.slane %v3551, %v3564
        %v3566 = vcombine.high %v3542, 0.0
        %v3567 = vcombine.high %v3549, 0.0
        %v3568 = vcombine.high %v3558, 0.0
        %v3569 = vcombine.high %v3565, 0.0
        %3571 = vrot.lane.b32.xlu0 %v1458, 2
        %v3572 = vpop.permute.xlu0 %3571
        %3575 = vrot.lane.b32.xlu0 %v1441, 4
        %v3576 = vpop.permute.xlu0 %3575
        %3579 = vrot.lane.b32.xlu0 %v1459, 6
        %v3580 = vpop.permute.xlu0 %3579
        %3583 = vrot.lane.b32.xlu0 %v1450, 8
        %v3584 = vpop.permute.xlu0 %3583
        %3587 = vrot.lane.b32.xlu0 %v1460, 10
        %v3588 = vpop.permute.xlu0 %3587
        %3591 = vrot.lane.b32.xlu0 %v1457, 12
        %v3592 = vpop.permute.xlu0 %3591
        %3595 = vrot.lane.b32.xlu0 %v1461, 14
        %v3596 = vpop.permute.xlu0 %3595
        %3599 = vrot.lane.b32.xlu0 %v1502, 16
        %v3600 = vpop.permute.xlu0 %3599
        %3603 = vrot.lane.b32.xlu0 %v1526, 18
        %v3604 = vpop.permute.xlu0 %3603
        %3607 = vrot.lane.b32.xlu0 %v1509, 20
        %v3608 = vpop.permute.xlu0 %3607
        %3611 = vrot.lane.b32.xlu0 %v1527, 22
        %v3612 = vpop.permute.xlu0 %3611
        %3615 = vrot.lane.b32.xlu0 %v1518, 24
        %v3616 = vpop.permute.xlu0 %3615
        %3619 = vrot.lane.b32.xlu0 %v1528, 26
        %v3620 = vpop.permute.xlu0 %3619
        %3623 = vrot.lane.b32.xlu0 %v1525, 28
        %v3624 = vpop.permute.xlu0 %3623
        %3627 = vrot.lane.b32.xlu0 %v1529, 30
        %v3628 = vpop.permute.xlu0 %3627
        %3631 = vrot.lane.b32.xlu0 %v1570, 32
        %v3632 = vpop.permute.xlu0 %3631
        %3635 = vrot.lane.b32.xlu0 %v1594, 34
        %v3636 = vpop.permute.xlu0 %3635
        %3639 = vrot.lane.b32.xlu0 %v1577, 36
        %v3640 = vpop.permute.xlu0 %3639
        %3643 = vrot.lane.b32.xlu0 %v1595, 38
        %v3644 = vpop.permute.xlu0 %3643
        %3647 = vrot.lane.b32.xlu0 %v1586, 40
        %v3648 = vpop.permute.xlu0 %3647
        %3651 = vrot.lane.b32.xlu0 %v1596, 42
        %v3652 = vpop.permute.xlu0 %3651
        %3655 = vrot.lane.b32.xlu0 %v1593, 44
        %v3656 = vpop.permute.xlu0 %3655
        %3659 = vrot.lane.b32.xlu0 %v1597, 46
        %v3660 = vpop.permute.xlu0 %3659
        %3663 = vrot.lane.b32.xlu0 %v1638, 48
        %v3664 = vpop.permute.xlu0 %3663
        %3667 = vrot.lane.b32.xlu0 %v1662, 50
        %v3668 = vpop.permute.xlu0 %3667
        %3671 = vrot.lane.b32.xlu0 %v1645, 52
        %v3672 = vpop.permute.xlu0 %3671
        %3675 = vrot.lane.b32.xlu0 %v1663, 54
        %v3676 = vpop.permute.xlu0 %3675
        %3679 = vrot.lane.b32.xlu0 %v1654, 56
        %v3680 = vpop.permute.xlu0 %3679
        %3683 = vrot.lane.b32.xlu0 %v1664, 58
        %v3684 = vpop.permute.xlu0 %3683
        %3687 = vrot.lane.b32.xlu0 %v1661, 60
        %v3688 = vpop.permute.xlu0 %3687
        %3691 = vrot.lane.b32.xlu0 %v1665, 62
        %v3692 = vpop.permute.xlu0 %3691
        %3695 = vrot.lane.b32.xlu0 %v1706, 64
        %v3696 = vpop.permute.xlu0 %3695
        %3699 = vrot.lane.b32.xlu0 %v1730, 66
        %v3700 = vpop.permute.xlu0 %3699
        %3703 = vrot.lane.b32.xlu0 %v1713, 68
        %v3704 = vpop.permute.xlu0 %3703
        %3707 = vrot.lane.b32.xlu0 %v1731, 70
        %v3708 = vpop.permute.xlu0 %3707
        %3711 = vrot.lane.b32.xlu0 %v1722, 72
        %v3712 = vpop.permute.xlu0 %3711
        %3715 = vrot.lane.b32.xlu0 %v1732, 74
        %v3716 = vpop.permute.xlu0 %3715
        %3719 = vrot.lane.b32.xlu0 %v1729, 76
        %v3720 = vpop.permute.xlu0 %3719
        %3723 = vrot.lane.b32.xlu0 %v1733, 78
        %v3724 = vpop.permute.xlu0 %3723
        %3727 = vrot.lane.b32.xlu0 %v1774, 80
        %v3728 = vpop.permute.xlu0 %3727
        %3731 = vrot.lane.b32.xlu0 %v1798, 82
        %v3732 = vpop.permute.xlu0 %3731
        %3735 = vrot.lane.b32.xlu0 %v1781, 84
        %v3736 = vpop.permute.xlu0 %3735
        %3739 = vrot.lane.b32.xlu0 %v1799, 86
        %v3740 = vpop.permute.xlu0 %3739
        %3743 = vrot.lane.b32.xlu0 %v1790, 88
        %v3744 = vpop.permute.xlu0 %3743
        %3747 = vrot.lane.b32.xlu0 %v1800, 90
        %v3748 = vpop.permute.xlu0 %3747
        %3751 = vrot.lane.b32.xlu0 %v1797, 92
        %v3752 = vpop.permute.xlu0 %3751
        %3755 = vrot.lane.b32.xlu0 %v1801, 94
        %v3756 = vpop.permute.xlu0 %3755
        %3759 = vrot.lane.b32.xlu0 %v1842, 96
        %v3760 = vpop.permute.xlu0 %3759
        %3763 = vrot.lane.b32.xlu0 %v1866, 98
        %v3764 = vpop.permute.xlu0 %3763
        %3767 = vrot.lane.b32.xlu0 %v1849, 100
        %v3768 = vpop.permute.xlu0 %3767
        %3771 = vrot.lane.b32.xlu0 %v1867, 102
        %v3772 = vpop.permute.xlu0 %3771
        %3775 = vrot.lane.b32.xlu0 %v1858, 104
        %v3776 = vpop.permute.xlu0 %3775
        %3779 = vrot.lane.b32.xlu0 %v1868, 106
        %v3780 = vpop.permute.xlu0 %3779
        %3783 = vrot.lane.b32.xlu0 %v1865, 108
        %v3784 = vpop.permute.xlu0 %3783
        %3787 = vrot.lane.b32.xlu0 %v1869, 110
        %v3788 = vpop.permute.xlu0 %3787
        %3791 = vrot.lane.b32.xlu0 %v1910, 112
        %v3792 = vpop.permute.xlu0 %3791
        %3795 = vrot.lane.b32.xlu0 %v1934, 114
        %v3796 = vpop.permute.xlu0 %3795
        %3799 = vrot.lane.b32.xlu0 %v1917, 116
        %v3800 = vpop.permute.xlu0 %3799
        %3803 = vrot.lane.b32.xlu0 %v1935, 118
        %v3804 = vpop.permute.xlu0 %3803
        %3807 = vrot.lane.b32.xlu0 %v1926, 120
        %v3808 = vpop.permute.xlu0 %3807
        %3811 = vrot.lane.b32.xlu0 %v1936, 122
        %v3812 = vpop.permute.xlu0 %3811
        %3815 = vrot.lane.b32.xlu0 %v1933, 124
        %v3816 = vpop.permute.xlu0 %3815
        %3819 = vrot.lane.b32.xlu0 %v1937, 126
        %v3820 = vpop.permute.xlu0 %3819
        %3823 = vrot.lane.b32.xlu0 %v2002, 2
        %v3824 = vpop.permute.xlu0 %3823
        %3827 = vrot.lane.b32.xlu0 %v1985, 4
        %v3828 = vpop.permute.xlu0 %3827
        %3831 = vrot.lane.b32.xlu0 %v2003, 6
        %v3832 = vpop.permute.xlu0 %3831
        %3835 = vrot.lane.b32.xlu0 %v1994, 8
        %v3836 = vpop.permute.xlu0 %3835
        %3839 = vrot.lane.b32.xlu0 %v2004, 10
        %v3840 = vpop.permute.xlu0 %3839
        %3843 = vrot.lane.b32.xlu0 %v2001, 12
        %v3844 = vpop.permute.xlu0 %3843
        %3847 = vrot.lane.b32.xlu0 %v2005, 14
        %v3848 = vpop.permute.xlu0 %3847
        %3851 = vrot.lane.b32.xlu0 %v2046, 16
        %v3852 = vpop.permute.xlu0 %3851
        %3855 = vrot.lane.b32.xlu0 %v2070, 18
        %v3856 = vpop.permute.xlu0 %3855
        %3859 = vrot.lane.b32.xlu0 %v2053, 20
        %v3860 = vpop.permute.xlu0 %3859
        %3863 = vrot.lane.b32.xlu0 %v2071, 22
        %v3864 = vpop.permute.xlu0 %3863
        %3867 = vrot.lane.b32.xlu0 %v2062, 24
        %v3868 = vpop.permute.xlu0 %3867
        %3871 = vrot.lane.b32.xlu0 %v2072, 26
        %v3872 = vpop.permute.xlu0 %3871
        %3875 = vrot.lane.b32.xlu0 %v2069, 28
        %v3876 = vpop.permute.xlu0 %3875
        %3879 = vrot.lane.b32.xlu0 %v2073, 30
        %v3880 = vpop.permute.xlu0 %3879
        %3883 = vrot.lane.b32.xlu0 %v2114, 32
        %v3884 = vpop.permute.xlu0 %3883
        %3887 = vrot.lane.b32.xlu0 %v2138, 34
        %v3888 = vpop.permute.xlu0 %3887
        %3891 = vrot.lane.b32.xlu0 %v2121, 36
        %v3892 = vpop.permute.xlu0 %3891
        %3895 = vrot.lane.b32.xlu0 %v2139, 38
        %v3896 = vpop.permute.xlu0 %3895
        %3899 = vrot.lane.b32.xlu0 %v2130, 40
        %v3900 = vpop.permute.xlu0 %3899
        %3903 = vrot.lane.b32.xlu0 %v2140, 42
        %v3904 = vpop.permute.xlu0 %3903
        %3907 = vrot.lane.b32.xlu0 %v2137, 44
        %v3908 = vpop.permute.xlu0 %3907
        %3911 = vrot.lane.b32.xlu0 %v2141, 46
        %v3912 = vpop.permute.xlu0 %3911
        %3915 = vrot.lane.b32.xlu0 %v2182, 48
        %v3916 = vpop.permute.xlu0 %3915
        %3919 = vrot.lane.b32.xlu0 %v2206, 50
        %v3920 = vpop.permute.xlu0 %3919
        %3923 = vrot.lane.b32.xlu0 %v2189, 52
        %v3924 = vpop.permute.xlu0 %3923
        %3927 = vrot.lane.b32.xlu0 %v2207, 54
        %v3928 = vpop.permute.xlu0 %3927
        %3931 = vrot.lane.b32.xlu0 %v2198, 56
        %v3932 = vpop.permute.xlu0 %3931
        %3935 = vrot.lane.b32.xlu0 %v2208, 58
        %v3936 = vpop.permute.xlu0 %3935
        %3939 = vrot.lane.b32.xlu0 %v2205, 60
        %v3940 = vpop.permute.xlu0 %3939
        %3943 = vrot.lane.b32.xlu0 %v2209, 62
        %v3944 = vpop.permute.xlu0 %3943
        %3947 = vrot.lane.b32.xlu0 %v2250, 64
        %v3948 = vpop.permute.xlu0 %3947
        %3951 = vrot.lane.b32.xlu0 %v2274, 66
        %v3952 = vpop.permute.xlu0 %3951
        %3955 = vrot.lane.b32.xlu0 %v2257, 68
        %v3956 = vpop.permute.xlu0 %3955
        %3959 = vrot.lane.b32.xlu0 %v2275, 70
        %v3960 = vpop.permute.xlu0 %3959
        %3963 = vrot.lane.b32.xlu0 %v2266, 72
        %v3964 = vpop.permute.xlu0 %3963
        %3967 = vrot.lane.b32.xlu0 %v2276, 74
        %v3968 = vpop.permute.xlu0 %3967
        %3971 = vrot.lane.b32.xlu0 %v2273, 76
        %v3972 = vpop.permute.xlu0 %3971
        %3975 = vrot.lane.b32.xlu0 %v2277, 78
        %v3976 = vpop.permute.xlu0 %3975
        %3979 = vrot.lane.b32.xlu0 %v2318, 80
        %v3980 = vpop.permute.xlu0 %3979
        %3983 = vrot.lane.b32.xlu0 %v2342, 82
        %v3984 = vpop.permute.xlu0 %3983
        %3987 = vrot.lane.b32.xlu0 %v2325, 84
        %v3988 = vpop.permute.xlu0 %3987
        %3991 = vrot.lane.b32.xlu0 %v2343, 86
        %v3992 = vpop.permute.xlu0 %3991
        %3995 = vrot.lane.b32.xlu0 %v2334, 88
        %v3996 = vpop.permute.xlu0 %3995
        %3999 = vrot.lane.b32.xlu0 %v2344, 90
        %v4000 = vpop.permute.xlu0 %3999
        %4003 = vrot.lane.b32.xlu0 %v2341, 92
        %v4004 = vpop.permute.xlu0 %4003
        %4007 = vrot.lane.b32.xlu0 %v2345, 94
        %v4008 = vpop.permute.xlu0 %4007
        %4011 = vrot.lane.b32.xlu0 %v2386, 96
        %v4012 = vpop.permute.xlu0 %4011
        %4015 = vrot.lane.b32.xlu0 %v2410, 98
        %v4016 = vpop.permute.xlu0 %4015
        %4019 = vrot.lane.b32.xlu0 %v2393, 100
        %v4020 = vpop.permute.xlu0 %4019
        %4023 = vrot.lane.b32.xlu0 %v2411, 102
        %v4024 = vpop.permute.xlu0 %4023
        %4027 = vrot.lane.b32.xlu0 %v2402, 104
        %v4028 = vpop.permute.xlu0 %4027
        %4031 = vrot.lane.b32.xlu0 %v2412, 106
        %v4032 = vpop.permute.xlu0 %4031
        %4035 = vrot.lane.b32.xlu0 %v2409, 108
        %v4036 = vpop.permute.xlu0 %4035
        %4039 = vrot.lane.b32.xlu0 %v2413, 110
        %v4040 = vpop.permute.xlu0 %4039
        %4043 = vrot.lane.b32.xlu0 %v2454, 112
        %v4044 = vpop.permute.xlu0 %4043
        %4047 = vrot.lane.b32.xlu0 %v2478, 114
        %v4048 = vpop.permute.xlu0 %4047
        %4051 = vrot.lane.b32.xlu0 %v2461, 116
        %v4052 = vpop.permute.xlu0 %4051
        %4055 = vrot.lane.b32.xlu0 %v2479, 118
        %v4056 = vpop.permute.xlu0 %4055
        %4059 = vrot.lane.b32.xlu0 %v2470, 120
        %v4060 = vpop.permute.xlu0 %4059
        %4063 = vrot.lane.b32.xlu0 %v2480, 122
        %v4064 = vpop.permute.xlu0 %4063
        %4067 = vrot.lane.b32.xlu0 %v2477, 124
        %v4068 = vpop.permute.xlu0 %4067
        %4071 = vrot.lane.b32.xlu0 %v2481, 126
        %v4072 = vpop.permute.xlu0 %4071
        %4075 = vrot.lane.b32.xlu0 %v2546, 2
        %v4076 = vpop.permute.xlu0 %4075
        %4079 = vrot.lane.b32.xlu0 %v2529, 4
        %v4080 = vpop.permute.xlu0 %4079
        %4083 = vrot.lane.b32.xlu0 %v2547, 6
        %v4084 = vpop.permute.xlu0 %4083
        %4087 = vrot.lane.b32.xlu0 %v2538, 8
        %v4088 = vpop.permute.xlu0 %4087
        %4091 = vrot.lane.b32.xlu0 %v2548, 10
        %v4092 = vpop.permute.xlu0 %4091
        %4095 = vrot.lane.b32.xlu0 %v2545, 12
        %v4096 = vpop.permute.xlu0 %4095
        %4099 = vrot.lane.b32.xlu0 %v2549, 14
        %v4100 = vpop.permute.xlu0 %4099
        %4103 = vrot.lane.b32.xlu0 %v2590, 16
        %v4104 = vpop.permute.xlu0 %4103
        %4107 = vrot.lane.b32.xlu0 %v2614, 18
        %v4108 = vpop.permute.xlu0 %4107
        %4111 = vrot.lane.b32.xlu0 %v2597, 20
        %v4112 = vpop.permute.xlu0 %4111
        %4115 = vrot.lane.b32.xlu0 %v2615, 22
        %v4116 = vpop.permute.xlu0 %4115
        %4119 = vrot.lane.b32.xlu0 %v2606, 24
        %v4120 = vpop.permute.xlu0 %4119
        %4123 = vrot.lane.b32.xlu0 %v2616, 26
        %v4124 = vpop.permute.xlu0 %4123
        %4127 = vrot.lane.b32.xlu0 %v2613, 28
        %v4128 = vpop.permute.xlu0 %4127
        %4131 = vrot.lane.b32.xlu0 %v2617, 30
        %v4132 = vpop.permute.xlu0 %4131
        %4135 = vrot.lane.b32.xlu0 %v2658, 32
        %v4136 = vpop.permute.xlu0 %4135
        %4139 = vrot.lane.b32.xlu0 %v2682, 34
        %v4140 = vpop.permute.xlu0 %4139
        %4143 = vrot.lane.b32.xlu0 %v2665, 36
        %v4144 = vpop.permute.xlu0 %4143
        %4147 = vrot.lane.b32.xlu0 %v2683, 38
        %v4148 = vpop.permute.xlu0 %4147
        %4151 = vrot.lane.b32.xlu0 %v2674, 40
        %v4152 = vpop.permute.xlu0 %4151
        %4155 = vrot.lane.b32.xlu0 %v2684, 42
        %v4156 = vpop.permute.xlu0 %4155
        %4159 = vrot.lane.b32.xlu0 %v2681, 44
        %v4160 = vpop.permute.xlu0 %4159
        %4163 = vrot.lane.b32.xlu0 %v2685, 46
        %v4164 = vpop.permute.xlu0 %4163
        %4167 = vrot.lane.b32.xlu0 %v2726, 48
        %v4168 = vpop.permute.xlu0 %4167
        %4171 = vrot.lane.b32.xlu0 %v2750, 50
        %v4172 = vpop.permute.xlu0 %4171
        %4175 = vrot.lane.b32.xlu0 %v2733, 52
        %v4176 = vpop.permute.xlu0 %4175
        %4179 = vrot.lane.b32.xlu0 %v2751, 54
        %v4180 = vpop.permute.xlu0 %4179
        %4183 = vrot.lane.b32.xlu0 %v2742, 56
        %v4184 = vpop.permute.xlu0 %4183
        %4187 = vrot.lane.b32.xlu0 %v2752, 58
        %v4188 = vpop.permute.xlu0 %4187
        %4191 = vrot.lane.b32.xlu0 %v2749, 60
        %v4192 = vpop.permute.xlu0 %4191
        %4195 = vrot.lane.b32.xlu0 %v2753, 62
        %v4196 = vpop.permute.xlu0 %4195
        %4199 = vrot.lane.b32.xlu0 %v2794, 64
        %v4200 = vpop.permute.xlu0 %4199
        %4203 = vrot.lane.b32.xlu0 %v2818, 66
        %v4204 = vpop.permute.xlu0 %4203
        %4207 = vrot.lane.b32.xlu0 %v2801, 68
        %v4208 = vpop.permute.xlu0 %4207
        %4211 = vrot.lane.b32.xlu0 %v2819, 70
        %v4212 = vpop.permute.xlu0 %4211
        %4215 = vrot.lane.b32.xlu0 %v2810, 72
        %v4216 = vpop.permute.xlu0 %4215
        %4219 = vrot.lane.b32.xlu0 %v2820, 74
        %v4220 = vpop.permute.xlu0 %4219
        %4223 = vrot.lane.b32.xlu0 %v2817, 76
        %v4224 = vpop.permute.xlu0 %4223
        %4227 = vrot.lane.b32.xlu0 %v2821, 78
        %v4228 = vpop.permute.xlu0 %4227
        %4231 = vrot.lane.b32.xlu0 %v2862, 80
        %v4232 = vpop.permute.xlu0 %4231
        %4235 = vrot.lane.b32.xlu0 %v2886, 82
        %v4236 = vpop.permute.xlu0 %4235
        %4239 = vrot.lane.b32.xlu0 %v2869, 84
        %v4240 = vpop.permute.xlu0 %4239
        %4243 = vrot.lane.b32.xlu0 %v2887, 86
        %v4244 = vpop.permute.xlu0 %4243
        %4247 = vrot.lane.b32.xlu0 %v2878, 88
        %v4248 = vpop.permute.xlu0 %4247
        %4251 = vrot.lane.b32.xlu0 %v2888, 90
        %v4252 = vpop.permute.xlu0 %4251
        %4255 = vrot.lane.b32.xlu0 %v2885, 92
        %v4256 = vpop.permute.xlu0 %4255
        %4259 = vrot.lane.b32.xlu0 %v2889, 94
        %v4260 = vpop.permute.xlu0 %4259
        %4263 = vrot.lane.b32.xlu0 %v2930, 96
        %v4264 = vpop.permute.xlu0 %4263
        %4267 = vrot.lane.b32.xlu0 %v2954, 98
        %v4268 = vpop.permute.xlu0 %4267
        %4271 = vrot.lane.b32.xlu0 %v2937, 100
        %v4272 = vpop.permute.xlu0 %4271
        %4275 = vrot.lane.b32.xlu0 %v2955, 102
        %v4276 = vpop.permute.xlu0 %4275
        %4279 = vrot.lane.b32.xlu0 %v2946, 104
        %v4280 = vpop.permute.xlu0 %4279
        %4283 = vrot.lane.b32.xlu0 %v2956, 106
        %v4284 = vpop.permute.xlu0 %4283
        %4287 = vrot.lane.b32.xlu0 %v2953, 108
        %v4288 = vpop.permute.xlu0 %4287
        %4291 = vrot.lane.b32.xlu0 %v2957, 110
        %v4292 = vpop.permute.xlu0 %4291
        %4295 = vrot.lane.b32.xlu0 %v2998, 112
        %v4296 = vpop.permute.xlu0 %4295
        %4299 = vrot.lane.b32.xlu0 %v3022, 114
        %v4300 = vpop.permute.xlu0 %4299
        %4303 = vrot.lane.b32.xlu0 %v3005, 116
        %v4304 = vpop.permute.xlu0 %4303
        %4307 = vrot.lane.b32.xlu0 %v3023, 118
        %v4308 = vpop.permute.xlu0 %4307
        %4311 = vrot.lane.b32.xlu0 %v3014, 120
        %v4312 = vpop.permute.xlu0 %4311
        %4315 = vrot.lane.b32.xlu0 %v3024, 122
        %v4316 = vpop.permute.xlu0 %4315
        %4319 = vrot.lane.b32.xlu0 %v3021, 124
        %v4320 = vpop.permute.xlu0 %4319
        %4323 = vrot.lane.b32.xlu0 %v3025, 126
        %v4324 = vpop.permute.xlu0 %4323
        %4327 = vrot.lane.b32.xlu0 %v3090, 2
        %v4328 = vpop.permute.xlu0 %4327
        %4331 = vrot.lane.b32.xlu0 %v3073, 4
        %v4332 = vpop.permute.xlu0 %4331
        %4335 = vrot.lane.b32.xlu0 %v3091, 6
        %v4336 = vpop.permute.xlu0 %4335
        %4339 = vrot.lane.b32.xlu0 %v3082, 8
        %v4340 = vpop.permute.xlu0 %4339
        %4343 = vrot.lane.b32.xlu0 %v3092, 10
        %v4344 = vpop.permute.xlu0 %4343
        %4347 = vrot.lane.b32.xlu0 %v3089, 12
        %v4348 = vpop.permute.xlu0 %4347
        %4351 = vrot.lane.b32.xlu0 %v3093, 14
        %v4352 = vpop.permute.xlu0 %4351
        %4355 = vrot.lane.b32.xlu0 %v3134, 16
        %v4356 = vpop.permute.xlu0 %4355
        %4359 = vrot.lane.b32.xlu0 %v3158, 18
        %v4360 = vpop.permute.xlu0 %4359
        %4363 = vrot.lane.b32.xlu0 %v3141, 20
        %v4364 = vpop.permute.xlu0 %4363
        %4367 = vrot.lane.b32.xlu0 %v3159, 22
        %v4368 = vpop.permute.xlu0 %4367
        %4371 = vrot.lane.b32.xlu0 %v3150, 24
        %v4372 = vpop.permute.xlu0 %4371
        %4375 = vrot.lane.b32.xlu0 %v3160, 26
        %v4376 = vpop.permute.xlu0 %4375
        %4379 = vrot.lane.b32.xlu0 %v3157, 28
        %v4380 = vpop.permute.xlu0 %4379
        %4383 = vrot.lane.b32.xlu0 %v3161, 30
        %v4384 = vpop.permute.xlu0 %4383
        %4387 = vrot.lane.b32.xlu0 %v3202, 32
        %v4388 = vpop.permute.xlu0 %4387
        %4391 = vrot.lane.b32.xlu0 %v3226, 34
        %v4392 = vpop.permute.xlu0 %4391
        %4395 = vrot.lane.b32.xlu0 %v3209, 36
        %v4396 = vpop.permute.xlu0 %4395
        %4399 = vrot.lane.b32.xlu0 %v3227, 38
        %v4400 = vpop.permute.xlu0 %4399
        %4403 = vrot.lane.b32.xlu0 %v3218, 40
        %v4404 = vpop.permute.xlu0 %4403
        %4407 = vrot.lane.b32.xlu0 %v3228, 42
        %v4408 = vpop.permute.xlu0 %4407
        %4411 = vrot.lane.b32.xlu0 %v3225, 44
        %v4412 = vpop.permute.xlu0 %4411
        %4415 = vrot.lane.b32.xlu0 %v3229, 46
        %v4416 = vpop.permute.xlu0 %4415
        %4419 = vrot.lane.b32.xlu0 %v3270, 48
        %v4420 = vpop.permute.xlu0 %4419
        %4423 = vrot.lane.b32.xlu0 %v3294, 50
        %v4424 = vpop.permute.xlu0 %4423
        %4427 = vrot.lane.b32.xlu0 %v3277, 52
        %v4428 = vpop.permute.xlu0 %4427
        %4431 = vrot.lane.b32.xlu0 %v3295, 54
        %v4432 = vpop.permute.xlu0 %4431
        %4435 = vrot.lane.b32.xlu0 %v3286, 56
        %v4436 = vpop.permute.xlu0 %4435
        %4439 = vrot.lane.b32.xlu0 %v3296, 58
        %v4440 = vpop.permute.xlu0 %4439
        %4443 = vrot.lane.b32.xlu0 %v3293, 60
        %v4444 = vpop.permute.xlu0 %4443
        %4447 = vrot.lane.b32.xlu0 %v3297, 62
        %v4448 = vpop.permute.xlu0 %4447
        %4451 = vrot.lane.b32.xlu0 %v3338, 64
        %v4452 = vpop.permute.xlu0 %4451
        %4455 = vrot.lane.b32.xlu0 %v3362, 66
        %v4456 = vpop.permute.xlu0 %4455
        %4459 = vrot.lane.b32.xlu0 %v3345, 68
        %v4460 = vpop.permute.xlu0 %4459
        %4463 = vrot.lane.b32.xlu0 %v3363, 70
        %v4464 = vpop.permute.xlu0 %4463
        %4467 = vrot.lane.b32.xlu0 %v3354, 72
        %v4468 = vpop.permute.xlu0 %4467
        %4471 = vrot.lane.b32.xlu0 %v3364, 74
        %v4472 = vpop.permute.xlu0 %4471
        %4475 = vrot.lane.b32.xlu0 %v3361, 76
        %v4476 = vpop.permute.xlu0 %4475
        %4479 = vrot.lane.b32.xlu0 %v3365, 78
        %v4480 = vpop.permute.xlu0 %4479
        %4483 = vrot.lane.b32.xlu0 %v3406, 80
        %v4484 = vpop.permute.xlu0 %4483
        %4487 = vrot.lane.b32.xlu0 %v3430, 82
        %v4488 = vpop.permute.xlu0 %4487
        %4491 = vrot.lane.b32.xlu0 %v3413, 84
        %v4492 = vpop.permute.xlu0 %4491
        %4495 = vrot.lane.b32.xlu0 %v3431, 86
        %v4496 = vpop.permute.xlu0 %4495
        %4499 = vrot.lane.b32.xlu0 %v3422, 88
        %v4500 = vpop.permute.xlu0 %4499
        %4503 = vrot.lane.b32.xlu0 %v3432, 90
        %v4504 = vpop.permute.xlu0 %4503
        %4507 = vrot.lane.b32.xlu0 %v3429, 92
        %v4508 = vpop.permute.xlu0 %4507
        %4511 = vrot.lane.b32.xlu0 %v3433, 94
        %v4512 = vpop.permute.xlu0 %4511
        %4515 = vrot.lane.b32.xlu0 %v3474, 96
        %v4516 = vpop.permute.xlu0 %4515
        %4519 = vrot.lane.b32.xlu0 %v3498, 98
        %v4520 = vpop.permute.xlu0 %4519
        %4523 = vrot.lane.b32.xlu0 %v3481, 100
        %v4524 = vpop.permute.xlu0 %4523
        %4527 = vrot.lane.b32.xlu0 %v3499, 102
        %v4528 = vpop.permute.xlu0 %4527
        %4531 = vrot.lane.b32.xlu0 %v3490, 104
        %v4532 = vpop.permute.xlu0 %4531
        %4535 = vrot.lane.b32.xlu0 %v3500, 106
        %v4536 = vpop.permute.xlu0 %4535
        %4539 = vrot.lane.b32.xlu0 %v3497, 108
        %v4540 = vpop.permute.xlu0 %4539
        %4543 = vrot.lane.b32.xlu0 %v3501, 110
        %v4544 = vpop.permute.xlu0 %4543
        %4547 = vrot.lane.b32.xlu0 %v3542, 112
        %v4548 = vpop.permute.xlu0 %4547
        %4551 = vrot.lane.b32.xlu0 %v3566, 114
        %v4552 = vpop.permute.xlu0 %4551
        %4555 = vrot.lane.b32.xlu0 %v3549, 116
        %v4556 = vpop.permute.xlu0 %4555
        %4559 = vrot.lane.b32.xlu0 %v3567, 118
        %v4560 = vpop.permute.xlu0 %4559
        %4563 = vrot.lane.b32.xlu0 %v3558, 120
        %v4564 = vpop.permute.xlu0 %4563
        %4567 = vrot.lane.b32.xlu0 %v3568, 122
        %v4568 = vpop.permute.xlu0 %4567
        %4571 = vrot.lane.b32.xlu0 %v3565, 124
        %v4572 = vpop.permute.xlu0 %4571
        %4575 = vrot.lane.b32.xlu0 %v3569, 126
        %v4576 = vpop.permute.xlu0 %4575
        %vm4578 = vcmask 15360
        %v4579 = vsel %vm4578, %v1434, %v3572
        %vm4580 = vcmask 31744
        %v4581 = vsel %vm4580, %v4579, %v3576
        %vm4582 = vcmask 48128
        %v4583 = vsel %vm4582, %v4581, %v3580
        %vm4584 = vcmask 64512
        %v4585 = vsel %vm4584, %v4583, %v3584
        %vm4586 = vcmask 80896
        %v4587 = vsel %vm4586, %v4585, %v3588
        %vm4588 = vcmask 97280
        %v4589 = vsel %vm4588, %v4587, %v3592
        %vm4590 = vcmask 113664
        %v4591 = vsel %vm4590, %v4589, %v3596
        %vm4592 = vcmask 130048
        %v4593 = vsel %vm4592, %v4591, %v3600
        %vm4594 = vcmask 146432
        %v4595 = vsel %vm4594, %v4593, %v3604
        %vm4596 = vcmask 162816
        %v4597 = vsel %vm4596, %v4595, %v3608
        %vm4598 = vcmask 179200
        %v4599 = vsel %vm4598, %v4597, %v3612
        %vm4600 = vcmask 195584
        %v4601 = vsel %vm4600, %v4599, %v3616
        %vm4602 = vcmask 211968
        %v4603 = vsel %vm4602, %v4601, %v3620
        %vm4604 = vcmask 228352
        %v4605 = vsel %vm4604, %v4603, %v3624
        %vm4606 = vcmask 244736
        %v4607 = vsel %vm4606, %v4605, %v3628
        %vm4608 = vcmask 261120
        %v4609 = vsel %vm4608, %v4607, %v3632
        %vm4610 = vcmask 277504
        %v4611 = vsel %vm4610, %v4609, %v3636
        %vm4612 = vcmask 293888
        %v4613 = vsel %vm4612, %v4611, %v3640
        %vm4614 = vcmask 310272
        %v4615 = vsel %vm4614, %v4613, %v3644
        %vm4616 = vcmask 326656
        %v4617 = vsel %vm4616, %v4615, %v3648
        %vm4618 = vcmask 343040
        %v4619 = vsel %vm4618, %v4617, %v3652
        %vm4620 = vcmask 359424
        %v4621 = vsel %vm4620, %v4619, %v3656
        %vm4622 = vcmask 375808
        %v4623 = vsel %vm4622, %v4621, %v3660
        %vm4624 = vcmask 392192
        %v4625 = vsel %vm4624, %v4623, %v3664
        %vm4626 = vcmask 408576
        %v4627 = vsel %vm4626, %v4625, %v3668
        %vm4628 = vcmask 424960
        %v4629 = vsel %vm4628, %v4627, %v3672
        %vm4630 = vcmask 441344
        %v4631 = vsel %vm4630, %v4629, %v3676
        %vm4632 = vcmask 457728
        %v4633 = vsel %vm4632, %v4631, %v3680
        %vm4634 = vcmask 474112
        %v4635 = vsel %vm4634, %v4633, %v3684
        %vm4636 = vcmask 490496
        %v4637 = vsel %vm4636, %v4635, %v3688
        %vm4638 = vcmask 506880
        %v4639 = vsel %vm4638, %v4637, %v3692
        %vm4640 = vcmask 523264
        %v4641 = vsel %vm4640, %v4639, %v3696
        %vm4642 = vcmask 539648
        %v4643 = vsel %vm4642, %v4641, %v3700
        %vm4644 = vcmask 556032
        %v4645 = vsel %vm4644, %v4643, %v3704
        %vm4646 = vcmask 572416
        %v4647 = vsel %vm4646, %v4645, %v3708
        %vm4648 = vcmask 588800
        %v4649 = vsel %vm4648, %v4647, %v3712
        %vm4650 = vcmask 605184
        %v4651 = vsel %vm4650, %v4649, %v3716
        %vm4652 = vcmask 621568
        %v4653 = vsel %vm4652, %v4651, %v3720
        %vm4654 = vcmask 637952
        %v4655 = vsel %vm4654, %v4653, %v3724
        %vm4656 = vcmask 654336
        %v4657 = vsel %vm4656, %v4655, %v3728
        %vm4658 = vcmask 670720
        %v4659 = vsel %vm4658, %v4657, %v3732
        %vm4660 = vcmask 687104
        %v4661 = vsel %vm4660, %v4659, %v3736
        %vm4662 = vcmask 703488
        %v4663 = vsel %vm4662, %v4661, %v3740
        %vm4664 = vcmask 719872
        %v4665 = vsel %vm4664, %v4663, %v3744
        %vm4666 = vcmask 736256
        %v4667 = vsel %vm4666, %v4665, %v3748
        %vm4668 = vcmask 752640
        %v4669 = vsel %vm4668, %v4667, %v3752
        %vm4670 = vcmask 769024
        %v4671 = vsel %vm4670, %v4669, %v3756
        %vm4672 = vcmask 785408
        %v4673 = vsel %vm4672, %v4671, %v3760
        %vm4674 = vcmask 801792
        %v4675 = vsel %vm4674, %v4673, %v3764
        %vm4676 = vcmask 818176
        %v4677 = vsel %vm4676, %v4675, %v3768
        %vm4678 = vcmask 834560
        %v4679 = vsel %vm4678, %v4677, %v3772
        %vm4680 = vcmask 850944
        %v4681 = vsel %vm4680, %v4679, %v3776
        %vm4682 = vcmask 867328
        %v4683 = vsel %vm4682, %v4681, %v3780
        %vm4684 = vcmask 883712
        %v4685 = vsel %vm4684, %v4683, %v3784
        %vm4686 = vcmask 900096
        %v4687 = vsel %vm4686, %v4685, %v3788
        %vm4688 = vcmask 916480
        %v4689 = vsel %vm4688, %v4687, %v3792
        %vm4690 = vcmask 932864
        %v4691 = vsel %vm4690, %v4689, %v3796
        %vm4692 = vcmask 949248
        %v4693 = vsel %vm4692, %v4691, %v3800
        %vm4694 = vcmask 965632
        %v4695 = vsel %vm4694, %v4693, %v3804
        %vm4696 = vcmask 982016
        %v4697 = vsel %vm4696, %v4695, %v3808
        %vm4698 = vcmask 998400
        %v4699 = vsel %vm4698, %v4697, %v3812
        %vm4700 = vcmask 1014784
        %v4701 = vsel %vm4700, %v4699, %v3816
        %vm4702 = vcmask 1031168
        %v4703 = vsel %vm4702, %v4701, %v3820
        %v4704 = vsel %vm4578, %v1978, %v3824
        %v4705 = vsel %vm4580, %v4704, %v3828
        %v4706 = vsel %vm4582, %v4705, %v3832
        %v4707 = vsel %vm4584, %v4706, %v3836
        %v4708 = vsel %vm4586, %v4707, %v3840
        %v4709 = vsel %vm4588, %v4708, %v3844
        %v4710 = vsel %vm4590, %v4709, %v3848
        %v4711 = vsel %vm4592, %v4710, %v3852
        %v4712 = vsel %vm4594, %v4711, %v3856
        %v4713 = vsel %vm4596, %v4712, %v3860
        %v4714 = vsel %vm4598, %v4713, %v3864
        %v4715 = vsel %vm4600, %v4714, %v3868
        %v4716 = vsel %vm4602, %v4715, %v3872
        %v4717 = vsel %vm4604, %v4716, %v3876
        %v4718 = vsel %vm4606, %v4717, %v3880
        %v4719 = vsel %vm4608, %v4718, %v3884
        %v4720 = vsel %vm4610, %v4719, %v3888
        %v4721 = vsel %vm4612, %v4720, %v3892
        %v4722 = vsel %vm4614, %v4721, %v3896
        %v4723 = vsel %vm4616, %v4722, %v3900
        %v4724 = vsel %vm4618, %v4723, %v3904
        %v4725 = vsel %vm4620, %v4724, %v3908
        %v4726 = vsel %vm4622, %v4725, %v3912
        %v4727 = vsel %vm4624, %v4726, %v3916
        %v4728 = vsel %vm4626, %v4727, %v3920
        %v4729 = vsel %vm4628, %v4728, %v3924
        %v4730 = vsel %vm4630, %v4729, %v3928
        %v4731 = vsel %vm4632, %v4730, %v3932
        %v4732 = vsel %vm4634, %v4731, %v3936
        %v4733 = vsel %vm4636, %v4732, %v3940
        %v4734 = vsel %vm4638, %v4733, %v3944
        %v4735 = vsel %vm4640, %v4734, %v3948
        %v4736 = vsel %vm4642, %v4735, %v3952
        %v4737 = vsel %vm4644, %v4736, %v3956
        %v4738 = vsel %vm4646, %v4737, %v3960
        %v4739 = vsel %vm4648, %v4738, %v3964
        %v4740 = vsel %vm4650, %v4739, %v3968
        %v4741 = vsel %vm4652, %v4740, %v3972
        %v4742 = vsel %vm4654, %v4741, %v3976
        %v4743 = vsel %vm4656, %v4742, %v3980
        %v4744 = vsel %vm4658, %v4743, %v3984
        %v4745 = vsel %vm4660, %v4744, %v3988
        %v4746 = vsel %vm4662, %v4745, %v3992
        %v4747 = vsel %vm4664, %v4746, %v3996
        %v4748 = vsel %vm4666, %v4747, %v4000
        %v4749 = vsel %vm4668, %v4748, %v4004
        %v4750 = vsel %vm4670, %v4749, %v4008
        %v4751 = vsel %vm4672, %v4750, %v4012
        %v4752 = vsel %vm4674, %v4751, %v4016
        %v4753 = vsel %vm4676, %v4752, %v4020
        %v4754 = vsel %vm4678, %v4753, %v4024
        %v4755 = vsel %vm4680, %v4754, %v4028
        %v4756 = vsel %vm4682, %v4755, %v4032
        %v4757 = vsel %vm4684, %v4756, %v4036
        %v4758 = vsel %vm4686, %v4757, %v4040
        %v4759 = vsel %vm4688, %v4758, %v4044
        %v4760 = vsel %vm4690, %v4759, %v4048
        %v4761 = vsel %vm4692, %v4760, %v4052
        %v4762 = vsel %vm4694, %v4761, %v4056
        %v4763 = vsel %vm4696, %v4762, %v4060
        %v4764 = vsel %vm4698, %v4763, %v4064
        %v4765 = vsel %vm4700, %v4764, %v4068
        %v4766 = vsel %vm4702, %v4765, %v4072
        %v4767 = vsel %vm4578, %v2522, %v4076
        %v4768 = vsel %vm4580, %v4767, %v4080
        %v4769 = vsel %vm4582, %v4768, %v4084
        %v4770 = vsel %vm4584, %v4769, %v4088
        %v4771 = vsel %vm4586, %v4770, %v4092
        %v4772 = vsel %vm4588, %v4771, %v4096
        %v4773 = vsel %vm4590, %v4772, %v4100
        %v4774 = vsel %vm4592, %v4773, %v4104
        %v4775 = vsel %vm4594, %v4774, %v4108
        %v4776 = vsel %vm4596, %v4775, %v4112
        %v4777 = vsel %vm4598, %v4776, %v4116
        %v4778 = vsel %vm4600, %v4777, %v4120
        %v4779 = vsel %vm4602, %v4778, %v4124
        %v4780 = vsel %vm4604, %v4779, %v4128
        %v4781 = vsel %vm4606, %v4780, %v4132
        %v4782 = vsel %vm4608, %v4781, %v4136
        %v4783 = vsel %vm4610, %v4782, %v4140
        %v4784 = vsel %vm4612, %v4783, %v4144
        %v4785 = vsel %vm4614, %v4784, %v4148
        %v4786 = vsel %vm4616, %v4785, %v4152
        %v4787 = vsel %vm4618, %v4786, %v4156
        %v4788 = vsel %vm4620, %v4787, %v4160
        %v4789 = vsel %vm4622, %v4788, %v4164
        %v4790 = vsel %vm4624, %v4789, %v4168
        %v4791 = vsel %vm4626, %v4790, %v4172
        %v4792 = vsel %vm4628, %v4791, %v4176
        %v4793 = vsel %vm4630, %v4792, %v4180
        %v4794 = vsel %vm4632, %v4793, %v4184
        %v4795 = vsel %vm4634, %v4794, %v4188
        %v4796 = vsel %vm4636, %v4795, %v4192
        %v4797 = vsel %vm4638, %v4796, %v4196
        %v4798 = vsel %vm4640, %v4797, %v4200
        %v4799 = vsel %vm4642, %v4798, %v4204
        %v4800 = vsel %vm4644, %v4799, %v4208
        %v4801 = vsel %vm4646, %v4800, %v4212
        %v4802 = vsel %vm4648, %v4801, %v4216
        %v4803 = vsel %vm4650, %v4802, %v4220
        %v4804 = vsel %vm4652, %v4803, %v4224
        %v4805 = vsel %vm4654, %v4804, %v4228
        %v4806 = vsel %vm4656, %v4805, %v4232
        %v4807 = vsel %vm4658, %v4806, %v4236
        %v4808 = vsel %vm4660, %v4807, %v4240
        %v4809 = vsel %vm4662, %v4808, %v4244
        %v4810 = vsel %vm4664, %v4809, %v4248
        %v4811 = vsel %vm4666, %v4810, %v4252
        %v4812 = vsel %vm4668, %v4811, %v4256
        %v4813 = vsel %vm4670, %v4812, %v4260
        %v4814 = vsel %vm4672, %v4813, %v4264
        %v4815 = vsel %vm4674, %v4814, %v4268
        %v4816 = vsel %vm4676, %v4815, %v4272
        %v4817 = vsel %vm4678, %v4816, %v4276
        %v4818 = vsel %vm4680, %v4817, %v4280
        %v4819 = vsel %vm4682, %v4818, %v4284
        %v4820 = vsel %vm4684, %v4819, %v4288
        %v4821 = vsel %vm4686, %v4820, %v4292
        %v4822 = vsel %vm4688, %v4821, %v4296
        %v4823 = vsel %vm4690, %v4822, %v4300
        %v4824 = vsel %vm4692, %v4823, %v4304
        %v4825 = vsel %vm4694, %v4824, %v4308
        %v4826 = vsel %vm4696, %v4825, %v4312
        %v4827 = vsel %vm4698, %v4826, %v4316
        %v4828 = vsel %vm4700, %v4827, %v4320
        %v4829 = vsel %vm4702, %v4828, %v4324
        %v4830 = vsel %vm4578, %v3066, %v4328
        %v4831 = vsel %vm4580, %v4830, %v4332
        %v4832 = vsel %vm4582, %v4831, %v4336
        %v4833 = vsel %vm4584, %v4832, %v4340
        %v4834 = vsel %vm4586, %v4833, %v4344
        %v4835 = vsel %vm4588, %v4834, %v4348
        %v4836 = vsel %vm4590, %v4835, %v4352
        %v4837 = vsel %vm4592, %v4836, %v4356
        %v4838 = vsel %vm4594, %v4837, %v4360
        %v4839 = vsel %vm4596, %v4838, %v4364
        %v4840 = vsel %vm4598, %v4839, %v4368
        %v4841 = vsel %vm4600, %v4840, %v4372
        %v4842 = vsel %vm4602, %v4841, %v4376
        %v4843 = vsel %vm4604, %v4842, %v4380
        %v4844 = vsel %vm4606, %v4843, %v4384
        %v4845 = vsel %vm4608, %v4844, %v4388
        %v4846 = vsel %vm4610, %v4845, %v4392
        %v4847 = vsel %vm4612, %v4846, %v4396
        %v4848 = vsel %vm4614, %v4847, %v4400
        %v4849 = vsel %vm4616, %v4848, %v4404
        %v4850 = vsel %vm4618, %v4849, %v4408
        %v4851 = vsel %vm4620, %v4850, %v4412
        %v4852 = vsel %vm4622, %v4851, %v4416
        %v4853 = vsel %vm4624, %v4852, %v4420
        %v4854 = vsel %vm4626, %v4853, %v4424
        %v4855 = vsel %vm4628, %v4854, %v4428
        %v4856 = vsel %vm4630, %v4855, %v4432
        %v4857 = vsel %vm4632, %v4856, %v4436
        %v4858 = vsel %vm4634, %v4857, %v4440
        %v4859 = vsel %vm4636, %v4858, %v4444
        %v4860 = vsel %vm4638, %v4859, %v4448
        %v4861 = vsel %vm4640, %v4860, %v4452
        %v4862 = vsel %vm4642, %v4861, %v4456
        %v4863 = vsel %vm4644, %v4862, %v4460
        %v4864 = vsel %vm4646, %v4863, %v4464
        %v4865 = vsel %vm4648, %v4864, %v4468
        %v4866 = vsel %vm4650, %v4865, %v4472
        %v4867 = vsel %vm4652, %v4866, %v4476
        %v4868 = vsel %vm4654, %v4867, %v4480
        %v4869 = vsel %vm4656, %v4868, %v4484
        %v4870 = vsel %vm4658, %v4869, %v4488
        %v4871 = vsel %vm4660, %v4870, %v4492
        %v4872 = vsel %vm4662, %v4871, %v4496
        %v4873 = vsel %vm4664, %v4872, %v4500
        %v4874 = vsel %vm4666, %v4873, %v4504
        %v4875 = vsel %vm4668, %v4874, %v4508
        %v4876 = vsel %vm4670, %v4875, %v4512
        %v4877 = vsel %vm4672, %v4876, %v4516
        %v4878 = vsel %vm4674, %v4877, %v4520
        %v4879 = vsel %vm4676, %v4878, %v4524
        %v4880 = vsel %vm4678, %v4879, %v4528
        %v4881 = vsel %vm4680, %v4880, %v4532
        %v4882 = vsel %vm4682, %v4881, %v4536
        %v4883 = vsel %vm4684, %v4882, %v4540
        %v4884 = vsel %vm4686, %v4883, %v4544
        %v4885 = vsel %vm4688, %v4884, %v4548
        %v4886 = vsel %vm4690, %v4885, %v4552
        %v4887 = vsel %vm4692, %v4886, %v4556
        %v4888 = vsel %vm4694, %v4887, %v4560
        %v4889 = vsel %vm4696, %v4888, %v4564
        %v4890 = vsel %vm4698, %v4889, %v4568
        %v4891 = vsel %vm4700, %v4890, %v4572
        %v4892 = vsel %vm4702, %v4891, %v4576
        %v4894 = vcombine.high %v184, %v184
        %v4896 = vlaneseq
        %v4897 = vshrl.u32 %v4896, 7
        %v4898 = vsub.s32 0, %v4897
        %v4899 = vrot.slane %v184, %v4898
        %4901 = vbcast.lane.b32.xlu0 %v4899, 256
        %v4902 = vpop.permute.xlu0 %4901
        %s4904 = sor.u32 256, 8
        %4905 = vbcast.lane.b32.xlu0 %v4899, %s4904
        %v4906 = vpop.permute.xlu0 %4905
        %s4908 = sor.u32 256, 16
        %4909 = vbcast.lane.b32.xlu0 %v4899, %s4908
        %v4910 = vpop.permute.xlu0 %4909
        %s4912 = sor.u32 256, 24
        %4913 = vbcast.lane.b32.xlu0 %v4899, %s4912
        %v4914 = vpop.permute.xlu0 %4913
        %s4916 = sor.u32 256, 32
        %4917 = vbcast.lane.b32.xlu0 %v4899, %s4916
        %v4918 = vpop.permute.xlu0 %4917
        %s4920 = sor.u32 256, 40
        %4921 = vbcast.lane.b32.xlu0 %v4899, %s4920
        %v4922 = vpop.permute.xlu0 %4921
        %s4924 = sor.u32 256, 48
        %4925 = vbcast.lane.b32.xlu0 %v4899, %s4924
        %v4926 = vpop.permute.xlu0 %4925
        %s4928 = sor.u32 256, 56
        %4929 = vbcast.lane.b32.xlu0 %v4899, %s4928
        %v4930 = vpop.permute.xlu0 %4929
        %s4932 = sor.u32 256, 64
        %4933 = vbcast.lane.b32.xlu0 %v4899, %s4932
        %v4934 = vpop.permute.xlu0 %4933
        %s4936 = sor.u32 256, 72
        %4937 = vbcast.lane.b32.xlu0 %v4899, %s4936
        %v4938 = vpop.permute.xlu0 %4937
        %s4940 = sor.u32 256, 80
        %4941 = vbcast.lane.b32.xlu0 %v4899, %s4940
        %v4942 = vpop.permute.xlu0 %4941
        %s4944 = sor.u32 256, 88
        %4945 = vbcast.lane.b32.xlu0 %v4899, %s4944
        %v4946 = vpop.permute.xlu0 %4945
        %s4948 = sor.u32 256, 96
        %4949 = vbcast.lane.b32.xlu0 %v4899, %s4948
        %v4950 = vpop.permute.xlu0 %4949
        %s4952 = sor.u32 256, 104
        %4953 = vbcast.lane.b32.xlu0 %v4899, %s4952
        %v4954 = vpop.permute.xlu0 %4953
        %s4956 = sor.u32 256, 112
        %4957 = vbcast.lane.b32.xlu0 %v4899, %s4956
        %v4958 = vpop.permute.xlu0 %4957
        %s4960 = sor.u32 256, 120
        %4961 = vbcast.lane.b32.xlu0 %v4899, %s4960
        %v4962 = vpop.permute.xlu0 %4961
        %v4963 = vlaneseq
        %v4964 = vshrl.u32 %v4963, 7
        %v4965 = vsub.s32 0, %v4964
        %v4966 = vrot.slane %v4894, %v4965
        %4968 = vbcast.lane.b32.xlu0 %v4966, 256
        %v4969 = vpop.permute.xlu0 %4968
        %s4971 = sor.u32 256, 8
        %4972 = vbcast.lane.b32.xlu0 %v4966, %s4971
        %v4973 = vpop.permute.xlu0 %4972
        %s4975 = sor.u32 256, 16
        %4976 = vbcast.lane.b32.xlu0 %v4966, %s4975
        %v4977 = vpop.permute.xlu0 %4976
        %s4979 = sor.u32 256, 24
        %4980 = vbcast.lane.b32.xlu0 %v4966, %s4979
        %v4981 = vpop.permute.xlu0 %4980
        %s4983 = sor.u32 256, 32
        %4984 = vbcast.lane.b32.xlu0 %v4966, %s4983
        %v4985 = vpop.permute.xlu0 %4984
        %s4987 = sor.u32 256, 40
        %4988 = vbcast.lane.b32.xlu0 %v4966, %s4987
        %v4989 = vpop.permute.xlu0 %4988
        %s4991 = sor.u32 256, 48
        %4992 = vbcast.lane.b32.xlu0 %v4966, %s4991
        %v4993 = vpop.permute.xlu0 %4992
        %s4995 = sor.u32 256, 56
        %4996 = vbcast.lane.b32.xlu0 %v4966, %s4995
        %v4997 = vpop.permute.xlu0 %4996
        %s4999 = sor.u32 256, 64
        %5000 = vbcast.lane.b32.xlu0 %v4966, %s4999
        %v5001 = vpop.permute.xlu0 %5000
        %s5003 = sor.u32 256, 72
        %5004 = vbcast.lane.b32.xlu0 %v4966, %s5003
        %v5005 = vpop.permute.xlu0 %5004
        %s5007 = sor.u32 256, 80
        %5008 = vbcast.lane.b32.xlu0 %v4966, %s5007
        %v5009 = vpop.permute.xlu0 %5008
        %s5011 = sor.u32 256, 88
        %5012 = vbcast.lane.b32.xlu0 %v4966, %s5011
        %v5013 = vpop.permute.xlu0 %5012
        %s5015 = sor.u32 256, 96
        %5016 = vbcast.lane.b32.xlu0 %v4966, %s5015
        %v5017 = vpop.permute.xlu0 %5016
        %s5019 = sor.u32 256, 104
        %5020 = vbcast.lane.b32.xlu0 %v4966, %s5019
        %v5021 = vpop.permute.xlu0 %5020
        %s5023 = sor.u32 256, 112
        %5024 = vbcast.lane.b32.xlu0 %v4966, %s5023
        %v5025 = vpop.permute.xlu0 %5024
        %s5027 = sor.u32 256, 120
        %5028 = vbcast.lane.b32.xlu0 %v4966, %s5027
        %v5029 = vpop.permute.xlu0 %5028
        %v5030 = vlaneseq
        %v5031 = vshrl.u32 %v5030, 7
        %v5032 = vsub.s32 1, %v5031
        %v5033 = vrot.slane %v184, %v5032
        %5035 = vbcast.lane.b32.xlu0 %v5033, 256
        %v5036 = vpop.permute.xlu0 %5035
        %s5038 = sor.u32 256, 8
        %5039 = vbcast.lane.b32.xlu0 %v5033, %s5038
        %v5040 = vpop.permute.xlu0 %5039
        %s5042 = sor.u32 256, 16
        %5043 = vbcast.lane.b32.xlu0 %v5033, %s5042
        %v5044 = vpop.permute.xlu0 %5043
        %s5046 = sor.u32 256, 24
        %5047 = vbcast.lane.b32.xlu0 %v5033, %s5046
        %v5048 = vpop.permute.xlu0 %5047
        %s5050 = sor.u32 256, 32
        %5051 = vbcast.lane.b32.xlu0 %v5033, %s5050
        %v5052 = vpop.permute.xlu0 %5051
        %s5054 = sor.u32 256, 40
        %5055 = vbcast.lane.b32.xlu0 %v5033, %s5054
        %v5056 = vpop.permute.xlu0 %5055
        %s5058 = sor.u32 256, 48
        %5059 = vbcast.lane.b32.xlu0 %v5033, %s5058
        %v5060 = vpop.permute.xlu0 %5059
        %s5062 = sor.u32 256, 56
        %5063 = vbcast.lane.b32.xlu0 %v5033, %s5062
        %v5064 = vpop.permute.xlu0 %5063
        %s5066 = sor.u32 256, 64
        %5067 = vbcast.lane.b32.xlu0 %v5033, %s5066
        %v5068 = vpop.permute.xlu0 %5067
        %s5070 = sor.u32 256, 72
        %5071 = vbcast.lane.b32.xlu0 %v5033, %s5070
        %v5072 = vpop.permute.xlu0 %5071
        %s5074 = sor.u32 256, 80
        %5075 = vbcast.lane.b32.xlu0 %v5033, %s5074
        %v5076 = vpop.permute.xlu0 %5075
        %s5078 = sor.u32 256, 88
        %5079 = vbcast.lane.b32.xlu0 %v5033, %s5078
        %v5080 = vpop.permute.xlu0 %5079
        %s5082 = sor.u32 256, 96
        %5083 = vbcast.lane.b32.xlu0 %v5033, %s5082
        %v5084 = vpop.permute.xlu0 %5083
        %s5086 = sor.u32 256, 104
        %5087 = vbcast.lane.b32.xlu0 %v5033, %s5086
        %v5088 = vpop.permute.xlu0 %5087
        %s5090 = sor.u32 256, 112
        %5091 = vbcast.lane.b32.xlu0 %v5033, %s5090
        %v5092 = vpop.permute.xlu0 %5091
        %s5094 = sor.u32 256, 120
        %5095 = vbcast.lane.b32.xlu0 %v5033, %s5094
        %v5096 = vpop.permute.xlu0 %5095
        %v5097 = vlaneseq
        %v5098 = vshrl.u32 %v5097, 7
        %v5099 = vsub.s32 1, %v5098
        %v5100 = vrot.slane %v4894, %v5099
        %5102 = vbcast.lane.b32.xlu0 %v5100, 256
        %v5103 = vpop.permute.xlu0 %5102
        %s5105 = sor.u32 256, 8
        %5106 = vbcast.lane.b32.xlu0 %v5100, %s5105
        %v5107 = vpop.permute.xlu0 %5106
        %s5109 = sor.u32 256, 16
        %5110 = vbcast.lane.b32.xlu0 %v5100, %s5109
        %v5111 = vpop.permute.xlu0 %5110
        %s5113 = sor.u32 256, 24
        %5114 = vbcast.lane.b32.xlu0 %v5100, %s5113
        %v5115 = vpop.permute.xlu0 %5114
        %s5117 = sor.u32 256, 32
        %5118 = vbcast.lane.b32.xlu0 %v5100, %s5117
        %v5119 = vpop.permute.xlu0 %5118
        %s5121 = sor.u32 256, 40
        %5122 = vbcast.lane.b32.xlu0 %v5100, %s5121
        %v5123 = vpop.permute.xlu0 %5122
        %s5125 = sor.u32 256, 48
        %5126 = vbcast.lane.b32.xlu0 %v5100, %s5125
        %v5127 = vpop.permute.xlu0 %5126
        %s5129 = sor.u32 256, 56
        %5130 = vbcast.lane.b32.xlu0 %v5100, %s5129
        %v5131 = vpop.permute.xlu0 %5130
        %s5133 = sor.u32 256, 64
        %5134 = vbcast.lane.b32.xlu0 %v5100, %s5133
        %v5135 = vpop.permute.xlu0 %5134
        %s5137 = sor.u32 256, 72
        %5138 = vbcast.lane.b32.xlu0 %v5100, %s5137
        %v5139 = vpop.permute.xlu0 %5138
        %s5141 = sor.u32 256, 80
        %5142 = vbcast.lane.b32.xlu0 %v5100, %s5141
        %v5143 = vpop.permute.xlu0 %5142
        %s5145 = sor.u32 256, 88
        %5146 = vbcast.lane.b32.xlu0 %v5100, %s5145
        %v5147 = vpop.permute.xlu0 %5146
        %s5149 = sor.u32 256, 96
        %5150 = vbcast.lane.b32.xlu0 %v5100, %s5149
        %v5151 = vpop.permute.xlu0 %5150
        %s5153 = sor.u32 256, 104
        %5154 = vbcast.lane.b32.xlu0 %v5100, %s5153
        %v5155 = vpop.permute.xlu0 %5154
        %s5157 = sor.u32 256, 112
        %5158 = vbcast.lane.b32.xlu0 %v5100, %s5157
        %v5159 = vpop.permute.xlu0 %5158
        %s5161 = sor.u32 256, 120
        %5162 = vbcast.lane.b32.xlu0 %v5100, %s5161
        %v5163 = vpop.permute.xlu0 %5162
        %v5164 = vlaneseq
        %v5165 = vshrl.u32 %v5164, 7
        %v5166 = vsub.s32 2, %v5165
        %v5167 = vrot.slane %v184, %v5166
        %5169 = vbcast.lane.b32.xlu0 %v5167, 256
        %v5170 = vpop.permute.xlu0 %5169
        %s5172 = sor.u32 256, 8
        %5173 = vbcast.lane.b32.xlu0 %v5167, %s5172
        %v5174 = vpop.permute.xlu0 %5173
        %s5176 = sor.u32 256, 16
        %5177 = vbcast.lane.b32.xlu0 %v5167, %s5176
        %v5178 = vpop.permute.xlu0 %5177
        %s5180 = sor.u32 256, 24
        %5181 = vbcast.lane.b32.xlu0 %v5167, %s5180
        %v5182 = vpop.permute.xlu0 %5181
        %s5184 = sor.u32 256, 32
        %5185 = vbcast.lane.b32.xlu0 %v5167, %s5184
        %v5186 = vpop.permute.xlu0 %5185
        %s5188 = sor.u32 256, 40
        %5189 = vbcast.lane.b32.xlu0 %v5167, %s5188
        %v5190 = vpop.permute.xlu0 %5189
        %s5192 = sor.u32 256, 48
        %5193 = vbcast.lane.b32.xlu0 %v5167, %s5192
        %v5194 = vpop.permute.xlu0 %5193
        %s5196 = sor.u32 256, 56
        %5197 = vbcast.lane.b32.xlu0 %v5167, %s5196
        %v5198 = vpop.permute.xlu0 %5197
        %s5200 = sor.u32 256, 64
        %5201 = vbcast.lane.b32.xlu0 %v5167, %s5200
        %v5202 = vpop.permute.xlu0 %5201
        %s5204 = sor.u32 256, 72
        %5205 = vbcast.lane.b32.xlu0 %v5167, %s5204
        %v5206 = vpop.permute.xlu0 %5205
        %s5208 = sor.u32 256, 80
        %5209 = vbcast.lane.b32.xlu0 %v5167, %s5208
        %v5210 = vpop.permute.xlu0 %5209
        %s5212 = sor.u32 256, 88
        %5213 = vbcast.lane.b32.xlu0 %v5167, %s5212
        %v5214 = vpop.permute.xlu0 %5213
        %s5216 = sor.u32 256, 96
        %5217 = vbcast.lane.b32.xlu0 %v5167, %s5216
        %v5218 = vpop.permute.xlu0 %5217
        %s5220 = sor.u32 256, 104
        %5221 = vbcast.lane.b32.xlu0 %v5167, %s5220
        %v5222 = vpop.permute.xlu0 %5221
        %s5224 = sor.u32 256, 112
        %5225 = vbcast.lane.b32.xlu0 %v5167, %s5224
        %v5226 = vpop.permute.xlu0 %5225
        %s5228 = sor.u32 256, 120
        %5229 = vbcast.lane.b32.xlu0 %v5167, %s5228
        %v5230 = vpop.permute.xlu0 %5229
        %v5231 = vlaneseq
        %v5232 = vshrl.u32 %v5231, 7
        %v5233 = vsub.s32 2, %v5232
        %v5234 = vrot.slane %v4894, %v5233
        %5236 = vbcast.lane.b32.xlu0 %v5234, 256
        %v5237 = vpop.permute.xlu0 %5236
        %s5239 = sor.u32 256, 8
        %5240 = vbcast.lane.b32.xlu0 %v5234, %s5239
        %v5241 = vpop.permute.xlu0 %5240
        %s5243 = sor.u32 256, 16
        %5244 = vbcast.lane.b32.xlu0 %v5234, %s5243
        %v5245 = vpop.permute.xlu0 %5244
        %s5247 = sor.u32 256, 24
        %5248 = vbcast.lane.b32.xlu0 %v5234, %s5247
        %v5249 = vpop.permute.xlu0 %5248
        %s5251 = sor.u32 256, 32
        %5252 = vbcast.lane.b32.xlu0 %v5234, %s5251
        %v5253 = vpop.permute.xlu0 %5252
        %s5255 = sor.u32 256, 40
        %5256 = vbcast.lane.b32.xlu0 %v5234, %s5255
        %v5257 = vpop.permute.xlu0 %5256
        %s5259 = sor.u32 256, 48
        %5260 = vbcast.lane.b32.xlu0 %v5234, %s5259
        %v5261 = vpop.permute.xlu0 %5260
        %s5263 = sor.u32 256, 56
        %5264 = vbcast.lane.b32.xlu0 %v5234, %s5263
        %v5265 = vpop.permute.xlu0 %5264
        %s5267 = sor.u32 256, 64
        %5268 = vbcast.lane.b32.xlu0 %v5234, %s5267
        %v5269 = vpop.permute.xlu0 %5268
        %s5271 = sor.u32 256, 72
        %5272 = vbcast.lane.b32.xlu0 %v5234, %s5271
        %v5273 = vpop.permute.xlu0 %5272
        %s5275 = sor.u32 256, 80
        %5276 = vbcast.lane.b32.xlu0 %v5234, %s5275
        %v5277 = vpop.permute.xlu0 %5276
        %s5279 = sor.u32 256, 88
        %5280 = vbcast.lane.b32.xlu0 %v5234, %s5279
        %v5281 = vpop.permute.xlu0 %5280
        %s5283 = sor.u32 256, 96
        %5284 = vbcast.lane.b32.xlu0 %v5234, %s5283
        %v5285 = vpop.permute.xlu0 %5284
        %s5287 = sor.u32 256, 104
        %5288 = vbcast.lane.b32.xlu0 %v5234, %s5287
        %v5289 = vpop.permute.xlu0 %5288
        %s5291 = sor.u32 256, 112
        %5292 = vbcast.lane.b32.xlu0 %v5234, %s5291
        %v5293 = vpop.permute.xlu0 %5292
        %s5295 = sor.u32 256, 120
        %5296 = vbcast.lane.b32.xlu0 %v5234, %s5295
        %v5297 = vpop.permute.xlu0 %5296
        %v5298 = vlaneseq
        %v5299 = vshrl.u32 %v5298, 7
        %v5300 = vsub.s32 3, %v5299
        %v5301 = vrot.slane %v184, %v5300
        %5303 = vbcast.lane.b32.xlu0 %v5301, 256
        %v5304 = vpop.permute.xlu0 %5303
        %s5306 = sor.u32 256, 8
        %5307 = vbcast.lane.b32.xlu0 %v5301, %s5306
        %v5308 = vpop.permute.xlu0 %5307
        %s5310 = sor.u32 256, 16
        %5311 = vbcast.lane.b32.xlu0 %v5301, %s5310
        %v5312 = vpop.permute.xlu0 %5311
        %s5314 = sor.u32 256, 24
        %5315 = vbcast.lane.b32.xlu0 %v5301, %s5314
        %v5316 = vpop.permute.xlu0 %5315
        %s5318 = sor.u32 256, 32
        %5319 = vbcast.lane.b32.xlu0 %v5301, %s5318
        %v5320 = vpop.permute.xlu0 %5319
        %s5322 = sor.u32 256, 40
        %5323 = vbcast.lane.b32.xlu0 %v5301, %s5322
        %v5324 = vpop.permute.xlu0 %5323
        %s5326 = sor.u32 256, 48
        %5327 = vbcast.lane.b32.xlu0 %v5301, %s5326
        %v5328 = vpop.permute.xlu0 %5327
        %s5330 = sor.u32 256, 56
        %5331 = vbcast.lane.b32.xlu0 %v5301, %s5330
        %v5332 = vpop.permute.xlu0 %5331
        %s5334 = sor.u32 256, 64
        %5335 = vbcast.lane.b32.xlu0 %v5301, %s5334
        %v5336 = vpop.permute.xlu0 %5335
        %s5338 = sor.u32 256, 72
        %5339 = vbcast.lane.b32.xlu0 %v5301, %s5338
        %v5340 = vpop.permute.xlu0 %5339
        %s5342 = sor.u32 256, 80
        %5343 = vbcast.lane.b32.xlu0 %v5301, %s5342
        %v5344 = vpop.permute.xlu0 %5343
        %s5346 = sor.u32 256, 88
        %5347 = vbcast.lane.b32.xlu0 %v5301, %s5346
        %v5348 = vpop.permute.xlu0 %5347
        %s5350 = sor.u32 256, 96
        %5351 = vbcast.lane.b32.xlu0 %v5301, %s5350
        %v5352 = vpop.permute.xlu0 %5351
        %s5354 = sor.u32 256, 104
        %5355 = vbcast.lane.b32.xlu0 %v5301, %s5354
        %v5356 = vpop.permute.xlu0 %5355
        %s5358 = sor.u32 256, 112
        %5359 = vbcast.lane.b32.xlu0 %v5301, %s5358
        %v5360 = vpop.permute.xlu0 %5359
        %s5362 = sor.u32 256, 120
        %5363 = vbcast.lane.b32.xlu0 %v5301, %s5362
        %v5364 = vpop.permute.xlu0 %5363
        %v5365 = vlaneseq
        %v5366 = vshrl.u32 %v5365, 7
        %v5367 = vsub.s32 3, %v5366
        %v5368 = vrot.slane %v4894, %v5367
        %5370 = vbcast.lane.b32.xlu0 %v5368, 256
        %v5371 = vpop.permute.xlu0 %5370
        %s5373 = sor.u32 256, 8
        %5374 = vbcast.lane.b32.xlu0 %v5368, %s5373
        %v5375 = vpop.permute.xlu0 %5374
        %s5377 = sor.u32 256, 16
        %5378 = vbcast.lane.b32.xlu0 %v5368, %s5377
        %v5379 = vpop.permute.xlu0 %5378
        %s5381 = sor.u32 256, 24
        %5382 = vbcast.lane.b32.xlu0 %v5368, %s5381
        %v5383 = vpop.permute.xlu0 %5382
        %s5385 = sor.u32 256, 32
        %5386 = vbcast.lane.b32.xlu0 %v5368, %s5385
        %v5387 = vpop.permute.xlu0 %5386
        %s5389 = sor.u32 256, 40
        %5390 = vbcast.lane.b32.xlu0 %v5368, %s5389
        %v5391 = vpop.permute.xlu0 %5390
        %s5393 = sor.u32 256, 48
        %5394 = vbcast.lane.b32.xlu0 %v5368, %s5393
        %v5395 = vpop.permute.xlu0 %5394
        %s5397 = sor.u32 256, 56
        %5398 = vbcast.lane.b32.xlu0 %v5368, %s5397
        %v5399 = vpop.permute.xlu0 %5398
        %s5401 = sor.u32 256, 64
        %5402 = vbcast.lane.b32.xlu0 %v5368, %s5401
        %v5403 = vpop.permute.xlu0 %5402
        %s5405 = sor.u32 256, 72
        %5406 = vbcast.lane.b32.xlu0 %v5368, %s5405
        %v5407 = vpop.permute.xlu0 %5406
        %s5409 = sor.u32 256, 80
        %5410 = vbcast.lane.b32.xlu0 %v5368, %s5409
        %v5411 = vpop.permute.xlu0 %5410
        %s5413 = sor.u32 256, 88
        %5414 = vbcast.lane.b32.xlu0 %v5368, %s5413
        %v5415 = vpop.permute.xlu0 %5414
        %s5417 = sor.u32 256, 96
        %5418 = vbcast.lane.b32.xlu0 %v5368, %s5417
        %v5419 = vpop.permute.xlu0 %5418
        %s5421 = sor.u32 256, 104
        %5422 = vbcast.lane.b32.xlu0 %v5368, %s5421
        %v5423 = vpop.permute.xlu0 %5422
        %s5425 = sor.u32 256, 112
        %5426 = vbcast.lane.b32.xlu0 %v5368, %s5425
        %v5427 = vpop.permute.xlu0 %5426
        %s5429 = sor.u32 256, 120
        %5430 = vbcast.lane.b32.xlu0 %v5368, %s5429
        %v5431 = vpop.permute.xlu0 %5430
        %v5433 = vcombine.high %v186, %v186
        %v5435 = vlaneseq
        %v5436 = vshrl.u32 %v5435, 7
        %v5437 = vsub.s32 0, %v5436
        %v5438 = vrot.slane %v186, %v5437
        %5440 = vbcast.lane.b32.xlu0 %v5438, 256
        %v5441 = vpop.permute.xlu0 %5440
        %s5443 = sor.u32 256, 8
        %5444 = vbcast.lane.b32.xlu0 %v5438, %s5443
        %v5445 = vpop.permute.xlu0 %5444
        %s5447 = sor.u32 256, 16
        %5448 = vbcast.lane.b32.xlu0 %v5438, %s5447
        %v5449 = vpop.permute.xlu0 %5448
        %s5451 = sor.u32 256, 24
        %5452 = vbcast.lane.b32.xlu0 %v5438, %s5451
        %v5453 = vpop.permute.xlu0 %5452
        %s5455 = sor.u32 256, 32
        %5456 = vbcast.lane.b32.xlu0 %v5438, %s5455
        %v5457 = vpop.permute.xlu0 %5456
        %s5459 = sor.u32 256, 40
        %5460 = vbcast.lane.b32.xlu0 %v5438, %s5459
        %v5461 = vpop.permute.xlu0 %5460
        %s5463 = sor.u32 256, 48
        %5464 = vbcast.lane.b32.xlu0 %v5438, %s5463
        %v5465 = vpop.permute.xlu0 %5464
        %s5467 = sor.u32 256, 56
        %5468 = vbcast.lane.b32.xlu0 %v5438, %s5467
        %v5469 = vpop.permute.xlu0 %5468
        %s5471 = sor.u32 256, 64
        %5472 = vbcast.lane.b32.xlu0 %v5438, %s5471
        %v5473 = vpop.permute.xlu0 %5472
        %s5475 = sor.u32 256, 72
        %5476 = vbcast.lane.b32.xlu0 %v5438, %s5475
        %v5477 = vpop.permute.xlu0 %5476
        %s5479 = sor.u32 256, 80
        %5480 = vbcast.lane.b32.xlu0 %v5438, %s5479
        %v5481 = vpop.permute.xlu0 %5480
        %s5483 = sor.u32 256, 88
        %5484 = vbcast.lane.b32.xlu0 %v5438, %s5483
        %v5485 = vpop.permute.xlu0 %5484
        %s5487 = sor.u32 256, 96
        %5488 = vbcast.lane.b32.xlu0 %v5438, %s5487
        %v5489 = vpop.permute.xlu0 %5488
        %s5491 = sor.u32 256, 104
        %5492 = vbcast.lane.b32.xlu0 %v5438, %s5491
        %v5493 = vpop.permute.xlu0 %5492
        %s5495 = sor.u32 256, 112
        %5496 = vbcast.lane.b32.xlu0 %v5438, %s5495
        %v5497 = vpop.permute.xlu0 %5496
        %s5499 = sor.u32 256, 120
        %5500 = vbcast.lane.b32.xlu0 %v5438, %s5499
        %v5501 = vpop.permute.xlu0 %5500
        %v5502 = vlaneseq
        %v5503 = vshrl.u32 %v5502, 7
        %v5504 = vsub.s32 0, %v5503
        %v5505 = vrot.slane %v5433, %v5504
        %5507 = vbcast.lane.b32.xlu0 %v5505, 256
        %v5508 = vpop.permute.xlu0 %5507
        %s5510 = sor.u32 256, 8
        %5511 = vbcast.lane.b32.xlu0 %v5505, %s5510
        %v5512 = vpop.permute.xlu0 %5511
        %s5514 = sor.u32 256, 16
        %5515 = vbcast.lane.b32.xlu0 %v5505, %s5514
        %v5516 = vpop.permute.xlu0 %5515
        %s5518 = sor.u32 256, 24
        %5519 = vbcast.lane.b32.xlu0 %v5505, %s5518
        %v5520 = vpop.permute.xlu0 %5519
        %s5522 = sor.u32 256, 32
        %5523 = vbcast.lane.b32.xlu0 %v5505, %s5522
        %v5524 = vpop.permute.xlu0 %5523
        %s5526 = sor.u32 256, 40
        %5527 = vbcast.lane.b32.xlu0 %v5505, %s5526
        %v5528 = vpop.permute.xlu0 %5527
        %s5530 = sor.u32 256, 48
        %5531 = vbcast.lane.b32.xlu0 %v5505, %s5530
        %v5532 = vpop.permute.xlu0 %5531
        %s5534 = sor.u32 256, 56
        %5535 = vbcast.lane.b32.xlu0 %v5505, %s5534
        %v5536 = vpop.permute.xlu0 %5535
        %s5538 = sor.u32 256, 64
        %5539 = vbcast.lane.b32.xlu0 %v5505, %s5538
        %v5540 = vpop.permute.xlu0 %5539
        %s5542 = sor.u32 256, 72
        %5543 = vbcast.lane.b32.xlu0 %v5505, %s5542
        %v5544 = vpop.permute.xlu0 %5543
        %s5546 = sor.u32 256, 80
        %5547 = vbcast.lane.b32.xlu0 %v5505, %s5546
        %v5548 = vpop.permute.xlu0 %5547
        %s5550 = sor.u32 256, 88
        %5551 = vbcast.lane.b32.xlu0 %v5505, %s5550
        %v5552 = vpop.permute.xlu0 %5551
        %s5554 = sor.u32 256, 96
        %5555 = vbcast.lane.b32.xlu0 %v5505, %s5554
        %v5556 = vpop.permute.xlu0 %5555
        %s5558 = sor.u32 256, 104
        %5559 = vbcast.lane.b32.xlu0 %v5505, %s5558
        %v5560 = vpop.permute.xlu0 %5559
        %s5562 = sor.u32 256, 112
        %5563 = vbcast.lane.b32.xlu0 %v5505, %s5562
        %v5564 = vpop.permute.xlu0 %5563
        %s5566 = sor.u32 256, 120
        %5567 = vbcast.lane.b32.xlu0 %v5505, %s5566
        %v5568 = vpop.permute.xlu0 %5567
        %v5569 = vlaneseq
        %v5570 = vshrl.u32 %v5569, 7
        %v5571 = vsub.s32 1, %v5570
        %v5572 = vrot.slane %v186, %v5571
        %5574 = vbcast.lane.b32.xlu0 %v5572, 256
        %v5575 = vpop.permute.xlu0 %5574
        %s5577 = sor.u32 256, 8
        %5578 = vbcast.lane.b32.xlu0 %v5572, %s5577
        %v5579 = vpop.permute.xlu0 %5578
        %s5581 = sor.u32 256, 16
        %5582 = vbcast.lane.b32.xlu0 %v5572, %s5581
        %v5583 = vpop.permute.xlu0 %5582
        %s5585 = sor.u32 256, 24
        %5586 = vbcast.lane.b32.xlu0 %v5572, %s5585
        %v5587 = vpop.permute.xlu0 %5586
        %s5589 = sor.u32 256, 32
        %5590 = vbcast.lane.b32.xlu0 %v5572, %s5589
        %v5591 = vpop.permute.xlu0 %5590
        %s5593 = sor.u32 256, 40
        %5594 = vbcast.lane.b32.xlu0 %v5572, %s5593
        %v5595 = vpop.permute.xlu0 %5594
        %s5597 = sor.u32 256, 48
        %5598 = vbcast.lane.b32.xlu0 %v5572, %s5597
        %v5599 = vpop.permute.xlu0 %5598
        %s5601 = sor.u32 256, 56
        %5602 = vbcast.lane.b32.xlu0 %v5572, %s5601
        %v5603 = vpop.permute.xlu0 %5602
        %s5605 = sor.u32 256, 64
        %5606 = vbcast.lane.b32.xlu0 %v5572, %s5605
        %v5607 = vpop.permute.xlu0 %5606
        %s5609 = sor.u32 256, 72
        %5610 = vbcast.lane.b32.xlu0 %v5572, %s5609
        %v5611 = vpop.permute.xlu0 %5610
        %s5613 = sor.u32 256, 80
        %5614 = vbcast.lane.b32.xlu0 %v5572, %s5613
        %v5615 = vpop.permute.xlu0 %5614
        %s5617 = sor.u32 256, 88
        %5618 = vbcast.lane.b32.xlu0 %v5572, %s5617
        %v5619 = vpop.permute.xlu0 %5618
        %s5621 = sor.u32 256, 96
        %5622 = vbcast.lane.b32.xlu0 %v5572, %s5621
        %v5623 = vpop.permute.xlu0 %5622
        %s5625 = sor.u32 256, 104
        %5626 = vbcast.lane.b32.xlu0 %v5572, %s5625
        %v5627 = vpop.permute.xlu0 %5626
        %s5629 = sor.u32 256, 112
        %5630 = vbcast.lane.b32.xlu0 %v5572, %s5629
        %v5631 = vpop.permute.xlu0 %5630
        %s5633 = sor.u32 256, 120
        %5634 = vbcast.lane.b32.xlu0 %v5572, %s5633
        %v5635 = vpop.permute.xlu0 %5634
        %v5636 = vlaneseq
        %v5637 = vshrl.u32 %v5636, 7
        %v5638 = vsub.s32 1, %v5637
        %v5639 = vrot.slane %v5433, %v5638
        %5641 = vbcast.lane.b32.xlu0 %v5639, 256
        %v5642 = vpop.permute.xlu0 %5641
        %s5644 = sor.u32 256, 8
        %5645 = vbcast.lane.b32.xlu0 %v5639, %s5644
        %v5646 = vpop.permute.xlu0 %5645
        %s5648 = sor.u32 256, 16
        %5649 = vbcast.lane.b32.xlu0 %v5639, %s5648
        %v5650 = vpop.permute.xlu0 %5649
        %s5652 = sor.u32 256, 24
        %5653 = vbcast.lane.b32.xlu0 %v5639, %s5652
        %v5654 = vpop.permute.xlu0 %5653
        %s5656 = sor.u32 256, 32
        %5657 = vbcast.lane.b32.xlu0 %v5639, %s5656
        %v5658 = vpop.permute.xlu0 %5657
        %s5660 = sor.u32 256, 40
        %5661 = vbcast.lane.b32.xlu0 %v5639, %s5660
        %v5662 = vpop.permute.xlu0 %5661
        %s5664 = sor.u32 256, 48
        %5665 = vbcast.lane.b32.xlu0 %v5639, %s5664
        %v5666 = vpop.permute.xlu0 %5665
        %s5668 = sor.u32 256, 56
        %5669 = vbcast.lane.b32.xlu0 %v5639, %s5668
        %v5670 = vpop.permute.xlu0 %5669
        %s5672 = sor.u32 256, 64
        %5673 = vbcast.lane.b32.xlu0 %v5639, %s5672
        %v5674 = vpop.permute.xlu0 %5673
        %s5676 = sor.u32 256, 72
        %5677 = vbcast.lane.b32.xlu0 %v5639, %s5676
        %v5678 = vpop.permute.xlu0 %5677
        %s5680 = sor.u32 256, 80
        %5681 = vbcast.lane.b32.xlu0 %v5639, %s5680
        %v5682 = vpop.permute.xlu0 %5681
        %s5684 = sor.u32 256, 88
        %5685 = vbcast.lane.b32.xlu0 %v5639, %s5684
        %v5686 = vpop.permute.xlu0 %5685
        %s5688 = sor.u32 256, 96
        %5689 = vbcast.lane.b32.xlu0 %v5639, %s5688
        %v5690 = vpop.permute.xlu0 %5689
        %s5692 = sor.u32 256, 104
        %5693 = vbcast.lane.b32.xlu0 %v5639, %s5692
        %v5694 = vpop.permute.xlu0 %5693
        %s5696 = sor.u32 256, 112
        %5697 = vbcast.lane.b32.xlu0 %v5639, %s5696
        %v5698 = vpop.permute.xlu0 %5697
        %s5700 = sor.u32 256, 120
        %5701 = vbcast.lane.b32.xlu0 %v5639, %s5700
        %v5702 = vpop.permute.xlu0 %5701
        %v5703 = vlaneseq
        %v5704 = vshrl.u32 %v5703, 7
        %v5705 = vsub.s32 2, %v5704
        %v5706 = vrot.slane %v186, %v5705
        %5708 = vbcast.lane.b32.xlu0 %v5706, 256
        %v5709 = vpop.permute.xlu0 %5708
        %s5711 = sor.u32 256, 8
        %5712 = vbcast.lane.b32.xlu0 %v5706, %s5711
        %v5713 = vpop.permute.xlu0 %5712
        %s5715 = sor.u32 256, 16
        %5716 = vbcast.lane.b32.xlu0 %v5706, %s5715
        %v5717 = vpop.permute.xlu0 %5716
        %s5719 = sor.u32 256, 24
        %5720 = vbcast.lane.b32.xlu0 %v5706, %s5719
        %v5721 = vpop.permute.xlu0 %5720
        %s5723 = sor.u32 256, 32
        %5724 = vbcast.lane.b32.xlu0 %v5706, %s5723
        %v5725 = vpop.permute.xlu0 %5724
        %s5727 = sor.u32 256, 40
        %5728 = vbcast.lane.b32.xlu0 %v5706, %s5727
        %v5729 = vpop.permute.xlu0 %5728
        %s5731 = sor.u32 256, 48
        %5732 = vbcast.lane.b32.xlu0 %v5706, %s5731
        %v5733 = vpop.permute.xlu0 %5732
        %s5735 = sor.u32 256, 56
        %5736 = vbcast.lane.b32.xlu0 %v5706, %s5735
        %v5737 = vpop.permute.xlu0 %5736
        %s5739 = sor.u32 256, 64
        %5740 = vbcast.lane.b32.xlu0 %v5706, %s5739
        %v5741 = vpop.permute.xlu0 %5740
        %s5743 = sor.u32 256, 72
        %5744 = vbcast.lane.b32.xlu0 %v5706, %s5743
        %v5745 = vpop.permute.xlu0 %5744
        %s5747 = sor.u32 256, 80
        %5748 = vbcast.lane.b32.xlu0 %v5706, %s5747
        %v5749 = vpop.permute.xlu0 %5748
        %s5751 = sor.u32 256, 88
        %5752 = vbcast.lane.b32.xlu0 %v5706, %s5751
        %v5753 = vpop.permute.xlu0 %5752
        %s5755 = sor.u32 256, 96
        %5756 = vbcast.lane.b32.xlu0 %v5706, %s5755
        %v5757 = vpop.permute.xlu0 %5756
        %s5759 = sor.u32 256, 104
        %5760 = vbcast.lane.b32.xlu0 %v5706, %s5759
        %v5761 = vpop.permute.xlu0 %5760
        %s5763 = sor.u32 256, 112
        %5764 = vbcast.lane.b32.xlu0 %v5706, %s5763
        %v5765 = vpop.permute.xlu0 %5764
        %s5767 = sor.u32 256, 120
        %5768 = vbcast.lane.b32.xlu0 %v5706, %s5767
        %v5769 = vpop.permute.xlu0 %5768
        %v5770 = vlaneseq
        %v5771 = vshrl.u32 %v5770, 7
        %v5772 = vsub.s32 2, %v5771
        %v5773 = vrot.slane %v5433, %v5772
        %5775 = vbcast.lane.b32.xlu0 %v5773, 256
        %v5776 = vpop.permute.xlu0 %5775
        %s5778 = sor.u32 256, 8
        %5779 = vbcast.lane.b32.xlu0 %v5773, %s5778
        %v5780 = vpop.permute.xlu0 %5779
        %s5782 = sor.u32 256, 16
        %5783 = vbcast.lane.b32.xlu0 %v5773, %s5782
        %v5784 = vpop.permute.xlu0 %5783
        %s5786 = sor.u32 256, 24
        %5787 = vbcast.lane.b32.xlu0 %v5773, %s5786
        %v5788 = vpop.permute.xlu0 %5787
        %s5790 = sor.u32 256, 32
        %5791 = vbcast.lane.b32.xlu0 %v5773, %s5790
        %v5792 = vpop.permute.xlu0 %5791
        %s5794 = sor.u32 256, 40
        %5795 = vbcast.lane.b32.xlu0 %v5773, %s5794
        %v5796 = vpop.permute.xlu0 %5795
        %s5798 = sor.u32 256, 48
        %5799 = vbcast.lane.b32.xlu0 %v5773, %s5798
        %v5800 = vpop.permute.xlu0 %5799
        %s5802 = sor.u32 256, 56
        %5803 = vbcast.lane.b32.xlu0 %v5773, %s5802
        %v5804 = vpop.permute.xlu0 %5803
        %s5806 = sor.u32 256, 64
        %5807 = vbcast.lane.b32.xlu0 %v5773, %s5806
        %v5808 = vpop.permute.xlu0 %5807
        %s5810 = sor.u32 256, 72
        %5811 = vbcast.lane.b32.xlu0 %v5773, %s5810
        %v5812 = vpop.permute.xlu0 %5811
        %s5814 = sor.u32 256, 80
        %5815 = vbcast.lane.b32.xlu0 %v5773, %s5814
        %v5816 = vpop.permute.xlu0 %5815
        %s5818 = sor.u32 256, 88
        %5819 = vbcast.lane.b32.xlu0 %v5773, %s5818
        %v5820 = vpop.permute.xlu0 %5819
        %s5822 = sor.u32 256, 96
        %5823 = vbcast.lane.b32.xlu0 %v5773, %s5822
        %v5824 = vpop.permute.xlu0 %5823
        %s5826 = sor.u32 256, 104
        %5827 = vbcast.lane.b32.xlu0 %v5773, %s5826
        %v5828 = vpop.permute.xlu0 %5827
        %s5830 = sor.u32 256, 112
        %5831 = vbcast.lane.b32.xlu0 %v5773, %s5830
        %v5832 = vpop.permute.xlu0 %5831
        %s5834 = sor.u32 256, 120
        %5835 = vbcast.lane.b32.xlu0 %v5773, %s5834
        %v5836 = vpop.permute.xlu0 %5835
        %v5837 = vlaneseq
        %v5838 = vshrl.u32 %v5837, 7
        %v5839 = vsub.s32 3, %v5838
        %v5840 = vrot.slane %v186, %v5839
        %5842 = vbcast.lane.b32.xlu0 %v5840, 256
        %v5843 = vpop.permute.xlu0 %5842
        %s5845 = sor.u32 256, 8
        %5846 = vbcast.lane.b32.xlu0 %v5840, %s5845
        %v5847 = vpop.permute.xlu0 %5846
        %s5849 = sor.u32 256, 16
        %5850 = vbcast.lane.b32.xlu0 %v5840, %s5849
        %v5851 = vpop.permute.xlu0 %5850
        %s5853 = sor.u32 256, 24
        %5854 = vbcast.lane.b32.xlu0 %v5840, %s5853
        %v5855 = vpop.permute.xlu0 %5854
        %s5857 = sor.u32 256, 32
        %5858 = vbcast.lane.b32.xlu0 %v5840, %s5857
        %v5859 = vpop.permute.xlu0 %5858
        %s5861 = sor.u32 256, 40
        %5862 = vbcast.lane.b32.xlu0 %v5840, %s5861
        %v5863 = vpop.permute.xlu0 %5862
        %s5865 = sor.u32 256, 48
        %5866 = vbcast.lane.b32.xlu0 %v5840, %s5865
        %v5867 = vpop.permute.xlu0 %5866
        %s5869 = sor.u32 256, 56
        %5870 = vbcast.lane.b32.xlu0 %v5840, %s5869
        %v5871 = vpop.permute.xlu0 %5870
        %s5873 = sor.u32 256, 64
        %5874 = vbcast.lane.b32.xlu0 %v5840, %s5873
        %v5875 = vpop.permute.xlu0 %5874
        %s5877 = sor.u32 256, 72
        %5878 = vbcast.lane.b32.xlu0 %v5840, %s5877
        %v5879 = vpop.permute.xlu0 %5878
        %s5881 = sor.u32 256, 80
        %5882 = vbcast.lane.b32.xlu0 %v5840, %s5881
        %v5883 = vpop.permute.xlu0 %5882
        %s5885 = sor.u32 256, 88
        %5886 = vbcast.lane.b32.xlu0 %v5840, %s5885
        %v5887 = vpop.permute.xlu0 %5886
        %s5889 = sor.u32 256, 96
        %5890 = vbcast.lane.b32.xlu0 %v5840, %s5889
        %v5891 = vpop.permute.xlu0 %5890
        %s5893 = sor.u32 256, 104
        %5894 = vbcast.lane.b32.xlu0 %v5840, %s5893
        %v5895 = vpop.permute.xlu0 %5894
        %s5897 = sor.u32 256, 112
        %5898 = vbcast.lane.b32.xlu0 %v5840, %s5897
        %v5899 = vpop.permute.xlu0 %5898
        %s5901 = sor.u32 256, 120
        %5902 = vbcast.lane.b32.xlu0 %v5840, %s5901
        %v5903 = vpop.permute.xlu0 %5902
        %v5904 = vlaneseq
        %v5905 = vshrl.u32 %v5904, 7
        %v5906 = vsub.s32 3, %v5905
        %v5907 = vrot.slane %v5433, %v5906
        %5909 = vbcast.lane.b32.xlu0 %v5907, 256
        %v5910 = vpop.permute.xlu0 %5909
        %s5912 = sor.u32 256, 8
        %5913 = vbcast.lane.b32.xlu0 %v5907, %s5912
        %v5914 = vpop.permute.xlu0 %5913
        %s5916 = sor.u32 256, 16
        %5917 = vbcast.lane.b32.xlu0 %v5907, %s5916
        %v5918 = vpop.permute.xlu0 %5917
        %s5920 = sor.u32 256, 24
        %5921 = vbcast.lane.b32.xlu0 %v5907, %s5920
        %v5922 = vpop.permute.xlu0 %5921
        %s5924 = sor.u32 256, 32
        %5925 = vbcast.lane.b32.xlu0 %v5907, %s5924
        %v5926 = vpop.permute.xlu0 %5925
        %s5928 = sor.u32 256, 40
        %5929 = vbcast.lane.b32.xlu0 %v5907, %s5928
        %v5930 = vpop.permute.xlu0 %5929
        %s5932 = sor.u32 256, 48
        %5933 = vbcast.lane.b32.xlu0 %v5907, %s5932
        %v5934 = vpop.permute.xlu0 %5933
        %s5936 = sor.u32 256, 56
        %5937 = vbcast.lane.b32.xlu0 %v5907, %s5936
        %v5938 = vpop.permute.xlu0 %5937
        %s5940 = sor.u32 256, 64
        %5941 = vbcast.lane.b32.xlu0 %v5907, %s5940
        %v5942 = vpop.permute.xlu0 %5941
        %s5944 = sor.u32 256, 72
        %5945 = vbcast.lane.b32.xlu0 %v5907, %s5944
        %v5946 = vpop.permute.xlu0 %5945
        %s5948 = sor.u32 256, 80
        %5949 = vbcast.lane.b32.xlu0 %v5907, %s5948
        %v5950 = vpop.permute.xlu0 %5949
        %s5952 = sor.u32 256, 88
        %5953 = vbcast.lane.b32.xlu0 %v5907, %s5952
        %v5954 = vpop.permute.xlu0 %5953
        %s5956 = sor.u32 256, 96
        %5957 = vbcast.lane.b32.xlu0 %v5907, %s5956
        %v5958 = vpop.permute.xlu0 %5957
        %s5960 = sor.u32 256, 104
        %5961 = vbcast.lane.b32.xlu0 %v5907, %s5960
        %v5962 = vpop.permute.xlu0 %5961
        %s5964 = sor.u32 256, 112
        %5965 = vbcast.lane.b32.xlu0 %v5907, %s5964
        %v5966 = vpop.permute.xlu0 %5965
        %s5968 = sor.u32 256, 120
        %5969 = vbcast.lane.b32.xlu0 %v5907, %s5968
        %v5970 = vpop.permute.xlu0 %5969
        %v5971 = vsel %vm1265, %v4902, %v5441
        %v5972 = vsel %vm1265, %v4906, %v5445
        %v5973 = vsel %vm1265, %v4910, %v5449
        %v5974 = vsel %vm1265, %v4914, %v5453
        %v5975 = vsel %vm1265, %v4918, %v5457
        %v5976 = vsel %vm1265, %v4922, %v5461
        %v5977 = vsel %vm1265, %v4926, %v5465
        %v5978 = vsel %vm1265, %v4930, %v5469
        %v5979 = vsel %vm1265, %v4934, %v5473
        %v5980 = vsel %vm1265, %v4938, %v5477
        %v5981 = vsel %vm1265, %v4942, %v5481
        %v5982 = vsel %vm1265, %v4946, %v5485
        %v5983 = vsel %vm1265, %v4950, %v5489
        %v5984 = vsel %vm1265, %v4954, %v5493
        %v5985 = vsel %vm1265, %v4958, %v5497
        %v5986 = vsel %vm1265, %v4962, %v5501
        %v5987 = vsel %vm1265, %v4969, %v5508
        %v5988 = vsel %vm1265, %v4973, %v5512
        %v5989 = vsel %vm1265, %v4977, %v5516
        %v5990 = vsel %vm1265, %v4981, %v5520
        %v5991 = vsel %vm1265, %v4985, %v5524
        %v5992 = vsel %vm1265, %v4989, %v5528
        %v5993 = vsel %vm1265, %v4993, %v5532
        %v5994 = vsel %vm1265, %v4997, %v5536
        %v5995 = vsel %vm1265, %v5001, %v5540
        %v5996 = vsel %vm1265, %v5005, %v5544
        %v5997 = vsel %vm1265, %v5009, %v5548
        %v5998 = vsel %vm1265, %v5013, %v5552
        %v5999 = vsel %vm1265, %v5017, %v5556
        %v6000 = vsel %vm1265, %v5021, %v5560
        %v6001 = vsel %vm1265, %v5025, %v5564
        %v6002 = vsel %vm1265, %v5029, %v5568
        %v6003 = vsel %vm1265, %v5036, %v5575
        %v6004 = vsel %vm1265, %v5040, %v5579
        %v6005 = vsel %vm1265, %v5044, %v5583
        %v6006 = vsel %vm1265, %v5048, %v5587
        %v6007 = vsel %vm1265, %v5052, %v5591
        %v6008 = vsel %vm1265, %v5056, %v5595
        %v6009 = vsel %vm1265, %v5060, %v5599
        %v6010 = vsel %vm1265, %v5064, %v5603
        %v6011 = vsel %vm1265, %v5068, %v5607
        %v6012 = vsel %vm1265, %v5072, %v5611
        %v6013 = vsel %vm1265, %v5076, %v5615
        %v6014 = vsel %vm1265, %v5080, %v5619
        %v6015 = vsel %vm1265, %v5084, %v5623
        %v6016 = vsel %vm1265, %v5088, %v5627
        %v6017 = vsel %vm1265, %v5092, %v5631
        %v6018 = vsel %vm1265, %v5096, %v5635
        %v6019 = vsel %vm1265, %v5103, %v5642
        %v6020 = vsel %vm1265, %v5107, %v5646
        %v6021 = vsel %vm1265, %v5111, %v5650
        %v6022 = vsel %vm1265, %v5115, %v5654
        %v6023 = vsel %vm1265, %v5119, %v5658
        %v6024 = vsel %vm1265, %v5123, %v5662
        %v6025 = vsel %vm1265, %v5127, %v5666
        %v6026 = vsel %vm1265, %v5131, %v5670
        %v6027 = vsel %vm1265, %v5135, %v5674
        %v6028 = vsel %vm1265, %v5139, %v5678
        %v6029 = vsel %vm1265, %v5143, %v5682
        %v6030 = vsel %vm1265, %v5147, %v5686
        %v6031 = vsel %vm1265, %v5151, %v5690
        %v6032 = vsel %vm1265, %v5155, %v5694
        %v6033 = vsel %vm1265, %v5159, %v5698
        %v6034 = vsel %vm1265, %v5163, %v5702
        %v6035 = vsel %vm1265, %v5170, %v5709
        %v6036 = vsel %vm1265, %v5174, %v5713
        %v6037 = vsel %vm1265, %v5178, %v5717
        %v6038 = vsel %vm1265, %v5182, %v5721
        %v6039 = vsel %vm1265, %v5186, %v5725
        %v6040 = vsel %vm1265, %v5190, %v5729
        %v6041 = vsel %vm1265, %v5194, %v5733
        %v6042 = vsel %vm1265, %v5198, %v5737
        %v6043 = vsel %vm1265, %v5202, %v5741
        %v6044 = vsel %vm1265, %v5206, %v5745
        %v6045 = vsel %vm1265, %v5210, %v5749
        %v6046 = vsel %vm1265, %v5214, %v5753
        %v6047 = vsel %vm1265, %v5218, %v5757
        %v6048 = vsel %vm1265, %v5222, %v5761
        %v6049 = vsel %vm1265, %v5226, %v5765
        %v6050 = vsel %vm1265, %v5230, %v5769
        %v6051 = vsel %vm1265, %v5237, %v5776
        %v6052 = vsel %vm1265, %v5241, %v5780
        %v6053 = vsel %vm1265, %v5245, %v5784
        %v6054 = vsel %vm1265, %v5249, %v5788
        %v6055 = vsel %vm1265, %v5253, %v5792
        %v6056 = vsel %vm1265, %v5257, %v5796
        %v6057 = vsel %vm1265, %v5261, %v5800
        %v6058 = vsel %vm1265, %v5265, %v5804
        %v6059 = vsel %vm1265, %v5269, %v5808
        %v6060 = vsel %vm1265, %v5273, %v5812
        %v6061 = vsel %vm1265, %v5277, %v5816
        %v6062 = vsel %vm1265, %v5281, %v5820
        %v6063 = vsel %vm1265, %v5285, %v5824
        %v6064 = vsel %vm1265, %v5289, %v5828
        %v6065 = vsel %vm1265, %v5293, %v5832
        %v6066 = vsel %vm1265, %v5297, %v5836
        %v6067 = vsel %vm1265, %v5304, %v5843
        %v6068 = vsel %vm1265, %v5308, %v5847
        %v6069 = vsel %vm1265, %v5312, %v5851
        %v6070 = vsel %vm1265, %v5316, %v5855
        %v6071 = vsel %vm1265, %v5320, %v5859
        %v6072 = vsel %vm1265, %v5324, %v5863
        %v6073 = vsel %vm1265, %v5328, %v5867
        %v6074 = vsel %vm1265, %v5332, %v5871
        %v6075 = vsel %vm1265, %v5336, %v5875
        %v6076 = vsel %vm1265, %v5340, %v5879
        %v6077 = vsel %vm1265, %v5344, %v5883
        %v6078 = vsel %vm1265, %v5348, %v5887
        %v6079 = vsel %vm1265, %v5352, %v5891
        %v6080 = vsel %vm1265, %v5356, %v5895
        %v6081 = vsel %vm1265, %v5360, %v5899
        %v6082 = vsel %vm1265, %v5364, %v5903
        %v6083 = vsel %vm1265, %v5371, %v5910
        %v6084 = vsel %vm1265, %v5375, %v5914
        %v6085 = vsel %vm1265, %v5379, %v5918
        %v6086 = vsel %vm1265, %v5383, %v5922
        %v6087 = vsel %vm1265, %v5387, %v5926
        %v6088 = vsel %vm1265, %v5391, %v5930
        %v6089 = vsel %vm1265, %v5395, %v5934
        %v6090 = vsel %vm1265, %v5399, %v5938
        %v6091 = vsel %vm1265, %v5403, %v5942
        %v6092 = vsel %vm1265, %v5407, %v5946
        %v6093 = vsel %vm1265, %v5411, %v5950
        %v6094 = vsel %vm1265, %v5415, %v5954
        %v6095 = vsel %vm1265, %v5419, %v5958
        %v6096 = vsel %vm1265, %v5423, %v5962
        %v6097 = vsel %vm1265, %v5427, %v5966
        %v6098 = vsel %vm1265, %v5431, %v5970
        %v6099 = vcombine.low %v5971, %v6035
        %v6100 = vcombine.high %v5971, %v6035
        %v6102 = vunpack.c.l.s4 1983009808
        %v6103 = vunpack.c.0.s8 %v6102
        %v6104 = vlaneseq
        %v6105 = vshrl.u32 %v6104, 7
        %v6106 = vsub.s32 %v6103, %v6105
        %v6107 = vrot.slane %v6099, %v6106
        %v6109 = vunpack.c.l.s4 1983009808
        %v6110 = vunpack.c.0.s8 %v6109
        %v6111 = vlaneseq
        %v6112 = vshrl.u32 %v6111, 7
        %v6113 = vsub.s32 %v6110, %v6112
        %v6114 = vrot.slane %v6100, %v6113
        %v6115 = vcombine.low %v6003, %v6067
        %v6116 = vcombine.high %v6003, %v6067
        %v6118 = vunpack.c.l.s4 1983009808
        %v6119 = vunpack.c.0.s8 %v6118
        %v6120 = vlaneseq
        %v6121 = vshrl.u32 %v6120, 7
        %v6122 = vsub.s32 %v6119, %v6121
        %v6123 = vrot.slane %v6115, %v6122
        %v6125 = vunpack.c.l.s4 1983009808
        %v6126 = vunpack.c.0.s8 %v6125
        %v6127 = vlaneseq
        %v6128 = vshrl.u32 %v6127, 7
        %v6129 = vsub.s32 %v6126, %v6128
        %v6130 = vrot.slane %v6116, %v6129
        %v6131 = vcombine.low %v6107, %v6123
        %v6132 = vcombine.high %v6107, %v6123
        %v6134 = vunpack.c.l.s4 1934713408
        %v6135 = vunpack.c.0.s8 %v6134
        %v6136 = vlaneseq
        %v6137 = vshrl.u32 %v6136, 7
        %v6138 = vsub.s32 %v6135, %v6137
        %v6139 = vrot.slane %v6131, %v6138
        %v6141 = vunpack.c.l.s4 1934713408
        %v6142 = vunpack.c.0.s8 %v6141
        %v6143 = vlaneseq
        %v6144 = vshrl.u32 %v6143, 7
        %v6145 = vsub.s32 %v6142, %v6144
        %v6146 = vrot.slane %v6132, %v6145
        %v6147 = vcombine.low %v6114, %v6130
        %v6148 = vcombine.high %v6114, %v6130
        %v6150 = vunpack.c.l.s4 1934713408
        %v6151 = vunpack.c.0.s8 %v6150
        %v6152 = vlaneseq
        %v6153 = vshrl.u32 %v6152, 7
        %v6154 = vsub.s32 %v6151, %v6153
        %v6155 = vrot.slane %v6147, %v6154
        %v6157 = vunpack.c.l.s4 1934713408
        %v6158 = vunpack.c.0.s8 %v6157
        %v6159 = vlaneseq
        %v6160 = vshrl.u32 %v6159, 7
        %v6161 = vsub.s32 %v6158, %v6160
        %v6162 = vrot.slane %v6148, %v6161
        %v6163 = vcombine.high %v6139, 0.0
        %v6164 = vcombine.high %v6146, 0.0
        %v6165 = vcombine.high %v6155, 0.0
        %v6166 = vcombine.high %v6162, 0.0
        %v6167 = vcombine.low %v5972, %v6036
        %v6168 = vcombine.high %v5972, %v6036
        %v6170 = vunpack.c.l.s4 1983009808
        %v6171 = vunpack.c.0.s8 %v6170
        %v6172 = vlaneseq
        %v6173 = vshrl.u32 %v6172, 7
        %v6174 = vsub.s32 %v6171, %v6173
        %v6175 = vrot.slane %v6167, %v6174
        %v6177 = vunpack.c.l.s4 1983009808
        %v6178 = vunpack.c.0.s8 %v6177
        %v6179 = vlaneseq
        %v6180 = vshrl.u32 %v6179, 7
        %v6181 = vsub.s32 %v6178, %v6180
        %v6182 = vrot.slane %v6168, %v6181
        %v6183 = vcombine.low %v6004, %v6068
        %v6184 = vcombine.high %v6004, %v6068
        %v6186 = vunpack.c.l.s4 1983009808
        %v6187 = vunpack.c.0.s8 %v6186
        %v6188 = vlaneseq
        %v6189 = vshrl.u32 %v6188, 7
        %v6190 = vsub.s32 %v6187, %v6189
        %v6191 = vrot.slane %v6183, %v6190
        %v6193 = vunpack.c.l.s4 1983009808
        %v6194 = vunpack.c.0.s8 %v6193
        %v6195 = vlaneseq
        %v6196 = vshrl.u32 %v6195, 7
        %v6197 = vsub.s32 %v6194, %v6196
        %v6198 = vrot.slane %v6184, %v6197
        %v6199 = vcombine.low %v6175, %v6191
        %v6200 = vcombine.high %v6175, %v6191
        %v6202 = vunpack.c.l.s4 1934713408
        %v6203 = vunpack.c.0.s8 %v6202
        %v6204 = vlaneseq
        %v6205 = vshrl.u32 %v6204, 7
        %v6206 = vsub.s32 %v6203, %v6205
        %v6207 = vrot.slane %v6199, %v6206
        %v6209 = vunpack.c.l.s4 1934713408
        %v6210 = vunpack.c.0.s8 %v6209
        %v6211 = vlaneseq
        %v6212 = vshrl.u32 %v6211, 7
        %v6213 = vsub.s32 %v6210, %v6212
        %v6214 = vrot.slane %v6200, %v6213
        %v6215 = vcombine.low %v6182, %v6198
        %v6216 = vcombine.high %v6182, %v6198
        %v6218 = vunpack.c.l.s4 1934713408
        %v6219 = vunpack.c.0.s8 %v6218
        %v6220 = vlaneseq
        %v6221 = vshrl.u32 %v6220, 7
        %v6222 = vsub.s32 %v6219, %v6221
        %v6223 = vrot.slane %v6215, %v6222
        %v6225 = vunpack.c.l.s4 1934713408
        %v6226 = vunpack.c.0.s8 %v6225
        %v6227 = vlaneseq
        %v6228 = vshrl.u32 %v6227, 7
        %v6229 = vsub.s32 %v6226, %v6228
        %v6230 = vrot.slane %v6216, %v6229
        %v6231 = vcombine.high %v6207, 0.0
        %v6232 = vcombine.high %v6214, 0.0
        %v6233 = vcombine.high %v6223, 0.0
        %v6234 = vcombine.high %v6230, 0.0
        %v6235 = vcombine.low %v5973, %v6037
        %v6236 = vcombine.high %v5973, %v6037
        %v6238 = vunpack.c.l.s4 1983009808
        %v6239 = vunpack.c.0.s8 %v6238
        %v6240 = vlaneseq
        %v6241 = vshrl.u32 %v6240, 7
        %v6242 = vsub.s32 %v6239, %v6241
        %v6243 = vrot.slane %v6235, %v6242
        %v6245 = vunpack.c.l.s4 1983009808
        %v6246 = vunpack.c.0.s8 %v6245
        %v6247 = vlaneseq
        %v6248 = vshrl.u32 %v6247, 7
        %v6249 = vsub.s32 %v6246, %v6248
        %v6250 = vrot.slane %v6236, %v6249
        %v6251 = vcombine.low %v6005, %v6069
        %v6252 = vcombine.high %v6005, %v6069
        %v6254 = vunpack.c.l.s4 1983009808
        %v6255 = vunpack.c.0.s8 %v6254
        %v6256 = vlaneseq
        %v6257 = vshrl.u32 %v6256, 7
        %v6258 = vsub.s32 %v6255, %v6257
        %v6259 = vrot.slane %v6251, %v6258
        %v6261 = vunpack.c.l.s4 1983009808
        %v6262 = vunpack.c.0.s8 %v6261
        %v6263 = vlaneseq
        %v6264 = vshrl.u32 %v6263, 7
        %v6265 = vsub.s32 %v6262, %v6264
        %v6266 = vrot.slane %v6252, %v6265
        %v6267 = vcombine.low %v6243, %v6259
        %v6268 = vcombine.high %v6243, %v6259
        %v6270 = vunpack.c.l.s4 1934713408
        %v6271 = vunpack.c.0.s8 %v6270
        %v6272 = vlaneseq
        %v6273 = vshrl.u32 %v6272, 7
        %v6274 = vsub.s32 %v6271, %v6273
        %v6275 = vrot.slane %v6267, %v6274
        %v6277 = vunpack.c.l.s4 1934713408
        %v6278 = vunpack.c.0.s8 %v6277
        %v6279 = vlaneseq
        %v6280 = vshrl.u32 %v6279, 7
        %v6281 = vsub.s32 %v6278, %v6280
        %v6282 = vrot.slane %v6268, %v6281
        %v6283 = vcombine.low %v6250, %v6266
        %v6284 = vcombine.high %v6250, %v6266
        %v6286 = vunpack.c.l.s4 1934713408
        %v6287 = vunpack.c.0.s8 %v6286
        %v6288 = vlaneseq
        %v6289 = vshrl.u32 %v6288, 7
        %v6290 = vsub.s32 %v6287, %v6289
        %v6291 = vrot.slane %v6283, %v6290
        %v6293 = vunpack.c.l.s4 1934713408
        %v6294 = vunpack.c.0.s8 %v6293
        %v6295 = vlaneseq
        %v6296 = vshrl.u32 %v6295, 7
        %v6297 = vsub.s32 %v6294, %v6296
        %v6298 = vrot.slane %v6284, %v6297
        %v6299 = vcombine.high %v6275, 0.0
        %v6300 = vcombine.high %v6282, 0.0
        %v6301 = vcombine.high %v6291, 0.0
        %v6302 = vcombine.high %v6298, 0.0
        %v6303 = vcombine.low %v5974, %v6038
        %v6304 = vcombine.high %v5974, %v6038
        %v6306 = vunpack.c.l.s4 1983009808
        %v6307 = vunpack.c.0.s8 %v6306
        %v6308 = vlaneseq
        %v6309 = vshrl.u32 %v6308, 7
        %v6310 = vsub.s32 %v6307, %v6309
        %v6311 = vrot.slane %v6303, %v6310
        %v6313 = vunpack.c.l.s4 1983009808
        %v6314 = vunpack.c.0.s8 %v6313
        %v6315 = vlaneseq
        %v6316 = vshrl.u32 %v6315, 7
        %v6317 = vsub.s32 %v6314, %v6316
        %v6318 = vrot.slane %v6304, %v6317
        %v6319 = vcombine.low %v6006, %v6070
        %v6320 = vcombine.high %v6006, %v6070
        %v6322 = vunpack.c.l.s4 1983009808
        %v6323 = vunpack.c.0.s8 %v6322
        %v6324 = vlaneseq
        %v6325 = vshrl.u32 %v6324, 7
        %v6326 = vsub.s32 %v6323, %v6325
        %v6327 = vrot.slane %v6319, %v6326
        %v6329 = vunpack.c.l.s4 1983009808
        %v6330 = vunpack.c.0.s8 %v6329
        %v6331 = vlaneseq
        %v6332 = vshrl.u32 %v6331, 7
        %v6333 = vsub.s32 %v6330, %v6332
        %v6334 = vrot.slane %v6320, %v6333
        %v6335 = vcombine.low %v6311, %v6327
        %v6336 = vcombine.high %v6311, %v6327
        %v6338 = vunpack.c.l.s4 1934713408
        %v6339 = vunpack.c.0.s8 %v6338
        %v6340 = vlaneseq
        %v6341 = vshrl.u32 %v6340, 7
        %v6342 = vsub.s32 %v6339, %v6341
        %v6343 = vrot.slane %v6335, %v6342
        %v6345 = vunpack.c.l.s4 1934713408
        %v6346 = vunpack.c.0.s8 %v6345
        %v6347 = vlaneseq
        %v6348 = vshrl.u32 %v6347, 7
        %v6349 = vsub.s32 %v6346, %v6348
        %v6350 = vrot.slane %v6336, %v6349
        %v6351 = vcombine.low %v6318, %v6334
        %v6352 = vcombine.high %v6318, %v6334
        %v6354 = vunpack.c.l.s4 1934713408
        %v6355 = vunpack.c.0.s8 %v6354
        %v6356 = vlaneseq
        %v6357 = vshrl.u32 %v6356, 7
        %v6358 = vsub.s32 %v6355, %v6357
        %v6359 = vrot.slane %v6351, %v6358
        %v6361 = vunpack.c.l.s4 1934713408
        %v6362 = vunpack.c.0.s8 %v6361
        %v6363 = vlaneseq
        %v6364 = vshrl.u32 %v6363, 7
        %v6365 = vsub.s32 %v6362, %v6364
        %v6366 = vrot.slane %v6352, %v6365
        %v6367 = vcombine.high %v6343, 0.0
        %v6368 = vcombine.high %v6350, 0.0
        %v6369 = vcombine.high %v6359, 0.0
        %v6370 = vcombine.high %v6366, 0.0
        %v6371 = vcombine.low %v5975, %v6039
        %v6372 = vcombine.high %v5975, %v6039
        %v6374 = vunpack.c.l.s4 1983009808
        %v6375 = vunpack.c.0.s8 %v6374
        %v6376 = vlaneseq
        %v6377 = vshrl.u32 %v6376, 7
        %v6378 = vsub.s32 %v6375, %v6377
        %v6379 = vrot.slane %v6371, %v6378
        %v6381 = vunpack.c.l.s4 1983009808
        %v6382 = vunpack.c.0.s8 %v6381
        %v6383 = vlaneseq
        %v6384 = vshrl.u32 %v6383, 7
        %v6385 = vsub.s32 %v6382, %v6384
        %v6386 = vrot.slane %v6372, %v6385
        %v6387 = vcombine.low %v6007, %v6071
        %v6388 = vcombine.high %v6007, %v6071
        %v6390 = vunpack.c.l.s4 1983009808
        %v6391 = vunpack.c.0.s8 %v6390
        %v6392 = vlaneseq
        %v6393 = vshrl.u32 %v6392, 7
        %v6394 = vsub.s32 %v6391, %v6393
        %v6395 = vrot.slane %v6387, %v6394
        %v6397 = vunpack.c.l.s4 1983009808
        %v6398 = vunpack.c.0.s8 %v6397
        %v6399 = vlaneseq
        %v6400 = vshrl.u32 %v6399, 7
        %v6401 = vsub.s32 %v6398, %v6400
        %v6402 = vrot.slane %v6388, %v6401
        %v6403 = vcombine.low %v6379, %v6395
        %v6404 = vcombine.high %v6379, %v6395
        %v6406 = vunpack.c.l.s4 1934713408
        %v6407 = vunpack.c.0.s8 %v6406
        %v6408 = vlaneseq
        %v6409 = vshrl.u32 %v6408, 7
        %v6410 = vsub.s32 %v6407, %v6409
        %v6411 = vrot.slane %v6403, %v6410
        %v6413 = vunpack.c.l.s4 1934713408
        %v6414 = vunpack.c.0.s8 %v6413
        %v6415 = vlaneseq
        %v6416 = vshrl.u32 %v6415, 7
        %v6417 = vsub.s32 %v6414, %v6416
        %v6418 = vrot.slane %v6404, %v6417
        %v6419 = vcombine.low %v6386, %v6402
        %v6420 = vcombine.high %v6386, %v6402
        %v6422 = vunpack.c.l.s4 1934713408
        %v6423 = vunpack.c.0.s8 %v6422
        %v6424 = vlaneseq
        %v6425 = vshrl.u32 %v6424, 7
        %v6426 = vsub.s32 %v6423, %v6425
        %v6427 = vrot.slane %v6419, %v6426
        %v6429 = vunpack.c.l.s4 1934713408
        %v6430 = vunpack.c.0.s8 %v6429
        %v6431 = vlaneseq
        %v6432 = vshrl.u32 %v6431, 7
        %v6433 = vsub.s32 %v6430, %v6432
        %v6434 = vrot.slane %v6420, %v6433
        %v6435 = vcombine.high %v6411, 0.0
        %v6436 = vcombine.high %v6418, 0.0
        %v6437 = vcombine.high %v6427, 0.0
        %v6438 = vcombine.high %v6434, 0.0
        %v6439 = vcombine.low %v5976, %v6040
        %v6440 = vcombine.high %v5976, %v6040
        %v6442 = vunpack.c.l.s4 1983009808
        %v6443 = vunpack.c.0.s8 %v6442
        %v6444 = vlaneseq
        %v6445 = vshrl.u32 %v6444, 7
        %v6446 = vsub.s32 %v6443, %v6445
        %v6447 = vrot.slane %v6439, %v6446
        %v6449 = vunpack.c.l.s4 1983009808
        %v6450 = vunpack.c.0.s8 %v6449
        %v6451 = vlaneseq
        %v6452 = vshrl.u32 %v6451, 7
        %v6453 = vsub.s32 %v6450, %v6452
        %v6454 = vrot.slane %v6440, %v6453
        %v6455 = vcombine.low %v6008, %v6072
        %v6456 = vcombine.high %v6008, %v6072
        %v6458 = vunpack.c.l.s4 1983009808
        %v6459 = vunpack.c.0.s8 %v6458
        %v6460 = vlaneseq
        %v6461 = vshrl.u32 %v6460, 7
        %v6462 = vsub.s32 %v6459, %v6461
        %v6463 = vrot.slane %v6455, %v6462
        %v6465 = vunpack.c.l.s4 1983009808
        %v6466 = vunpack.c.0.s8 %v6465
        %v6467 = vlaneseq
        %v6468 = vshrl.u32 %v6467, 7
        %v6469 = vsub.s32 %v6466, %v6468
        %v6470 = vrot.slane %v6456, %v6469
        %v6471 = vcombine.low %v6447, %v6463
        %v6472 = vcombine.high %v6447, %v6463
        %v6474 = vunpack.c.l.s4 1934713408
        %v6475 = vunpack.c.0.s8 %v6474
        %v6476 = vlaneseq
        %v6477 = vshrl.u32 %v6476, 7
        %v6478 = vsub.s32 %v6475, %v6477
        %v6479 = vrot.slane %v6471, %v6478
        %v6481 = vunpack.c.l.s4 1934713408
        %v6482 = vunpack.c.0.s8 %v6481
        %v6483 = vlaneseq
        %v6484 = vshrl.u32 %v6483, 7
        %v6485 = vsub.s32 %v6482, %v6484
        %v6486 = vrot.slane %v6472, %v6485
        %v6487 = vcombine.low %v6454, %v6470
        %v6488 = vcombine.high %v6454, %v6470
        %v6490 = vunpack.c.l.s4 1934713408
        %v6491 = vunpack.c.0.s8 %v6490
        %v6492 = vlaneseq
        %v6493 = vshrl.u32 %v6492, 7
        %v6494 = vsub.s32 %v6491, %v6493
        %v6495 = vrot.slane %v6487, %v6494
        %v6497 = vunpack.c.l.s4 1934713408
        %v6498 = vunpack.c.0.s8 %v6497
        %v6499 = vlaneseq
        %v6500 = vshrl.u32 %v6499, 7
        %v6501 = vsub.s32 %v6498, %v6500
        %v6502 = vrot.slane %v6488, %v6501
        %v6503 = vcombine.high %v6479, 0.0
        %v6504 = vcombine.high %v6486, 0.0
        %v6505 = vcombine.high %v6495, 0.0
        %v6506 = vcombine.high %v6502, 0.0
        %v6507 = vcombine.low %v5977, %v6041
        %v6508 = vcombine.high %v5977, %v6041
        %v6510 = vunpack.c.l.s4 1983009808
        %v6511 = vunpack.c.0.s8 %v6510
        %v6512 = vlaneseq
        %v6513 = vshrl.u32 %v6512, 7
        %v6514 = vsub.s32 %v6511, %v6513
        %v6515 = vrot.slane %v6507, %v6514
        %v6517 = vunpack.c.l.s4 1983009808
        %v6518 = vunpack.c.0.s8 %v6517
        %v6519 = vlaneseq
        %v6520 = vshrl.u32 %v6519, 7
        %v6521 = vsub.s32 %v6518, %v6520
        %v6522 = vrot.slane %v6508, %v6521
        %v6523 = vcombine.low %v6009, %v6073
        %v6524 = vcombine.high %v6009, %v6073
        %v6526 = vunpack.c.l.s4 1983009808
        %v6527 = vunpack.c.0.s8 %v6526
        %v6528 = vlaneseq
        %v6529 = vshrl.u32 %v6528, 7
        %v6530 = vsub.s32 %v6527, %v6529
        %v6531 = vrot.slane %v6523, %v6530
        %v6533 = vunpack.c.l.s4 1983009808
        %v6534 = vunpack.c.0.s8 %v6533
        %v6535 = vlaneseq
        %v6536 = vshrl.u32 %v6535, 7
        %v6537 = vsub.s32 %v6534, %v6536
        %v6538 = vrot.slane %v6524, %v6537
        %v6539 = vcombine.low %v6515, %v6531
        %v6540 = vcombine.high %v6515, %v6531
        %v6542 = vunpack.c.l.s4 1934713408
        %v6543 = vunpack.c.0.s8 %v6542
        %v6544 = vlaneseq
        %v6545 = vshrl.u32 %v6544, 7
        %v6546 = vsub.s32 %v6543, %v6545
        %v6547 = vrot.slane %v6539, %v6546
        %v6549 = vunpack.c.l.s4 1934713408
        %v6550 = vunpack.c.0.s8 %v6549
        %v6551 = vlaneseq
        %v6552 = vshrl.u32 %v6551, 7
        %v6553 = vsub.s32 %v6550, %v6552
        %v6554 = vrot.slane %v6540, %v6553
        %v6555 = vcombine.low %v6522, %v6538
        %v6556 = vcombine.high %v6522, %v6538
        %v6558 = vunpack.c.l.s4 1934713408
        %v6559 = vunpack.c.0.s8 %v6558
        %v6560 = vlaneseq
        %v6561 = vshrl.u32 %v6560, 7
        %v6562 = vsub.s32 %v6559, %v6561
        %v6563 = vrot.slane %v6555, %v6562
        %v6565 = vunpack.c.l.s4 1934713408
        %v6566 = vunpack.c.0.s8 %v6565
        %v6567 = vlaneseq
        %v6568 = vshrl.u32 %v6567, 7
        %v6569 = vsub.s32 %v6566, %v6568
        %v6570 = vrot.slane %v6556, %v6569
        %v6571 = vcombine.high %v6547, 0.0
        %v6572 = vcombine.high %v6554, 0.0
        %v6573 = vcombine.high %v6563, 0.0
        %v6574 = vcombine.high %v6570, 0.0
        %v6575 = vcombine.low %v5978, %v6042
        %v6576 = vcombine.high %v5978, %v6042
        %v6578 = vunpack.c.l.s4 1983009808
        %v6579 = vunpack.c.0.s8 %v6578
        %v6580 = vlaneseq
        %v6581 = vshrl.u32 %v6580, 7
        %v6582 = vsub.s32 %v6579, %v6581
        %v6583 = vrot.slane %v6575, %v6582
        %v6585 = vunpack.c.l.s4 1983009808
        %v6586 = vunpack.c.0.s8 %v6585
        %v6587 = vlaneseq
        %v6588 = vshrl.u32 %v6587, 7
        %v6589 = vsub.s32 %v6586, %v6588
        %v6590 = vrot.slane %v6576, %v6589
        %v6591 = vcombine.low %v6010, %v6074
        %v6592 = vcombine.high %v6010, %v6074
        %v6594 = vunpack.c.l.s4 1983009808
        %v6595 = vunpack.c.0.s8 %v6594
        %v6596 = vlaneseq
        %v6597 = vshrl.u32 %v6596, 7
        %v6598 = vsub.s32 %v6595, %v6597
        %v6599 = vrot.slane %v6591, %v6598
        %v6601 = vunpack.c.l.s4 1983009808
        %v6602 = vunpack.c.0.s8 %v6601
        %v6603 = vlaneseq
        %v6604 = vshrl.u32 %v6603, 7
        %v6605 = vsub.s32 %v6602, %v6604
        %v6606 = vrot.slane %v6592, %v6605
        %v6607 = vcombine.low %v6583, %v6599
        %v6608 = vcombine.high %v6583, %v6599
        %v6610 = vunpack.c.l.s4 1934713408
        %v6611 = vunpack.c.0.s8 %v6610
        %v6612 = vlaneseq
        %v6613 = vshrl.u32 %v6612, 7
        %v6614 = vsub.s32 %v6611, %v6613
        %v6615 = vrot.slane %v6607, %v6614
        %v6617 = vunpack.c.l.s4 1934713408
        %v6618 = vunpack.c.0.s8 %v6617
        %v6619 = vlaneseq
        %v6620 = vshrl.u32 %v6619, 7
        %v6621 = vsub.s32 %v6618, %v6620
        %v6622 = vrot.slane %v6608, %v6621
        %v6623 = vcombine.low %v6590, %v6606
        %v6624 = vcombine.high %v6590, %v6606
        %v6626 = vunpack.c.l.s4 1934713408
        %v6627 = vunpack.c.0.s8 %v6626
        %v6628 = vlaneseq
        %v6629 = vshrl.u32 %v6628, 7
        %v6630 = vsub.s32 %v6627, %v6629
        %v6631 = vrot.slane %v6623, %v6630
        %v6633 = vunpack.c.l.s4 1934713408
        %v6634 = vunpack.c.0.s8 %v6633
        %v6635 = vlaneseq
        %v6636 = vshrl.u32 %v6635, 7
        %v6637 = vsub.s32 %v6634, %v6636
        %v6638 = vrot.slane %v6624, %v6637
        %v6639 = vcombine.high %v6615, 0.0
        %v6640 = vcombine.high %v6622, 0.0
        %v6641 = vcombine.high %v6631, 0.0
        %v6642 = vcombine.high %v6638, 0.0
        %v6643 = vcombine.low %v5979, %v6043
        %v6644 = vcombine.high %v5979, %v6043
        %v6646 = vunpack.c.l.s4 1983009808
        %v6647 = vunpack.c.0.s8 %v6646
        %v6648 = vlaneseq
        %v6649 = vshrl.u32 %v6648, 7
        %v6650 = vsub.s32 %v6647, %v6649
        %v6651 = vrot.slane %v6643, %v6650
        %v6653 = vunpack.c.l.s4 1983009808
        %v6654 = vunpack.c.0.s8 %v6653
        %v6655 = vlaneseq
        %v6656 = vshrl.u32 %v6655, 7
        %v6657 = vsub.s32 %v6654, %v6656
        %v6658 = vrot.slane %v6644, %v6657
        %v6659 = vcombine.low %v6011, %v6075
        %v6660 = vcombine.high %v6011, %v6075
        %v6662 = vunpack.c.l.s4 1983009808
        %v6663 = vunpack.c.0.s8 %v6662
        %v6664 = vlaneseq
        %v6665 = vshrl.u32 %v6664, 7
        %v6666 = vsub.s32 %v6663, %v6665
        %v6667 = vrot.slane %v6659, %v6666
        %v6669 = vunpack.c.l.s4 1983009808
        %v6670 = vunpack.c.0.s8 %v6669
        %v6671 = vlaneseq
        %v6672 = vshrl.u32 %v6671, 7
        %v6673 = vsub.s32 %v6670, %v6672
        %v6674 = vrot.slane %v6660, %v6673
        %v6675 = vcombine.low %v6651, %v6667
        %v6676 = vcombine.high %v6651, %v6667
        %v6678 = vunpack.c.l.s4 1934713408
        %v6679 = vunpack.c.0.s8 %v6678
        %v6680 = vlaneseq
        %v6681 = vshrl.u32 %v6680, 7
        %v6682 = vsub.s32 %v6679, %v6681
        %v6683 = vrot.slane %v6675, %v6682
        %v6685 = vunpack.c.l.s4 1934713408
        %v6686 = vunpack.c.0.s8 %v6685
        %v6687 = vlaneseq
        %v6688 = vshrl.u32 %v6687, 7
        %v6689 = vsub.s32 %v6686, %v6688
        %v6690 = vrot.slane %v6676, %v6689
        %v6691 = vcombine.low %v6658, %v6674
        %v6692 = vcombine.high %v6658, %v6674
        %v6694 = vunpack.c.l.s4 1934713408
        %v6695 = vunpack.c.0.s8 %v6694
        %v6696 = vlaneseq
        %v6697 = vshrl.u32 %v6696, 7
        %v6698 = vsub.s32 %v6695, %v6697
        %v6699 = vrot.slane %v6691, %v6698
        %v6701 = vunpack.c.l.s4 1934713408
        %v6702 = vunpack.c.0.s8 %v6701
        %v6703 = vlaneseq
        %v6704 = vshrl.u32 %v6703, 7
        %v6705 = vsub.s32 %v6702, %v6704
        %v6706 = vrot.slane %v6692, %v6705
        %v6707 = vcombine.high %v6683, 0.0
        %v6708 = vcombine.high %v6690, 0.0
        %v6709 = vcombine.high %v6699, 0.0
        %v6710 = vcombine.high %v6706, 0.0
        %v6711 = vcombine.low %v5980, %v6044
        %v6712 = vcombine.high %v5980, %v6044
        %v6714 = vunpack.c.l.s4 1983009808
        %v6715 = vunpack.c.0.s8 %v6714
        %v6716 = vlaneseq
        %v6717 = vshrl.u32 %v6716, 7
        %v6718 = vsub.s32 %v6715, %v6717
        %v6719 = vrot.slane %v6711, %v6718
        %v6721 = vunpack.c.l.s4 1983009808
        %v6722 = vunpack.c.0.s8 %v6721
        %v6723 = vlaneseq
        %v6724 = vshrl.u32 %v6723, 7
        %v6725 = vsub.s32 %v6722, %v6724
        %v6726 = vrot.slane %v6712, %v6725
        %v6727 = vcombine.low %v6012, %v6076
        %v6728 = vcombine.high %v6012, %v6076
        %v6730 = vunpack.c.l.s4 1983009808
        %v6731 = vunpack.c.0.s8 %v6730
        %v6732 = vlaneseq
        %v6733 = vshrl.u32 %v6732, 7
        %v6734 = vsub.s32 %v6731, %v6733
        %v6735 = vrot.slane %v6727, %v6734
        %v6737 = vunpack.c.l.s4 1983009808
        %v6738 = vunpack.c.0.s8 %v6737
        %v6739 = vlaneseq
        %v6740 = vshrl.u32 %v6739, 7
        %v6741 = vsub.s32 %v6738, %v6740
        %v6742 = vrot.slane %v6728, %v6741
        %v6743 = vcombine.low %v6719, %v6735
        %v6744 = vcombine.high %v6719, %v6735
        %v6746 = vunpack.c.l.s4 1934713408
        %v6747 = vunpack.c.0.s8 %v6746
        %v6748 = vlaneseq
        %v6749 = vshrl.u32 %v6748, 7
        %v6750 = vsub.s32 %v6747, %v6749
        %v6751 = vrot.slane %v6743, %v6750
        %v6753 = vunpack.c.l.s4 1934713408
        %v6754 = vunpack.c.0.s8 %v6753
        %v6755 = vlaneseq
        %v6756 = vshrl.u32 %v6755, 7
        %v6757 = vsub.s32 %v6754, %v6756
        %v6758 = vrot.slane %v6744, %v6757
        %v6759 = vcombine.low %v6726, %v6742
        %v6760 = vcombine.high %v6726, %v6742
        %v6762 = vunpack.c.l.s4 1934713408
        %v6763 = vunpack.c.0.s8 %v6762
        %v6764 = vlaneseq
        %v6765 = vshrl.u32 %v6764, 7
        %v6766 = vsub.s32 %v6763, %v6765
        %v6767 = vrot.slane %v6759, %v6766
        %v6769 = vunpack.c.l.s4 1934713408
        %v6770 = vunpack.c.0.s8 %v6769
        %v6771 = vlaneseq
        %v6772 = vshrl.u32 %v6771, 7
        %v6773 = vsub.s32 %v6770, %v6772
        %v6774 = vrot.slane %v6760, %v6773
        %v6775 = vcombine.high %v6751, 0.0
        %v6776 = vcombine.high %v6758, 0.0
        %v6777 = vcombine.high %v6767, 0.0
        %v6778 = vcombine.high %v6774, 0.0
        %v6779 = vcombine.low %v5981, %v6045
        %v6780 = vcombine.high %v5981, %v6045
        %v6782 = vunpack.c.l.s4 1983009808
        %v6783 = vunpack.c.0.s8 %v6782
        %v6784 = vlaneseq
        %v6785 = vshrl.u32 %v6784, 7
        %v6786 = vsub.s32 %v6783, %v6785
        %v6787 = vrot.slane %v6779, %v6786
        %v6789 = vunpack.c.l.s4 1983009808
        %v6790 = vunpack.c.0.s8 %v6789
        %v6791 = vlaneseq
        %v6792 = vshrl.u32 %v6791, 7
        %v6793 = vsub.s32 %v6790, %v6792
        %v6794 = vrot.slane %v6780, %v6793
        %v6795 = vcombine.low %v6013, %v6077
        %v6796 = vcombine.high %v6013, %v6077
        %v6798 = vunpack.c.l.s4 1983009808
        %v6799 = vunpack.c.0.s8 %v6798
        %v6800 = vlaneseq
        %v6801 = vshrl.u32 %v6800, 7
        %v6802 = vsub.s32 %v6799, %v6801
        %v6803 = vrot.slane %v6795, %v6802
        %v6805 = vunpack.c.l.s4 1983009808
        %v6806 = vunpack.c.0.s8 %v6805
        %v6807 = vlaneseq
        %v6808 = vshrl.u32 %v6807, 7
        %v6809 = vsub.s32 %v6806, %v6808
        %v6810 = vrot.slane %v6796, %v6809
        %v6811 = vcombine.low %v6787, %v6803
        %v6812 = vcombine.high %v6787, %v6803
        %v6814 = vunpack.c.l.s4 1934713408
        %v6815 = vunpack.c.0.s8 %v6814
        %v6816 = vlaneseq
        %v6817 = vshrl.u32 %v6816, 7
        %v6818 = vsub.s32 %v6815, %v6817
        %v6819 = vrot.slane %v6811, %v6818
        %v6821 = vunpack.c.l.s4 1934713408
        %v6822 = vunpack.c.0.s8 %v6821
        %v6823 = vlaneseq
        %v6824 = vshrl.u32 %v6823, 7
        %v6825 = vsub.s32 %v6822, %v6824
        %v6826 = vrot.slane %v6812, %v6825
        %v6827 = vcombine.low %v6794, %v6810
        %v6828 = vcombine.high %v6794, %v6810
        %v6830 = vunpack.c.l.s4 1934713408
        %v6831 = vunpack.c.0.s8 %v6830
        %v6832 = vlaneseq
        %v6833 = vshrl.u32 %v6832, 7
        %v6834 = vsub.s32 %v6831, %v6833
        %v6835 = vrot.slane %v6827, %v6834
        %v6837 = vunpack.c.l.s4 1934713408
        %v6838 = vunpack.c.0.s8 %v6837
        %v6839 = vlaneseq
        %v6840 = vshrl.u32 %v6839, 7
        %v6841 = vsub.s32 %v6838, %v6840
        %v6842 = vrot.slane %v6828, %v6841
        %v6843 = vcombine.high %v6819, 0.0
        %v6844 = vcombine.high %v6826, 0.0
        %v6845 = vcombine.high %v6835, 0.0
        %v6846 = vcombine.high %v6842, 0.0
        %v6847 = vcombine.low %v5982, %v6046
        %v6848 = vcombine.high %v5982, %v6046
        %v6850 = vunpack.c.l.s4 1983009808
        %v6851 = vunpack.c.0.s8 %v6850
        %v6852 = vlaneseq
        %v6853 = vshrl.u32 %v6852, 7
        %v6854 = vsub.s32 %v6851, %v6853
        %v6855 = vrot.slane %v6847, %v6854
        %v6857 = vunpack.c.l.s4 1983009808
        %v6858 = vunpack.c.0.s8 %v6857
        %v6859 = vlaneseq
        %v6860 = vshrl.u32 %v6859, 7
        %v6861 = vsub.s32 %v6858, %v6860
        %v6862 = vrot.slane %v6848, %v6861
        %v6863 = vcombine.low %v6014, %v6078
        %v6864 = vcombine.high %v6014, %v6078
        %v6866 = vunpack.c.l.s4 1983009808
        %v6867 = vunpack.c.0.s8 %v6866
        %v6868 = vlaneseq
        %v6869 = vshrl.u32 %v6868, 7
        %v6870 = vsub.s32 %v6867, %v6869
        %v6871 = vrot.slane %v6863, %v6870
        %v6873 = vunpack.c.l.s4 1983009808
        %v6874 = vunpack.c.0.s8 %v6873
        %v6875 = vlaneseq
        %v6876 = vshrl.u32 %v6875, 7
        %v6877 = vsub.s32 %v6874, %v6876
        %v6878 = vrot.slane %v6864, %v6877
        %v6879 = vcombine.low %v6855, %v6871
        %v6880 = vcombine.high %v6855, %v6871
        %v6882 = vunpack.c.l.s4 1934713408
        %v6883 = vunpack.c.0.s8 %v6882
        %v6884 = vlaneseq
        %v6885 = vshrl.u32 %v6884, 7
        %v6886 = vsub.s32 %v6883, %v6885
        %v6887 = vrot.slane %v6879, %v6886
        %v6889 = vunpack.c.l.s4 1934713408
        %v6890 = vunpack.c.0.s8 %v6889
        %v6891 = vlaneseq
        %v6892 = vshrl.u32 %v6891, 7
        %v6893 = vsub.s32 %v6890, %v6892
        %v6894 = vrot.slane %v6880, %v6893
        %v6895 = vcombine.low %v6862, %v6878
        %v6896 = vcombine.high %v6862, %v6878
        %v6898 = vunpack.c.l.s4 1934713408
        %v6899 = vunpack.c.0.s8 %v6898
        %v6900 = vlaneseq
        %v6901 = vshrl.u32 %v6900, 7
        %v6902 = vsub.s32 %v6899, %v6901
        %v6903 = vrot.slane %v6895, %v6902
        %v6905 = vunpack.c.l.s4 1934713408
        %v6906 = vunpack.c.0.s8 %v6905
        %v6907 = vlaneseq
        %v6908 = vshrl.u32 %v6907, 7
        %v6909 = vsub.s32 %v6906, %v6908
        %v6910 = vrot.slane %v6896, %v6909
        %v6911 = vcombine.high %v6887, 0.0
        %v6912 = vcombine.high %v6894, 0.0
        %v6913 = vcombine.high %v6903, 0.0
        %v6914 = vcombine.high %v6910, 0.0
        %v6915 = vcombine.low %v5983, %v6047
        %v6916 = vcombine.high %v5983, %v6047
        %v6918 = vunpack.c.l.s4 1983009808
        %v6919 = vunpack.c.0.s8 %v6918
        %v6920 = vlaneseq
        %v6921 = vshrl.u32 %v6920, 7
        %v6922 = vsub.s32 %v6919, %v6921
        %v6923 = vrot.slane %v6915, %v6922
        %v6925 = vunpack.c.l.s4 1983009808
        %v6926 = vunpack.c.0.s8 %v6925
        %v6927 = vlaneseq
        %v6928 = vshrl.u32 %v6927, 7
        %v6929 = vsub.s32 %v6926, %v6928
        %v6930 = vrot.slane %v6916, %v6929
        %v6931 = vcombine.low %v6015, %v6079
        %v6932 = vcombine.high %v6015, %v6079
        %v6934 = vunpack.c.l.s4 1983009808
        %v6935 = vunpack.c.0.s8 %v6934
        %v6936 = vlaneseq
        %v6937 = vshrl.u32 %v6936, 7
        %v6938 = vsub.s32 %v6935, %v6937
        %v6939 = vrot.slane %v6931, %v6938
        %v6941 = vunpack.c.l.s4 1983009808
        %v6942 = vunpack.c.0.s8 %v6941
        %v6943 = vlaneseq
        %v6944 = vshrl.u32 %v6943, 7
        %v6945 = vsub.s32 %v6942, %v6944
        %v6946 = vrot.slane %v6932, %v6945
        %v6947 = vcombine.low %v6923, %v6939
        %v6948 = vcombine.high %v6923, %v6939
        %v6950 = vunpack.c.l.s4 1934713408
        %v6951 = vunpack.c.0.s8 %v6950
        %v6952 = vlaneseq
        %v6953 = vshrl.u32 %v6952, 7
        %v6954 = vsub.s32 %v6951, %v6953
        %v6955 = vrot.slane %v6947, %v6954
        %v6957 = vunpack.c.l.s4 1934713408
        %v6958 = vunpack.c.0.s8 %v6957
        %v6959 = vlaneseq
        %v6960 = vshrl.u32 %v6959, 7
        %v6961 = vsub.s32 %v6958, %v6960
        %v6962 = vrot.slane %v6948, %v6961
        %v6963 = vcombine.low %v6930, %v6946
        %v6964 = vcombine.high %v6930, %v6946
        %v6966 = vunpack.c.l.s4 1934713408
        %v6967 = vunpack.c.0.s8 %v6966
        %v6968 = vlaneseq
        %v6969 = vshrl.u32 %v6968, 7
        %v6970 = vsub.s32 %v6967, %v6969
        %v6971 = vrot.slane %v6963, %v6970
        %v6973 = vunpack.c.l.s4 1934713408
        %v6974 = vunpack.c.0.s8 %v6973
        %v6975 = vlaneseq
        %v6976 = vshrl.u32 %v6975, 7
        %v6977 = vsub.s32 %v6974, %v6976
        %v6978 = vrot.slane %v6964, %v6977
        %v6979 = vcombine.high %v6955, 0.0
        %v6980 = vcombine.high %v6962, 0.0
        %v6981 = vcombine.high %v6971, 0.0
        %v6982 = vcombine.high %v6978, 0.0
        %v6983 = vcombine.low %v5984, %v6048
        %v6984 = vcombine.high %v5984, %v6048
        %v6986 = vunpack.c.l.s4 1983009808
        %v6987 = vunpack.c.0.s8 %v6986
        %v6988 = vlaneseq
        %v6989 = vshrl.u32 %v6988, 7
        %v6990 = vsub.s32 %v6987, %v6989
        %v6991 = vrot.slane %v6983, %v6990
        %v6993 = vunpack.c.l.s4 1983009808
        %v6994 = vunpack.c.0.s8 %v6993
        %v6995 = vlaneseq
        %v6996 = vshrl.u32 %v6995, 7
        %v6997 = vsub.s32 %v6994, %v6996
        %v6998 = vrot.slane %v6984, %v6997
        %v6999 = vcombine.low %v6016, %v6080
        %v7000 = vcombine.high %v6016, %v6080
        %v7002 = vunpack.c.l.s4 1983009808
        %v7003 = vunpack.c.0.s8 %v7002
        %v7004 = vlaneseq
        %v7005 = vshrl.u32 %v7004, 7
        %v7006 = vsub.s32 %v7003, %v7005
        %v7007 = vrot.slane %v6999, %v7006
        %v7009 = vunpack.c.l.s4 1983009808
        %v7010 = vunpack.c.0.s8 %v7009
        %v7011 = vlaneseq
        %v7012 = vshrl.u32 %v7011, 7
        %v7013 = vsub.s32 %v7010, %v7012
        %v7014 = vrot.slane %v7000, %v7013
        %v7015 = vcombine.low %v6991, %v7007
        %v7016 = vcombine.high %v6991, %v7007
        %v7018 = vunpack.c.l.s4 1934713408
        %v7019 = vunpack.c.0.s8 %v7018
        %v7020 = vlaneseq
        %v7021 = vshrl.u32 %v7020, 7
        %v7022 = vsub.s32 %v7019, %v7021
        %v7023 = vrot.slane %v7015, %v7022
        %v7025 = vunpack.c.l.s4 1934713408
        %v7026 = vunpack.c.0.s8 %v7025
        %v7027 = vlaneseq
        %v7028 = vshrl.u32 %v7027, 7
        %v7029 = vsub.s32 %v7026, %v7028
        %v7030 = vrot.slane %v7016, %v7029
        %v7031 = vcombine.low %v6998, %v7014
        %v7032 = vcombine.high %v6998, %v7014
        %v7034 = vunpack.c.l.s4 1934713408
        %v7035 = vunpack.c.0.s8 %v7034
        %v7036 = vlaneseq
        %v7037 = vshrl.u32 %v7036, 7
        %v7038 = vsub.s32 %v7035, %v7037
        %v7039 = vrot.slane %v7031, %v7038
        %v7041 = vunpack.c.l.s4 1934713408
        %v7042 = vunpack.c.0.s8 %v7041
        %v7043 = vlaneseq
        %v7044 = vshrl.u32 %v7043, 7
        %v7045 = vsub.s32 %v7042, %v7044
        %v7046 = vrot.slane %v7032, %v7045
        %v7047 = vcombine.high %v7023, 0.0
        %v7048 = vcombine.high %v7030, 0.0
        %v7049 = vcombine.high %v7039, 0.0
        %v7050 = vcombine.high %v7046, 0.0
        %v7051 = vcombine.low %v5985, %v6049
        %v7052 = vcombine.high %v5985, %v6049
        %v7054 = vunpack.c.l.s4 1983009808
        %v7055 = vunpack.c.0.s8 %v7054
        %v7056 = vlaneseq
        %v7057 = vshrl.u32 %v7056, 7
        %v7058 = vsub.s32 %v7055, %v7057
        %v7059 = vrot.slane %v7051, %v7058
        %v7061 = vunpack.c.l.s4 1983009808
        %v7062 = vunpack.c.0.s8 %v7061
        %v7063 = vlaneseq
        %v7064 = vshrl.u32 %v7063, 7
        %v7065 = vsub.s32 %v7062, %v7064
        %v7066 = vrot.slane %v7052, %v7065
        %v7067 = vcombine.low %v6017, %v6081
        %v7068 = vcombine.high %v6017, %v6081
        %v7070 = vunpack.c.l.s4 1983009808
        %v7071 = vunpack.c.0.s8 %v7070
        %v7072 = vlaneseq
        %v7073 = vshrl.u32 %v7072, 7
        %v7074 = vsub.s32 %v7071, %v7073
        %v7075 = vrot.slane %v7067, %v7074
        %v7077 = vunpack.c.l.s4 1983009808
        %v7078 = vunpack.c.0.s8 %v7077
        %v7079 = vlaneseq
        %v7080 = vshrl.u32 %v7079, 7
        %v7081 = vsub.s32 %v7078, %v7080
        %v7082 = vrot.slane %v7068, %v7081
        %v7083 = vcombine.low %v7059, %v7075
        %v7084 = vcombine.high %v7059, %v7075
        %v7086 = vunpack.c.l.s4 1934713408
        %v7087 = vunpack.c.0.s8 %v7086
        %v7088 = vlaneseq
        %v7089 = vshrl.u32 %v7088, 7
        %v7090 = vsub.s32 %v7087, %v7089
        %v7091 = vrot.slane %v7083, %v7090
        %v7093 = vunpack.c.l.s4 1934713408
        %v7094 = vunpack.c.0.s8 %v7093
        %v7095 = vlaneseq
        %v7096 = vshrl.u32 %v7095, 7
        %v7097 = vsub.s32 %v7094, %v7096
        %v7098 = vrot.slane %v7084, %v7097
        %v7099 = vcombine.low %v7066, %v7082
        %v7100 = vcombine.high %v7066, %v7082
        %v7102 = vunpack.c.l.s4 1934713408
        %v7103 = vunpack.c.0.s8 %v7102
        %v7104 = vlaneseq
        %v7105 = vshrl.u32 %v7104, 7
        %v7106 = vsub.s32 %v7103, %v7105
        %v7107 = vrot.slane %v7099, %v7106
        %v7109 = vunpack.c.l.s4 1934713408
        %v7110 = vunpack.c.0.s8 %v7109
        %v7111 = vlaneseq
        %v7112 = vshrl.u32 %v7111, 7
        %v7113 = vsub.s32 %v7110, %v7112
        %v7114 = vrot.slane %v7100, %v7113
        %v7115 = vcombine.high %v7091, 0.0
        %v7116 = vcombine.high %v7098, 0.0
        %v7117 = vcombine.high %v7107, 0.0
        %v7118 = vcombine.high %v7114, 0.0
        %v7119 = vcombine.low %v5986, %v6050
        %v7120 = vcombine.high %v5986, %v6050
        %v7122 = vunpack.c.l.s4 1983009808
        %v7123 = vunpack.c.0.s8 %v7122
        %v7124 = vlaneseq
        %v7125 = vshrl.u32 %v7124, 7
        %v7126 = vsub.s32 %v7123, %v7125
        %v7127 = vrot.slane %v7119, %v7126
        %v7129 = vunpack.c.l.s4 1983009808
        %v7130 = vunpack.c.0.s8 %v7129
        %v7131 = vlaneseq
        %v7132 = vshrl.u32 %v7131, 7
        %v7133 = vsub.s32 %v7130, %v7132
        %v7134 = vrot.slane %v7120, %v7133
        %v7135 = vcombine.low %v6018, %v6082
        %v7136 = vcombine.high %v6018, %v6082
        %v7138 = vunpack.c.l.s4 1983009808
        %v7139 = vunpack.c.0.s8 %v7138
        %v7140 = vlaneseq
        %v7141 = vshrl.u32 %v7140, 7
        %v7142 = vsub.s32 %v7139, %v7141
        %v7143 = vrot.slane %v7135, %v7142
        %v7145 = vunpack.c.l.s4 1983009808
        %v7146 = vunpack.c.0.s8 %v7145
        %v7147 = vlaneseq
        %v7148 = vshrl.u32 %v7147, 7
        %v7149 = vsub.s32 %v7146, %v7148
        %v7150 = vrot.slane %v7136, %v7149
        %v7151 = vcombine.low %v7127, %v7143
        %v7152 = vcombine.high %v7127, %v7143
        %v7154 = vunpack.c.l.s4 1934713408
        %v7155 = vunpack.c.0.s8 %v7154
        %v7156 = vlaneseq
        %v7157 = vshrl.u32 %v7156, 7
        %v7158 = vsub.s32 %v7155, %v7157
        %v7159 = vrot.slane %v7151, %v7158
        %v7161 = vunpack.c.l.s4 1934713408
        %v7162 = vunpack.c.0.s8 %v7161
        %v7163 = vlaneseq
        %v7164 = vshrl.u32 %v7163, 7
        %v7165 = vsub.s32 %v7162, %v7164
        %v7166 = vrot.slane %v7152, %v7165
        %v7167 = vcombine.low %v7134, %v7150
        %v7168 = vcombine.high %v7134, %v7150
        %v7170 = vunpack.c.l.s4 1934713408
        %v7171 = vunpack.c.0.s8 %v7170
        %v7172 = vlaneseq
        %v7173 = vshrl.u32 %v7172, 7
        %v7174 = vsub.s32 %v7171, %v7173
        %v7175 = vrot.slane %v7167, %v7174
        %v7177 = vunpack.c.l.s4 1934713408
        %v7178 = vunpack.c.0.s8 %v7177
        %v7179 = vlaneseq
        %v7180 = vshrl.u32 %v7179, 7
        %v7181 = vsub.s32 %v7178, %v7180
        %v7182 = vrot.slane %v7168, %v7181
        %v7183 = vcombine.high %v7159, 0.0
        %v7184 = vcombine.high %v7166, 0.0
        %v7185 = vcombine.high %v7175, 0.0
        %v7186 = vcombine.high %v7182, 0.0
        %v7187 = vcombine.low %v5987, %v6051
        %v7188 = vcombine.high %v5987, %v6051
        %v7190 = vunpack.c.l.s4 1983009808
        %v7191 = vunpack.c.0.s8 %v7190
        %v7192 = vlaneseq
        %v7193 = vshrl.u32 %v7192, 7
        %v7194 = vsub.s32 %v7191, %v7193
        %v7195 = vrot.slane %v7187, %v7194
        %v7197 = vunpack.c.l.s4 1983009808
        %v7198 = vunpack.c.0.s8 %v7197
        %v7199 = vlaneseq
        %v7200 = vshrl.u32 %v7199, 7
        %v7201 = vsub.s32 %v7198, %v7200
        %v7202 = vrot.slane %v7188, %v7201
        %v7203 = vcombine.low %v6019, %v6083
        %v7204 = vcombine.high %v6019, %v6083
        %v7206 = vunpack.c.l.s4 1983009808
        %v7207 = vunpack.c.0.s8 %v7206
        %v7208 = vlaneseq
        %v7209 = vshrl.u32 %v7208, 7
        %v7210 = vsub.s32 %v7207, %v7209
        %v7211 = vrot.slane %v7203, %v7210
        %v7213 = vunpack.c.l.s4 1983009808
        %v7214 = vunpack.c.0.s8 %v7213
        %v7215 = vlaneseq
        %v7216 = vshrl.u32 %v7215, 7
        %v7217 = vsub.s32 %v7214, %v7216
        %v7218 = vrot.slane %v7204, %v7217
        %v7219 = vcombine.low %v7195, %v7211
        %v7220 = vcombine.high %v7195, %v7211
        %v7222 = vunpack.c.l.s4 1934713408
        %v7223 = vunpack.c.0.s8 %v7222
        %v7224 = vlaneseq
        %v7225 = vshrl.u32 %v7224, 7
        %v7226 = vsub.s32 %v7223, %v7225
        %v7227 = vrot.slane %v7219, %v7226
        %v7229 = vunpack.c.l.s4 1934713408
        %v7230 = vunpack.c.0.s8 %v7229
        %v7231 = vlaneseq
        %v7232 = vshrl.u32 %v7231, 7
        %v7233 = vsub.s32 %v7230, %v7232
        %v7234 = vrot.slane %v7220, %v7233
        %v7235 = vcombine.low %v7202, %v7218
        %v7236 = vcombine.high %v7202, %v7218
        %v7238 = vunpack.c.l.s4 1934713408
        %v7239 = vunpack.c.0.s8 %v7238
        %v7240 = vlaneseq
        %v7241 = vshrl.u32 %v7240, 7
        %v7242 = vsub.s32 %v7239, %v7241
        %v7243 = vrot.slane %v7235, %v7242
        %v7245 = vunpack.c.l.s4 1934713408
        %v7246 = vunpack.c.0.s8 %v7245
        %v7247 = vlaneseq
        %v7248 = vshrl.u32 %v7247, 7
        %v7249 = vsub.s32 %v7246, %v7248
        %v7250 = vrot.slane %v7236, %v7249
        %v7251 = vcombine.high %v7227, 0.0
        %v7252 = vcombine.high %v7234, 0.0
        %v7253 = vcombine.high %v7243, 0.0
        %v7254 = vcombine.high %v7250, 0.0
        %v7255 = vcombine.low %v5988, %v6052
        %v7256 = vcombine.high %v5988, %v6052
        %v7258 = vunpack.c.l.s4 1983009808
        %v7259 = vunpack.c.0.s8 %v7258
        %v7260 = vlaneseq
        %v7261 = vshrl.u32 %v7260, 7
        %v7262 = vsub.s32 %v7259, %v7261
        %v7263 = vrot.slane %v7255, %v7262
        %v7265 = vunpack.c.l.s4 1983009808
        %v7266 = vunpack.c.0.s8 %v7265
        %v7267 = vlaneseq
        %v7268 = vshrl.u32 %v7267, 7
        %v7269 = vsub.s32 %v7266, %v7268
        %v7270 = vrot.slane %v7256, %v7269
        %v7271 = vcombine.low %v6020, %v6084
        %v7272 = vcombine.high %v6020, %v6084
        %v7274 = vunpack.c.l.s4 1983009808
        %v7275 = vunpack.c.0.s8 %v7274
        %v7276 = vlaneseq
        %v7277 = vshrl.u32 %v7276, 7
        %v7278 = vsub.s32 %v7275, %v7277
        %v7279 = vrot.slane %v7271, %v7278
        %v7281 = vunpack.c.l.s4 1983009808
        %v7282 = vunpack.c.0.s8 %v7281
        %v7283 = vlaneseq
        %v7284 = vshrl.u32 %v7283, 7
        %v7285 = vsub.s32 %v7282, %v7284
        %v7286 = vrot.slane %v7272, %v7285
        %v7287 = vcombine.low %v7263, %v7279
        %v7288 = vcombine.high %v7263, %v7279
        %v7290 = vunpack.c.l.s4 1934713408
        %v7291 = vunpack.c.0.s8 %v7290
        %v7292 = vlaneseq
        %v7293 = vshrl.u32 %v7292, 7
        %v7294 = vsub.s32 %v7291, %v7293
        %v7295 = vrot.slane %v7287, %v7294
        %v7297 = vunpack.c.l.s4 1934713408
        %v7298 = vunpack.c.0.s8 %v7297
        %v7299 = vlaneseq
        %v7300 = vshrl.u32 %v7299, 7
        %v7301 = vsub.s32 %v7298, %v7300
        %v7302 = vrot.slane %v7288, %v7301
        %v7303 = vcombine.low %v7270, %v7286
        %v7304 = vcombine.high %v7270, %v7286
        %v7306 = vunpack.c.l.s4 1934713408
        %v7307 = vunpack.c.0.s8 %v7306
        %v7308 = vlaneseq
        %v7309 = vshrl.u32 %v7308, 7
        %v7310 = vsub.s32 %v7307, %v7309
        %v7311 = vrot.slane %v7303, %v7310
        %v7313 = vunpack.c.l.s4 1934713408
        %v7314 = vunpack.c.0.s8 %v7313
        %v7315 = vlaneseq
        %v7316 = vshrl.u32 %v7315, 7
        %v7317 = vsub.s32 %v7314, %v7316
        %v7318 = vrot.slane %v7304, %v7317
        %v7319 = vcombine.high %v7295, 0.0
        %v7320 = vcombine.high %v7302, 0.0
        %v7321 = vcombine.high %v7311, 0.0
        %v7322 = vcombine.high %v7318, 0.0
        %v7323 = vcombine.low %v5989, %v6053
        %v7324 = vcombine.high %v5989, %v6053
        %v7326 = vunpack.c.l.s4 1983009808
        %v7327 = vunpack.c.0.s8 %v7326
        %v7328 = vlaneseq
        %v7329 = vshrl.u32 %v7328, 7
        %v7330 = vsub.s32 %v7327, %v7329
        %v7331 = vrot.slane %v7323, %v7330
        %v7333 = vunpack.c.l.s4 1983009808
        %v7334 = vunpack.c.0.s8 %v7333
        %v7335 = vlaneseq
        %v7336 = vshrl.u32 %v7335, 7
        %v7337 = vsub.s32 %v7334, %v7336
        %v7338 = vrot.slane %v7324, %v7337
        %v7339 = vcombine.low %v6021, %v6085
        %v7340 = vcombine.high %v6021, %v6085
        %v7342 = vunpack.c.l.s4 1983009808
        %v7343 = vunpack.c.0.s8 %v7342
        %v7344 = vlaneseq
        %v7345 = vshrl.u32 %v7344, 7
        %v7346 = vsub.s32 %v7343, %v7345
        %v7347 = vrot.slane %v7339, %v7346
        %v7349 = vunpack.c.l.s4 1983009808
        %v7350 = vunpack.c.0.s8 %v7349
        %v7351 = vlaneseq
        %v7352 = vshrl.u32 %v7351, 7
        %v7353 = vsub.s32 %v7350, %v7352
        %v7354 = vrot.slane %v7340, %v7353
        %v7355 = vcombine.low %v7331, %v7347
        %v7356 = vcombine.high %v7331, %v7347
        %v7358 = vunpack.c.l.s4 1934713408
        %v7359 = vunpack.c.0.s8 %v7358
        %v7360 = vlaneseq
        %v7361 = vshrl.u32 %v7360, 7
        %v7362 = vsub.s32 %v7359, %v7361
        %v7363 = vrot.slane %v7355, %v7362
        %v7365 = vunpack.c.l.s4 1934713408
        %v7366 = vunpack.c.0.s8 %v7365
        %v7367 = vlaneseq
        %v7368 = vshrl.u32 %v7367, 7
        %v7369 = vsub.s32 %v7366, %v7368
        %v7370 = vrot.slane %v7356, %v7369
        %v7371 = vcombine.low %v7338, %v7354
        %v7372 = vcombine.high %v7338, %v7354
        %v7374 = vunpack.c.l.s4 1934713408
        %v7375 = vunpack.c.0.s8 %v7374
        %v7376 = vlaneseq
        %v7377 = vshrl.u32 %v7376, 7
        %v7378 = vsub.s32 %v7375, %v7377
        %v7379 = vrot.slane %v7371, %v7378
        %v7381 = vunpack.c.l.s4 1934713408
        %v7382 = vunpack.c.0.s8 %v7381
        %v7383 = vlaneseq
        %v7384 = vshrl.u32 %v7383, 7
        %v7385 = vsub.s32 %v7382, %v7384
        %v7386 = vrot.slane %v7372, %v7385
        %v7387 = vcombine.high %v7363, 0.0
        %v7388 = vcombine.high %v7370, 0.0
        %v7389 = vcombine.high %v7379, 0.0
        %v7390 = vcombine.high %v7386, 0.0
        %v7391 = vcombine.low %v5990, %v6054
        %v7392 = vcombine.high %v5990, %v6054
        %v7394 = vunpack.c.l.s4 1983009808
        %v7395 = vunpack.c.0.s8 %v7394
        %v7396 = vlaneseq
        %v7397 = vshrl.u32 %v7396, 7
        %v7398 = vsub.s32 %v7395, %v7397
        %v7399 = vrot.slane %v7391, %v7398
        %v7401 = vunpack.c.l.s4 1983009808
        %v7402 = vunpack.c.0.s8 %v7401
        %v7403 = vlaneseq
        %v7404 = vshrl.u32 %v7403, 7
        %v7405 = vsub.s32 %v7402, %v7404
        %v7406 = vrot.slane %v7392, %v7405
        %v7407 = vcombine.low %v6022, %v6086
        %v7408 = vcombine.high %v6022, %v6086
        %v7410 = vunpack.c.l.s4 1983009808
        %v7411 = vunpack.c.0.s8 %v7410
        %v7412 = vlaneseq
        %v7413 = vshrl.u32 %v7412, 7
        %v7414 = vsub.s32 %v7411, %v7413
        %v7415 = vrot.slane %v7407, %v7414
        %v7417 = vunpack.c.l.s4 1983009808
        %v7418 = vunpack.c.0.s8 %v7417
        %v7419 = vlaneseq
        %v7420 = vshrl.u32 %v7419, 7
        %v7421 = vsub.s32 %v7418, %v7420
        %v7422 = vrot.slane %v7408, %v7421
        %v7423 = vcombine.low %v7399, %v7415
        %v7424 = vcombine.high %v7399, %v7415
        %v7426 = vunpack.c.l.s4 1934713408
        %v7427 = vunpack.c.0.s8 %v7426
        %v7428 = vlaneseq
        %v7429 = vshrl.u32 %v7428, 7
        %v7430 = vsub.s32 %v7427, %v7429
        %v7431 = vrot.slane %v7423, %v7430
        %v7433 = vunpack.c.l.s4 1934713408
        %v7434 = vunpack.c.0.s8 %v7433
        %v7435 = vlaneseq
        %v7436 = vshrl.u32 %v7435, 7
        %v7437 = vsub.s32 %v7434, %v7436
        %v7438 = vrot.slane %v7424, %v7437
        %v7439 = vcombine.low %v7406, %v7422
        %v7440 = vcombine.high %v7406, %v7422
        %v7442 = vunpack.c.l.s4 1934713408
        %v7443 = vunpack.c.0.s8 %v7442
        %v7444 = vlaneseq
        %v7445 = vshrl.u32 %v7444, 7
        %v7446 = vsub.s32 %v7443, %v7445
        %v7447 = vrot.slane %v7439, %v7446
        %v7449 = vunpack.c.l.s4 1934713408
        %v7450 = vunpack.c.0.s8 %v7449
        %v7451 = vlaneseq
        %v7452 = vshrl.u32 %v7451, 7
        %v7453 = vsub.s32 %v7450, %v7452
        %v7454 = vrot.slane %v7440, %v7453
        %v7455 = vcombine.high %v7431, 0.0
        %v7456 = vcombine.high %v7438, 0.0
        %v7457 = vcombine.high %v7447, 0.0
        %v7458 = vcombine.high %v7454, 0.0
        %v7459 = vcombine.low %v5991, %v6055
        %v7460 = vcombine.high %v5991, %v6055
        %v7462 = vunpack.c.l.s4 1983009808
        %v7463 = vunpack.c.0.s8 %v7462
        %v7464 = vlaneseq
        %v7465 = vshrl.u32 %v7464, 7
        %v7466 = vsub.s32 %v7463, %v7465
        %v7467 = vrot.slane %v7459, %v7466
        %v7469 = vunpack.c.l.s4 1983009808
        %v7470 = vunpack.c.0.s8 %v7469
        %v7471 = vlaneseq
        %v7472 = vshrl.u32 %v7471, 7
        %v7473 = vsub.s32 %v7470, %v7472
        %v7474 = vrot.slane %v7460, %v7473
        %v7475 = vcombine.low %v6023, %v6087
        %v7476 = vcombine.high %v6023, %v6087
        %v7478 = vunpack.c.l.s4 1983009808
        %v7479 = vunpack.c.0.s8 %v7478
        %v7480 = vlaneseq
        %v7481 = vshrl.u32 %v7480, 7
        %v7482 = vsub.s32 %v7479, %v7481
        %v7483 = vrot.slane %v7475, %v7482
        %v7485 = vunpack.c.l.s4 1983009808
        %v7486 = vunpack.c.0.s8 %v7485
        %v7487 = vlaneseq
        %v7488 = vshrl.u32 %v7487, 7
        %v7489 = vsub.s32 %v7486, %v7488
        %v7490 = vrot.slane %v7476, %v7489
        %v7491 = vcombine.low %v7467, %v7483
        %v7492 = vcombine.high %v7467, %v7483
        %v7494 = vunpack.c.l.s4 1934713408
        %v7495 = vunpack.c.0.s8 %v7494
        %v7496 = vlaneseq
        %v7497 = vshrl.u32 %v7496, 7
        %v7498 = vsub.s32 %v7495, %v7497
        %v7499 = vrot.slane %v7491, %v7498
        %v7501 = vunpack.c.l.s4 1934713408
        %v7502 = vunpack.c.0.s8 %v7501
        %v7503 = vlaneseq
        %v7504 = vshrl.u32 %v7503, 7
        %v7505 = vsub.s32 %v7502, %v7504
        %v7506 = vrot.slane %v7492, %v7505
        %v7507 = vcombine.low %v7474, %v7490
        %v7508 = vcombine.high %v7474, %v7490
        %v7510 = vunpack.c.l.s4 1934713408
        %v7511 = vunpack.c.0.s8 %v7510
        %v7512 = vlaneseq
        %v7513 = vshrl.u32 %v7512, 7
        %v7514 = vsub.s32 %v7511, %v7513
        %v7515 = vrot.slane %v7507, %v7514
        %v7517 = vunpack.c.l.s4 1934713408
        %v7518 = vunpack.c.0.s8 %v7517
        %v7519 = vlaneseq
        %v7520 = vshrl.u32 %v7519, 7
        %v7521 = vsub.s32 %v7518, %v7520
        %v7522 = vrot.slane %v7508, %v7521
        %v7523 = vcombine.high %v7499, 0.0
        %v7524 = vcombine.high %v7506, 0.0
        %v7525 = vcombine.high %v7515, 0.0
        %v7526 = vcombine.high %v7522, 0.0
        %v7527 = vcombine.low %v5992, %v6056
        %v7528 = vcombine.high %v5992, %v6056
        %v7530 = vunpack.c.l.s4 1983009808
        %v7531 = vunpack.c.0.s8 %v7530
        %v7532 = vlaneseq
        %v7533 = vshrl.u32 %v7532, 7
        %v7534 = vsub.s32 %v7531, %v7533
        %v7535 = vrot.slane %v7527, %v7534
        %v7537 = vunpack.c.l.s4 1983009808
        %v7538 = vunpack.c.0.s8 %v7537
        %v7539 = vlaneseq
        %v7540 = vshrl.u32 %v7539, 7
        %v7541 = vsub.s32 %v7538, %v7540
        %v7542 = vrot.slane %v7528, %v7541
        %v7543 = vcombine.low %v6024, %v6088
        %v7544 = vcombine.high %v6024, %v6088
        %v7546 = vunpack.c.l.s4 1983009808
        %v7547 = vunpack.c.0.s8 %v7546
        %v7548 = vlaneseq
        %v7549 = vshrl.u32 %v7548, 7
        %v7550 = vsub.s32 %v7547, %v7549
        %v7551 = vrot.slane %v7543, %v7550
        %v7553 = vunpack.c.l.s4 1983009808
        %v7554 = vunpack.c.0.s8 %v7553
        %v7555 = vlaneseq
        %v7556 = vshrl.u32 %v7555, 7
        %v7557 = vsub.s32 %v7554, %v7556
        %v7558 = vrot.slane %v7544, %v7557
        %v7559 = vcombine.low %v7535, %v7551
        %v7560 = vcombine.high %v7535, %v7551
        %v7562 = vunpack.c.l.s4 1934713408
        %v7563 = vunpack.c.0.s8 %v7562
        %v7564 = vlaneseq
        %v7565 = vshrl.u32 %v7564, 7
        %v7566 = vsub.s32 %v7563, %v7565
        %v7567 = vrot.slane %v7559, %v7566
        %v7569 = vunpack.c.l.s4 1934713408
        %v7570 = vunpack.c.0.s8 %v7569
        %v7571 = vlaneseq
        %v7572 = vshrl.u32 %v7571, 7
        %v7573 = vsub.s32 %v7570, %v7572
        %v7574 = vrot.slane %v7560, %v7573
        %v7575 = vcombine.low %v7542, %v7558
        %v7576 = vcombine.high %v7542, %v7558
        %v7578 = vunpack.c.l.s4 1934713408
        %v7579 = vunpack.c.0.s8 %v7578
        %v7580 = vlaneseq
        %v7581 = vshrl.u32 %v7580, 7
        %v7582 = vsub.s32 %v7579, %v7581
        %v7583 = vrot.slane %v7575, %v7582
        %v7585 = vunpack.c.l.s4 1934713408
        %v7586 = vunpack.c.0.s8 %v7585
        %v7587 = vlaneseq
        %v7588 = vshrl.u32 %v7587, 7
        %v7589 = vsub.s32 %v7586, %v7588
        %v7590 = vrot.slane %v7576, %v7589
        %v7591 = vcombine.high %v7567, 0.0
        %v7592 = vcombine.high %v7574, 0.0
        %v7593 = vcombine.high %v7583, 0.0
        %v7594 = vcombine.high %v7590, 0.0
        %v7595 = vcombine.low %v5993, %v6057
        %v7596 = vcombine.high %v5993, %v6057
        %v7598 = vunpack.c.l.s4 1983009808
        %v7599 = vunpack.c.0.s8 %v7598
        %v7600 = vlaneseq
        %v7601 = vshrl.u32 %v7600, 7
        %v7602 = vsub.s32 %v7599, %v7601
        %v7603 = vrot.slane %v7595, %v7602
        %v7605 = vunpack.c.l.s4 1983009808
        %v7606 = vunpack.c.0.s8 %v7605
        %v7607 = vlaneseq
        %v7608 = vshrl.u32 %v7607, 7
        %v7609 = vsub.s32 %v7606, %v7608
        %v7610 = vrot.slane %v7596, %v7609
        %v7611 = vcombine.low %v6025, %v6089
        %v7612 = vcombine.high %v6025, %v6089
        %v7614 = vunpack.c.l.s4 1983009808
        %v7615 = vunpack.c.0.s8 %v7614
        %v7616 = vlaneseq
        %v7617 = vshrl.u32 %v7616, 7
        %v7618 = vsub.s32 %v7615, %v7617
        %v7619 = vrot.slane %v7611, %v7618
        %v7621 = vunpack.c.l.s4 1983009808
        %v7622 = vunpack.c.0.s8 %v7621
        %v7623 = vlaneseq
        %v7624 = vshrl.u32 %v7623, 7
        %v7625 = vsub.s32 %v7622, %v7624
        %v7626 = vrot.slane %v7612, %v7625
        %v7627 = vcombine.low %v7603, %v7619
        %v7628 = vcombine.high %v7603, %v7619
        %v7630 = vunpack.c.l.s4 1934713408
        %v7631 = vunpack.c.0.s8 %v7630
        %v7632 = vlaneseq
        %v7633 = vshrl.u32 %v7632, 7
        %v7634 = vsub.s32 %v7631, %v7633
        %v7635 = vrot.slane %v7627, %v7634
        %v7637 = vunpack.c.l.s4 1934713408
        %v7638 = vunpack.c.0.s8 %v7637
        %v7639 = vlaneseq
        %v7640 = vshrl.u32 %v7639, 7
        %v7641 = vsub.s32 %v7638, %v7640
        %v7642 = vrot.slane %v7628, %v7641
        %v7643 = vcombine.low %v7610, %v7626
        %v7644 = vcombine.high %v7610, %v7626
        %v7646 = vunpack.c.l.s4 1934713408
        %v7647 = vunpack.c.0.s8 %v7646
        %v7648 = vlaneseq
        %v7649 = vshrl.u32 %v7648, 7
        %v7650 = vsub.s32 %v7647, %v7649
        %v7651 = vrot.slane %v7643, %v7650
        %v7653 = vunpack.c.l.s4 1934713408
        %v7654 = vunpack.c.0.s8 %v7653
        %v7655 = vlaneseq
        %v7656 = vshrl.u32 %v7655, 7
        %v7657 = vsub.s32 %v7654, %v7656
        %v7658 = vrot.slane %v7644, %v7657
        %v7659 = vcombine.high %v7635, 0.0
        %v7660 = vcombine.high %v7642, 0.0
        %v7661 = vcombine.high %v7651, 0.0
        %v7662 = vcombine.high %v7658, 0.0
        %v7663 = vcombine.low %v5994, %v6058
        %v7664 = vcombine.high %v5994, %v6058
        %v7666 = vunpack.c.l.s4 1983009808
        %v7667 = vunpack.c.0.s8 %v7666
        %v7668 = vlaneseq
        %v7669 = vshrl.u32 %v7668, 7
        %v7670 = vsub.s32 %v7667, %v7669
        %v7671 = vrot.slane %v7663, %v7670
        %v7673 = vunpack.c.l.s4 1983009808
        %v7674 = vunpack.c.0.s8 %v7673
        %v7675 = vlaneseq
        %v7676 = vshrl.u32 %v7675, 7
        %v7677 = vsub.s32 %v7674, %v7676
        %v7678 = vrot.slane %v7664, %v7677
        %v7679 = vcombine.low %v6026, %v6090
        %v7680 = vcombine.high %v6026, %v6090
        %v7682 = vunpack.c.l.s4 1983009808
        %v7683 = vunpack.c.0.s8 %v7682
        %v7684 = vlaneseq
        %v7685 = vshrl.u32 %v7684, 7
        %v7686 = vsub.s32 %v7683, %v7685
        %v7687 = vrot.slane %v7679, %v7686
        %v7689 = vunpack.c.l.s4 1983009808
        %v7690 = vunpack.c.0.s8 %v7689
        %v7691 = vlaneseq
        %v7692 = vshrl.u32 %v7691, 7
        %v7693 = vsub.s32 %v7690, %v7692
        %v7694 = vrot.slane %v7680, %v7693
        %v7695 = vcombine.low %v7671, %v7687
        %v7696 = vcombine.high %v7671, %v7687
        %v7698 = vunpack.c.l.s4 1934713408
        %v7699 = vunpack.c.0.s8 %v7698
        %v7700 = vlaneseq
        %v7701 = vshrl.u32 %v7700, 7
        %v7702 = vsub.s32 %v7699, %v7701
        %v7703 = vrot.slane %v7695, %v7702
        %v7705 = vunpack.c.l.s4 1934713408
        %v7706 = vunpack.c.0.s8 %v7705
        %v7707 = vlaneseq
        %v7708 = vshrl.u32 %v7707, 7
        %v7709 = vsub.s32 %v7706, %v7708
        %v7710 = vrot.slane %v7696, %v7709
        %v7711 = vcombine.low %v7678, %v7694
        %v7712 = vcombine.high %v7678, %v7694
        %v7714 = vunpack.c.l.s4 1934713408
        %v7715 = vunpack.c.0.s8 %v7714
        %v7716 = vlaneseq
        %v7717 = vshrl.u32 %v7716, 7
        %v7718 = vsub.s32 %v7715, %v7717
        %v7719 = vrot.slane %v7711, %v7718
        %v7721 = vunpack.c.l.s4 1934713408
        %v7722 = vunpack.c.0.s8 %v7721
        %v7723 = vlaneseq
        %v7724 = vshrl.u32 %v7723, 7
        %v7725 = vsub.s32 %v7722, %v7724
        %v7726 = vrot.slane %v7712, %v7725
        %v7727 = vcombine.high %v7703, 0.0
        %v7728 = vcombine.high %v7710, 0.0
        %v7729 = vcombine.high %v7719, 0.0
        %v7730 = vcombine.high %v7726, 0.0
        %v7731 = vcombine.low %v5995, %v6059
        %v7732 = vcombine.high %v5995, %v6059
        %v7734 = vunpack.c.l.s4 1983009808
        %v7735 = vunpack.c.0.s8 %v7734
        %v7736 = vlaneseq
        %v7737 = vshrl.u32 %v7736, 7
        %v7738 = vsub.s32 %v7735, %v7737
        %v7739 = vrot.slane %v7731, %v7738
        %v7741 = vunpack.c.l.s4 1983009808
        %v7742 = vunpack.c.0.s8 %v7741
        %v7743 = vlaneseq
        %v7744 = vshrl.u32 %v7743, 7
        %v7745 = vsub.s32 %v7742, %v7744
        %v7746 = vrot.slane %v7732, %v7745
        %v7747 = vcombine.low %v6027, %v6091
        %v7748 = vcombine.high %v6027, %v6091
        %v7750 = vunpack.c.l.s4 1983009808
        %v7751 = vunpack.c.0.s8 %v7750
        %v7752 = vlaneseq
        %v7753 = vshrl.u32 %v7752, 7
        %v7754 = vsub.s32 %v7751, %v7753
        %v7755 = vrot.slane %v7747, %v7754
        %v7757 = vunpack.c.l.s4 1983009808
        %v7758 = vunpack.c.0.s8 %v7757
        %v7759 = vlaneseq
        %v7760 = vshrl.u32 %v7759, 7
        %v7761 = vsub.s32 %v7758, %v7760
        %v7762 = vrot.slane %v7748, %v7761
        %v7763 = vcombine.low %v7739, %v7755
        %v7764 = vcombine.high %v7739, %v7755
        %v7766 = vunpack.c.l.s4 1934713408
        %v7767 = vunpack.c.0.s8 %v7766
        %v7768 = vlaneseq
        %v7769 = vshrl.u32 %v7768, 7
        %v7770 = vsub.s32 %v7767, %v7769
        %v7771 = vrot.slane %v7763, %v7770
        %v7773 = vunpack.c.l.s4 1934713408
        %v7774 = vunpack.c.0.s8 %v7773
        %v7775 = vlaneseq
        %v7776 = vshrl.u32 %v7775, 7
        %v7777 = vsub.s32 %v7774, %v7776
        %v7778 = vrot.slane %v7764, %v7777
        %v7779 = vcombine.low %v7746, %v7762
        %v7780 = vcombine.high %v7746, %v7762
        %v7782 = vunpack.c.l.s4 1934713408
        %v7783 = vunpack.c.0.s8 %v7782
        %v7784 = vlaneseq
        %v7785 = vshrl.u32 %v7784, 7
        %v7786 = vsub.s32 %v7783, %v7785
        %v7787 = vrot.slane %v7779, %v7786
        %v7789 = vunpack.c.l.s4 1934713408
        %v7790 = vunpack.c.0.s8 %v7789
        %v7791 = vlaneseq
        %v7792 = vshrl.u32 %v7791, 7
        %v7793 = vsub.s32 %v7790, %v7792
        %v7794 = vrot.slane %v7780, %v7793
        %v7795 = vcombine.high %v7771, 0.0
        %v7796 = vcombine.high %v7778, 0.0
        %v7797 = vcombine.high %v7787, 0.0
        %v7798 = vcombine.high %v7794, 0.0
        %v7799 = vcombine.low %v5996, %v6060
        %v7800 = vcombine.high %v5996, %v6060
        %v7802 = vunpack.c.l.s4 1983009808
        %v7803 = vunpack.c.0.s8 %v7802
        %v7804 = vlaneseq
        %v7805 = vshrl.u32 %v7804, 7
        %v7806 = vsub.s32 %v7803, %v7805
        %v7807 = vrot.slane %v7799, %v7806
        %v7809 = vunpack.c.l.s4 1983009808
        %v7810 = vunpack.c.0.s8 %v7809
        %v7811 = vlaneseq
        %v7812 = vshrl.u32 %v7811, 7
        %v7813 = vsub.s32 %v7810, %v7812
        %v7814 = vrot.slane %v7800, %v7813
        %v7815 = vcombine.low %v6028, %v6092
        %v7816 = vcombine.high %v6028, %v6092
        %v7818 = vunpack.c.l.s4 1983009808
        %v7819 = vunpack.c.0.s8 %v7818
        %v7820 = vlaneseq
        %v7821 = vshrl.u32 %v7820, 7
        %v7822 = vsub.s32 %v7819, %v7821
        %v7823 = vrot.slane %v7815, %v7822
        %v7825 = vunpack.c.l.s4 1983009808
        %v7826 = vunpack.c.0.s8 %v7825
        %v7827 = vlaneseq
        %v7828 = vshrl.u32 %v7827, 7
        %v7829 = vsub.s32 %v7826, %v7828
        %v7830 = vrot.slane %v7816, %v7829
        %v7831 = vcombine.low %v7807, %v7823
        %v7832 = vcombine.high %v7807, %v7823
        %v7834 = vunpack.c.l.s4 1934713408
        %v7835 = vunpack.c.0.s8 %v7834
        %v7836 = vlaneseq
        %v7837 = vshrl.u32 %v7836, 7
        %v7838 = vsub.s32 %v7835, %v7837
        %v7839 = vrot.slane %v7831, %v7838
        %v7841 = vunpack.c.l.s4 1934713408
        %v7842 = vunpack.c.0.s8 %v7841
        %v7843 = vlaneseq
        %v7844 = vshrl.u32 %v7843, 7
        %v7845 = vsub.s32 %v7842, %v7844
        %v7846 = vrot.slane %v7832, %v7845
        %v7847 = vcombine.low %v7814, %v7830
        %v7848 = vcombine.high %v7814, %v7830
        %v7850 = vunpack.c.l.s4 1934713408
        %v7851 = vunpack.c.0.s8 %v7850
        %v7852 = vlaneseq
        %v7853 = vshrl.u32 %v7852, 7
        %v7854 = vsub.s32 %v7851, %v7853
        %v7855 = vrot.slane %v7847, %v7854
        %v7857 = vunpack.c.l.s4 1934713408
        %v7858 = vunpack.c.0.s8 %v7857
        %v7859 = vlaneseq
        %v7860 = vshrl.u32 %v7859, 7
        %v7861 = vsub.s32 %v7858, %v7860
        %v7862 = vrot.slane %v7848, %v7861
        %v7863 = vcombine.high %v7839, 0.0
        %v7864 = vcombine.high %v7846, 0.0
        %v7865 = vcombine.high %v7855, 0.0
        %v7866 = vcombine.high %v7862, 0.0
        %v7867 = vcombine.low %v5997, %v6061
        %v7868 = vcombine.high %v5997, %v6061
        %v7870 = vunpack.c.l.s4 1983009808
        %v7871 = vunpack.c.0.s8 %v7870
        %v7872 = vlaneseq
        %v7873 = vshrl.u32 %v7872, 7
        %v7874 = vsub.s32 %v7871, %v7873
        %v7875 = vrot.slane %v7867, %v7874
        %v7877 = vunpack.c.l.s4 1983009808
        %v7878 = vunpack.c.0.s8 %v7877
        %v7879 = vlaneseq
        %v7880 = vshrl.u32 %v7879, 7
        %v7881 = vsub.s32 %v7878, %v7880
        %v7882 = vrot.slane %v7868, %v7881
        %v7883 = vcombine.low %v6029, %v6093
        %v7884 = vcombine.high %v6029, %v6093
        %v7886 = vunpack.c.l.s4 1983009808
        %v7887 = vunpack.c.0.s8 %v7886
        %v7888 = vlaneseq
        %v7889 = vshrl.u32 %v7888, 7
        %v7890 = vsub.s32 %v7887, %v7889
        %v7891 = vrot.slane %v7883, %v7890
        %v7893 = vunpack.c.l.s4 1983009808
        %v7894 = vunpack.c.0.s8 %v7893
        %v7895 = vlaneseq
        %v7896 = vshrl.u32 %v7895, 7
        %v7897 = vsub.s32 %v7894, %v7896
        %v7898 = vrot.slane %v7884, %v7897
        %v7899 = vcombine.low %v7875, %v7891
        %v7900 = vcombine.high %v7875, %v7891
        %v7902 = vunpack.c.l.s4 1934713408
        %v7903 = vunpack.c.0.s8 %v7902
        %v7904 = vlaneseq
        %v7905 = vshrl.u32 %v7904, 7
        %v7906 = vsub.s32 %v7903, %v7905
        %v7907 = vrot.slane %v7899, %v7906
        %v7909 = vunpack.c.l.s4 1934713408
        %v7910 = vunpack.c.0.s8 %v7909
        %v7911 = vlaneseq
        %v7912 = vshrl.u32 %v7911, 7
        %v7913 = vsub.s32 %v7910, %v7912
        %v7914 = vrot.slane %v7900, %v7913
        %v7915 = vcombine.low %v7882, %v7898
        %v7916 = vcombine.high %v7882, %v7898
        %v7918 = vunpack.c.l.s4 1934713408
        %v7919 = vunpack.c.0.s8 %v7918
        %v7920 = vlaneseq
        %v7921 = vshrl.u32 %v7920, 7
        %v7922 = vsub.s32 %v7919, %v7921
        %v7923 = vrot.slane %v7915, %v7922
        %v7925 = vunpack.c.l.s4 1934713408
        %v7926 = vunpack.c.0.s8 %v7925
        %v7927 = vlaneseq
        %v7928 = vshrl.u32 %v7927, 7
        %v7929 = vsub.s32 %v7926, %v7928
        %v7930 = vrot.slane %v7916, %v7929
        %v7931 = vcombine.high %v7907, 0.0
        %v7932 = vcombine.high %v7914, 0.0
        %v7933 = vcombine.high %v7923, 0.0
        %v7934 = vcombine.high %v7930, 0.0
        %v7935 = vcombine.low %v5998, %v6062
        %v7936 = vcombine.high %v5998, %v6062
        %v7938 = vunpack.c.l.s4 1983009808
        %v7939 = vunpack.c.0.s8 %v7938
        %v7940 = vlaneseq
        %v7941 = vshrl.u32 %v7940, 7
        %v7942 = vsub.s32 %v7939, %v7941
        %v7943 = vrot.slane %v7935, %v7942
        %v7945 = vunpack.c.l.s4 1983009808
        %v7946 = vunpack.c.0.s8 %v7945
        %v7947 = vlaneseq
        %v7948 = vshrl.u32 %v7947, 7
        %v7949 = vsub.s32 %v7946, %v7948
        %v7950 = vrot.slane %v7936, %v7949
        %v7951 = vcombine.low %v6030, %v6094
        %v7952 = vcombine.high %v6030, %v6094
        %v7954 = vunpack.c.l.s4 1983009808
        %v7955 = vunpack.c.0.s8 %v7954
        %v7956 = vlaneseq
        %v7957 = vshrl.u32 %v7956, 7
        %v7958 = vsub.s32 %v7955, %v7957
        %v7959 = vrot.slane %v7951, %v7958
        %v7961 = vunpack.c.l.s4 1983009808
        %v7962 = vunpack.c.0.s8 %v7961
        %v7963 = vlaneseq
        %v7964 = vshrl.u32 %v7963, 7
        %v7965 = vsub.s32 %v7962, %v7964
        %v7966 = vrot.slane %v7952, %v7965
        %v7967 = vcombine.low %v7943, %v7959
        %v7968 = vcombine.high %v7943, %v7959
        %v7970 = vunpack.c.l.s4 1934713408
        %v7971 = vunpack.c.0.s8 %v7970
        %v7972 = vlaneseq
        %v7973 = vshrl.u32 %v7972, 7
        %v7974 = vsub.s32 %v7971, %v7973
        %v7975 = vrot.slane %v7967, %v7974
        %v7977 = vunpack.c.l.s4 1934713408
        %v7978 = vunpack.c.0.s8 %v7977
        %v7979 = vlaneseq
        %v7980 = vshrl.u32 %v7979, 7
        %v7981 = vsub.s32 %v7978, %v7980
        %v7982 = vrot.slane %v7968, %v7981
        %v7983 = vcombine.low %v7950, %v7966
        %v7984 = vcombine.high %v7950, %v7966
        %v7986 = vunpack.c.l.s4 1934713408
        %v7987 = vunpack.c.0.s8 %v7986
        %v7988 = vlaneseq
        %v7989 = vshrl.u32 %v7988, 7
        %v7990 = vsub.s32 %v7987, %v7989
        %v7991 = vrot.slane %v7983, %v7990
        %v7993 = vunpack.c.l.s4 1934713408
        %v7994 = vunpack.c.0.s8 %v7993
        %v7995 = vlaneseq
        %v7996 = vshrl.u32 %v7995, 7
        %v7997 = vsub.s32 %v7994, %v7996
        %v7998 = vrot.slane %v7984, %v7997
        %v7999 = vcombine.high %v7975, 0.0
        %v8000 = vcombine.high %v7982, 0.0
        %v8001 = vcombine.high %v7991, 0.0
        %v8002 = vcombine.high %v7998, 0.0
        %v8003 = vcombine.low %v5999, %v6063
        %v8004 = vcombine.high %v5999, %v6063
        %v8006 = vunpack.c.l.s4 1983009808
        %v8007 = vunpack.c.0.s8 %v8006
        %v8008 = vlaneseq
        %v8009 = vshrl.u32 %v8008, 7
        %v8010 = vsub.s32 %v8007, %v8009
        %v8011 = vrot.slane %v8003, %v8010
        %v8013 = vunpack.c.l.s4 1983009808
        %v8014 = vunpack.c.0.s8 %v8013
        %v8015 = vlaneseq
        %v8016 = vshrl.u32 %v8015, 7
        %v8017 = vsub.s32 %v8014, %v8016
        %v8018 = vrot.slane %v8004, %v8017
        %v8019 = vcombine.low %v6031, %v6095
        %v8020 = vcombine.high %v6031, %v6095
        %v8022 = vunpack.c.l.s4 1983009808
        %v8023 = vunpack.c.0.s8 %v8022
        %v8024 = vlaneseq
        %v8025 = vshrl.u32 %v8024, 7
        %v8026 = vsub.s32 %v8023, %v8025
        %v8027 = vrot.slane %v8019, %v8026
        %v8029 = vunpack.c.l.s4 1983009808
        %v8030 = vunpack.c.0.s8 %v8029
        %v8031 = vlaneseq
        %v8032 = vshrl.u32 %v8031, 7
        %v8033 = vsub.s32 %v8030, %v8032
        %v8034 = vrot.slane %v8020, %v8033
        %v8035 = vcombine.low %v8011, %v8027
        %v8036 = vcombine.high %v8011, %v8027
        %v8038 = vunpack.c.l.s4 1934713408
        %v8039 = vunpack.c.0.s8 %v8038
        %v8040 = vlaneseq
        %v8041 = vshrl.u32 %v8040, 7
        %v8042 = vsub.s32 %v8039, %v8041
        %v8043 = vrot.slane %v8035, %v8042
        %v8045 = vunpack.c.l.s4 1934713408
        %v8046 = vunpack.c.0.s8 %v8045
        %v8047 = vlaneseq
        %v8048 = vshrl.u32 %v8047, 7
        %v8049 = vsub.s32 %v8046, %v8048
        %v8050 = vrot.slane %v8036, %v8049
        %v8051 = vcombine.low %v8018, %v8034
        %v8052 = vcombine.high %v8018, %v8034
        %v8054 = vunpack.c.l.s4 1934713408
        %v8055 = vunpack.c.0.s8 %v8054
        %v8056 = vlaneseq
        %v8057 = vshrl.u32 %v8056, 7
        %v8058 = vsub.s32 %v8055, %v8057
        %v8059 = vrot.slane %v8051, %v8058
        %v8061 = vunpack.c.l.s4 1934713408
        %v8062 = vunpack.c.0.s8 %v8061
        %v8063 = vlaneseq
        %v8064 = vshrl.u32 %v8063, 7
        %v8065 = vsub.s32 %v8062, %v8064
        %v8066 = vrot.slane %v8052, %v8065
        %v8067 = vcombine.high %v8043, 0.0
        %v8068 = vcombine.high %v8050, 0.0
        %v8069 = vcombine.high %v8059, 0.0
        %v8070 = vcombine.high %v8066, 0.0
        %v8071 = vcombine.low %v6000, %v6064
        %v8072 = vcombine.high %v6000, %v6064
        %v8074 = vunpack.c.l.s4 1983009808
        %v8075 = vunpack.c.0.s8 %v8074
        %v8076 = vlaneseq
        %v8077 = vshrl.u32 %v8076, 7
        %v8078 = vsub.s32 %v8075, %v8077
        %v8079 = vrot.slane %v8071, %v8078
        %v8081 = vunpack.c.l.s4 1983009808
        %v8082 = vunpack.c.0.s8 %v8081
        %v8083 = vlaneseq
        %v8084 = vshrl.u32 %v8083, 7
        %v8085 = vsub.s32 %v8082, %v8084
        %v8086 = vrot.slane %v8072, %v8085
        %v8087 = vcombine.low %v6032, %v6096
        %v8088 = vcombine.high %v6032, %v6096
        %v8090 = vunpack.c.l.s4 1983009808
        %v8091 = vunpack.c.0.s8 %v8090
        %v8092 = vlaneseq
        %v8093 = vshrl.u32 %v8092, 7
        %v8094 = vsub.s32 %v8091, %v8093
        %v8095 = vrot.slane %v8087, %v8094
        %v8097 = vunpack.c.l.s4 1983009808
        %v8098 = vunpack.c.0.s8 %v8097
        %v8099 = vlaneseq
        %v8100 = vshrl.u32 %v8099, 7
        %v8101 = vsub.s32 %v8098, %v8100
        %v8102 = vrot.slane %v8088, %v8101
        %v8103 = vcombine.low %v8079, %v8095
        %v8104 = vcombine.high %v8079, %v8095
        %v8106 = vunpack.c.l.s4 1934713408
        %v8107 = vunpack.c.0.s8 %v8106
        %v8108 = vlaneseq
        %v8109 = vshrl.u32 %v8108, 7
        %v8110 = vsub.s32 %v8107, %v8109
        %v8111 = vrot.slane %v8103, %v8110
        %v8113 = vunpack.c.l.s4 1934713408
        %v8114 = vunpack.c.0.s8 %v8113
        %v8115 = vlaneseq
        %v8116 = vshrl.u32 %v8115, 7
        %v8117 = vsub.s32 %v8114, %v8116
        %v8118 = vrot.slane %v8104, %v8117
        %v8119 = vcombine.low %v8086, %v8102
        %v8120 = vcombine.high %v8086, %v8102
        %v8122 = vunpack.c.l.s4 1934713408
        %v8123 = vunpack.c.0.s8 %v8122
        %v8124 = vlaneseq
        %v8125 = vshrl.u32 %v8124, 7
        %v8126 = vsub.s32 %v8123, %v8125
        %v8127 = vrot.slane %v8119, %v8126
        %v8129 = vunpack.c.l.s4 1934713408
        %v8130 = vunpack.c.0.s8 %v8129
        %v8131 = vlaneseq
        %v8132 = vshrl.u32 %v8131, 7
        %v8133 = vsub.s32 %v8130, %v8132
        %v8134 = vrot.slane %v8120, %v8133
        %v8135 = vcombine.high %v8111, 0.0
        %v8136 = vcombine.high %v8118, 0.0
        %v8137 = vcombine.high %v8127, 0.0
        %v8138 = vcombine.high %v8134, 0.0
        %v8139 = vcombine.low %v6001, %v6065
        %v8140 = vcombine.high %v6001, %v6065
        %v8142 = vunpack.c.l.s4 1983009808
        %v8143 = vunpack.c.0.s8 %v8142
        %v8144 = vlaneseq
        %v8145 = vshrl.u32 %v8144, 7
        %v8146 = vsub.s32 %v8143, %v8145
        %v8147 = vrot.slane %v8139, %v8146
        %v8149 = vunpack.c.l.s4 1983009808
        %v8150 = vunpack.c.0.s8 %v8149
        %v8151 = vlaneseq
        %v8152 = vshrl.u32 %v8151, 7
        %v8153 = vsub.s32 %v8150, %v8152
        %v8154 = vrot.slane %v8140, %v8153
        %v8155 = vcombine.low %v6033, %v6097
        %v8156 = vcombine.high %v6033, %v6097
        %v8158 = vunpack.c.l.s4 1983009808
        %v8159 = vunpack.c.0.s8 %v8158
        %v8160 = vlaneseq
        %v8161 = vshrl.u32 %v8160, 7
        %v8162 = vsub.s32 %v8159, %v8161
        %v8163 = vrot.slane %v8155, %v8162
        %v8165 = vunpack.c.l.s4 1983009808
        %v8166 = vunpack.c.0.s8 %v8165
        %v8167 = vlaneseq
        %v8168 = vshrl.u32 %v8167, 7
        %v8169 = vsub.s32 %v8166, %v8168
        %v8170 = vrot.slane %v8156, %v8169
        %v8171 = vcombine.low %v8147, %v8163
        %v8172 = vcombine.high %v8147, %v8163
        %v8174 = vunpack.c.l.s4 1934713408
        %v8175 = vunpack.c.0.s8 %v8174
        %v8176 = vlaneseq
        %v8177 = vshrl.u32 %v8176, 7
        %v8178 = vsub.s32 %v8175, %v8177
        %v8179 = vrot.slane %v8171, %v8178
        %v8181 = vunpack.c.l.s4 1934713408
        %v8182 = vunpack.c.0.s8 %v8181
        %v8183 = vlaneseq
        %v8184 = vshrl.u32 %v8183, 7
        %v8185 = vsub.s32 %v8182, %v8184
        %v8186 = vrot.slane %v8172, %v8185
        %v8187 = vcombine.low %v8154, %v8170
        %v8188 = vcombine.high %v8154, %v8170
        %v8190 = vunpack.c.l.s4 1934713408
        %v8191 = vunpack.c.0.s8 %v8190
        %v8192 = vlaneseq
        %v8193 = vshrl.u32 %v8192, 7
        %v8194 = vsub.s32 %v8191, %v8193
        %v8195 = vrot.slane %v8187, %v8194
        %v8197 = vunpack.c.l.s4 1934713408
        %v8198 = vunpack.c.0.s8 %v8197
        %v8199 = vlaneseq
        %v8200 = vshrl.u32 %v8199, 7
        %v8201 = vsub.s32 %v8198, %v8200
        %v8202 = vrot.slane %v8188, %v8201
        %v8203 = vcombine.high %v8179, 0.0
        %v8204 = vcombine.high %v8186, 0.0
        %v8205 = vcombine.high %v8195, 0.0
        %v8206 = vcombine.high %v8202, 0.0
        %v8207 = vcombine.low %v6002, %v6066
        %v8208 = vcombine.high %v6002, %v6066
        %v8210 = vunpack.c.l.s4 1983009808
        %v8211 = vunpack.c.0.s8 %v8210
        %v8212 = vlaneseq
        %v8213 = vshrl.u32 %v8212, 7
        %v8214 = vsub.s32 %v8211, %v8213
        %v8215 = vrot.slane %v8207, %v8214
        %v8217 = vunpack.c.l.s4 1983009808
        %v8218 = vunpack.c.0.s8 %v8217
        %v8219 = vlaneseq
        %v8220 = vshrl.u32 %v8219, 7
        %v8221 = vsub.s32 %v8218, %v8220
        %v8222 = vrot.slane %v8208, %v8221
        %v8223 = vcombine.low %v6034, %v6098
        %v8224 = vcombine.high %v6034, %v6098
        %v8226 = vunpack.c.l.s4 1983009808
        %v8227 = vunpack.c.0.s8 %v8226
        %v8228 = vlaneseq
        %v8229 = vshrl.u32 %v8228, 7
        %v8230 = vsub.s32 %v8227, %v8229
        %v8231 = vrot.slane %v8223, %v8230
        %v8233 = vunpack.c.l.s4 1983009808
        %v8234 = vunpack.c.0.s8 %v8233
        %v8235 = vlaneseq
        %v8236 = vshrl.u32 %v8235, 7
        %v8237 = vsub.s32 %v8234, %v8236
        %v8238 = vrot.slane %v8224, %v8237
        %v8239 = vcombine.low %v8215, %v8231
        %v8240 = vcombine.high %v8215, %v8231
        %v8242 = vunpack.c.l.s4 1934713408
        %v8243 = vunpack.c.0.s8 %v8242
        %v8244 = vlaneseq
        %v8245 = vshrl.u32 %v8244, 7
        %v8246 = vsub.s32 %v8243, %v8245
        %v8247 = vrot.slane %v8239, %v8246
        %v8249 = vunpack.c.l.s4 1934713408
        %v8250 = vunpack.c.0.s8 %v8249
        %v8251 = vlaneseq
        %v8252 = vshrl.u32 %v8251, 7
        %v8253 = vsub.s32 %v8250, %v8252
        %v8254 = vrot.slane %v8240, %v8253
        %v8255 = vcombine.low %v8222, %v8238
        %v8256 = vcombine.high %v8222, %v8238
        %v8258 = vunpack.c.l.s4 1934713408
        %v8259 = vunpack.c.0.s8 %v8258
        %v8260 = vlaneseq
        %v8261 = vshrl.u32 %v8260, 7
        %v8262 = vsub.s32 %v8259, %v8261
        %v8263 = vrot.slane %v8255, %v8262
        %v8265 = vunpack.c.l.s4 1934713408
        %v8266 = vunpack.c.0.s8 %v8265
        %v8267 = vlaneseq
        %v8268 = vshrl.u32 %v8267, 7
        %v8269 = vsub.s32 %v8266, %v8268
        %v8270 = vrot.slane %v8256, %v8269
        %v8271 = vcombine.high %v8247, 0.0
        %v8272 = vcombine.high %v8254, 0.0
        %v8273 = vcombine.high %v8263, 0.0
        %v8274 = vcombine.high %v8270, 0.0
        %8276 = vrot.lane.b32.xlu0 %v6163, 2
        %v8277 = vpop.permute.xlu0 %8276
        %8280 = vrot.lane.b32.xlu0 %v6146, 4
        %v8281 = vpop.permute.xlu0 %8280
        %8284 = vrot.lane.b32.xlu0 %v6164, 6
        %v8285 = vpop.permute.xlu0 %8284
        %8288 = vrot.lane.b32.xlu0 %v6155, 8
        %v8289 = vpop.permute.xlu0 %8288
        %8292 = vrot.lane.b32.xlu0 %v6165, 10
        %v8293 = vpop.permute.xlu0 %8292
        %8296 = vrot.lane.b32.xlu0 %v6162, 12
        %v8297 = vpop.permute.xlu0 %8296
        %8300 = vrot.lane.b32.xlu0 %v6166, 14
        %v8301 = vpop.permute.xlu0 %8300
        %8304 = vrot.lane.b32.xlu0 %v6207, 16
        %v8305 = vpop.permute.xlu0 %8304
        %8308 = vrot.lane.b32.xlu0 %v6231, 18
        %v8309 = vpop.permute.xlu0 %8308
        %8312 = vrot.lane.b32.xlu0 %v6214, 20
        %v8313 = vpop.permute.xlu0 %8312
        %8316 = vrot.lane.b32.xlu0 %v6232, 22
        %v8317 = vpop.permute.xlu0 %8316
        %8320 = vrot.lane.b32.xlu0 %v6223, 24
        %v8321 = vpop.permute.xlu0 %8320
        %8324 = vrot.lane.b32.xlu0 %v6233, 26
        %v8325 = vpop.permute.xlu0 %8324
        %8328 = vrot.lane.b32.xlu0 %v6230, 28
        %v8329 = vpop.permute.xlu0 %8328
        %8332 = vrot.lane.b32.xlu0 %v6234, 30
        %v8333 = vpop.permute.xlu0 %8332
        %8336 = vrot.lane.b32.xlu0 %v6275, 32
        %v8337 = vpop.permute.xlu0 %8336
        %8340 = vrot.lane.b32.xlu0 %v6299, 34
        %v8341 = vpop.permute.xlu0 %8340
        %8344 = vrot.lane.b32.xlu0 %v6282, 36
        %v8345 = vpop.permute.xlu0 %8344
        %8348 = vrot.lane.b32.xlu0 %v6300, 38
        %v8349 = vpop.permute.xlu0 %8348
        %8352 = vrot.lane.b32.xlu0 %v6291, 40
        %v8353 = vpop.permute.xlu0 %8352
        %8356 = vrot.lane.b32.xlu0 %v6301, 42
        %v8357 = vpop.permute.xlu0 %8356
        %8360 = vrot.lane.b32.xlu0 %v6298, 44
        %v8361 = vpop.permute.xlu0 %8360
        %8364 = vrot.lane.b32.xlu0 %v6302, 46
        %v8365 = vpop.permute.xlu0 %8364
        %8368 = vrot.lane.b32.xlu0 %v6343, 48
        %v8369 = vpop.permute.xlu0 %8368
        %8372 = vrot.lane.b32.xlu0 %v6367, 50
        %v8373 = vpop.permute.xlu0 %8372
        %8376 = vrot.lane.b32.xlu0 %v6350, 52
        %v8377 = vpop.permute.xlu0 %8376
        %8380 = vrot.lane.b32.xlu0 %v6368, 54
        %v8381 = vpop.permute.xlu0 %8380
        %8384 = vrot.lane.b32.xlu0 %v6359, 56
        %v8385 = vpop.permute.xlu0 %8384
        %8388 = vrot.lane.b32.xlu0 %v6369, 58
        %v8389 = vpop.permute.xlu0 %8388
        %8392 = vrot.lane.b32.xlu0 %v6366, 60
        %v8393 = vpop.permute.xlu0 %8392
        %8396 = vrot.lane.b32.xlu0 %v6370, 62
        %v8397 = vpop.permute.xlu0 %8396
        %8400 = vrot.lane.b32.xlu0 %v6411, 64
        %v8401 = vpop.permute.xlu0 %8400
        %8404 = vrot.lane.b32.xlu0 %v6435, 66
        %v8405 = vpop.permute.xlu0 %8404
        %8408 = vrot.lane.b32.xlu0 %v6418, 68
        %v8409 = vpop.permute.xlu0 %8408
        %8412 = vrot.lane.b32.xlu0 %v6436, 70
        %v8413 = vpop.permute.xlu0 %8412
        %8416 = vrot.lane.b32.xlu0 %v6427, 72
        %v8417 = vpop.permute.xlu0 %8416
        %8420 = vrot.lane.b32.xlu0 %v6437, 74
        %v8421 = vpop.permute.xlu0 %8420
        %8424 = vrot.lane.b32.xlu0 %v6434, 76
        %v8425 = vpop.permute.xlu0 %8424
        %8428 = vrot.lane.b32.xlu0 %v6438, 78
        %v8429 = vpop.permute.xlu0 %8428
        %8432 = vrot.lane.b32.xlu0 %v6479, 80
        %v8433 = vpop.permute.xlu0 %8432
        %8436 = vrot.lane.b32.xlu0 %v6503, 82
        %v8437 = vpop.permute.xlu0 %8436
        %8440 = vrot.lane.b32.xlu0 %v6486, 84
        %v8441 = vpop.permute.xlu0 %8440
        %8444 = vrot.lane.b32.xlu0 %v6504, 86
        %v8445 = vpop.permute.xlu0 %8444
        %8448 = vrot.lane.b32.xlu0 %v6495, 88
        %v8449 = vpop.permute.xlu0 %8448
        %8452 = vrot.lane.b32.xlu0 %v6505, 90
        %v8453 = vpop.permute.xlu0 %8452
        %8456 = vrot.lane.b32.xlu0 %v6502, 92
        %v8457 = vpop.permute.xlu0 %8456
        %8460 = vrot.lane.b32.xlu0 %v6506, 94
        %v8461 = vpop.permute.xlu0 %8460
        %8464 = vrot.lane.b32.xlu0 %v6547, 96
        %v8465 = vpop.permute.xlu0 %8464
        %8468 = vrot.lane.b32.xlu0 %v6571, 98
        %v8469 = vpop.permute.xlu0 %8468
        %8472 = vrot.lane.b32.xlu0 %v6554, 100
        %v8473 = vpop.permute.xlu0 %8472
        %8476 = vrot.lane.b32.xlu0 %v6572, 102
        %v8477 = vpop.permute.xlu0 %8476
        %8480 = vrot.lane.b32.xlu0 %v6563, 104
        %v8481 = vpop.permute.xlu0 %8480
        %8484 = vrot.lane.b32.xlu0 %v6573, 106
        %v8485 = vpop.permute.xlu0 %8484
        %8488 = vrot.lane.b32.xlu0 %v6570, 108
        %v8489 = vpop.permute.xlu0 %8488
        %8492 = vrot.lane.b32.xlu0 %v6574, 110
        %v8493 = vpop.permute.xlu0 %8492
        %8496 = vrot.lane.b32.xlu0 %v6615, 112
        %v8497 = vpop.permute.xlu0 %8496
        %8500 = vrot.lane.b32.xlu0 %v6639, 114
        %v8501 = vpop.permute.xlu0 %8500
        %8504 = vrot.lane.b32.xlu0 %v6622, 116
        %v8505 = vpop.permute.xlu0 %8504
        %8508 = vrot.lane.b32.xlu0 %v6640, 118
        %v8509 = vpop.permute.xlu0 %8508
        %8512 = vrot.lane.b32.xlu0 %v6631, 120
        %v8513 = vpop.permute.xlu0 %8512
        %8516 = vrot.lane.b32.xlu0 %v6641, 122
        %v8517 = vpop.permute.xlu0 %8516
        %8520 = vrot.lane.b32.xlu0 %v6638, 124
        %v8521 = vpop.permute.xlu0 %8520
        %8524 = vrot.lane.b32.xlu0 %v6642, 126
        %v8525 = vpop.permute.xlu0 %8524
        %8528 = vrot.lane.b32.xlu0 %v6707, 2
        %v8529 = vpop.permute.xlu0 %8528
        %8532 = vrot.lane.b32.xlu0 %v6690, 4
        %v8533 = vpop.permute.xlu0 %8532
        %8536 = vrot.lane.b32.xlu0 %v6708, 6
        %v8537 = vpop.permute.xlu0 %8536
        %8540 = vrot.lane.b32.xlu0 %v6699, 8
        %v8541 = vpop.permute.xlu0 %8540
        %8544 = vrot.lane.b32.xlu0 %v6709, 10
        %v8545 = vpop.permute.xlu0 %8544
        %8548 = vrot.lane.b32.xlu0 %v6706, 12
        %v8549 = vpop.permute.xlu0 %8548
        %8552 = vrot.lane.b32.xlu0 %v6710, 14
        %v8553 = vpop.permute.xlu0 %8552
        %8556 = vrot.lane.b32.xlu0 %v6751, 16
        %v8557 = vpop.permute.xlu0 %8556
        %8560 = vrot.lane.b32.xlu0 %v6775, 18
        %v8561 = vpop.permute.xlu0 %8560
        %8564 = vrot.lane.b32.xlu0 %v6758, 20
        %v8565 = vpop.permute.xlu0 %8564
        %8568 = vrot.lane.b32.xlu0 %v6776, 22
        %v8569 = vpop.permute.xlu0 %8568
        %8572 = vrot.lane.b32.xlu0 %v6767, 24
        %v8573 = vpop.permute.xlu0 %8572
        %8576 = vrot.lane.b32.xlu0 %v6777, 26
        %v8577 = vpop.permute.xlu0 %8576
        %8580 = vrot.lane.b32.xlu0 %v6774, 28
        %v8581 = vpop.permute.xlu0 %8580
        %8584 = vrot.lane.b32.xlu0 %v6778, 30
        %v8585 = vpop.permute.xlu0 %8584
        %8588 = vrot.lane.b32.xlu0 %v6819, 32
        %v8589 = vpop.permute.xlu0 %8588
        %8592 = vrot.lane.b32.xlu0 %v6843, 34
        %v8593 = vpop.permute.xlu0 %8592
        %8596 = vrot.lane.b32.xlu0 %v6826, 36
        %v8597 = vpop.permute.xlu0 %8596
        %8600 = vrot.lane.b32.xlu0 %v6844, 38
        %v8601 = vpop.permute.xlu0 %8600
        %8604 = vrot.lane.b32.xlu0 %v6835, 40
        %v8605 = vpop.permute.xlu0 %8604
        %8608 = vrot.lane.b32.xlu0 %v6845, 42
        %v8609 = vpop.permute.xlu0 %8608
        %8612 = vrot.lane.b32.xlu0 %v6842, 44
        %v8613 = vpop.permute.xlu0 %8612
        %8616 = vrot.lane.b32.xlu0 %v6846, 46
        %v8617 = vpop.permute.xlu0 %8616
        %8620 = vrot.lane.b32.xlu0 %v6887, 48
        %v8621 = vpop.permute.xlu0 %8620
        %8624 = vrot.lane.b32.xlu0 %v6911, 50
        %v8625 = vpop.permute.xlu0 %8624
        %8628 = vrot.lane.b32.xlu0 %v6894, 52
        %v8629 = vpop.permute.xlu0 %8628
        %8632 = vrot.lane.b32.xlu0 %v6912, 54
        %v8633 = vpop.permute.xlu0 %8632
        %8636 = vrot.lane.b32.xlu0 %v6903, 56
        %v8637 = vpop.permute.xlu0 %8636
        %8640 = vrot.lane.b32.xlu0 %v6913, 58
        %v8641 = vpop.permute.xlu0 %8640
        %8644 = vrot.lane.b32.xlu0 %v6910, 60
        %v8645 = vpop.permute.xlu0 %8644
        %8648 = vrot.lane.b32.xlu0 %v6914, 62
        %v8649 = vpop.permute.xlu0 %8648
        %8652 = vrot.lane.b32.xlu0 %v6955, 64
        %v8653 = vpop.permute.xlu0 %8652
        %8656 = vrot.lane.b32.xlu0 %v6979, 66
        %v8657 = vpop.permute.xlu0 %8656
        %8660 = vrot.lane.b32.xlu0 %v6962, 68
        %v8661 = vpop.permute.xlu0 %8660
        %8664 = vrot.lane.b32.xlu0 %v6980, 70
        %v8665 = vpop.permute.xlu0 %8664
        %8668 = vrot.lane.b32.xlu0 %v6971, 72
        %v8669 = vpop.permute.xlu0 %8668
        %8672 = vrot.lane.b32.xlu0 %v6981, 74
        %v8673 = vpop.permute.xlu0 %8672
        %8676 = vrot.lane.b32.xlu0 %v6978, 76
        %v8677 = vpop.permute.xlu0 %8676
        %8680 = vrot.lane.b32.xlu0 %v6982, 78
        %v8681 = vpop.permute.xlu0 %8680
        %8684 = vrot.lane.b32.xlu0 %v7023, 80
        %v8685 = vpop.permute.xlu0 %8684
        %8688 = vrot.lane.b32.xlu0 %v7047, 82
        %v8689 = vpop.permute.xlu0 %8688
        %8692 = vrot.lane.b32.xlu0 %v7030, 84
        %v8693 = vpop.permute.xlu0 %8692
        %8696 = vrot.lane.b32.xlu0 %v7048, 86
        %v8697 = vpop.permute.xlu0 %8696
        %8700 = vrot.lane.b32.xlu0 %v7039, 88
        %v8701 = vpop.permute.xlu0 %8700
        %8704 = vrot.lane.b32.xlu0 %v7049, 90
        %v8705 = vpop.permute.xlu0 %8704
        %8708 = vrot.lane.b32.xlu0 %v7046, 92
        %v8709 = vpop.permute.xlu0 %8708
        %8712 = vrot.lane.b32.xlu0 %v7050, 94
        %v8713 = vpop.permute.xlu0 %8712
        %8716 = vrot.lane.b32.xlu0 %v7091, 96
        %v8717 = vpop.permute.xlu0 %8716
        %8720 = vrot.lane.b32.xlu0 %v7115, 98
        %v8721 = vpop.permute.xlu0 %8720
        %8724 = vrot.lane.b32.xlu0 %v7098, 100
        %v8725 = vpop.permute.xlu0 %8724
        %8728 = vrot.lane.b32.xlu0 %v7116, 102
        %v8729 = vpop.permute.xlu0 %8728
        %8732 = vrot.lane.b32.xlu0 %v7107, 104
        %v8733 = vpop.permute.xlu0 %8732
        %8736 = vrot.lane.b32.xlu0 %v7117, 106
        %v8737 = vpop.permute.xlu0 %8736
        %8740 = vrot.lane.b32.xlu0 %v7114, 108
        %v8741 = vpop.permute.xlu0 %8740
        %8744 = vrot.lane.b32.xlu0 %v7118, 110
        %v8745 = vpop.permute.xlu0 %8744
        %8748 = vrot.lane.b32.xlu0 %v7159, 112
        %v8749 = vpop.permute.xlu0 %8748
        %8752 = vrot.lane.b32.xlu0 %v7183, 114
        %v8753 = vpop.permute.xlu0 %8752
        %8756 = vrot.lane.b32.xlu0 %v7166, 116
        %v8757 = vpop.permute.xlu0 %8756
        %8760 = vrot.lane.b32.xlu0 %v7184, 118
        %v8761 = vpop.permute.xlu0 %8760
        %8764 = vrot.lane.b32.xlu0 %v7175, 120
        %v8765 = vpop.permute.xlu0 %8764
        %8768 = vrot.lane.b32.xlu0 %v7185, 122
        %v8769 = vpop.permute.xlu0 %8768
        %8772 = vrot.lane.b32.xlu0 %v7182, 124
        %v8773 = vpop.permute.xlu0 %8772
        %8776 = vrot.lane.b32.xlu0 %v7186, 126
        %v8777 = vpop.permute.xlu0 %8776
        %8780 = vrot.lane.b32.xlu0 %v7251, 2
        %v8781 = vpop.permute.xlu0 %8780
        %8784 = vrot.lane.b32.xlu0 %v7234, 4
        %v8785 = vpop.permute.xlu0 %8784
        %8788 = vrot.lane.b32.xlu0 %v7252, 6
        %v8789 = vpop.permute.xlu0 %8788
        %8792 = vrot.lane.b32.xlu0 %v7243, 8
        %v8793 = vpop.permute.xlu0 %8792
        %8796 = vrot.lane.b32.xlu0 %v7253, 10
        %v8797 = vpop.permute.xlu0 %8796
        %8800 = vrot.lane.b32.xlu0 %v7250, 12
        %v8801 = vpop.permute.xlu0 %8800
        %8804 = vrot.lane.b32.xlu0 %v7254, 14
        %v8805 = vpop.permute.xlu0 %8804
        %8808 = vrot.lane.b32.xlu0 %v7295, 16
        %v8809 = vpop.permute.xlu0 %8808
        %8812 = vrot.lane.b32.xlu0 %v7319, 18
        %v8813 = vpop.permute.xlu0 %8812
        %8816 = vrot.lane.b32.xlu0 %v7302, 20
        %v8817 = vpop.permute.xlu0 %8816
        %8820 = vrot.lane.b32.xlu0 %v7320, 22
        %v8821 = vpop.permute.xlu0 %8820
        %8824 = vrot.lane.b32.xlu0 %v7311, 24
        %v8825 = vpop.permute.xlu0 %8824
        %8828 = vrot.lane.b32.xlu0 %v7321, 26
        %v8829 = vpop.permute.xlu0 %8828
        %8832 = vrot.lane.b32.xlu0 %v7318, 28
        %v8833 = vpop.permute.xlu0 %8832
        %8836 = vrot.lane.b32.xlu0 %v7322, 30
        %v8837 = vpop.permute.xlu0 %8836
        %8840 = vrot.lane.b32.xlu0 %v7363, 32
        %v8841 = vpop.permute.xlu0 %8840
        %8844 = vrot.lane.b32.xlu0 %v7387, 34
        %v8845 = vpop.permute.xlu0 %8844
        %8848 = vrot.lane.b32.xlu0 %v7370, 36
        %v8849 = vpop.permute.xlu0 %8848
        %8852 = vrot.lane.b32.xlu0 %v7388, 38
        %v8853 = vpop.permute.xlu0 %8852
        %8856 = vrot.lane.b32.xlu0 %v7379, 40
        %v8857 = vpop.permute.xlu0 %8856
        %8860 = vrot.lane.b32.xlu0 %v7389, 42
        %v8861 = vpop.permute.xlu0 %8860
        %8864 = vrot.lane.b32.xlu0 %v7386, 44
        %v8865 = vpop.permute.xlu0 %8864
        %8868 = vrot.lane.b32.xlu0 %v7390, 46
        %v8869 = vpop.permute.xlu0 %8868
        %8872 = vrot.lane.b32.xlu0 %v7431, 48
        %v8873 = vpop.permute.xlu0 %8872
        %8876 = vrot.lane.b32.xlu0 %v7455, 50
        %v8877 = vpop.permute.xlu0 %8876
        %8880 = vrot.lane.b32.xlu0 %v7438, 52
        %v8881 = vpop.permute.xlu0 %8880
        %8884 = vrot.lane.b32.xlu0 %v7456, 54
        %v8885 = vpop.permute.xlu0 %8884
        %8888 = vrot.lane.b32.xlu0 %v7447, 56
        %v8889 = vpop.permute.xlu0 %8888
        %8892 = vrot.lane.b32.xlu0 %v7457, 58
        %v8893 = vpop.permute.xlu0 %8892
        %8896 = vrot.lane.b32.xlu0 %v7454, 60
        %v8897 = vpop.permute.xlu0 %8896
        %8900 = vrot.lane.b32.xlu0 %v7458, 62
        %v8901 = vpop.permute.xlu0 %8900
        %8904 = vrot.lane.b32.xlu0 %v7499, 64
        %v8905 = vpop.permute.xlu0 %8904
        %8908 = vrot.lane.b32.xlu0 %v7523, 66
        %v8909 = vpop.permute.xlu0 %8908
        %8912 = vrot.lane.b32.xlu0 %v7506, 68
        %v8913 = vpop.permute.xlu0 %8912
        %8916 = vrot.lane.b32.xlu0 %v7524, 70
        %v8917 = vpop.permute.xlu0 %8916
        %8920 = vrot.lane.b32.xlu0 %v7515, 72
        %v8921 = vpop.permute.xlu0 %8920
        %8924 = vrot.lane.b32.xlu0 %v7525, 74
        %v8925 = vpop.permute.xlu0 %8924
        %8928 = vrot.lane.b32.xlu0 %v7522, 76
        %v8929 = vpop.permute.xlu0 %8928
        %8932 = vrot.lane.b32.xlu0 %v7526, 78
        %v8933 = vpop.permute.xlu0 %8932
        %8936 = vrot.lane.b32.xlu0 %v7567, 80
        %v8937 = vpop.permute.xlu0 %8936
        %8940 = vrot.lane.b32.xlu0 %v7591, 82
        %v8941 = vpop.permute.xlu0 %8940
        %8944 = vrot.lane.b32.xlu0 %v7574, 84
        %v8945 = vpop.permute.xlu0 %8944
        %8948 = vrot.lane.b32.xlu0 %v7592, 86
        %v8949 = vpop.permute.xlu0 %8948
        %8952 = vrot.lane.b32.xlu0 %v7583, 88
        %v8953 = vpop.permute.xlu0 %8952
        %8956 = vrot.lane.b32.xlu0 %v7593, 90
        %v8957 = vpop.permute.xlu0 %8956
        %8960 = vrot.lane.b32.xlu0 %v7590, 92
        %v8961 = vpop.permute.xlu0 %8960
        %8964 = vrot.lane.b32.xlu0 %v7594, 94
        %v8965 = vpop.permute.xlu0 %8964
        %8968 = vrot.lane.b32.xlu0 %v7635, 96
        %v8969 = vpop.permute.xlu0 %8968
        %8972 = vrot.lane.b32.xlu0 %v7659, 98
        %v8973 = vpop.permute.xlu0 %8972
        %8976 = vrot.lane.b32.xlu0 %v7642, 100
        %v8977 = vpop.permute.xlu0 %8976
        %8980 = vrot.lane.b32.xlu0 %v7660, 102
        %v8981 = vpop.permute.xlu0 %8980
        %8984 = vrot.lane.b32.xlu0 %v7651, 104
        %v8985 = vpop.permute.xlu0 %8984
        %8988 = vrot.lane.b32.xlu0 %v7661, 106
        %v8989 = vpop.permute.xlu0 %8988
        %8992 = vrot.lane.b32.xlu0 %v7658, 108
        %v8993 = vpop.permute.xlu0 %8992
        %8996 = vrot.lane.b32.xlu0 %v7662, 110
        %v8997 = vpop.permute.xlu0 %8996
        %9000 = vrot.lane.b32.xlu0 %v7703, 112
        %v9001 = vpop.permute.xlu0 %9000
        %9004 = vrot.lane.b32.xlu0 %v7727, 114
        %v9005 = vpop.permute.xlu0 %9004
        %9008 = vrot.lane.b32.xlu0 %v7710, 116
        %v9009 = vpop.permute.xlu0 %9008
        %9012 = vrot.lane.b32.xlu0 %v7728, 118
        %v9013 = vpop.permute.xlu0 %9012
        %9016 = vrot.lane.b32.xlu0 %v7719, 120
        %v9017 = vpop.permute.xlu0 %9016
        %9020 = vrot.lane.b32.xlu0 %v7729, 122
        %v9021 = vpop.permute.xlu0 %9020
        %9024 = vrot.lane.b32.xlu0 %v7726, 124
        %v9025 = vpop.permute.xlu0 %9024
        %9028 = vrot.lane.b32.xlu0 %v7730, 126
        %v9029 = vpop.permute.xlu0 %9028
        %9032 = vrot.lane.b32.xlu0 %v7795, 2
        %v9033 = vpop.permute.xlu0 %9032
        %9036 = vrot.lane.b32.xlu0 %v7778, 4
        %v9037 = vpop.permute.xlu0 %9036
        %9040 = vrot.lane.b32.xlu0 %v7796, 6
        %v9041 = vpop.permute.xlu0 %9040
        %9044 = vrot.lane.b32.xlu0 %v7787, 8
        %v9045 = vpop.permute.xlu0 %9044
        %9048 = vrot.lane.b32.xlu0 %v7797, 10
        %v9049 = vpop.permute.xlu0 %9048
        %9052 = vrot.lane.b32.xlu0 %v7794, 12
        %v9053 = vpop.permute.xlu0 %9052
        %9056 = vrot.lane.b32.xlu0 %v7798, 14
        %v9057 = vpop.permute.xlu0 %9056
        %9060 = vrot.lane.b32.xlu0 %v7839, 16
        %v9061 = vpop.permute.xlu0 %9060
        %9064 = vrot.lane.b32.xlu0 %v7863, 18
        %v9065 = vpop.permute.xlu0 %9064
        %9068 = vrot.lane.b32.xlu0 %v7846, 20
        %v9069 = vpop.permute.xlu0 %9068
        %9072 = vrot.lane.b32.xlu0 %v7864, 22
        %v9073 = vpop.permute.xlu0 %9072
        %9076 = vrot.lane.b32.xlu0 %v7855, 24
        %v9077 = vpop.permute.xlu0 %9076
        %9080 = vrot.lane.b32.xlu0 %v7865, 26
        %v9081 = vpop.permute.xlu0 %9080
        %9084 = vrot.lane.b32.xlu0 %v7862, 28
        %v9085 = vpop.permute.xlu0 %9084
        %9088 = vrot.lane.b32.xlu0 %v7866, 30
        %v9089 = vpop.permute.xlu0 %9088
        %9092 = vrot.lane.b32.xlu0 %v7907, 32
        %v9093 = vpop.permute.xlu0 %9092
        %9096 = vrot.lane.b32.xlu0 %v7931, 34
        %v9097 = vpop.permute.xlu0 %9096
        %9100 = vrot.lane.b32.xlu0 %v7914, 36
        %v9101 = vpop.permute.xlu0 %9100
        %9104 = vrot.lane.b32.xlu0 %v7932, 38
        %v9105 = vpop.permute.xlu0 %9104
        %9108 = vrot.lane.b32.xlu0 %v7923, 40
        %v9109 = vpop.permute.xlu0 %9108
        %9112 = vrot.lane.b32.xlu0 %v7933, 42
        %v9113 = vpop.permute.xlu0 %9112
        %9116 = vrot.lane.b32.xlu0 %v7930, 44
        %v9117 = vpop.permute.xlu0 %9116
        %9120 = vrot.lane.b32.xlu0 %v7934, 46
        %v9121 = vpop.permute.xlu0 %9120
        %9124 = vrot.lane.b32.xlu0 %v7975, 48
        %v9125 = vpop.permute.xlu0 %9124
        %9128 = vrot.lane.b32.xlu0 %v7999, 50
        %v9129 = vpop.permute.xlu0 %9128
        %9132 = vrot.lane.b32.xlu0 %v7982, 52
        %v9133 = vpop.permute.xlu0 %9132
        %9136 = vrot.lane.b32.xlu0 %v8000, 54
        %v9137 = vpop.permute.xlu0 %9136
        %9140 = vrot.lane.b32.xlu0 %v7991, 56
        %v9141 = vpop.permute.xlu0 %9140
        %9144 = vrot.lane.b32.xlu0 %v8001, 58
        %v9145 = vpop.permute.xlu0 %9144
        %9148 = vrot.lane.b32.xlu0 %v7998, 60
        %v9149 = vpop.permute.xlu0 %9148
        %9152 = vrot.lane.b32.xlu0 %v8002, 62
        %v9153 = vpop.permute.xlu0 %9152
        %9156 = vrot.lane.b32.xlu0 %v8043, 64
        %v9157 = vpop.permute.xlu0 %9156
        %9160 = vrot.lane.b32.xlu0 %v8067, 66
        %v9161 = vpop.permute.xlu0 %9160
        %9164 = vrot.lane.b32.xlu0 %v8050, 68
        %v9165 = vpop.permute.xlu0 %9164
        %9168 = vrot.lane.b32.xlu0 %v8068, 70
        %v9169 = vpop.permute.xlu0 %9168
        %9172 = vrot.lane.b32.xlu0 %v8059, 72
        %v9173 = vpop.permute.xlu0 %9172
        %9176 = vrot.lane.b32.xlu0 %v8069, 74
        %v9177 = vpop.permute.xlu0 %9176
        %9180 = vrot.lane.b32.xlu0 %v8066, 76
        %v9181 = vpop.permute.xlu0 %9180
        %9184 = vrot.lane.b32.xlu0 %v8070, 78
        %v9185 = vpop.permute.xlu0 %9184
        %9188 = vrot.lane.b32.xlu0 %v8111, 80
        %v9189 = vpop.permute.xlu0 %9188
        %9192 = vrot.lane.b32.xlu0 %v8135, 82
        %v9193 = vpop.permute.xlu0 %9192
        %9196 = vrot.lane.b32.xlu0 %v8118, 84
        %v9197 = vpop.permute.xlu0 %9196
        %9200 = vrot.lane.b32.xlu0 %v8136, 86
        %v9201 = vpop.permute.xlu0 %9200
        %9204 = vrot.lane.b32.xlu0 %v8127, 88
        %v9205 = vpop.permute.xlu0 %9204
        %9208 = vrot.lane.b32.xlu0 %v8137, 90
        %v9209 = vpop.permute.xlu0 %9208
        %9212 = vrot.lane.b32.xlu0 %v8134, 92
        %v9213 = vpop.permute.xlu0 %9212
        %9216 = vrot.lane.b32.xlu0 %v8138, 94
        %v9217 = vpop.permute.xlu0 %9216
        %9220 = vrot.lane.b32.xlu0 %v8179, 96
        %v9221 = vpop.permute.xlu0 %9220
        %9224 = vrot.lane.b32.xlu0 %v8203, 98
        %v9225 = vpop.permute.xlu0 %9224
        %9228 = vrot.lane.b32.xlu0 %v8186, 100
        %v9229 = vpop.permute.xlu0 %9228
        %9232 = vrot.lane.b32.xlu0 %v8204, 102
        %v9233 = vpop.permute.xlu0 %9232
        %9236 = vrot.lane.b32.xlu0 %v8195, 104
        %v9237 = vpop.permute.xlu0 %9236
        %9240 = vrot.lane.b32.xlu0 %v8205, 106
        %v9241 = vpop.permute.xlu0 %9240
        %9244 = vrot.lane.b32.xlu0 %v8202, 108
        %v9245 = vpop.permute.xlu0 %9244
        %9248 = vrot.lane.b32.xlu0 %v8206, 110
        %v9249 = vpop.permute.xlu0 %9248
        %9252 = vrot.lane.b32.xlu0 %v8247, 112
        %v9253 = vpop.permute.xlu0 %9252
        %9256 = vrot.lane.b32.xlu0 %v8271, 114
        %v9257 = vpop.permute.xlu0 %9256
        %9260 = vrot.lane.b32.xlu0 %v8254, 116
        %v9261 = vpop.permute.xlu0 %9260
        %9264 = vrot.lane.b32.xlu0 %v8272, 118
        %v9265 = vpop.permute.xlu0 %9264
        %9268 = vrot.lane.b32.xlu0 %v8263, 120
        %v9269 = vpop.permute.xlu0 %9268
        %9272 = vrot.lane.b32.xlu0 %v8273, 122
        %v9273 = vpop.permute.xlu0 %9272
        %9276 = vrot.lane.b32.xlu0 %v8270, 124
        %v9277 = vpop.permute.xlu0 %9276
        %9280 = vrot.lane.b32.xlu0 %v8274, 126
        %v9281 = vpop.permute.xlu0 %9280
        %v9283 = vsel %vm4578, %v6139, %v8277
        %v9284 = vsel %vm4580, %v9283, %v8281
        %v9285 = vsel %vm4582, %v9284, %v8285
        %v9286 = vsel %vm4584, %v9285, %v8289
        %v9287 = vsel %vm4586, %v9286, %v8293
        %v9288 = vsel %vm4588, %v9287, %v8297
        %v9289 = vsel %vm4590, %v9288, %v8301
        %v9290 = vsel %vm4592, %v9289, %v8305
        %v9291 = vsel %vm4594, %v9290, %v8309
        %v9292 = vsel %vm4596, %v9291, %v8313
        %v9293 = vsel %vm4598, %v9292, %v8317
        %v9294 = vsel %vm4600, %v9293, %v8321
        %v9295 = vsel %vm4602, %v9294, %v8325
        %v9296 = vsel %vm4604, %v9295, %v8329
        %v9297 = vsel %vm4606, %v9296, %v8333
        %v9298 = vsel %vm4608, %v9297, %v8337
        %v9299 = vsel %vm4610, %v9298, %v8341
        %v9300 = vsel %vm4612, %v9299, %v8345
        %v9301 = vsel %vm4614, %v9300, %v8349
        %v9302 = vsel %vm4616, %v9301, %v8353
        %v9303 = vsel %vm4618, %v9302, %v8357
        %v9304 = vsel %vm4620, %v9303, %v8361
        %v9305 = vsel %vm4622, %v9304, %v8365
        %v9306 = vsel %vm4624, %v9305, %v8369
        %v9307 = vsel %vm4626, %v9306, %v8373
        %v9308 = vsel %vm4628, %v9307, %v8377
        %v9309 = vsel %vm4630, %v9308, %v8381
        %v9310 = vsel %vm4632, %v9309, %v8385
        %v9311 = vsel %vm4634, %v9310, %v8389
        %v9312 = vsel %vm4636, %v9311, %v8393
        %v9313 = vsel %vm4638, %v9312, %v8397
        %v9314 = vsel %vm4640, %v9313, %v8401
        %v9315 = vsel %vm4642, %v9314, %v8405
        %v9316 = vsel %vm4644, %v9315, %v8409
        %v9317 = vsel %vm4646, %v9316, %v8413
        %v9318 = vsel %vm4648, %v9317, %v8417
        %v9319 = vsel %vm4650, %v9318, %v8421
        %v9320 = vsel %vm4652, %v9319, %v8425
        %v9321 = vsel %vm4654, %v9320, %v8429
        %v9322 = vsel %vm4656, %v9321, %v8433
        %v9323 = vsel %vm4658, %v9322, %v8437
        %v9324 = vsel %vm4660, %v9323, %v8441
        %v9325 = vsel %vm4662, %v9324, %v8445
        %v9326 = vsel %vm4664, %v9325, %v8449
        %v9327 = vsel %vm4666, %v9326, %v8453
        %v9328 = vsel %vm4668, %v9327, %v8457
        %v9329 = vsel %vm4670, %v9328, %v8461
        %v9330 = vsel %vm4672, %v9329, %v8465
        %v9331 = vsel %vm4674, %v9330, %v8469
        %v9332 = vsel %vm4676, %v9331, %v8473
        %v9333 = vsel %vm4678, %v9332, %v8477
        %v9334 = vsel %vm4680, %v9333, %v8481
        %v9335 = vsel %vm4682, %v9334, %v8485
        %v9336 = vsel %vm4684, %v9335, %v8489
        %v9337 = vsel %vm4686, %v9336, %v8493
        %v9338 = vsel %vm4688, %v9337, %v8497
        %v9339 = vsel %vm4690, %v9338, %v8501
        %v9340 = vsel %vm4692, %v9339, %v8505
        %v9341 = vsel %vm4694, %v9340, %v8509
        %v9342 = vsel %vm4696, %v9341, %v8513
        %v9343 = vsel %vm4698, %v9342, %v8517
        %v9344 = vsel %vm4700, %v9343, %v8521
        %v9345 = vsel %vm4702, %v9344, %v8525
        %v9346 = vsel %vm4578, %v6683, %v8529
        %v9347 = vsel %vm4580, %v9346, %v8533
        %v9348 = vsel %vm4582, %v9347, %v8537
        %v9349 = vsel %vm4584, %v9348, %v8541
        %v9350 = vsel %vm4586, %v9349, %v8545
        %v9351 = vsel %vm4588, %v9350, %v8549
        %v9352 = vsel %vm4590, %v9351, %v8553
        %v9353 = vsel %vm4592, %v9352, %v8557
        %v9354 = vsel %vm4594, %v9353, %v8561
        %v9355 = vsel %vm4596, %v9354, %v8565
        %v9356 = vsel %vm4598, %v9355, %v8569
        %v9357 = vsel %vm4600, %v9356, %v8573
        %v9358 = vsel %vm4602, %v9357, %v8577
        %v9359 = vsel %vm4604, %v9358, %v8581
        %v9360 = vsel %vm4606, %v9359, %v8585
        %v9361 = vsel %vm4608, %v9360, %v8589
        %v9362 = vsel %vm4610, %v9361, %v8593
        %v9363 = vsel %vm4612, %v9362, %v8597
        %v9364 = vsel %vm4614, %v9363, %v8601
        %v9365 = vsel %vm4616, %v9364, %v8605
        %v9366 = vsel %vm4618, %v9365, %v8609
        %v9367 = vsel %vm4620, %v9366, %v8613
        %v9368 = vsel %vm4622, %v9367, %v8617
        %v9369 = vsel %vm4624, %v9368, %v8621
        %v9370 = vsel %vm4626, %v9369, %v8625
        %v9371 = vsel %vm4628, %v9370, %v8629
        %v9372 = vsel %vm4630, %v9371, %v8633
        %v9373 = vsel %vm4632, %v9372, %v8637
        %v9374 = vsel %vm4634, %v9373, %v8641
        %v9375 = vsel %vm4636, %v9374, %v8645
        %v9376 = vsel %vm4638, %v9375, %v8649
        %v9377 = vsel %vm4640, %v9376, %v8653
        %v9378 = vsel %vm4642, %v9377, %v8657
        %v9379 = vsel %vm4644, %v9378, %v8661
        %v9380 = vsel %vm4646, %v9379, %v8665
        %v9381 = vsel %vm4648, %v9380, %v8669
        %v9382 = vsel %vm4650, %v9381, %v8673
        %v9383 = vsel %vm4652, %v9382, %v8677
        %v9384 = vsel %vm4654, %v9383, %v8681
        %v9385 = vsel %vm4656, %v9384, %v8685
        %v9386 = vsel %vm4658, %v9385, %v8689
        %v9387 = vsel %vm4660, %v9386, %v8693
        %v9388 = vsel %vm4662, %v9387, %v8697
        %v9389 = vsel %vm4664, %v9388, %v8701
        %v9390 = vsel %vm4666, %v9389, %v8705
        %v9391 = vsel %vm4668, %v9390, %v8709
        %v9392 = vsel %vm4670, %v9391, %v8713
        %v9393 = vsel %vm4672, %v9392, %v8717
        %v9394 = vsel %vm4674, %v9393, %v8721
        %v9395 = vsel %vm4676, %v9394, %v8725
        %v9396 = vsel %vm4678, %v9395, %v8729
        %v9397 = vsel %vm4680, %v9396, %v8733
        %v9398 = vsel %vm4682, %v9397, %v8737
        %v9399 = vsel %vm4684, %v9398, %v8741
        %v9400 = vsel %vm4686, %v9399, %v8745
        %v9401 = vsel %vm4688, %v9400, %v8749
        %v9402 = vsel %vm4690, %v9401, %v8753
        %v9403 = vsel %vm4692, %v9402, %v8757
        %v9404 = vsel %vm4694, %v9403, %v8761
        %v9405 = vsel %vm4696, %v9404, %v8765
        %v9406 = vsel %vm4698, %v9405, %v8769
        %v9407 = vsel %vm4700, %v9406, %v8773
        %v9408 = vsel %vm4702, %v9407, %v8777
        %v9409 = vsel %vm4578, %v7227, %v8781
        %v9410 = vsel %vm4580, %v9409, %v8785
        %v9411 = vsel %vm4582, %v9410, %v8789
        %v9412 = vsel %vm4584, %v9411, %v8793
        %v9413 = vsel %vm4586, %v9412, %v8797
        %v9414 = vsel %vm4588, %v9413, %v8801
        %v9415 = vsel %vm4590, %v9414, %v8805
        %v9416 = vsel %vm4592, %v9415, %v8809
        %v9417 = vsel %vm4594, %v9416, %v8813
        %v9418 = vsel %vm4596, %v9417, %v8817
        %v9419 = vsel %vm4598, %v9418, %v8821
        %v9420 = vsel %vm4600, %v9419, %v8825
        %v9421 = vsel %vm4602, %v9420, %v8829
        %v9422 = vsel %vm4604, %v9421, %v8833
        %v9423 = vsel %vm4606, %v9422, %v8837
        %v9424 = vsel %vm4608, %v9423, %v8841
        %v9425 = vsel %vm4610, %v9424, %v8845
        %v9426 = vsel %vm4612, %v9425, %v8849
        %v9427 = vsel %vm4614, %v9426, %v8853
        %v9428 = vsel %vm4616, %v9427, %v8857
        %v9429 = vsel %vm4618, %v9428, %v8861
        %v9430 = vsel %vm4620, %v9429, %v8865
        %v9431 = vsel %vm4622, %v9430, %v8869
        %v9432 = vsel %vm4624, %v9431, %v8873
        %v9433 = vsel %vm4626, %v9432, %v8877
        %v9434 = vsel %vm4628, %v9433, %v8881
        %v9435 = vsel %vm4630, %v9434, %v8885
        %v9436 = vsel %vm4632, %v9435, %v8889
        %v9437 = vsel %vm4634, %v9436, %v8893
        %v9438 = vsel %vm4636, %v9437, %v8897
        %v9439 = vsel %vm4638, %v9438, %v8901
        %v9440 = vsel %vm4640, %v9439, %v8905
        %v9441 = vsel %vm4642, %v9440, %v8909
        %v9442 = vsel %vm4644, %v9441, %v8913
        %v9443 = vsel %vm4646, %v9442, %v8917
        %v9444 = vsel %vm4648, %v9443, %v8921
        %v9445 = vsel %vm4650, %v9444, %v8925
        %v9446 = vsel %vm4652, %v9445, %v8929
        %v9447 = vsel %vm4654, %v9446, %v8933
        %v9448 = vsel %vm4656, %v9447, %v8937
        %v9449 = vsel %vm4658, %v9448, %v8941
        %v9450 = vsel %vm4660, %v9449, %v8945
        %v9451 = vsel %vm4662, %v9450, %v8949
        %v9452 = vsel %vm4664, %v9451, %v8953
        %v9453 = vsel %vm4666, %v9452, %v8957
        %v9454 = vsel %vm4668, %v9453, %v8961
        %v9455 = vsel %vm4670, %v9454, %v8965
        %v9456 = vsel %vm4672, %v9455, %v8969
        %v9457 = vsel %vm4674, %v9456, %v8973
        %v9458 = vsel %vm4676, %v9457, %v8977
        %v9459 = vsel %vm4678, %v9458, %v8981
        %v9460 = vsel %vm4680, %v9459, %v8985
        %v9461 = vsel %vm4682, %v9460, %v8989
        %v9462 = vsel %vm4684, %v9461, %v8993
        %v9463 = vsel %vm4686, %v9462, %v8997
        %v9464 = vsel %vm4688, %v9463, %v9001
        %v9465 = vsel %vm4690, %v9464, %v9005
        %v9466 = vsel %vm4692, %v9465, %v9009
        %v9467 = vsel %vm4694, %v9466, %v9013
        %v9468 = vsel %vm4696, %v9467, %v9017
        %v9469 = vsel %vm4698, %v9468, %v9021
        %v9470 = vsel %vm4700, %v9469, %v9025
        %v9471 = vsel %vm4702, %v9470, %v9029
        %v9472 = vsel %vm4578, %v7771, %v9033
        %v9473 = vsel %vm4580, %v9472, %v9037
        %v9474 = vsel %vm4582, %v9473, %v9041
        %v9475 = vsel %vm4584, %v9474, %v9045
        %v9476 = vsel %vm4586, %v9475, %v9049
        %v9477 = vsel %vm4588, %v9476, %v9053
        %v9478 = vsel %vm4590, %v9477, %v9057
        %v9479 = vsel %vm4592, %v9478, %v9061
        %v9480 = vsel %vm4594, %v9479, %v9065
        %v9481 = vsel %vm4596, %v9480, %v9069
        %v9482 = vsel %vm4598, %v9481, %v9073
        %v9483 = vsel %vm4600, %v9482, %v9077
        %v9484 = vsel %vm4602, %v9483, %v9081
        %v9485 = vsel %vm4604, %v9484, %v9085
        %v9486 = vsel %vm4606, %v9485, %v9089
        %v9487 = vsel %vm4608, %v9486, %v9093
        %v9488 = vsel %vm4610, %v9487, %v9097
        %v9489 = vsel %vm4612, %v9488, %v9101
        %v9490 = vsel %vm4614, %v9489, %v9105
        %v9491 = vsel %vm4616, %v9490, %v9109
        %v9492 = vsel %vm4618, %v9491, %v9113
        %v9493 = vsel %vm4620, %v9492, %v9117
        %v9494 = vsel %vm4622, %v9493, %v9121
        %v9495 = vsel %vm4624, %v9494, %v9125
        %v9496 = vsel %vm4626, %v9495, %v9129
        %v9497 = vsel %vm4628, %v9496, %v9133
        %v9498 = vsel %vm4630, %v9497, %v9137
        %v9499 = vsel %vm4632, %v9498, %v9141
        %v9500 = vsel %vm4634, %v9499, %v9145
        %v9501 = vsel %vm4636, %v9500, %v9149
        %v9502 = vsel %vm4638, %v9501, %v9153
        %v9503 = vsel %vm4640, %v9502, %v9157
        %v9504 = vsel %vm4642, %v9503, %v9161
        %v9505 = vsel %vm4644, %v9504, %v9165
        %v9506 = vsel %vm4646, %v9505, %v9169
        %v9507 = vsel %vm4648, %v9506, %v9173
        %v9508 = vsel %vm4650, %v9507, %v9177
        %v9509 = vsel %vm4652, %v9508, %v9181
        %v9510 = vsel %vm4654, %v9509, %v9185
        %v9511 = vsel %vm4656, %v9510, %v9189
        %v9512 = vsel %vm4658, %v9511, %v9193
        %v9513 = vsel %vm4660, %v9512, %v9197
        %v9514 = vsel %vm4662, %v9513, %v9201
        %v9515 = vsel %vm4664, %v9514, %v9205
        %v9516 = vsel %vm4666, %v9515, %v9209
        %v9517 = vsel %vm4668, %v9516, %v9213
        %v9518 = vsel %vm4670, %v9517, %v9217
        %v9519 = vsel %vm4672, %v9518, %v9221
        %v9520 = vsel %vm4674, %v9519, %v9225
        %v9521 = vsel %vm4676, %v9520, %v9229
        %v9522 = vsel %vm4678, %v9521, %v9233
        %v9523 = vsel %vm4680, %v9522, %v9237
        %v9524 = vsel %vm4682, %v9523, %v9241
        %v9525 = vsel %vm4684, %v9524, %v9245
        %v9526 = vsel %vm4686, %v9525, %v9249
        %v9527 = vsel %vm4688, %v9526, %v9253
        %v9528 = vsel %vm4690, %v9527, %v9257
        %v9529 = vsel %vm4692, %v9528, %v9261
        %v9530 = vsel %vm4694, %v9529, %v9265
        %v9531 = vsel %vm4696, %v9530, %v9269
        %v9532 = vsel %vm4698, %v9531, %v9273
        %v9533 = vsel %vm4700, %v9532, %v9277
        %v9534 = vsel %vm4702, %v9533, %v9281
        %9536 = vrot.lane.b32.xlu0 %v9345, 32
        %v9537 = vpop.permute.xlu0 %9536
        %9540 = vrot.lane.b32.xlu0 %v4703, 32
        %v9541 = vpop.permute.xlu0 %9540
        %9543 = vrot.lane.b32.xlu0 %v9345, 64
        %v9544 = vpop.permute.xlu0 %9543
        %9546 = vrot.lane.b32.xlu0 %v4703, 64
        %v9547 = vpop.permute.xlu0 %9546
        %9549 = vrot.lane.b32.xlu0 %v9345, 96
        %v9550 = vpop.permute.xlu0 %9549
        %9552 = vrot.lane.b32.xlu0 %v4703, 96
        %v9553 = vpop.permute.xlu0 %9552
        %9556 = vrot.lane.b32.xlu0 %v9408, 32
        %v9557 = vpop.permute.xlu0 %9556
        %9560 = vrot.lane.b32.xlu0 %v4766, 32
        %v9561 = vpop.permute.xlu0 %9560
        %9563 = vrot.lane.b32.xlu0 %v9408, 64
        %v9564 = vpop.permute.xlu0 %9563
        %9566 = vrot.lane.b32.xlu0 %v4766, 64
        %v9567 = vpop.permute.xlu0 %9566
        %9569 = vrot.lane.b32.xlu0 %v9408, 96
        %v9570 = vpop.permute.xlu0 %9569
        %9572 = vrot.lane.b32.xlu0 %v4766, 96
        %v9573 = vpop.permute.xlu0 %9572
        %v9575 = vsel %vm4608, %v4703, %v9537
        %v9576 = vsel %vm4640, %v9575, %v9541
        %v9577 = vsel %vm4672, %v9576, %v9544
        %v9578 = vsel %vm4608, %v9547, %v9550
        %v9579 = vsel %vm4640, %v9578, %v9553
        %v9580 = vsel %vm4672, %v9579, %v9345
        %v9581 = vsel %vm4608, %v4766, %v9557
        %v9582 = vsel %vm4640, %v9581, %v9561
        %v9583 = vsel %vm4672, %v9582, %v9564
        %v9584 = vsel %vm4608, %v9567, %v9570
        %v9585 = vsel %vm4640, %v9584, %v9573
        %v9586 = vsel %vm4672, %v9585, %v9408
        %9588 = vrot.lane.b32.xlu0 %v9471, 32
        %v9589 = vpop.permute.xlu0 %9588
        %9592 = vrot.lane.b32.xlu0 %v4829, 32
        %v9593 = vpop.permute.xlu0 %9592
        %9595 = vrot.lane.b32.xlu0 %v9471, 64
        %v9596 = vpop.permute.xlu0 %9595
        %9598 = vrot.lane.b32.xlu0 %v4829, 64
        %v9599 = vpop.permute.xlu0 %9598
        %9601 = vrot.lane.b32.xlu0 %v9471, 96
        %v9602 = vpop.permute.xlu0 %9601
        %9604 = vrot.lane.b32.xlu0 %v4829, 96
        %v9605 = vpop.permute.xlu0 %9604
        %9608 = vrot.lane.b32.xlu0 %v9534, 32
        %v9609 = vpop.permute.xlu0 %9608
        %9612 = vrot.lane.b32.xlu0 %v4892, 32
        %v9613 = vpop.permute.xlu0 %9612
        %9615 = vrot.lane.b32.xlu0 %v9534, 64
        %v9616 = vpop.permute.xlu0 %9615
        %9618 = vrot.lane.b32.xlu0 %v4892, 64
        %v9619 = vpop.permute.xlu0 %9618
        %9621 = vrot.lane.b32.xlu0 %v9534, 96
        %v9622 = vpop.permute.xlu0 %9621
        %9624 = vrot.lane.b32.xlu0 %v4892, 96
        %v9625 = vpop.permute.xlu0 %9624
        %v9627 = vsel %vm4608, %v4829, %v9589
        %v9628 = vsel %vm4640, %v9627, %v9593
        %v9629 = vsel %vm4672, %v9628, %v9596
        %v9630 = vsel %vm4608, %v9599, %v9602
        %v9631 = vsel %vm4640, %v9630, %v9605
        %v9632 = vsel %vm4672, %v9631, %v9471
        %v9633 = vsel %vm4608, %v4892, %v9609
        %v9634 = vsel %vm4640, %v9633, %v9613
        %v9635 = vsel %vm4672, %v9634, %v9616
        %v9636 = vsel %vm4608, %v9619, %v9622
        %v9637 = vsel %vm4640, %v9636, %v9625
        %v9638 = vsel %vm4672, %v9637, %v9534
        %v9647 = vcombine.low %v9577, %v9580
        %v9648 = vcombine.low %v9583, %v9586
        %v9649 = vcombine.low %v9629, %v9632
        %v9650 = vcombine.low %v9635, %v9638
        %9655 = vst [vmem:[%s165] sm:$0xff] %v9647
        %9656 = vst [vmem:[%s165 + $0x8] sm:$0xff] %v9648
        %9657 = vst [vmem:[%s165 + $0x10] sm:$0xff] %v9649
        %9658 = vst [vmem:[%s165 + $0x18] sm:$0xff] %v9650
        %s9659 = sand.u32 %s79, 1
        %s9660 = scalar_lea.sflag [#allocation4], %s9659
        %s9661 = sand.u32 %s79, 1
        %s9662 = smul.addr %s9661, 32
        %s9663 = scalar_lea.vmem [#allocation5], %s9662
        // Predicated region
        $region29: #{tpu_custom_call.1} parent=23 // pred_check
          %p9664 = pneg %p89
        $region30: #{tpu_custom_call.1} parent=23 // pred_check_branch
          %9666 = sbr.rel (%p9664) target = $region32
        $region31: #{tpu_custom_call.1} parent=23 // pred_region
          %s9667 = smul.u32 8, %s25
          %s9669 = ssub.s32 512, 512
          %9670 = vsyncadd %s9660, %s9669
          %s9671 = smul.addr %s24, 8
          %s9672 = sadd.s32 %s9667, %s9671
          %s9673 = smul.addr %s23, 8
          %s9674 = sadd.s32 %s9672, %s9673
          %s9675 = smul.addr %s9674, 64
          %s9676 = scalar_lea.hbm %s1, %s9675
          %s9678 = sshll.u32 %s9663, 4
          %s9679 = int_to_ptr.vmem [resolvable:$true] %s9678
          %9681 = dma.vmem_to_hbm [thread:$0]  %s9679, 512, %s9676, %s9660
        $region32: #{tpu_custom_call.1} parent=23 // pred_fallthru
          _
      $region24: #{tpu_custom_call.1} parent=5 // pred_fallthru
        _
      %p9682 = scmp.le.s32.totalorder 2, %s13
      // Predicated region
      $region33: #{tpu_custom_call.1} parent=5 // pred_check
        %p9683 = pneg %p9682
      $region34: #{tpu_custom_call.1} parent=5 // pred_check_branch
        %9685 = sbr.rel (%p9683) target = $region36
      $region35: #{tpu_custom_call.1} parent=5 // pred_region
        %s9686 = ssub.s32 %s13, 2
        // Predicated region
        $region37: #{tpu_custom_call.1} parent=35 // pred_check
          %p9687 = pneg %p95
        $region38: #{tpu_custom_call.1} parent=35 // pred_check_branch
          %9689 = sbr.rel (%p9687) target = $region40
        $region39: #{tpu_custom_call.1} parent=35 // pred_region
          %s9690 = sand.u32 %s80, 1
          %s9691 = scalar_lea.sflag [#allocation4], %s9690
          %s9692 = sand.u32 %s80, 1
          %s9693 = smul.addr %s9692, 32
          %s9694 = scalar_lea.vmem [#allocation5], %s9693
          %9695 = dma.done %s9691, 512
        $region40: #{tpu_custom_call.1} parent=35 // pred_fallthru
          _
      $region36: #{tpu_custom_call.1} parent=5 // pred_fallthru
        _
    $region6: #{tpu_custom_call.1} parent=1 // loop_footer
      %s17 = sadd.s32 1, %s13
    $region7: #{tpu_custom_call.1} parent=1 // loop_footer_branch
      %12 = sbr.rel target = $region3
    $region8: #{tpu_custom_call.1} parent=1 // loop_exit
      _
    %9696 = vsyncpa [#allocation3], 1
    %s9697 = scalar_lea.sflag [#allocation3], 1
    %9698 = vsyncpa %s9697, 1
    %9699 = vsyncpa [#allocation4], 1
    %s9700 = scalar_lea.sflag [#allocation4], 1
    %9701 = vsyncpa %s9700, 1

</llo_original>
